<compile_context>
chip_gen: v7x
topology: tpu7x:2x2x1
jax: 0.10.0
libtpu: 0.0.40
codegen_flags: <defaults>
</compile_context>

<pallas_src>
import jax
import jax.numpy as jnp
from jax import lax
from jax.experimental import pallas as pl
from jax.experimental.pallas import tpu as pltpu


def _round_up(x, m):
    return ((x + m - 1) // m) * m


def conv2_forward(x_nchw, w3, w1, gamma, beta, run_mean, run_var, eps=1e-5):
    """Conv2.forward: SiLU(BN(conv3x3(x) + conv1x1(x))), stride=1, groups=1, dil=1."""
    N, C1, H, W = map(int, x_nchw.shape)
    C2 = int(w3.shape[0])
    Wp2 = W + 2

    # ---- channel geometry: sublane-friendly C1, lane-dense (and blockable) C2
    C1p = max(8, _round_up(C1, 8))
    C2p = _round_up(C2, 128)
    if C2p >= 512:                       # native 256-wide MXU N blocks on v6e/v7x
        C2p = _round_up(C2p, 256)
        tn = 256
    else:
        tn = C2p
    nb = C2p // tn

    # ---- generation-aware VMEM budget --------------------------------------
    try:
        vmem_cap = int(pltpu.get_tpu_info().vmem_capacity_bytes)
    except Exception:
        vmem_cap = 64 * 1024 * 1024      # conservative fallback (v7x-sized)
    vmem_budget = int(0.75 * vmem_cap)   # ~48 MiB on v7x, ~96 MiB on v5e/v6e

    # ---- rows per block (th): big tiles, shrink until footprint fits --------
    target_pixels = 2048 if vmem_cap >= 100 * 1024 * 1024 else 1024
    th = max(1, min(H, pl.cdiv(target_pixels, Wp2)))
    if N * pl.cdiv(H, th) < 2 and H >= 2:     # keep >=2 grid blocks (megacore)
        th = pl.cdiv(H, 2)

    def footprint(rows):
        ps = (rows + 2) * Wp2
        po = rows * Wp2 - 2
        return (2 * ps * C1p * 2          # bf16 slab, double-buffered
                + 2 * 9 * C1p * tn * 2    # bf16 fused weights (worst case 2 bufs)
                + 2 * 2 * tn * 4          # f32 scale/bias
                + 2 * po * tn * 2         # bf16 output, double-buffered
                + po * tn * 4             # f32 accumulator scratch
                + (1 << 20))              # compiler-internal headroom

    while th > 1 and footprint(th) > vmem_budget:
        th -= 1

    HB = pl.cdiv(H, th)
    Hp = HB * th
    G = N * HB
    Ps = (th + 2) * Wp2                   # pixels per input slab (with halo)
    Po = th * Wp2 - 2                     # pixels per output block (flat, incl. junk cols)

    # ---- bf16 NHWC glue + halo'd row slabs (read by the in-kernel im2col) ---
    x = jnp.transpose(x_nchw, (0, 2, 3, 1)).astype(jnp.bfloat16)        # NHWC bf16
    xp = jnp.pad(x, ((0, 0), (1, 1 + Hp - H), (1, 1), (0, C1p - C1)))   # (N,Hp+2,W+2,C1p)
    row_idx = jnp.arange(HB)[:, None] * th + jnp.arange(th + 2)[None, :]
    slabs = jnp.take(xp, row_idx, axis=1)              # (N, HB, th+2, W+2, C1p)
    slabs = slabs.reshape(G, Ps, C1p)                   # flat pixel slabs

    # ---- fold 1x1 branch into the 3x3 centre tap; lay out as (tap, C1, C2) --
    w3f = w3.astype(jnp.float32).at[:, :, 1, 1].add(w1[:, :, 0, 0].astype(jnp.float32))
    wk = jnp.transpose(w3f, (2, 3, 1, 0)).reshape(9, C1, C2)
    wk = jnp.pad(wk, ((0, 0), (0, C1p - C1), (0, C2p - C2))).astype(jnp.bfloat16)

    # ---- eval-mode BN folded into one (2, C2p) scale/bias operand -----------
    inv_std = gamma.astype(jnp.float32) / jnp.sqrt(run_var.astype(jnp.float32) + eps)
    sb = jnp.stack([inv_std,
                    beta.astype(jnp.float32) - run_mean.astype(jnp.float32) * inv_std])
    sb = jnp.pad(sb, ((0, 0), (0, C2p - C2)))           # (2, C2p) f32

    # ---- kernel: 9-tap in-kernel im2col matmul + fused BN + SiLU ------------
    def kernel(slab_ref, w_ref, sb_ref, o_ref, acc_ref):
        for t in range(9):
            kh, kw = divmod(t, 3)
            off = kh * Wp2 + kw
            tap = slab_ref[0, off:off + Po, :]                       # (Po, C1p) bf16
            contrib = jnp.dot(tap, w_ref[t],
                              preferred_element_type=jnp.float32)    # MXU, f32 acc
            if t == 0:
                acc_ref[...] = contrib
            else:
                acc_ref[...] += contrib
        y = acc_ref[...] * sb_ref[0:1, :] + sb_ref[1:2, :]           # BN (f32)
        # SiLU with one EUP op: sigmoid(y) = 0.5*(tanh(y/2) + 1)
        o_ref[0] = (y * (0.5 * jnp.tanh(0.5 * y) + 0.5)).astype(o_ref.dtype)

    cost = pl.CostEstimate(
        flops=2 * G * Po * (9 * C1p) * C2p,
        transcendentals=G * Po * C2p,                    # one tanh per output elem
        bytes_accessed=int(G * Ps * C1p * 2 + 9 * C1p * C2p * 2
                           + 2 * C2p * 4 + G * Po * C2p * 2),
    )
    vmem_limit = int(min(vmem_budget, max(32 * 1024 * 1024, 2 * footprint(th))))

    def _make_call(single_buffer_consts):
        def const_spec(shape, imap):
            if single_buffer_consts and hasattr(pl, "Buffered"):
                try:   # grid-invariant operand: no need to double-buffer it
                    return pl.BlockSpec(shape, imap, pipeline_mode=pl.Buffered(1))
                except TypeError:
                    pass
            return pl.BlockSpec(shape, imap)

        return pl.pallas_call(
            kernel,
            out_shape=jax.ShapeDtypeStruct((G, Po, C2p), jnp.bfloat16),
            grid_spec=pltpu.PrefetchScalarGridSpec(
                num_scalar_prefetch=0,
                grid=(G, nb),
                in_specs=[
                    pl.BlockSpec((1, Ps, C1p), lambda g, j: (g, 0, 0)),   # pixel slab
                    const_spec((9, C1p, tn), lambda g, j: (0, 0, j)),     # fused weights
                    const_spec((2, tn), lambda g, j: (0, j)),             # bn scale/bias
                ],
                out_specs=pl.BlockSpec((1, Po, tn), lambda g, j: (g, 0, j)),
                scratch_shapes=[pltpu.VMEM((Po, tn), jnp.float32)],
            ),
            compiler_params=pltpu.CompilerParams(
                dimension_semantics=("parallel", "parallel"),
                vmem_limit_bytes=vmem_limit,
            ),
            cost_estimate=cost,
        )

    try:
        out = _make_call(single_buffer_consts=(nb == 1))(slabs, wk, sb)
    except Exception:
        # Fallback: default double-buffering for the constant operands.
        out = _make_call(single_buffer_consts=False)(slabs, wk, sb)

    # ---- un-flatten, drop junk cols/rows & channel padding, back to NCHW ----
    out = jnp.pad(out, ((0, 0), (0, 2), (0, 0)))         # restore th*(W+2) rows
    out = out.reshape(N, Hp, Wp2, C2p)[:, :H, :W, :C2].astype(x_nchw.dtype)
    return jnp.transpose(out, (0, 3, 1, 2))              # NCHW


def _reference(x, w3, w1, gamma, beta, mean, var, eps=1e-5):
    """Pure-JAX reference mirroring the PyTorch Conv2 forward (eval-mode BN)."""
    dn = lax.conv_dimension_numbers(x.shape, w3.shape, ('NCHW', 'OIHW', 'NCHW'))
    y3 = lax.conv_general_dilated(x, w3, (1, 1), ((1, 1), (1, 1)), dimension_numbers=dn)
    y1 = lax.conv_general_dilated(x, w1, (1, 1), ((0, 0), (0, 0)), dimension_numbers=dn)
    y = y3 + y1
    s = gamma / jnp.sqrt(var + eps)
    y = y * s[None, :, None, None] + (beta - mean * s)[None, :, None, None]
    return y * jax.nn.sigmoid(y)


if __name__ == "__main__":
    key = jax.random.PRNGKey(0)
    k1, k2, k3, k4, k5, k6, k7 = jax.random.split(key, 7)
    N, C1, H, W, C2 = 2, 4, 16, 16, 8

    # deterministic synthetic parameters (shapes per Conv2.__init__; no checkpoint)
    x = jax.random.normal(k1, (N, C1, H, W), jnp.float32)
    w3 = jax.random.normal(k2, (C2, C1, 3, 3), jnp.float32) * 0.1    # self.conv (bias=False)
    w1 = jax.random.normal(k3, (C2, C1, 1, 1), jnp.float32) * 0.1    # self.cv2  (bias=False)
    gamma = 1.0 + 0.1 * jax.random.normal(k4, (C2,), jnp.float32)    # bn.weight
    beta = 0.1 * jax.random.normal(k5, (C2,), jnp.float32)           # bn.bias
    run_mean = 0.1 * jax.random.normal(k6, (C2,), jnp.float32)       # bn.running_mean
    run_var = jax.random.uniform(k7, (C2,), jnp.float32, minval=0.5, maxval=1.5)

    y = conv2_forward(x, w3, w1, gamma, beta, run_mean, run_var)
    y = jax.block_until_ready(y)

    y_ref = _reference(x, w3, w1, gamma, beta, run_mean, run_var)
    assert y.shape == (N, C2, H, W)
    # bf16 matmul operands + bf16 kernel output -> relaxed tolerance vs f32 ref
    err = float(jnp.max(jnp.abs(y - y_ref)))
    assert err < 4e-2, err
    print("KERNEL_OK")
</pallas_src>

<mosaic_0001>
module attributes {stable_mosaic.version = 11 : i64} {
  func.func @kernel(%arg0: i32, %arg1: i32, %arg2: memref<1x324x8xbf16, #tpu.memory_space<vmem>>, %arg3: memref<9x8x128xbf16, #tpu.memory_space<vmem>>, %arg4: memref<2x128xf32, #tpu.memory_space<vmem>>, %arg5: memref<1x286x128xbf16, #tpu.memory_space<vmem>>, %arg6: memref<286x128xf32, #tpu.memory_space<vmem>>) attributes {dimension_semantics = [#tpu.dimension_semantics<parallel>, #tpu.dimension_semantics<parallel>], iteration_bounds = array<i64: 2, 1>, scalar_prefetch = 0 : i64, scratch_operands = 1 : i64, tpu.core_type = #tpu.core_type<tc>, window_params = [{transform_indices = @transform_0, window_bounds = array<i64: 1, 324, 8>}, {pipeline_mode = #tpu.pipeline_mode<synchronous>, transform_indices = @transform_1, window_bounds = array<i64: 9, 8, 128>}, {pipeline_mode = #tpu.pipeline_mode<synchronous>, transform_indices = @transform_2, window_bounds = array<i64: 2, 128>}, {transform_indices = @transform_3, window_bounds = array<i64: 1, 286, 128>}]} {
    %c0 = arith.constant 0 : index
    %c0_0 = arith.constant 0 : index
    %c0_1 = arith.constant 0 : index
    %0 = vector.load %arg2[%c0, %c0_0, %c0_1] : memref<1x324x8xbf16, #tpu.memory_space<vmem>>, vector<1x286x8xbf16>
    %1 = vector.shape_cast %0 : vector<1x286x8xbf16> to vector<286x8xbf16>
    %c0_2 = arith.constant 0 : index
    %c0_3 = arith.constant 0 : index
    %c0_4 = arith.constant 0 : index
    %2 = vector.load %arg3[%c0_2, %c0_3, %c0_4] : memref<9x8x128xbf16, #tpu.memory_space<vmem>>, vector<1x8x128xbf16>
    %3 = vector.shape_cast %2 : vector<1x8x128xbf16> to vector<8x128xbf16>
    %cst = arith.constant dense<0.000000e+00> : vector<286x128xf32>
    %4 = tpu.matmul %1, %3, %cst {dimension_numbers = #tpu.dot_dimension_numbers<[1], [0], [0], [1], [0, 0, 1, 1], [], []>} : vector<286x8xbf16>, vector<8x128xbf16>, vector<286x128xf32> -> vector<286x128xf32>
    %c0_5 = arith.constant 0 : index
    %c0_6 = arith.constant 0 : index
    %5 = vector.load %arg6[%c0_5, %c0_6] : memref<286x128xf32, #tpu.memory_space<vmem>>, vector<286x128xf32>
    tpu.vector_store %arg6[%c0_5, %c0_6], %4 {strides = array<i32>} : memref<286x128xf32, #tpu.memory_space<vmem>>, vector<286x128xf32>,
    %c0_7 = arith.constant 0 : index
    %c1 = arith.constant 1 : index
    %c0_8 = arith.constant 0 : index
    %6 = vector.load %arg2[%c0_7, %c1, %c0_8] : memref<1x324x8xbf16, #tpu.memory_space<vmem>>, vector<1x286x8xbf16>
    %7 = vector.shape_cast %6 : vector<1x286x8xbf16> to vector<286x8xbf16>
    %c1_9 = arith.constant 1 : index
    %c0_10 = arith.constant 0 : index
    %c0_11 = arith.constant 0 : index
    %8 = vector.load %arg3[%c1_9, %c0_10, %c0_11] : memref<9x8x128xbf16, #tpu.memory_space<vmem>>, vector<1x8x128xbf16>
    %9 = vector.shape_cast %8 : vector<1x8x128xbf16> to vector<8x128xbf16>
    %cst_12 = arith.constant dense<0.000000e+00> : vector<286x128xf32>
    %10 = tpu.matmul %7, %9, %cst_12 {dimension_numbers = #tpu.dot_dimension_numbers<[1], [0], [0], [1], [0, 0, 1, 1], [], []>} : vector<286x8xbf16>, vector<8x128xbf16>, vector<286x128xf32> -> vector<286x128xf32>
    %c0_13 = arith.constant 0 : index
    %c0_14 = arith.constant 0 : index
    %11 = vector.load %arg6[%c0_13, %c0_14] : memref<286x128xf32, #tpu.memory_space<vmem>>, vector<286x128xf32>
    %12 = arith.addf %11, %10 : vector<286x128xf32>
    %c0_15 = arith.constant 0 : index
    %c0_16 = arith.constant 0 : index
    %13 = vector.load %arg6[%c0_15, %c0_16] : memref<286x128xf32, #tpu.memory_space<vmem>>, vector<286x128xf32>
    tpu.vector_store %arg6[%c0_15, %c0_16], %12 {strides = array<i32>} : memref<286x128xf32, #tpu.memory_space<vmem>>, vector<286x128xf32>,
    %c0_17 = arith.constant 0 : index
    %c2 = arith.constant 2 : index
    %c0_18 = arith.constant 0 : index
    %14 = vector.load %arg2[%c0_17, %c2, %c0_18] : memref<1x324x8xbf16, #tpu.memory_space<vmem>>, vector<1x286x8xbf16>
    %15 = vector.shape_cast %14 : vector<1x286x8xbf16> to vector<286x8xbf16>
    %c2_19 = arith.constant 2 : index
    %c0_20 = arith.constant 0 : index
    %c0_21 = arith.constant 0 : index
    %16 = vector.load %arg3[%c2_19, %c0_20, %c0_21] : memref<9x8x128xbf16, #tpu.memory_space<vmem>>, vector<1x8x128xbf16>
    %17 = vector.shape_cast %16 : vector<1x8x128xbf16> to vector<8x128xbf16>
    %cst_22 = arith.constant dense<0.000000e+00> : vector<286x128xf32>
    %18 = tpu.matmul %15, %17, %cst_22 {dimension_numbers = #tpu.dot_dimension_numbers<[1], [0], [0], [1], [0, 0, 1, 1], [], []>} : vector<286x8xbf16>, vector<8x128xbf16>, vector<286x128xf32> -> vector<286x128xf32>
    %c0_23 = arith.constant 0 : index
    %c0_24 = arith.constant 0 : index
    %19 = vector.load %arg6[%c0_23, %c0_24] : memref<286x128xf32, #tpu.memory_space<vmem>>, vector<286x128xf32>
    %20 = arith.addf %19, %18 : vector<286x128xf32>
    %c0_25 = arith.constant 0 : index
    %c0_26 = arith.constant 0 : index
    %21 = vector.load %arg6[%c0_25, %c0_26] : memref<286x128xf32, #tpu.memory_space<vmem>>, vector<286x128xf32>
    tpu.vector_store %arg6[%c0_25, %c0_26], %20 {strides = array<i32>} : memref<286x128xf32, #tpu.memory_space<vmem>>, vector<286x128xf32>,
    %c0_27 = arith.constant 0 : index
    %c18 = arith.constant 18 : index
    %c0_28 = arith.constant 0 : index
    %22 = vector.load %arg2[%c0_27, %c18, %c0_28] : memref<1x324x8xbf16, #tpu.memory_space<vmem>>, vector<1x286x8xbf16>
    %23 = vector.shape_cast %22 : vector<1x286x8xbf16> to vector<286x8xbf16>
    %c3 = arith.constant 3 : index
    %c0_29 = arith.constant 0 : index
    %c0_30 = arith.constant 0 : index
    %24 = vector.load %arg3[%c3, %c0_29, %c0_30] : memref<9x8x128xbf16, #tpu.memory_space<vmem>>, vector<1x8x128xbf16>
    %25 = vector.shape_cast %24 : vector<1x8x128xbf16> to vector<8x128xbf16>
    %cst_31 = arith.constant dense<0.000000e+00> : vector<286x128xf32>
    %26 = tpu.matmul %23, %25, %cst_31 {dimension_numbers = #tpu.dot_dimension_numbers<[1], [0], [0], [1], [0, 0, 1, 1], [], []>} : vector<286x8xbf16>, vector<8x128xbf16>, vector<286x128xf32> -> vector<286x128xf32>
    %c0_32 = arith.constant 0 : index
    %c0_33 = arith.constant 0 : index
    %27 = vector.load %arg6[%c0_32, %c0_33] : memref<286x128xf32, #tpu.memory_space<vmem>>, vector<286x128xf32>
    %28 = arith.addf %27, %26 : vector<286x128xf32>
    %c0_34 = arith.constant 0 : index
    %c0_35 = arith.constant 0 : index
    %29 = vector.load %arg6[%c0_34, %c0_35] : memref<286x128xf32, #tpu.memory_space<vmem>>, vector<286x128xf32>
    tpu.vector_store %arg6[%c0_34, %c0_35], %28 {strides = array<i32>} : memref<286x128xf32, #tpu.memory_space<vmem>>, vector<286x128xf32>,
    %c0_36 = arith.constant 0 : index
    %c19 = arith.constant 19 : index
    %c0_37 = arith.constant 0 : index
    %30 = vector.load %arg2[%c0_36, %c19, %c0_37] : memref<1x324x8xbf16, #tpu.memory_space<vmem>>, vector<1x286x8xbf16>
    %31 = vector.shape_cast %30 : vector<1x286x8xbf16> to vector<286x8xbf16>
    %c4 = arith.constant 4 : index
    %c0_38 = arith.constant 0 : index
    %c0_39 = arith.constant 0 : index
    %32 = vector.load %arg3[%c4, %c0_38, %c0_39] : memref<9x8x128xbf16, #tpu.memory_space<vmem>>, vector<1x8x128xbf16>
    %33 = vector.shape_cast %32 : vector<1x8x128xbf16> to vector<8x128xbf16>
    %cst_40 = arith.constant dense<0.000000e+00> : vector<286x128xf32>
    %34 = tpu.matmul %31, %33, %cst_40 {dimension_numbers = #tpu.dot_dimension_numbers<[1], [0], [0], [1], [0, 0, 1, 1], [], []>} : vector<286x8xbf16>, vector<8x128xbf16>, vector<286x128xf32> -> vector<286x128xf32>
    %c0_41 = arith.constant 0 : index
    %c0_42 = arith.constant 0 : index
    %35 = vector.load %arg6[%c0_41, %c0_42] : memref<286x128xf32, #tpu.memory_space<vmem>>, vector<286x128xf32>
    %36 = arith.addf %35, %34 : vector<286x128xf32>
    %c0_43 = arith.constant 0 : index
    %c0_44 = arith.constant 0 : index
    %37 = vector.load %arg6[%c0_43, %c0_44] : memref<286x128xf32, #tpu.memory_space<vmem>>, vector<286x128xf32>
    tpu.vector_store %arg6[%c0_43, %c0_44], %36 {strides = array<i32>} : memref<286x128xf32, #tpu.memory_space<vmem>>, vector<286x128xf32>,
    %c0_45 = arith.constant 0 : index
    %c20 = arith.constant 20 : index
    %c0_46 = arith.constant 0 : index
    %38 = vector.load %arg2[%c0_45, %c20, %c0_46] : memref<1x324x8xbf16, #tpu.memory_space<vmem>>, vector<1x286x8xbf16>
    %39 = vector.shape_cast %38 : vector<1x286x8xbf16> to vector<286x8xbf16>
    %c5 = arith.constant 5 : index
    %c0_47 = arith.constant 0 : index
    %c0_48 = arith.constant 0 : index
    %40 = vector.load %arg3[%c5, %c0_47, %c0_48] : memref<9x8x128xbf16, #tpu.memory_space<vmem>>, vector<1x8x128xbf16>
    %41 = vector.shape_cast %40 : vector<1x8x128xbf16> to vector<8x128xbf16>
    %cst_49 = arith.constant dense<0.000000e+00> : vector<286x128xf32>
    %42 = tpu.matmul %39, %41, %cst_49 {dimension_numbers = #tpu.dot_dimension_numbers<[1], [0], [0], [1], [0, 0, 1, 1], [], []>} : vector<286x8xbf16>, vector<8x128xbf16>, vector<286x128xf32> -> vector<286x128xf32>
    %c0_50 = arith.constant 0 : index
    %c0_51 = arith.constant 0 : index
    %43 = vector.load %arg6[%c0_50, %c0_51] : memref<286x128xf32, #tpu.memory_space<vmem>>, vector<286x128xf32>
    %44 = arith.addf %43, %42 : vector<286x128xf32>
    %c0_52 = arith.constant 0 : index
    %c0_53 = arith.constant 0 : index
    %45 = vector.load %arg6[%c0_52, %c0_53] : memref<286x128xf32, #tpu.memory_space<vmem>>, vector<286x128xf32>
    tpu.vector_store %arg6[%c0_52, %c0_53], %44 {strides = array<i32>} : memref<286x128xf32, #tpu.memory_space<vmem>>, vector<286x128xf32>,
    %c0_54 = arith.constant 0 : index
    %c36 = arith.constant 36 : index
    %c0_55 = arith.constant 0 : index
    %46 = vector.load %arg2[%c0_54, %c36, %c0_55] : memref<1x324x8xbf16, #tpu.memory_space<vmem>>, vector<1x286x8xbf16>
    %47 = vector.shape_cast %46 : vector<1x286x8xbf16> to vector<286x8xbf16>
    %c6 = arith.constant 6 : index
    %c0_56 = arith.constant 0 : index
    %c0_57 = arith.constant 0 : index
    %48 = vector.load %arg3[%c6, %c0_56, %c0_57] : memref<9x8x128xbf16, #tpu.memory_space<vmem>>, vector<1x8x128xbf16>
    %49 = vector.shape_cast %48 : vector<1x8x128xbf16> to vector<8x128xbf16>
    %cst_58 = arith.constant dense<0.000000e+00> : vector<286x128xf32>
    %50 = tpu.matmul %47, %49, %cst_58 {dimension_numbers = #tpu.dot_dimension_numbers<[1], [0], [0], [1], [0, 0, 1, 1], [], []>} : vector<286x8xbf16>, vector<8x128xbf16>, vector<286x128xf32> -> vector<286x128xf32>
    %c0_59 = arith.constant 0 : index
    %c0_60 = arith.constant 0 : index
    %51 = vector.load %arg6[%c0_59, %c0_60] : memref<286x128xf32, #tpu.memory_space<vmem>>, vector<286x128xf32>
    %52 = arith.addf %51, %50 : vector<286x128xf32>
    %c0_61 = arith.constant 0 : index
    %c0_62 = arith.constant 0 : index
    %53 = vector.load %arg6[%c0_61, %c0_62] : memref<286x128xf32, #tpu.memory_space<vmem>>, vector<286x128xf32>
    tpu.vector_store %arg6[%c0_61, %c0_62], %52 {strides = array<i32>} : memref<286x128xf32, #tpu.memory_space<vmem>>, vector<286x128xf32>,
    %c0_63 = arith.constant 0 : index
    %c37 = arith.constant 37 : index
    %c0_64 = arith.constant 0 : index
    %54 = vector.load %arg2[%c0_63, %c37, %c0_64] : memref<1x324x8xbf16, #tpu.memory_space<vmem>>, vector<1x286x8xbf16>
    %55 = vector.shape_cast %54 : vector<1x286x8xbf16> to vector<286x8xbf16>
    %c7 = arith.constant 7 : index
    %c0_65 = arith.constant 0 : index
    %c0_66 = arith.constant 0 : index
    %56 = vector.load %arg3[%c7, %c0_65, %c0_66] : memref<9x8x128xbf16, #tpu.memory_space<vmem>>, vector<1x8x128xbf16>
    %57 = vector.shape_cast %56 : vector<1x8x128xbf16> to vector<8x128xbf16>
    %cst_67 = arith.constant dense<0.000000e+00> : vector<286x128xf32>
    %58 = tpu.matmul %55, %57, %cst_67 {dimension_numbers = #tpu.dot_dimension_numbers<[1], [0], [0], [1], [0, 0, 1, 1], [], []>} : vector<286x8xbf16>, vector<8x128xbf16>, vector<286x128xf32> -> vector<286x128xf32>
    %c0_68 = arith.constant 0 : index
    %c0_69 = arith.constant 0 : index
    %59 = vector.load %arg6[%c0_68, %c0_69] : memref<286x128xf32, #tpu.memory_space<vmem>>, vector<286x128xf32>
    %60 = arith.addf %59, %58 : vector<286x128xf32>
    %c0_70 = arith.constant 0 : index
    %c0_71 = arith.constant 0 : index
    %61 = vector.load %arg6[%c0_70, %c0_71] : memref<286x128xf32, #tpu.memory_space<vmem>>, vector<286x128xf32>
    tpu.vector_store %arg6[%c0_70, %c0_71], %60 {strides = array<i32>} : memref<286x128xf32, #tpu.memory_space<vmem>>, vector<286x128xf32>,
    %c0_72 = arith.constant 0 : index
    %c38 = arith.constant 38 : index
    %c0_73 = arith.constant 0 : index
    %62 = vector.load %arg2[%c0_72, %c38, %c0_73] : memref<1x324x8xbf16, #tpu.memory_space<vmem>>, vector<1x286x8xbf16>
    %63 = vector.shape_cast %62 : vector<1x286x8xbf16> to vector<286x8xbf16>
    %c8 = arith.constant 8 : index
    %c0_74 = arith.constant 0 : index
    %c0_75 = arith.constant 0 : index
    %64 = vector.load %arg3[%c8, %c0_74, %c0_75] : memref<9x8x128xbf16, #tpu.memory_space<vmem>>, vector<1x8x128xbf16>
    %65 = vector.shape_cast %64 : vector<1x8x128xbf16> to vector<8x128xbf16>
    %cst_76 = arith.constant dense<0.000000e+00> : vector<286x128xf32>
    %66 = tpu.matmul %63, %65, %cst_76 {dimension_numbers = #tpu.dot_dimension_numbers<[1], [0], [0], [1], [0, 0, 1, 1], [], []>} : vector<286x8xbf16>, vector<8x128xbf16>, vector<286x128xf32> -> vector<286x128xf32>
    %c0_77 = arith.constant 0 : index
    %c0_78 = arith.constant 0 : index
    %67 = vector.load %arg6[%c0_77, %c0_78] : memref<286x128xf32, #tpu.memory_space<vmem>>, vector<286x128xf32>
    %68 = arith.addf %67, %66 : vector<286x128xf32>
    %c0_79 = arith.constant 0 : index
    %c0_80 = arith.constant 0 : index
    %69 = vector.load %arg6[%c0_79, %c0_80] : memref<286x128xf32, #tpu.memory_space<vmem>>, vector<286x128xf32>
    tpu.vector_store %arg6[%c0_79, %c0_80], %68 {strides = array<i32>} : memref<286x128xf32, #tpu.memory_space<vmem>>, vector<286x128xf32>,
    %c0_81 = arith.constant 0 : index
    %c0_82 = arith.constant 0 : index
    %70 = vector.load %arg6[%c0_81, %c0_82] : memref<286x128xf32, #tpu.memory_space<vmem>>, vector<286x128xf32>
    %c0_83 = arith.constant 0 : index
    %c0_84 = arith.constant 0 : index
    %71 = vector.load %arg4[%c0_83, %c0_84] : memref<2x128xf32, #tpu.memory_space<vmem>>, vector<1x128xf32>
    %72 = vector.broadcast %71 : vector<1x128xf32> to vector<286x128xf32>
    %73 = arith.mulf %70, %72 : vector<286x128xf32>
    %c1_85 = arith.constant 1 : index
    %c0_86 = arith.constant 0 : index
    %74 = vector.load %arg4[%c1_85, %c0_86] : memref<2x128xf32, #tpu.memory_space<vmem>>, vector<1x128xf32>
    %75 = vector.broadcast %74 : vector<1x128xf32> to vector<286x128xf32>
    %76 = arith.addf %73, %75 : vector<286x128xf32>
    %cst_87 = arith.constant 5.000000e-01 : f32
    %77 = vector.broadcast %cst_87 : f32 to vector<286x128xf32>
    %78 = arith.mulf %77, %76 : vector<286x128xf32>
    %79 = math.tanh %78 : vector<286x128xf32>
    %cst_88 = arith.constant 5.000000e-01 : f32
    %80 = vector.broadcast %cst_88 : f32 to vector<286x128xf32>
    %81 = arith.mulf %80, %79 : vector<286x128xf32>
    %cst_89 = arith.constant 5.000000e-01 : f32
    %82 = vector.broadcast %cst_89 : f32 to vector<286x128xf32>
    %83 = arith.addf %81, %82 : vector<286x128xf32>
    %84 = arith.mulf %76, %83 : vector<286x128xf32>
    %85 = arith.truncf %84 : vector<286x128xf32> to vector<286x128xbf16>
    %c0_90 = arith.constant 0 : index
    %c0_91 = arith.constant 0 : index
    %c0_92 = arith.constant 0 : index
    %86 = vector.load %arg5[%c0_90, %c0_91, %c0_92] : memref<1x286x128xbf16, #tpu.memory_space<vmem>>, vector<1x286x128xbf16>
    %87 = vector.shape_cast %86 : vector<1x286x128xbf16> to vector<286x128xbf16>
    %88 = vector.shape_cast %85 : vector<286x128xbf16> to vector<1x286x128xbf16>
    tpu.vector_store %arg5[%c0_90, %c0_91, %c0_92], %88 {strides = array<i32>} : memref<1x286x128xbf16, #tpu.memory_space<vmem>>, vector<1x286x128xbf16>,
    return
  }
  func.func @transform_0(%arg0: i32, %arg1: i32) -> (i32, i32, i32) {
    %c0_i32 = arith.constant 0 : i32
    %c0_i32_0 = arith.constant 0 : i32
    %c0_i32_1 = arith.constant 0 : i32
    return %arg0, %c0_i32, %c0_i32_0 : i32, i32, i32
  }
  func.func @transform_1(%arg0: i32, %arg1: i32) -> (i32, i32, i32) {
    %c0_i32 = arith.constant 0 : i32
    %c0_i32_0 = arith.constant 0 : i32
    %c0_i32_1 = arith.constant 0 : i32
    return %c0_i32, %c0_i32_0, %arg1 : i32, i32, i32
  }
  func.func @transform_2(%arg0: i32, %arg1: i32) -> (i32, i32) {
    %c0_i32 = arith.constant 0 : i32
    %c0_i32_0 = arith.constant 0 : i32
    return %c0_i32, %arg1 : i32, i32
  }
  func.func @transform_3(%arg0: i32, %arg1: i32) -> (i32, i32, i32) {
    %c0_i32 = arith.constant 0 : i32
    %c0_i32_0 = arith.constant 0 : i32
    return %arg0, %c0_i32, %arg1 : i32, i32, i32
  }
}

module attributes {stable_mosaic.version = 11 : i64} {
  func.func @kernel(%arg0: i32, %arg1: i32, %arg2: memref<1x324x8xbf16, #tpu.memory_space<vmem>>, %arg3: memref<9x8x128xbf16, #tpu.memory_space<vmem>>, %arg4: memref<2x128xf32, #tpu.memory_space<vmem>>, %arg5: memref<1x286x128xbf16, #tpu.memory_space<vmem>>, %arg6: memref<286x128xf32, #tpu.memory_space<vmem>>) attributes {dimension_semantics = [#tpu.dimension_semantics<parallel>, #tpu.dimension_semantics<parallel>], iteration_bounds = array<i64: 2, 1>, scalar_prefetch = 0 : i64, scratch_operands = 1 : i64, tpu.core_type = #tpu.core_type<tc>, window_params = [{transform_indices = @transform_0, window_bounds = array<i64: 1, 324, 8>}, {transform_indices = @transform_1, window_bounds = array<i64: 9, 8, 128>}, {transform_indices = @transform_2, window_bounds = array<i64: 2, 128>}, {transform_indices = @transform_3, window_bounds = array<i64: 1, 286, 128>}]} {
    %c0 = arith.constant 0 : index
    %c0_0 = arith.constant 0 : index
    %c0_1 = arith.constant 0 : index
    %0 = vector.load %arg2[%c0, %c0_0, %c0_1] : memref<1x324x8xbf16, #tpu.memory_space<vmem>>, vector<1x286x8xbf16>
    %1 = vector.shape_cast %0 : vector<1x286x8xbf16> to vector<286x8xbf16>
    %c0_2 = arith.constant 0 : index
    %c0_3 = arith.constant 0 : index
    %c0_4 = arith.constant 0 : index
    %2 = vector.load %arg3[%c0_2, %c0_3, %c0_4] : memref<9x8x128xbf16, #tpu.memory_space<vmem>>, vector<1x8x128xbf16>
    %3 = vector.shape_cast %2 : vector<1x8x128xbf16> to vector<8x128xbf16>
    %cst = arith.constant dense<0.000000e+00> : vector<286x128xf32>
    %4 = tpu.matmul %1, %3, %cst {dimension_numbers = #tpu.dot_dimension_numbers<[1], [0], [0], [1], [0, 0, 1, 1], [], []>} : vector<286x8xbf16>, vector<8x128xbf16>, vector<286x128xf32> -> vector<286x128xf32>
    %c0_5 = arith.constant 0 : index
    %c0_6 = arith.constant 0 : index
    %5 = vector.load %arg6[%c0_5, %c0_6] : memref<286x128xf32, #tpu.memory_space<vmem>>, vector<286x128xf32>
    tpu.vector_store %arg6[%c0_5, %c0_6], %4 {strides = array<i32>} : memref<286x128xf32, #tpu.memory_space<vmem>>, vector<286x128xf32>,
    %c0_7 = arith.constant 0 : index
    %c1 = arith.constant 1 : index
    %c0_8 = arith.constant 0 : index
    %6 = vector.load %arg2[%c0_7, %c1, %c0_8] : memref<1x324x8xbf16, #tpu.memory_space<vmem>>, vector<1x286x8xbf16>
    %7 = vector.shape_cast %6 : vector<1x286x8xbf16> to vector<286x8xbf16>
    %c1_9 = arith.constant 1 : index
    %c0_10 = arith.constant 0 : index
    %c0_11 = arith.constant 0 : index
    %8 = vector.load %arg3[%c1_9, %c0_10, %c0_11] : memref<9x8x128xbf16, #tpu.memory_space<vmem>>, vector<1x8x128xbf16>
    %9 = vector.shape_cast %8 : vector<1x8x128xbf16> to vector<8x128xbf16>
    %cst_12 = arith.constant dense<0.000000e+00> : vector<286x128xf32>
    %10 = tpu.matmul %7, %9, %cst_12 {dimension_numbers = #tpu.dot_dimension_numbers<[1], [0], [0], [1], [0, 0, 1, 1], [], []>} : vector<286x8xbf16>, vector<8x128xbf16>, vector<286x128xf32> -> vector<286x128xf32>
    %c0_13 = arith.constant 0 : index
    %c0_14 = arith.constant 0 : index
    %11 = vector.load %arg6[%c0_13, %c0_14] : memref<286x128xf32, #tpu.memory_space<vmem>>, vector<286x128xf32>
    %12 = arith.addf %11, %10 : vector<286x128xf32>
    %c0_15 = arith.constant 0 : index
    %c0_16 = arith.constant 0 : index
    %13 = vector.load %arg6[%c0_15, %c0_16] : memref<286x128xf32, #tpu.memory_space<vmem>>, vector<286x128xf32>
    tpu.vector_store %arg6[%c0_15, %c0_16], %12 {strides = array<i32>} : memref<286x128xf32, #tpu.memory_space<vmem>>, vector<286x128xf32>,
    %c0_17 = arith.constant 0 : index
    %c2 = arith.constant 2 : index
    %c0_18 = arith.constant 0 : index
    %14 = vector.load %arg2[%c0_17, %c2, %c0_18] : memref<1x324x8xbf16, #tpu.memory_space<vmem>>, vector<1x286x8xbf16>
    %15 = vector.shape_cast %14 : vector<1x286x8xbf16> to vector<286x8xbf16>
    %c2_19 = arith.constant 2 : index
    %c0_20 = arith.constant 0 : index
    %c0_21 = arith.constant 0 : index
    %16 = vector.load %arg3[%c2_19, %c0_20, %c0_21] : memref<9x8x128xbf16, #tpu.memory_space<vmem>>, vector<1x8x128xbf16>
    %17 = vector.shape_cast %16 : vector<1x8x128xbf16> to vector<8x128xbf16>
    %cst_22 = arith.constant dense<0.000000e+00> : vector<286x128xf32>
    %18 = tpu.matmul %15, %17, %cst_22 {dimension_numbers = #tpu.dot_dimension_numbers<[1], [0], [0], [1], [0, 0, 1, 1], [], []>} : vector<286x8xbf16>, vector<8x128xbf16>, vector<286x128xf32> -> vector<286x128xf32>
    %c0_23 = arith.constant 0 : index
    %c0_24 = arith.constant 0 : index
    %19 = vector.load %arg6[%c0_23, %c0_24] : memref<286x128xf32, #tpu.memory_space<vmem>>, vector<286x128xf32>
    %20 = arith.addf %19, %18 : vector<286x128xf32>
    %c0_25 = arith.constant 0 : index
    %c0_26 = arith.constant 0 : index
    %21 = vector.load %arg6[%c0_25, %c0_26] : memref<286x128xf32, #tpu.memory_space<vmem>>, vector<286x128xf32>
    tpu.vector_store %arg6[%c0_25, %c0_26], %20 {strides = array<i32>} : memref<286x128xf32, #tpu.memory_space<vmem>>, vector<286x128xf32>,
    %c0_27 = arith.constant 0 : index
    %c18 = arith.constant 18 : index
    %c0_28 = arith.constant 0 : index
    %22 = vector.load %arg2[%c0_27, %c18, %c0_28] : memref<1x324x8xbf16, #tpu.memory_space<vmem>>, vector<1x286x8xbf16>
    %23 = vector.shape_cast %22 : vector<1x286x8xbf16> to vector<286x8xbf16>
    %c3 = arith.constant 3 : index
    %c0_29 = arith.constant 0 : index
    %c0_30 = arith.constant 0 : index
    %24 = vector.load %arg3[%c3, %c0_29, %c0_30] : memref<9x8x128xbf16, #tpu.memory_space<vmem>>, vector<1x8x128xbf16>
    %25 = vector.shape_cast %24 : vector<1x8x128xbf16> to vector<8x128xbf16>
    %cst_31 = arith.constant dense<0.000000e+00> : vector<286x128xf32>
    %26 = tpu.matmul %23, %25, %cst_31 {dimension_numbers = #tpu.dot_dimension_numbers<[1], [0], [0], [1], [0, 0, 1, 1], [], []>} : vector<286x8xbf16>, vector<8x128xbf16>, vector<286x128xf32> -> vector<286x128xf32>
    %c0_32 = arith.constant 0 : index
    %c0_33 = arith.constant 0 : index
    %27 = vector.load %arg6[%c0_32, %c0_33] : memref<286x128xf32, #tpu.memory_space<vmem>>, vector<286x128xf32>
    %28 = arith.addf %27, %26 : vector<286x128xf32>
    %c0_34 = arith.constant 0 : index
    %c0_35 = arith.constant 0 : index
    %29 = vector.load %arg6[%c0_34, %c0_35] : memref<286x128xf32, #tpu.memory_space<vmem>>, vector<286x128xf32>
    tpu.vector_store %arg6[%c0_34, %c0_35], %28 {strides = array<i32>} : memref<286x128xf32, #tpu.memory_space<vmem>>, vector<286x128xf32>,
    %c0_36 = arith.constant 0 : index
    %c19 = arith.constant 19 : index
    %c0_37 = arith.constant 0 : index
    %30 = vector.load %arg2[%c0_36, %c19, %c0_37] : memref<1x324x8xbf16, #tpu.memory_space<vmem>>, vector<1x286x8xbf16>
    %31 = vector.shape_cast %30 : vector<1x286x8xbf16> to vector<286x8xbf16>
    %c4 = arith.constant 4 : index
    %c0_38 = arith.constant 0 : index
    %c0_39 = arith.constant 0 : index
    %32 = vector.load %arg3[%c4, %c0_38, %c0_39] : memref<9x8x128xbf16, #tpu.memory_space<vmem>>, vector<1x8x128xbf16>
    %33 = vector.shape_cast %32 : vector<1x8x128xbf16> to vector<8x128xbf16>
    %cst_40 = arith.constant dense<0.000000e+00> : vector<286x128xf32>
    %34 = tpu.matmul %31, %33, %cst_40 {dimension_numbers = #tpu.dot_dimension_numbers<[1], [0], [0], [1], [0, 0, 1, 1], [], []>} : vector<286x8xbf16>, vector<8x128xbf16>, vector<286x128xf32> -> vector<286x128xf32>
    %c0_41 = arith.constant 0 : index
    %c0_42 = arith.constant 0 : index
    %35 = vector.load %arg6[%c0_41, %c0_42] : memref<286x128xf32, #tpu.memory_space<vmem>>, vector<286x128xf32>
    %36 = arith.addf %35, %34 : vector<286x128xf32>
    %c0_43 = arith.constant 0 : index
    %c0_44 = arith.constant 0 : index
    %37 = vector.load %arg6[%c0_43, %c0_44] : memref<286x128xf32, #tpu.memory_space<vmem>>, vector<286x128xf32>
    tpu.vector_store %arg6[%c0_43, %c0_44], %36 {strides = array<i32>} : memref<286x128xf32, #tpu.memory_space<vmem>>, vector<286x128xf32>,
    %c0_45 = arith.constant 0 : index
    %c20 = arith.constant 20 : index
    %c0_46 = arith.constant 0 : index
    %38 = vector.load %arg2[%c0_45, %c20, %c0_46] : memref<1x324x8xbf16, #tpu.memory_space<vmem>>, vector<1x286x8xbf16>
    %39 = vector.shape_cast %38 : vector<1x286x8xbf16> to vector<286x8xbf16>
    %c5 = arith.constant 5 : index
    %c0_47 = arith.constant 0 : index
    %c0_48 = arith.constant 0 : index
    %40 = vector.load %arg3[%c5, %c0_47, %c0_48] : memref<9x8x128xbf16, #tpu.memory_space<vmem>>, vector<1x8x128xbf16>
    %41 = vector.shape_cast %40 : vector<1x8x128xbf16> to vector<8x128xbf16>
    %cst_49 = arith.constant dense<0.000000e+00> : vector<286x128xf32>
    %42 = tpu.matmul %39, %41, %cst_49 {dimension_numbers = #tpu.dot_dimension_numbers<[1], [0], [0], [1], [0, 0, 1, 1], [], []>} : vector<286x8xbf16>, vector<8x128xbf16>, vector<286x128xf32> -> vector<286x128xf32>
    %c0_50 = arith.constant 0 : index
    %c0_51 = arith.constant 0 : index
    %43 = vector.load %arg6[%c0_50, %c0_51] : memref<286x128xf32, #tpu.memory_space<vmem>>, vector<286x128xf32>
    %44 = arith.addf %43, %42 : vector<286x128xf32>
    %c0_52 = arith.constant 0 : index
    %c0_53 = arith.constant 0 : index
    %45 = vector.load %arg6[%c0_52, %c0_53] : memref<286x128xf32, #tpu.memory_space<vmem>>, vector<286x128xf32>
    tpu.vector_store %arg6[%c0_52, %c0_53], %44 {strides = array<i32>} : memref<286x128xf32, #tpu.memory_space<vmem>>, vector<286x128xf32>,
    %c0_54 = arith.constant 0 : index
    %c36 = arith.constant 36 : index
    %c0_55 = arith.constant 0 : index
    %46 = vector.load %arg2[%c0_54, %c36, %c0_55] : memref<1x324x8xbf16, #tpu.memory_space<vmem>>, vector<1x286x8xbf16>
    %47 = vector.shape_cast %46 : vector<1x286x8xbf16> to vector<286x8xbf16>
    %c6 = arith.constant 6 : index
    %c0_56 = arith.constant 0 : index
    %c0_57 = arith.constant 0 : index
    %48 = vector.load %arg3[%c6, %c0_56, %c0_57] : memref<9x8x128xbf16, #tpu.memory_space<vmem>>, vector<1x8x128xbf16>
    %49 = vector.shape_cast %48 : vector<1x8x128xbf16> to vector<8x128xbf16>
    %cst_58 = arith.constant dense<0.000000e+00> : vector<286x128xf32>
    %50 = tpu.matmul %47, %49, %cst_58 {dimension_numbers = #tpu.dot_dimension_numbers<[1], [0], [0], [1], [0, 0, 1, 1], [], []>} : vector<286x8xbf16>, vector<8x128xbf16>, vector<286x128xf32> -> vector<286x128xf32>
    %c0_59 = arith.constant 0 : index
    %c0_60 = arith.constant 0 : index
    %51 = vector.load %arg6[%c0_59, %c0_60] : memref<286x128xf32, #tpu.memory_space<vmem>>, vector<286x128xf32>
    %52 = arith.addf %51, %50 : vector<286x128xf32>
    %c0_61 = arith.constant 0 : index
    %c0_62 = arith.constant 0 : index
    %53 = vector.load %arg6[%c0_61, %c0_62] : memref<286x128xf32, #tpu.memory_space<vmem>>, vector<286x128xf32>
    tpu.vector_store %arg6[%c0_61, %c0_62], %52 {strides = array<i32>} : memref<286x128xf32, #tpu.memory_space<vmem>>, vector<286x128xf32>,
    %c0_63 = arith.constant 0 : index
    %c37 = arith.constant 37 : index
    %c0_64 = arith.constant 0 : index
    %54 = vector.load %arg2[%c0_63, %c37, %c0_64] : memref<1x324x8xbf16, #tpu.memory_space<vmem>>, vector<1x286x8xbf16>
    %55 = vector.shape_cast %54 : vector<1x286x8xbf16> to vector<286x8xbf16>
    %c7 = arith.constant 7 : index
    %c0_65 = arith.constant 0 : index
    %c0_66 = arith.constant 0 : index
    %56 = vector.load %arg3[%c7, %c0_65, %c0_66] : memref<9x8x128xbf16, #tpu.memory_space<vmem>>, vector<1x8x128xbf16>
    %57 = vector.shape_cast %56 : vector<1x8x128xbf16> to vector<8x128xbf16>
    %cst_67 = arith.constant dense<0.000000e+00> : vector<286x128xf32>
    %58 = tpu.matmul %55, %57, %cst_67 {dimension_numbers = #tpu.dot_dimension_numbers<[1], [0], [0], [1], [0, 0, 1, 1], [], []>} : vector<286x8xbf16>, vector<8x128xbf16>, vector<286x128xf32> -> vector<286x128xf32>
    %c0_68 = arith.constant 0 : index
    %c0_69 = arith.constant 0 : index
    %59 = vector.load %arg6[%c0_68, %c0_69] : memref<286x128xf32, #tpu.memory_space<vmem>>, vector<286x128xf32>
    %60 = arith.addf %59, %58 : vector<286x128xf32>
    %c0_70 = arith.constant 0 : index
    %c0_71 = arith.constant 0 : index
    %61 = vector.load %arg6[%c0_70, %c0_71] : memref<286x128xf32, #tpu.memory_space<vmem>>, vector<286x128xf32>
    tpu.vector_store %arg6[%c0_70, %c0_71], %60 {strides = array<i32>} : memref<286x128xf32, #tpu.memory_space<vmem>>, vector<286x128xf32>,
    %c0_72 = arith.constant 0 : index
    %c38 = arith.constant 38 : index
    %c0_73 = arith.constant 0 : index
    %62 = vector.load %arg2[%c0_72, %c38, %c0_73] : memref<1x324x8xbf16, #tpu.memory_space<vmem>>, vector<1x286x8xbf16>
    %63 = vector.shape_cast %62 : vector<1x286x8xbf16> to vector<286x8xbf16>
    %c8 = arith.constant 8 : index
    %c0_74 = arith.constant 0 : index
    %c0_75 = arith.constant 0 : index
    %64 = vector.load %arg3[%c8, %c0_74, %c0_75] : memref<9x8x128xbf16, #tpu.memory_space<vmem>>, vector<1x8x128xbf16>
    %65 = vector.shape_cast %64 : vector<1x8x128xbf16> to vector<8x128xbf16>
    %cst_76 = arith.constant dense<0.000000e+00> : vector<286x128xf32>
    %66 = tpu.matmul %63, %65, %cst_76 {dimension_numbers = #tpu.dot_dimension_numbers<[1], [0], [0], [1], [0, 0, 1, 1], [], []>} : vector<286x8xbf16>, vector<8x128xbf16>, vector<286x128xf32> -> vector<286x128xf32>
    %c0_77 = arith.constant 0 : index
    %c0_78 = arith.constant 0 : index
    %67 = vector.load %arg6[%c0_77, %c0_78] : memref<286x128xf32, #tpu.memory_space<vmem>>, vector<286x128xf32>
    %68 = arith.addf %67, %66 : vector<286x128xf32>
    %c0_79 = arith.constant 0 : index
    %c0_80 = arith.constant 0 : index
    %69 = vector.load %arg6[%c0_79, %c0_80] : memref<286x128xf32, #tpu.memory_space<vmem>>, vector<286x128xf32>
    tpu.vector_store %arg6[%c0_79, %c0_80], %68 {strides = array<i32>} : memref<286x128xf32, #tpu.memory_space<vmem>>, vector<286x128xf32>,
    %c0_81 = arith.constant 0 : index
    %c0_82 = arith.constant 0 : index
    %70 = vector.load %arg6[%c0_81, %c0_82] : memref<286x128xf32, #tpu.memory_space<vmem>>, vector<286x128xf32>
    %c0_83 = arith.constant 0 : index
    %c0_84 = arith.constant 0 : index
    %71 = vector.load %arg4[%c0_83, %c0_84] : memref<2x128xf32, #tpu.memory_space<vmem>>, vector<1x128xf32>
    %72 = vector.broadcast %71 : vector<1x128xf32> to vector<286x128xf32>
    %73 = arith.mulf %70, %72 : vector<286x128xf32>
    %c1_85 = arith.constant 1 : index
    %c0_86 = arith.constant 0 : index
    %74 = vector.load %arg4[%c1_85, %c0_86] : memref<2x128xf32, #tpu.memory_space<vmem>>, vector<1x128xf32>
    %75 = vector.broadcast %74 : vector<1x128xf32> to vector<286x128xf32>
    %76 = arith.addf %73, %75 : vector<286x128xf32>
    %cst_87 = arith.constant 5.000000e-01 : f32
    %77 = vector.broadcast %cst_87 : f32 to vector<286x128xf32>
    %78 = arith.mulf %77, %76 : vector<286x128xf32>
    %79 = math.tanh %78 : vector<286x128xf32>
    %cst_88 = arith.constant 5.000000e-01 : f32
    %80 = vector.broadcast %cst_88 : f32 to vector<286x128xf32>
    %81 = arith.mulf %80, %79 : vector<286x128xf32>
    %cst_89 = arith.constant 5.000000e-01 : f32
    %82 = vector.broadcast %cst_89 : f32 to vector<286x128xf32>
    %83 = arith.addf %81, %82 : vector<286x128xf32>
    %84 = arith.mulf %76, %83 : vector<286x128xf32>
    %85 = arith.truncf %84 : vector<286x128xf32> to vector<286x128xbf16>
    %c0_90 = arith.constant 0 : index
    %c0_91 = arith.constant 0 : index
    %c0_92 = arith.constant 0 : index
    %86 = vector.load %arg5[%c0_90, %c0_91, %c0_92] : memref<1x286x128xbf16, #tpu.memory_space<vmem>>, vector<1x286x128xbf16>
    %87 = vector.shape_cast %86 : vector<1x286x128xbf16> to vector<286x128xbf16>
    %88 = vector.shape_cast %85 : vector<286x128xbf16> to vector<1x286x128xbf16>
    tpu.vector_store %arg5[%c0_90, %c0_91, %c0_92], %88 {strides = array<i32>} : memref<1x286x128xbf16, #tpu.memory_space<vmem>>, vector<1x286x128xbf16>,
    return
  }
  func.func @transform_0(%arg0: i32, %arg1: i32) -> (i32, i32, i32) {
    %c0_i32 = arith.constant 0 : i32
    %c0_i32_0 = arith.constant 0 : i32
    %c0_i32_1 = arith.constant 0 : i32
    return %arg0, %c0_i32, %c0_i32_0 : i32, i32, i32
  }
  func.func @transform_1(%arg0: i32, %arg1: i32) -> (i32, i32, i32) {
    %c0_i32 = arith.constant 0 : i32
    %c0_i32_0 = arith.constant 0 : i32
    %c0_i32_1 = arith.constant 0 : i32
    return %c0_i32, %c0_i32_0, %arg1 : i32, i32, i32
  }
  func.func @transform_2(%arg0: i32, %arg1: i32) -> (i32, i32) {
    %c0_i32 = arith.constant 0 : i32
    %c0_i32_0 = arith.constant 0 : i32
    return %c0_i32, %arg1 : i32, i32
  }
  func.func @transform_3(%arg0: i32, %arg1: i32) -> (i32, i32, i32) {
    %c0_i32 = arith.constant 0 : i32
    %c0_i32_0 = arith.constant 0 : i32
    return %arg0, %c0_i32, %arg1 : i32, i32, i32
  }
}

</mosaic_0001>

<llo_original>
// kernel: tpu_custom_call.1
$region0: #{tpu_custom_call.1}
  #allocation0 [shape = 'u32[]', space=smem, size = 0x4, offset = 0x4, fixed_abs, tag = 'smem constant byte address 0x4 - core index']
  #allocation1 [shape = 'u32[144,128]{1,0:T(1,128)}', space=vmem, size = 0x12000, scoped, tag = 'internal scratch']
  #allocation2 [shape = 'f32[286,128]{1,0:T(8,128)}', space=vmem, size = 0x24000, scoped, tag = 'scratch operand']
  %s0 = inlined_call_operand.vmem [shape: bf16[2,324,8], index: 0, kind: input, shape index: {}]
  %s1 = inlined_call_operand.vmem [shape: bf16[9,8,128], index: 1, kind: input, shape index: {}]
  %s2 = inlined_call_operand.vmem [shape: f32[2,128], index: 2, kind: input, shape index: {}]
  %s3 = inlined_call_operand.vmem [shape: bf16[2,286,128], index: 3, kind: output, shape index: {}]
  %s4 = sld [smem:[#allocation0]]
  $region45: #{tpu_custom_call.1} parent=0
    _
  %s6 = ssub.s32 1, %s4
  %s7 = scalar_select 0, %s6, %s4
  loop: start=0, step=1, limit=4
  $region2: #{tpu_custom_call.1} parent=0 // loop_pre_header
    _
  $region3: #{tpu_custom_call.1} parent=0 // loop_header
    %s9 = sphi 0, %s13
    %p10 = scmp.ge.s32.totalorder %s9, 4
    %s16 = sphi 0, %s28
    %s17 = sphi 0, %s24
    %s18 = sphi 0, %s16
    %s19 = sphi 0, %s17
    %s20 = sphi 0, %s18
    %s21 = sphi 0, %s19
    %s31 = sphi 0, %s33
    %s34 = sphi 0, %s31
    %s35 = sphi 0, %s34
    %s51 = sphi 0, %s35
    %s57 = sphi 0, %s59
    %s60 = sphi 0, %s57
    %s61 = sphi 0, %s60
    %s77 = sphi 0, %s61
    %s83 = sphi 0, %s85
    %s86 = sphi 0, %s83
    %s87 = sphi 0, %s86
    %s103 = sphi 0, %s87
    %s111 = sphi 0, %s113
    %s114 = sphi 0, %s111
    %s115 = sphi 0, %s114
    %s131 = sphi 0, %s115
  $region4: #{tpu_custom_call.1} parent=0 // loop_header_branch
    %12 = sbr.rel (%p10) target = $region8
  $region5: #{tpu_custom_call.1} parent=0 // loop_body
    %s14 = ssub.s32 %s9, 1
    %s15 = ssub.s32 %s9, 2
    %s22 = sadd.s32 1, %s17
    %p23 = scmp.ge.s32.totalorder %s22, 1
    %s24 = scalar_select %p23, 0, %s22
    %s25 = sadd.s32 1, %s16
    %s26 = scalar_select %p23, %s25, %s16
    %p27 = scmp.ge.s32.totalorder %s26, 2
    %s28 = scalar_select %p27, 0, %s26
    %s29 = ssub.s32 %s16, %s28
    %p30 = scmp.eq.s32.totalorder %s29, 0
    %s32 = sadd.s32 %s31, 1
    %s33 = scalar_select %p30, %s31, %s32
    %p36 = pneg %p30
    %p37 = scmp.eq.s32.totalorder %s9, 1
    %p38 = por %p36, %p37
    %p39 = scmp.ne.s32.totalorder %s31, %s34
    %p40 = scmp.eq.s32.totalorder %s9, 0
    %p41 = por %p39, %p40
    %p42 = scmp.ne.s32.totalorder %s31, %s34
    %p43 = scmp.eq.s32.totalorder %s14, 1
    %p44 = por %p42, %p43
    %p45 = scmp.ne.s32.totalorder %s34, %s35
    %p46 = scmp.eq.s32.totalorder %s14, 0
    %p47 = por %p45, %p46
    %p48 = scmp.ne.s32.totalorder %s34, %s35
    %p49 = scmp.eq.s32.totalorder %s15, 1
    %p50 = por %p48, %p49
    %p52 = scmp.ne.s32.totalorder %s35, %s51
    %p53 = scmp.eq.s32.totalorder %s15, 0
    %p54 = por %p52, %p53
    %s55 = ssub.s32 %s17, %s24
    %p56 = scmp.eq.s32.totalorder %s55, 0
    %s58 = sadd.s32 %s57, 1
    %s59 = scalar_select %p56, %s57, %s58
    %p62 = pneg %p56
    %p63 = scmp.eq.s32.totalorder %s9, 1
    %p64 = por %p62, %p63
    %p65 = scmp.ne.s32.totalorder %s57, %s60
    %p66 = scmp.eq.s32.totalorder %s9, 0
    %p67 = por %p65, %p66
    %p68 = scmp.ne.s32.totalorder %s57, %s60
    %p69 = scmp.eq.s32.totalorder %s14, 1
    %p70 = por %p68, %p69
    %p71 = scmp.ne.s32.totalorder %s60, %s61
    %p72 = scmp.eq.s32.totalorder %s14, 0
    %p73 = por %p71, %p72
    %p74 = scmp.ne.s32.totalorder %s60, %s61
    %p75 = scmp.eq.s32.totalorder %s15, 1
    %p76 = por %p74, %p75
    %p78 = scmp.ne.s32.totalorder %s61, %s77
    %p79 = scmp.eq.s32.totalorder %s15, 0
    %p80 = por %p78, %p79
    %s81 = ssub.s32 %s17, %s24
    %p82 = scmp.eq.s32.totalorder %s81, 0
    %s84 = sadd.s32 %s83, 1
    %s85 = scalar_select %p82, %s83, %s84
    %p88 = pneg %p82
    %p89 = scmp.eq.s32.totalorder %s9, 1
    %p90 = por %p88, %p89
    %p91 = scmp.ne.s32.totalorder %s83, %s86
    %p92 = scmp.eq.s32.totalorder %s9, 0
    %p93 = por %p91, %p92
    %p94 = scmp.ne.s32.totalorder %s83, %s86
    %p95 = scmp.eq.s32.totalorder %s14, 1
    %p96 = por %p94, %p95
    %p97 = scmp.ne.s32.totalorder %s86, %s87
    %p98 = scmp.eq.s32.totalorder %s14, 0
    %p99 = por %p97, %p98
    %p100 = scmp.ne.s32.totalorder %s86, %s87
    %p101 = scmp.eq.s32.totalorder %s15, 1
    %p102 = por %p100, %p101
    %p104 = scmp.ne.s32.totalorder %s87, %s103
    %p105 = scmp.eq.s32.totalorder %s15, 0
    %p106 = por %p104, %p105
    %s107 = ssub.s32 %s16, %s28
    %s108 = ssub.s32 %s17, %s24
    %s109 = sor.u32 %s107, %s108
    %p110 = scmp.eq.s32.totalorder %s109, 0
    %s112 = sadd.s32 %s111, 1
    %s113 = scalar_select %p110, %s111, %s112
    %p116 = pneg %p110
    %p117 = scmp.eq.s32.totalorder %s9, 1
    %p118 = por %p116, %p117
    %p119 = scmp.ne.s32.totalorder %s111, %s114
    %p120 = scmp.eq.s32.totalorder %s9, 0
    %p121 = por %p119, %p120
    %p122 = scmp.ne.s32.totalorder %s111, %s114
    %p123 = scmp.eq.s32.totalorder %s14, 1
    %p124 = por %p122, %p123
    %p125 = scmp.ne.s32.totalorder %s114, %s115
    %p126 = scmp.eq.s32.totalorder %s14, 0
    %p127 = por %p125, %p126
    %p128 = scmp.ne.s32.totalorder %s114, %s115
    %p129 = scmp.eq.s32.totalorder %s15, 1
    %p130 = por %p128, %p129
    %p132 = scmp.ne.s32.totalorder %s115, %s131
    %p133 = scmp.eq.s32.totalorder %s15, 0
    %p134 = por %p132, %p133
    %p135 = scmp.le.s32.totalorder 1, %s9
    %p136 = scmp.lt.s32.totalorder %s9, 3
    %p137 = pnand %p135, %p136
    %p138 = pneg %p137
    // Predicated region
    $region9: #{tpu_custom_call.1} parent=5 // pred_check
      _
    $region10: #{tpu_custom_call.1} parent=5 // pred_check_branch
      %140 = sbr.rel (%p137) target = $region12
    $region11: #{tpu_custom_call.1} parent=5 // pred_region
      %s141 = ssub.s32 %s9, 1
      // Predicated region
      $region13: #{tpu_custom_call.1} parent=11 // pred_check
        %p142 = pneg %p73
      $region14: #{tpu_custom_call.1} parent=11 // pred_check_branch
        %144 = sbr.rel (%p142) target = $region16
      $region15: #{tpu_custom_call.1} parent=11 // pred_region
        %p145 = scmp.lt.s32.totalorder %s19, 0
        %s146 = scalar_select %p145, %s19, 0
        %s147 = smul.addr %s146, 4
        %s148 = scalar_lea.vmem %s1, %s147
      $region16: #{tpu_custom_call.1} parent=11 // pred_fallthru
        _
      // Predicated region
      $region17: #{tpu_custom_call.1} parent=11 // pred_check
        %p149 = pneg %p99
      $region18: #{tpu_custom_call.1} parent=11 // pred_check_branch
        %151 = sbr.rel (%p149) target = $region20
      $region19: #{tpu_custom_call.1} parent=11 // pred_region
        %p152 = scmp.lt.s32.totalorder %s19, 0
        %s153 = scalar_select %p152, %s19, 0
        %s154 = smul.addr %s153, 2
        %s155 = scalar_lea.vmem %s2, %s154
      $region20: #{tpu_custom_call.1} parent=11 // pred_fallthru
        _
    $region12: #{tpu_custom_call.1} parent=5 // pred_fallthru
      _
    %p156 = scmp.lt.s32.totalorder %s9, 2
    // Predicated region
    $region21: #{tpu_custom_call.1} parent=5 // pred_check
      %p157 = pneg %p156
    $region22: #{tpu_custom_call.1} parent=5 // pred_check_branch
      %159 = sbr.rel (%p157) target = $region24
    $region23: #{tpu_custom_call.1} parent=5 // pred_region
      // Predicated region
      $region25: #{tpu_custom_call.1} parent=23 // pred_check
        %p160 = pneg %p41
      $region26: #{tpu_custom_call.1} parent=23 // pred_check_branch
        %162 = sbr.rel (%p160) target = $region28
      $region27: #{tpu_custom_call.1} parent=23 // pred_region
        %p163 = scmp.lt.s32.totalorder %s16, 1
        %s164 = scalar_select %p163, %s16, 1
        %s165 = smul.addr %s164, 41
        %s166 = smul.addr %s165, 4
        %s167 = scalar_lea.vmem %s0, %s166
      $region28: #{tpu_custom_call.1} parent=23 // pred_fallthru
        _
    $region24: #{tpu_custom_call.1} parent=5 // pred_fallthru
      _
    %p168 = scmp.le.s32.totalorder 1, %s9
    %p169 = scmp.lt.s32.totalorder %s9, 3
    %p170 = pnand %p168, %p169
    %p171 = pneg %p170
    // Predicated region
    $region29: #{tpu_custom_call.1} parent=5 // pred_check
      _
    $region30: #{tpu_custom_call.1} parent=5 // pred_check_branch
      %173 = sbr.rel (%p170) target = $region32
    $region31: #{tpu_custom_call.1} parent=5 // pred_region
      %s174 = ssub.s32 %s9, 1
      %p175 = scmp.lt.s32.totalorder %s18, 1
      %s176 = scalar_select %p175, %s18, 1
      %s177 = smul.addr %s176, 41
      %s178 = smul.addr %s177, 4
      %s179 = scalar_lea.vmem %s0, %s178
      %p180 = pneg %p47
      %p181 = pneg %p44
      %p182 = scmp.lt.s32.totalorder %s19, 0
      %s183 = scalar_select %p182, %s19, 0
      %s184 = smul.addr %s183, 4
      %s185 = scalar_lea.vmem %s1, %s184
      %p186 = pneg %p73
      %p187 = pneg %p70
      %p188 = scmp.lt.s32.totalorder %s19, 0
      %s189 = scalar_select %p188, %s19, 0
      %s190 = smul.addr %s189, 2
      %s191 = scalar_lea.vmem %s2, %s190
      %p192 = pneg %p99
      %p193 = pneg %p96
      %p194 = pneg %p127
      %p195 = pneg %p124
      %p196 = scmp.lt.s32.totalorder %s18, 1
      %s197 = scalar_select %p196, %s18, 1
      %p198 = scmp.lt.s32.totalorder %s19, 0
      %s199 = scalar_select %p198, %s19, 0
      %s200 = smul.addr %s197, 36
      %s201 = sadd.s32 %s199, %s200
      %s202 = smul.addr %s201, 4
      %s203 = scalar_lea.vmem %s3, %s202
      %p204 = scmp.lt.s32.totalorder %s18, 1
      %s205 = scalar_select %p204, %s18, 1
      %s206 = smul.addr %s205, 41
      %s207 = smul.addr %s206, 4
      %s208 = scalar_lea.vmem %s0, %s207
      %p209 = scmp.lt.s32.totalorder %s19, 0
      %s210 = scalar_select %p209, %s19, 0
      %s211 = smul.addr %s210, 4
      %s212 = scalar_lea.vmem %s1, %s211
      %p213 = scmp.lt.s32.totalorder %s19, 0
      %s214 = scalar_select %p213, %s19, 0
      %s215 = smul.addr %s214, 2
      %s216 = scalar_lea.vmem %s2, %s215
      %p217 = scmp.lt.s32.totalorder %s18, 1
      %s218 = scalar_select %p217, %s18, 1
      %p219 = scmp.lt.s32.totalorder %s19, 0
      %s220 = scalar_select %p219, %s19, 0
      %s221 = smul.addr %s218, 36
      %s222 = sadd.s32 %s220, %s221
      %s223 = smul.addr %s222, 4
      %s224 = scalar_lea.vmem %s3, %s223
      %v226 = vld [vmem:[%s208] sm:$0xf]
      %v227 = vld [vmem:[%s208 + $0x4] sm:$0xf]
      %v228 = vld [vmem:[%s208 + $0x8] sm:$0xf]
      %v229 = vld [vmem:[%s208 + $0xc] sm:$0xf]
      %v230 = vld [vmem:[%s208 + $0x10] sm:$0xf]
      %v231 = vld [vmem:[%s208 + $0x14] sm:$0xf]
      %v232 = vld [vmem:[%s208 + $0x18] sm:$0xf]
      %v233 = vld [vmem:[%s208 + $0x1c] sm:$0xf]
      %v234 = vld [vmem:[%s208 + $0x20] sm:$0xf]
      %v235 = vld [vmem:[%s208 + $0x24] sm:$0xf]
      %v236 = vld [vmem:[%s208 + $0x28] sm:$0xf]
      %v237 = vld [vmem:[%s208 + $0x2c] sm:$0xf]
      %v238 = vld [vmem:[%s208 + $0x30] sm:$0xf]
      %v239 = vld [vmem:[%s208 + $0x34] sm:$0xf]
      %v240 = vld [vmem:[%s208 + $0x38] sm:$0xf]
      %v241 = vld [vmem:[%s208 + $0x3c] sm:$0xf]
      %v242 = vld [vmem:[%s208 + $0x40] sm:$0xf]
      %v243 = vld [vmem:[%s208 + $0x44] sm:$0xf]
      %v244 = vld [vmem:[%s208 + $0x48] sm:$0xf]
      %v245 = vld [vmem:[%s208 + $0x4c] sm:$0xf]
      %v246 = vld [vmem:[%s208 + $0x50] sm:$0xf]
      %v247 = vld [vmem:[%s208 + $0x54] sm:$0xf]
      %v248 = vld [vmem:[%s208 + $0x58] sm:$0xf]
      %v249 = vld [vmem:[%s208 + $0x5c] sm:$0xf]
      %v250 = vld [vmem:[%s208 + $0x60] sm:$0xf]
      %v251 = vld [vmem:[%s208 + $0x64] sm:$0xf]
      %v252 = vld [vmem:[%s208 + $0x68] sm:$0xf]
      %v253 = vld [vmem:[%s208 + $0x6c] sm:$0xf]
      %v254 = vld [vmem:[%s208 + $0x70] sm:$0xf]
      %v255 = vld [vmem:[%s208 + $0x74] sm:$0xf]
      %v256 = vld [vmem:[%s208 + $0x78] sm:$0xf]
      %v257 = vld [vmem:[%s208 + $0x7c] sm:$0xf]
      %v258 = vld [vmem:[%s208 + $0x80] sm:$0xf]
      %v259 = vld [vmem:[%s208 + $0x84] sm:$0xf]
      %v260 = vld [vmem:[%s208 + $0x88] sm:$0xf]
      %v261 = vld [vmem:[%s208 + $0x8c] sm:$0x7]
      %v262 = vld [vmem:[%s212] sm:$0xf]
      %v299 = vunpack.c.l.b16 %v226
      %v300 = vunpack.c.l.b16 %v227
      %v301 = vunpack.c.l.b16 %v228
      %v302 = vunpack.c.l.b16 %v229
      %v303 = vunpack.c.l.b16 %v230
      %v304 = vunpack.c.l.b16 %v231
      %v305 = vunpack.c.l.b16 %v232
      %v306 = vunpack.c.l.b16 %v233
      %v307 = vunpack.c.l.b16 %v234
      %v308 = vunpack.c.l.b16 %v235
      %v309 = vunpack.c.l.b16 %v236
      %v310 = vunpack.c.l.b16 %v237
      %v311 = vunpack.c.l.b16 %v238
      %v312 = vunpack.c.l.b16 %v239
      %v313 = vunpack.c.l.b16 %v240
      %v314 = vunpack.c.l.b16 %v241
      %v315 = vunpack.c.l.b16 %v242
      %v316 = vunpack.c.l.b16 %v243
      %v317 = vunpack.c.l.b16 %v244
      %v318 = vunpack.c.l.b16 %v245
      %v319 = vunpack.c.l.b16 %v246
      %v320 = vunpack.c.l.b16 %v247
      %v321 = vunpack.c.l.b16 %v248
      %v322 = vunpack.c.l.b16 %v249
      %v323 = vunpack.c.l.b16 %v250
      %v324 = vunpack.c.l.b16 %v251
      %v325 = vunpack.c.l.b16 %v252
      %v326 = vunpack.c.l.b16 %v253
      %v327 = vunpack.c.l.b16 %v254
      %v328 = vunpack.c.l.b16 %v255
      %v329 = vunpack.c.l.b16 %v256
      %v330 = vunpack.c.l.b16 %v257
      %v331 = vunpack.c.l.b16 %v258
      %v332 = vunpack.c.l.b16 %v259
      %v333 = vunpack.c.l.b16 %v260
      %v334 = vunpack.c.l.b16 %v261
      %v335 = vpack.c.b16 %v300, %v299
      %v336 = vpack.c.b16 %v302, %v301
      %v337 = vpack.c.b16 %v304, %v303
      %v338 = vpack.c.b16 %v306, %v305
      %v339 = vpack.c.b16 %v308, %v307
      %v340 = vpack.c.b16 %v310, %v309
      %v341 = vpack.c.b16 %v312, %v311
      %v342 = vpack.c.b16 %v314, %v313
      %v343 = vpack.c.b16 %v316, %v315
      %v344 = vpack.c.b16 %v318, %v317
      %v345 = vpack.c.b16 %v320, %v319
      %v346 = vpack.c.b16 %v322, %v321
      %v347 = vpack.c.b16 %v324, %v323
      %v348 = vpack.c.b16 %v326, %v325
      %v349 = vpack.c.b16 %v328, %v327
      %v350 = vpack.c.b16 %v330, %v329
      %v351 = vpack.c.b16 %v332, %v331
      %v352 = vpack.c.b16 %v334, %v333
      %vm353 = vcmask 64512
      %v355 = vsel %vm353, %v335, 0
      %v358 = vsel %vm353, %v336, 0
      %v361 = vsel %vm353, %v337, 0
      %v364 = vsel %vm353, %v338, 0
      %v367 = vsel %vm353, %v339, 0
      %v370 = vsel %vm353, %v340, 0
      %v373 = vsel %vm353, %v341, 0
      %v376 = vsel %vm353, %v342, 0
      %v379 = vsel %vm353, %v343, 0
      %v382 = vsel %vm353, %v344, 0
      %v385 = vsel %vm353, %v345, 0
      %v388 = vsel %vm353, %v346, 0
      %v391 = vsel %vm353, %v347, 0
      %v394 = vsel %vm353, %v348, 0
      %v397 = vsel %vm353, %v349, 0
      %v400 = vsel %vm353, %v350, 0
      %v403 = vsel %vm353, %v351, 0
      %v406 = vsel %vm353, %v352, 0
      %vm408 = vcmask 1043456
      %v410 = vsel %vm408, %v262, 0
      %412 = vmatprep.subr.bf16.mxu0 0
      %413 = vmatpush1.bf16.msra.mxu0 %v410
      %414 = vmatprep.subr.bf16.mxu0 0
      %415 = vmatpush1.bf16.msra.mxu0 0
      %416 = vmatprep.subr.bf16.mxu0 0
      %417 = vmatpush1.bf16.msra.mxu0 0
      %418 = vmatprep.subr.bf16.mxu0 0
      %419 = vmatpush1.bf16.msra.mxu0 0
      %420 = vmatprep.subr.bf16.mxu0 0
      %421 = vmatpush1.bf16.msra.mxu0 0
      %422 = vmatprep.subr.bf16.mxu0 0
      %423 = vmatpush1.bf16.msra.mxu0 0
      %424 = vmatprep.subr.bf16.mxu0 0
      %425 = vmatpush1.bf16.msra.mxu0 0
      %426 = vmatprep.subr.bf16.mxu0 0
      %427 = vmatpush1.bf16.msra.mxu0 0
      %428 = vmatprep.subr.bf16.mxu0 0
      %429 = vmatpush1.bf16.msra.mxu0 0
      %430 = vmatprep.subr.bf16.mxu0 0
      %431 = vmatpush1.bf16.msra.mxu0 0
      %432 = vmatprep.subr.bf16.mxu0 0
      %433 = vmatpush1.bf16.msra.mxu0 0
      %434 = vmatprep.subr.bf16.mxu0 0
      %435 = vmatpush1.bf16.msra.mxu0 0
      %436 = vmatprep.subr.bf16.mxu0 0
      %437 = vmatpush1.bf16.msra.mxu0 0
      %438 = vmatprep.subr.bf16.mxu0 0
      %439 = vmatpush1.bf16.msra.mxu0 0
      %440 = vmatprep.subr.bf16.mxu0 0
      %441 = vmatpush1.bf16.msra.mxu0 0
      %442 = vmatprep.subr.bf16.mxu0 0
      %443 = vmatpush1.bf16.msra.mxu0 0
      %444 = vmatprep.mubr.bf16.mxu0 0
      %445 = vmatmul.mubr.bf16.gmra.mrb[0].mxu0 %v355
      %v446 = vpop.f32.mrb[0].mxu0
      %v447 = vadd.f32 0.0, %v446
      %v448 = vpop.f32.mrb[0].mxu0
      %v449 = vpop.f32.mrb[0].mxu0
      %v450 = vadd.f32 0.0, %v449
      %v451 = vpop.f32.mrb[0].mxu0
      %452 = vmatprep.mubr.bf16.mxu0 0
      %453 = vmatmul.mubr.bf16.gmra.mrb[0].mxu0 %v358
      %v454 = vpop.f32.mrb[0].mxu0
      %v455 = vadd.f32 0.0, %v454
      %v456 = vpop.f32.mrb[0].mxu0
      %v457 = vpop.f32.mrb[0].mxu0
      %v458 = vadd.f32 0.0, %v457
      %v459 = vpop.f32.mrb[0].mxu0
      %460 = vmatprep.mubr.bf16.mxu0 0
      %461 = vmatmul.mubr.bf16.gmra.mrb[0].mxu0 %v361
      %v462 = vpop.f32.mrb[0].mxu0
      %v463 = vadd.f32 0.0, %v462
      %v464 = vpop.f32.mrb[0].mxu0
      %v465 = vpop.f32.mrb[0].mxu0
      %v466 = vadd.f32 0.0, %v465
      %v467 = vpop.f32.mrb[0].mxu0
      %468 = vmatprep.mubr.bf16.mxu0 0
      %469 = vmatmul.mubr.bf16.gmra.mrb[0].mxu0 %v364
      %v470 = vpop.f32.mrb[0].mxu0
      %v471 = vadd.f32 0.0, %v470
      %v472 = vpop.f32.mrb[0].mxu0
      %v473 = vpop.f32.mrb[0].mxu0
      %v474 = vadd.f32 0.0, %v473
      %v475 = vpop.f32.mrb[0].mxu0
      %476 = vmatprep.mubr.bf16.mxu0 0
      %477 = vmatmul.mubr.bf16.gmra.mrb[0].mxu0 %v367
      %v478 = vpop.f32.mrb[0].mxu0
      %v479 = vadd.f32 0.0, %v478
      %v480 = vpop.f32.mrb[0].mxu0
      %v481 = vpop.f32.mrb[0].mxu0
      %v482 = vadd.f32 0.0, %v481
      %v483 = vpop.f32.mrb[0].mxu0
      %484 = vmatprep.mubr.bf16.mxu0 0
      %485 = vmatmul.mubr.bf16.gmra.mrb[0].mxu0 %v370
      %v486 = vpop.f32.mrb[0].mxu0
      %v487 = vadd.f32 0.0, %v486
      %v488 = vpop.f32.mrb[0].mxu0
      %v489 = vpop.f32.mrb[0].mxu0
      %v490 = vadd.f32 0.0, %v489
      %v491 = vpop.f32.mrb[0].mxu0
      %492 = vmatprep.mubr.bf16.mxu0 0
      %493 = vmatmul.mubr.bf16.gmra.mrb[0].mxu0 %v373
      %v494 = vpop.f32.mrb[0].mxu0
      %v495 = vadd.f32 0.0, %v494
      %v496 = vpop.f32.mrb[0].mxu0
      %v497 = vpop.f32.mrb[0].mxu0
      %v498 = vadd.f32 0.0, %v497
      %v499 = vpop.f32.mrb[0].mxu0
      %500 = vmatprep.mubr.bf16.mxu0 0
      %501 = vmatmul.mubr.bf16.gmra.mrb[0].mxu0 %v376
      %v502 = vpop.f32.mrb[0].mxu0
      %v503 = vadd.f32 0.0, %v502
      %v504 = vpop.f32.mrb[0].mxu0
      %v505 = vpop.f32.mrb[0].mxu0
      %v506 = vadd.f32 0.0, %v505
      %v507 = vpop.f32.mrb[0].mxu0
      %508 = vmatprep.mubr.bf16.mxu0 0
      %509 = vmatmul.mubr.bf16.gmra.mrb[0].mxu0 %v379
      %v510 = vpop.f32.mrb[0].mxu0
      %v511 = vadd.f32 0.0, %v510
      %v512 = vpop.f32.mrb[0].mxu0
      %v513 = vpop.f32.mrb[0].mxu0
      %v514 = vadd.f32 0.0, %v513
      %v515 = vpop.f32.mrb[0].mxu0
      %516 = vmatprep.mubr.bf16.mxu0 0
      %517 = vmatmul.mubr.bf16.gmra.mrb[0].mxu0 %v382
      %v518 = vpop.f32.mrb[0].mxu0
      %v519 = vadd.f32 0.0, %v518
      %v520 = vpop.f32.mrb[0].mxu0
      %v521 = vpop.f32.mrb[0].mxu0
      %v522 = vadd.f32 0.0, %v521
      %v523 = vpop.f32.mrb[0].mxu0
      %524 = vmatprep.mubr.bf16.mxu0 0
      %525 = vmatmul.mubr.bf16.gmra.mrb[0].mxu0 %v385
      %v526 = vpop.f32.mrb[0].mxu0
      %v527 = vadd.f32 0.0, %v526
      %v528 = vpop.f32.mrb[0].mxu0
      %v529 = vpop.f32.mrb[0].mxu0
      %v530 = vadd.f32 0.0, %v529
      %v531 = vpop.f32.mrb[0].mxu0
      %532 = vmatprep.mubr.bf16.mxu0 0
      %533 = vmatmul.mubr.bf16.gmra.mrb[0].mxu0 %v388
      %v534 = vpop.f32.mrb[0].mxu0
      %v535 = vadd.f32 0.0, %v534
      %v536 = vpop.f32.mrb[0].mxu0
      %v537 = vpop.f32.mrb[0].mxu0
      %v538 = vadd.f32 0.0, %v537
      %v539 = vpop.f32.mrb[0].mxu0
      %540 = vmatprep.mubr.bf16.mxu0 0
      %541 = vmatmul.mubr.bf16.gmra.mrb[0].mxu0 %v391
      %v542 = vpop.f32.mrb[0].mxu0
      %v543 = vadd.f32 0.0, %v542
      %v544 = vpop.f32.mrb[0].mxu0
      %v545 = vpop.f32.mrb[0].mxu0
      %v546 = vadd.f32 0.0, %v545
      %v547 = vpop.f32.mrb[0].mxu0
      %548 = vmatprep.mubr.bf16.mxu0 0
      %549 = vmatmul.mubr.bf16.gmra.mrb[0].mxu0 %v394
      %v550 = vpop.f32.mrb[0].mxu0
      %v551 = vadd.f32 0.0, %v550
      %v552 = vpop.f32.mrb[0].mxu0
      %v553 = vpop.f32.mrb[0].mxu0
      %v554 = vadd.f32 0.0, %v553
      %v555 = vpop.f32.mrb[0].mxu0
      %556 = vmatprep.mubr.bf16.mxu0 0
      %557 = vmatmul.mubr.bf16.gmra.mrb[0].mxu0 %v397
      %v558 = vpop.f32.mrb[0].mxu0
      %v559 = vadd.f32 0.0, %v558
      %v560 = vpop.f32.mrb[0].mxu0
      %v561 = vpop.f32.mrb[0].mxu0
      %v562 = vadd.f32 0.0, %v561
      %v563 = vpop.f32.mrb[0].mxu0
      %564 = vmatprep.mubr.bf16.mxu0 0
      %565 = vmatmul.mubr.bf16.gmra.mrb[0].mxu0 %v400
      %v566 = vpop.f32.mrb[0].mxu0
      %v567 = vadd.f32 0.0, %v566
      %v568 = vpop.f32.mrb[0].mxu0
      %v569 = vpop.f32.mrb[0].mxu0
      %v570 = vadd.f32 0.0, %v569
      %v571 = vpop.f32.mrb[0].mxu0
      %572 = vmatprep.mubr.bf16.mxu0 0
      %573 = vmatmul.mubr.bf16.gmra.mrb[0].mxu0 %v403
      %v574 = vpop.f32.mrb[0].mxu0
      %v575 = vadd.f32 0.0, %v574
      %v576 = vpop.f32.mrb[0].mxu0
      %v577 = vpop.f32.mrb[0].mxu0
      %v578 = vadd.f32 0.0, %v577
      %v579 = vpop.f32.mrb[0].mxu0
      %580 = vmatprep.mubr.bf16.mxu0 0
      %581 = vmatmul.mubr.bf16.gmra.mrb[0].mxu0 %v406
      %v582 = vpop.f32.mrb[0].mxu0
      %v583 = vadd.f32 0.0, %v582
      %v584 = vpop.f32.mrb[0].mxu0
      %v585 = vpop.f32.mrb[0].mxu0
      %v586 = vadd.f32 0.0, %v585
      %v587 = vpop.f32.mrb[0].mxu0
      %588 = vdwg.mxu0
      %589 = vst [vmem:[#allocation2] sm:$0xff] %v447
      %590 = vst [vmem:[#allocation2 + $0x8] sm:$0xff] %v450
      %591 = vst [vmem:[#allocation2 + $0x10] sm:$0xff] %v455
      %592 = vst [vmem:[#allocation2 + $0x18] sm:$0xff] %v458
      %593 = vst [vmem:[#allocation2 + $0x20] sm:$0xff] %v463
      %594 = vst [vmem:[#allocation2 + $0x28] sm:$0xff] %v466
      %595 = vst [vmem:[#allocation2 + $0x30] sm:$0xff] %v471
      %596 = vst [vmem:[#allocation2 + $0x38] sm:$0xff] %v474
      %597 = vst [vmem:[#allocation2 + $0x40] sm:$0xff] %v479
      %598 = vst [vmem:[#allocation2 + $0x48] sm:$0xff] %v482
      %599 = vst [vmem:[#allocation2 + $0x50] sm:$0xff] %v487
      %600 = vst [vmem:[#allocation2 + $0x58] sm:$0xff] %v490
      %601 = vst [vmem:[#allocation2 + $0x60] sm:$0xff] %v495
      %602 = vst [vmem:[#allocation2 + $0x68] sm:$0xff] %v498
      %603 = vst [vmem:[#allocation2 + $0x70] sm:$0xff] %v503
      %604 = vst [vmem:[#allocation2 + $0x78] sm:$0xff] %v506
      %605 = vst [vmem:[#allocation2 + $0x80] sm:$0xff] %v511
      %606 = vst [vmem:[#allocation2 + $0x88] sm:$0xff] %v514
      %607 = vst [vmem:[#allocation2 + $0x90] sm:$0xff] %v519
      %608 = vst [vmem:[#allocation2 + $0x98] sm:$0xff] %v522
      %609 = vst [vmem:[#allocation2 + $0xa0] sm:$0xff] %v527
      %610 = vst [vmem:[#allocation2 + $0xa8] sm:$0xff] %v530
      %611 = vst [vmem:[#allocation2 + $0xb0] sm:$0xff] %v535
      %612 = vst [vmem:[#allocation2 + $0xb8] sm:$0xff] %v538
      %613 = vst [vmem:[#allocation2 + $0xc0] sm:$0xff] %v543
      %614 = vst [vmem:[#allocation2 + $0xc8] sm:$0xff] %v546
      %615 = vst [vmem:[#allocation2 + $0xd0] sm:$0xff] %v551
      %616 = vst [vmem:[#allocation2 + $0xd8] sm:$0xff] %v554
      %617 = vst [vmem:[#allocation2 + $0xe0] sm:$0xff] %v559
      %618 = vst [vmem:[#allocation2 + $0xe8] sm:$0xff] %v562
      %619 = vst [vmem:[#allocation2 + $0xf0] sm:$0xff] %v567
      %620 = vst [vmem:[#allocation2 + $0xf8] sm:$0xff] %v570
      %621 = vst [vmem:[#allocation2 + $0x100] sm:$0xff] %v575
      %622 = vst [vmem:[#allocation2 + $0x108] sm:$0xff] %v578
      %623 = vst [vmem:[#allocation2 + $0x110] sm:$0xff] %v583
      %624 = vst [vmem:[#allocation2 + $0x118] sm:$0x3f] %v586
      %v625 = vld [vmem:[%s208] sm:$0xf]
      %v626 = vld [vmem:[%s208 + $0x4] sm:$0xf]
      %v627 = vld [vmem:[%s208 + $0x8] sm:$0xf]
      %v628 = vld [vmem:[%s208 + $0xc] sm:$0xf]
      %v629 = vld [vmem:[%s208 + $0x10] sm:$0xf]
      %v630 = vld [vmem:[%s208 + $0x14] sm:$0xf]
      %v631 = vld [vmem:[%s208 + $0x18] sm:$0xf]
      %v632 = vld [vmem:[%s208 + $0x1c] sm:$0xf]
      %v633 = vld [vmem:[%s208 + $0x20] sm:$0xf]
      %v634 = vld [vmem:[%s208 + $0x24] sm:$0xf]
      %v635 = vld [vmem:[%s208 + $0x28] sm:$0xf]
      %v636 = vld [vmem:[%s208 + $0x2c] sm:$0xf]
      %v637 = vld [vmem:[%s208 + $0x30] sm:$0xf]
      %v638 = vld [vmem:[%s208 + $0x34] sm:$0xf]
      %v639 = vld [vmem:[%s208 + $0x38] sm:$0xf]
      %v640 = vld [vmem:[%s208 + $0x3c] sm:$0xf]
      %v641 = vld [vmem:[%s208 + $0x40] sm:$0xf]
      %v642 = vld [vmem:[%s208 + $0x44] sm:$0xf]
      %v643 = vld [vmem:[%s208 + $0x48] sm:$0xf]
      %v644 = vld [vmem:[%s208 + $0x4c] sm:$0xf]
      %v645 = vld [vmem:[%s208 + $0x50] sm:$0xf]
      %v646 = vld [vmem:[%s208 + $0x54] sm:$0xf]
      %v647 = vld [vmem:[%s208 + $0x58] sm:$0xf]
      %v648 = vld [vmem:[%s208 + $0x5c] sm:$0xf]
      %v649 = vld [vmem:[%s208 + $0x60] sm:$0xf]
      %v650 = vld [vmem:[%s208 + $0x64] sm:$0xf]
      %v651 = vld [vmem:[%s208 + $0x68] sm:$0xf]
      %v652 = vld [vmem:[%s208 + $0x6c] sm:$0xf]
      %v653 = vld [vmem:[%s208 + $0x70] sm:$0xf]
      %v654 = vld [vmem:[%s208 + $0x74] sm:$0xf]
      %v655 = vld [vmem:[%s208 + $0x78] sm:$0xf]
      %v656 = vld [vmem:[%s208 + $0x7c] sm:$0xf]
      %v657 = vld [vmem:[%s208 + $0x80] sm:$0xf]
      %v658 = vld [vmem:[%s208 + $0x84] sm:$0xf]
      %v659 = vld [vmem:[%s208 + $0x88] sm:$0xf]
      %v660 = vld [vmem:[%s208 + $0x8c] sm:$0xf]
      %s661 = scalar_lea.vmem %s212, 4
      %v662 = vld [vmem:[%s661] sm:$0xf]
      %v699 = vunpack.c.l.b16 %v625
      %v700 = vunpack.c.l.b16 %v626
      %v701 = vunpack.c.l.b16 %v627
      %v702 = vunpack.c.l.b16 %v628
      %v703 = vunpack.c.l.b16 %v629
      %v704 = vunpack.c.l.b16 %v630
      %v705 = vunpack.c.l.b16 %v631
      %v706 = vunpack.c.l.b16 %v632
      %v707 = vunpack.c.l.b16 %v633
      %v708 = vunpack.c.l.b16 %v634
      %v709 = vunpack.c.l.b16 %v635
      %v710 = vunpack.c.l.b16 %v636
      %v711 = vunpack.c.l.b16 %v637
      %v712 = vunpack.c.l.b16 %v638
      %v713 = vunpack.c.l.b16 %v639
      %v714 = vunpack.c.l.b16 %v640
      %v715 = vunpack.c.l.b16 %v641
      %v716 = vunpack.c.l.b16 %v642
      %v717 = vunpack.c.l.b16 %v643
      %v718 = vunpack.c.l.b16 %v644
      %v719 = vunpack.c.l.b16 %v645
      %v720 = vunpack.c.l.b16 %v646
      %v721 = vunpack.c.l.b16 %v647
      %v722 = vunpack.c.l.b16 %v648
      %v723 = vunpack.c.l.b16 %v649
      %v724 = vunpack.c.l.b16 %v650
      %v725 = vunpack.c.l.b16 %v651
      %v726 = vunpack.c.l.b16 %v652
      %v727 = vunpack.c.l.b16 %v653
      %v728 = vunpack.c.l.b16 %v654
      %v729 = vunpack.c.l.b16 %v655
      %v730 = vunpack.c.l.b16 %v656
      %v731 = vunpack.c.l.b16 %v657
      %v732 = vunpack.c.l.b16 %v658
      %v733 = vunpack.c.l.b16 %v659
      %v734 = vunpack.c.l.b16 %v660
      %v735 = vpack.c.b16 %v700, %v699
      %v736 = vpack.c.b16 %v702, %v701
      %v737 = vpack.c.b16 %v704, %v703
      %v738 = vpack.c.b16 %v706, %v705
      %v739 = vpack.c.b16 %v708, %v707
      %v740 = vpack.c.b16 %v710, %v709
      %v741 = vpack.c.b16 %v712, %v711
      %v742 = vpack.c.b16 %v714, %v713
      %v743 = vpack.c.b16 %v716, %v715
      %v744 = vpack.c.b16 %v718, %v717
      %v745 = vpack.c.b16 %v720, %v719
      %v746 = vpack.c.b16 %v722, %v721
      %v747 = vpack.c.b16 %v724, %v723
      %v748 = vpack.c.b16 %v726, %v725
      %v749 = vpack.c.b16 %v728, %v727
      %v750 = vpack.c.b16 %v730, %v729
      %v751 = vpack.c.b16 %v732, %v731
      %v752 = vpack.c.b16 %v734, %v733
      %vm753 = vsmask.f32 7424
      %v755 = vshrl.u32 %v735, 16
      %v757 = vshll.u32 %v735, 16
      %v759 = vrot.slane %v757, 1
      %v760 = vor.u32 %v755, %v759
      %v762 = vshll.u32 %v736, 16
      %v764 = vrot.slane %v762, 1
      %v765 = vsel %vm753, %v760, %v764
      %v766 = vshrl.u32 %v736, 16
      %v768 = vor.u32 %v766, %v764
      %v770 = vshll.u32 %v737, 16
      %v772 = vrot.slane %v770, 1
      %v773 = vsel %vm753, %v768, %v772
      %v774 = vshrl.u32 %v737, 16
      %v776 = vor.u32 %v774, %v772
      %v778 = vshll.u32 %v738, 16
      %v780 = vrot.slane %v778, 1
      %v781 = vsel %vm753, %v776, %v780
      %v782 = vshrl.u32 %v738, 16
      %v784 = vor.u32 %v782, %v780
      %v786 = vshll.u32 %v739, 16
      %v788 = vrot.slane %v786, 1
      %v789 = vsel %vm753, %v784, %v788
      %v790 = vshrl.u32 %v739, 16
      %v792 = vor.u32 %v790, %v788
      %v794 = vshll.u32 %v740, 16
      %v796 = vrot.slane %v794, 1
      %v797 = vsel %vm753, %v792, %v796
      %v798 = vshrl.u32 %v740, 16
      %v800 = vor.u32 %v798, %v796
      %v802 = vshll.u32 %v741, 16
      %v804 = vrot.slane %v802, 1
      %v805 = vsel %vm753, %v800, %v804
      %v806 = vshrl.u32 %v741, 16
      %v808 = vor.u32 %v806, %v804
      %v810 = vshll.u32 %v742, 16
      %v812 = vrot.slane %v810, 1
      %v813 = vsel %vm753, %v808, %v812
      %v814 = vshrl.u32 %v742, 16
      %v816 = vor.u32 %v814, %v812
      %v818 = vshll.u32 %v743, 16
      %v820 = vrot.slane %v818, 1
      %v821 = vsel %vm753, %v816, %v820
      %v822 = vshrl.u32 %v743, 16
      %v824 = vor.u32 %v822, %v820
      %v826 = vshll.u32 %v744, 16
      %v828 = vrot.slane %v826, 1
      %v829 = vsel %vm753, %v824, %v828
      %v830 = vshrl.u32 %v744, 16
      %v832 = vor.u32 %v830, %v828
      %v834 = vshll.u32 %v745, 16
      %v836 = vrot.slane %v834, 1
      %v837 = vsel %vm753, %v832, %v836
      %v838 = vshrl.u32 %v745, 16
      %v840 = vor.u32 %v838, %v836
      %v842 = vshll.u32 %v746, 16
      %v844 = vrot.slane %v842, 1
      %v845 = vsel %vm753, %v840, %v844
      %v846 = vshrl.u32 %v746, 16
      %v848 = vor.u32 %v846, %v844
      %v850 = vshll.u32 %v747, 16
      %v852 = vrot.slane %v850, 1
      %v853 = vsel %vm753, %v848, %v852
      %v854 = vshrl.u32 %v747, 16
      %v856 = vor.u32 %v854, %v852
      %v858 = vshll.u32 %v748, 16
      %v860 = vrot.slane %v858, 1
      %v861 = vsel %vm753, %v856, %v860
      %v862 = vshrl.u32 %v748, 16
      %v864 = vor.u32 %v862, %v860
      %v866 = vshll.u32 %v749, 16
      %v868 = vrot.slane %v866, 1
      %v869 = vsel %vm753, %v864, %v868
      %v870 = vshrl.u32 %v749, 16
      %v872 = vor.u32 %v870, %v868
      %v874 = vshll.u32 %v750, 16
      %v876 = vrot.slane %v874, 1
      %v877 = vsel %vm753, %v872, %v876
      %v878 = vshrl.u32 %v750, 16
      %v880 = vor.u32 %v878, %v876
      %v882 = vshll.u32 %v751, 16
      %v884 = vrot.slane %v882, 1
      %v885 = vsel %vm753, %v880, %v884
      %v886 = vshrl.u32 %v751, 16
      %v888 = vor.u32 %v886, %v884
      %v890 = vshll.u32 %v752, 16
      %v892 = vrot.slane %v890, 1
      %v893 = vsel %vm753, %v888, %v892
      %v894 = vshrl.u32 %v752, 16
      %v896 = vor.u32 %v894, %v892
      %v898 = vsel %vm353, %v765, 0
      %v901 = vsel %vm353, %v773, 0
      %v904 = vsel %vm353, %v781, 0
      %v907 = vsel %vm353, %v789, 0
      %v910 = vsel %vm353, %v797, 0
      %v913 = vsel %vm353, %v805, 0
      %v916 = vsel %vm353, %v813, 0
      %v919 = vsel %vm353, %v821, 0
      %v922 = vsel %vm353, %v829, 0
      %v925 = vsel %vm353, %v837, 0
      %v928 = vsel %vm353, %v845, 0
      %v931 = vsel %vm353, %v853, 0
      %v934 = vsel %vm353, %v861, 0
      %v937 = vsel %vm353, %v869, 0
      %v940 = vsel %vm353, %v877, 0
      %v943 = vsel %vm353, %v885, 0
      %v946 = vsel %vm353, %v893, 0
      %v949 = vsel %vm353, %v896, 0
      %v952 = vsel %vm408, %v662, 0
      %954 = vmatprep.subr.bf16.mxu0 0
      %955 = vmatpush1.bf16.msra.mxu0 %v952
      %956 = vmatprep.subr.bf16.mxu0 0
      %957 = vmatpush1.bf16.msra.mxu0 0
      %958 = vmatprep.subr.bf16.mxu0 0
      %959 = vmatpush1.bf16.msra.mxu0 0
      %960 = vmatprep.subr.bf16.mxu0 0
      %961 = vmatpush1.bf16.msra.mxu0 0
      %962 = vmatprep.subr.bf16.mxu0 0
      %963 = vmatpush1.bf16.msra.mxu0 0
      %964 = vmatprep.subr.bf16.mxu0 0
      %965 = vmatpush1.bf16.msra.mxu0 0
      %966 = vmatprep.subr.bf16.mxu0 0
      %967 = vmatpush1.bf16.msra.mxu0 0
      %968 = vmatprep.subr.bf16.mxu0 0
      %969 = vmatpush1.bf16.msra.mxu0 0
      %970 = vmatprep.subr.bf16.mxu0 0
      %971 = vmatpush1.bf16.msra.mxu0 0
      %972 = vmatprep.subr.bf16.mxu0 0
      %973 = vmatpush1.bf16.msra.mxu0 0
      %974 = vmatprep.subr.bf16.mxu0 0
      %975 = vmatpush1.bf16.msra.mxu0 0
      %976 = vmatprep.subr.bf16.mxu0 0
      %977 = vmatpush1.bf16.msra.mxu0 0
      %978 = vmatprep.subr.bf16.mxu0 0
      %979 = vmatpush1.bf16.msra.mxu0 0
      %980 = vmatprep.subr.bf16.mxu0 0
      %981 = vmatpush1.bf16.msra.mxu0 0
      %982 = vmatprep.subr.bf16.mxu0 0
      %983 = vmatpush1.bf16.msra.mxu0 0
      %984 = vmatprep.subr.bf16.mxu0 0
      %985 = vmatpush1.bf16.msra.mxu0 0
      %986 = vmatprep.mubr.bf16.mxu0 0
      %987 = vmatmul.mubr.bf16.gmra.mrb[0].mxu0 %v898
      %v988 = vpop.f32.mrb[0].mxu0
      %v989 = vadd.f32 0.0, %v988
      %v990 = vpop.f32.mrb[0].mxu0
      %v991 = vpop.f32.mrb[0].mxu0
      %v992 = vadd.f32 0.0, %v991
      %v993 = vpop.f32.mrb[0].mxu0
      %994 = vmatprep.mubr.bf16.mxu0 0
      %995 = vmatmul.mubr.bf16.gmra.mrb[0].mxu0 %v901
      %v996 = vpop.f32.mrb[0].mxu0
      %v997 = vadd.f32 0.0, %v996
      %v998 = vpop.f32.mrb[0].mxu0
      %v999 = vpop.f32.mrb[0].mxu0
      %v1000 = vadd.f32 0.0, %v999
      %v1001 = vpop.f32.mrb[0].mxu0
      %1002 = vmatprep.mubr.bf16.mxu0 0
      %1003 = vmatmul.mubr.bf16.gmra.mrb[0].mxu0 %v904
      %v1004 = vpop.f32.mrb[0].mxu0
      %v1005 = vadd.f32 0.0, %v1004
      %v1006 = vpop.f32.mrb[0].mxu0
      %v1007 = vpop.f32.mrb[0].mxu0
      %v1008 = vadd.f32 0.0, %v1007
      %v1009 = vpop.f32.mrb[0].mxu0
      %1010 = vmatprep.mubr.bf16.mxu0 0
      %1011 = vmatmul.mubr.bf16.gmra.mrb[0].mxu0 %v907
      %v1012 = vpop.f32.mrb[0].mxu0
      %v1013 = vadd.f32 0.0, %v1012
      %v1014 = vpop.f32.mrb[0].mxu0
      %v1015 = vpop.f32.mrb[0].mxu0
      %v1016 = vadd.f32 0.0, %v1015
      %v1017 = vpop.f32.mrb[0].mxu0
      %1018 = vmatprep.mubr.bf16.mxu0 0
      %1019 = vmatmul.mubr.bf16.gmra.mrb[0].mxu0 %v910
      %v1020 = vpop.f32.mrb[0].mxu0
      %v1021 = vadd.f32 0.0, %v1020
      %v1022 = vpop.f32.mrb[0].mxu0
      %v1023 = vpop.f32.mrb[0].mxu0
      %v1024 = vadd.f32 0.0, %v1023
      %v1025 = vpop.f32.mrb[0].mxu0
      %1026 = vmatprep.mubr.bf16.mxu0 0
      %1027 = vmatmul.mubr.bf16.gmra.mrb[0].mxu0 %v913
      %v1028 = vpop.f32.mrb[0].mxu0
      %v1029 = vadd.f32 0.0, %v1028
      %v1030 = vpop.f32.mrb[0].mxu0
      %v1031 = vpop.f32.mrb[0].mxu0
      %v1032 = vadd.f32 0.0, %v1031
      %v1033 = vpop.f32.mrb[0].mxu0
      %1034 = vmatprep.mubr.bf16.mxu0 0
      %1035 = vmatmul.mubr.bf16.gmra.mrb[0].mxu0 %v916
      %v1036 = vpop.f32.mrb[0].mxu0
      %v1037 = vadd.f32 0.0, %v1036
      %v1038 = vpop.f32.mrb[0].mxu0
      %v1039 = vpop.f32.mrb[0].mxu0
      %v1040 = vadd.f32 0.0, %v1039
      %v1041 = vpop.f32.mrb[0].mxu0
      %1042 = vmatprep.mubr.bf16.mxu0 0
      %1043 = vmatmul.mubr.bf16.gmra.mrb[0].mxu0 %v919
      %v1044 = vpop.f32.mrb[0].mxu0
      %v1045 = vadd.f32 0.0, %v1044
      %v1046 = vpop.f32.mrb[0].mxu0
      %v1047 = vpop.f32.mrb[0].mxu0
      %v1048 = vadd.f32 0.0, %v1047
      %v1049 = vpop.f32.mrb[0].mxu0
      %1050 = vmatprep.mubr.bf16.mxu0 0
      %1051 = vmatmul.mubr.bf16.gmra.mrb[0].mxu0 %v922
      %v1052 = vpop.f32.mrb[0].mxu0
      %v1053 = vadd.f32 0.0, %v1052
      %v1054 = vpop.f32.mrb[0].mxu0
      %v1055 = vpop.f32.mrb[0].mxu0
      %v1056 = vadd.f32 0.0, %v1055
      %v1057 = vpop.f32.mrb[0].mxu0
      %1058 = vmatprep.mubr.bf16.mxu0 0
      %1059 = vmatmul.mubr.bf16.gmra.mrb[0].mxu0 %v925
      %v1060 = vpop.f32.mrb[0].mxu0
      %v1061 = vadd.f32 0.0, %v1060
      %v1062 = vpop.f32.mrb[0].mxu0
      %v1063 = vpop.f32.mrb[0].mxu0
      %v1064 = vadd.f32 0.0, %v1063
      %v1065 = vpop.f32.mrb[0].mxu0
      %1066 = vmatprep.mubr.bf16.mxu0 0
      %1067 = vmatmul.mubr.bf16.gmra.mrb[0].mxu0 %v928
      %v1068 = vpop.f32.mrb[0].mxu0
      %v1069 = vadd.f32 0.0, %v1068
      %v1070 = vpop.f32.mrb[0].mxu0
      %v1071 = vpop.f32.mrb[0].mxu0
      %v1072 = vadd.f32 0.0, %v1071
      %v1073 = vpop.f32.mrb[0].mxu0
      %1074 = vmatprep.mubr.bf16.mxu0 0
      %1075 = vmatmul.mubr.bf16.gmra.mrb[0].mxu0 %v931
      %v1076 = vpop.f32.mrb[0].mxu0
      %v1077 = vadd.f32 0.0, %v1076
      %v1078 = vpop.f32.mrb[0].mxu0
      %v1079 = vpop.f32.mrb[0].mxu0
      %v1080 = vadd.f32 0.0, %v1079
      %v1081 = vpop.f32.mrb[0].mxu0
      %1082 = vmatprep.mubr.bf16.mxu0 0
      %1083 = vmatmul.mubr.bf16.gmra.mrb[0].mxu0 %v934
      %v1084 = vpop.f32.mrb[0].mxu0
      %v1085 = vadd.f32 0.0, %v1084
      %v1086 = vpop.f32.mrb[0].mxu0
      %v1087 = vpop.f32.mrb[0].mxu0
      %v1088 = vadd.f32 0.0, %v1087
      %v1089 = vpop.f32.mrb[0].mxu0
      %1090 = vmatprep.mubr.bf16.mxu0 0
      %1091 = vmatmul.mubr.bf16.gmra.mrb[0].mxu0 %v937
      %v1092 = vpop.f32.mrb[0].mxu0
      %v1093 = vadd.f32 0.0, %v1092
      %v1094 = vpop.f32.mrb[0].mxu0
      %v1095 = vpop.f32.mrb[0].mxu0
      %v1096 = vadd.f32 0.0, %v1095
      %v1097 = vpop.f32.mrb[0].mxu0
      %1098 = vmatprep.mubr.bf16.mxu0 0
      %1099 = vmatmul.mubr.bf16.gmra.mrb[0].mxu0 %v940
      %v1100 = vpop.f32.mrb[0].mxu0
      %v1101 = vadd.f32 0.0, %v1100
      %v1102 = vpop.f32.mrb[0].mxu0
      %v1103 = vpop.f32.mrb[0].mxu0
      %v1104 = vadd.f32 0.0, %v1103
      %v1105 = vpop.f32.mrb[0].mxu0
      %1106 = vmatprep.mubr.bf16.mxu0 0
      %1107 = vmatmul.mubr.bf16.gmra.mrb[0].mxu0 %v943
      %v1108 = vpop.f32.mrb[0].mxu0
      %v1109 = vadd.f32 0.0, %v1108
      %v1110 = vpop.f32.mrb[0].mxu0
      %v1111 = vpop.f32.mrb[0].mxu0
      %v1112 = vadd.f32 0.0, %v1111
      %v1113 = vpop.f32.mrb[0].mxu0
      %1114 = vmatprep.mubr.bf16.mxu0 0
      %1115 = vmatmul.mubr.bf16.gmra.mrb[0].mxu0 %v946
      %v1116 = vpop.f32.mrb[0].mxu0
      %v1117 = vadd.f32 0.0, %v1116
      %v1118 = vpop.f32.mrb[0].mxu0
      %v1119 = vpop.f32.mrb[0].mxu0
      %v1120 = vadd.f32 0.0, %v1119
      %v1121 = vpop.f32.mrb[0].mxu0
      %1122 = vmatprep.mubr.bf16.mxu0 0
      %1123 = vmatmul.mubr.bf16.gmra.mrb[0].mxu0 %v949
      %v1124 = vpop.f32.mrb[0].mxu0
      %v1125 = vadd.f32 0.0, %v1124
      %v1126 = vpop.f32.mrb[0].mxu0
      %v1127 = vpop.f32.mrb[0].mxu0
      %v1128 = vadd.f32 0.0, %v1127
      %v1129 = vpop.f32.mrb[0].mxu0
      %1130 = vdwg.mxu0
      %v1131 = vld [vmem:[#allocation2] sm:$0xff]
      %v1132 = vld [vmem:[#allocation2 + $0x8] sm:$0xff]
      %v1133 = vld [vmem:[#allocation2 + $0x10] sm:$0xff]
      %v1134 = vld [vmem:[#allocation2 + $0x18] sm:$0xff]
      %v1135 = vld [vmem:[#allocation2 + $0x20] sm:$0xff]
      %v1136 = vld [vmem:[#allocation2 + $0x28] sm:$0xff]
      %v1137 = vld [vmem:[#allocation2 + $0x30] sm:$0xff]
      %v1138 = vld [vmem:[#allocation2 + $0x38] sm:$0xff]
      %v1139 = vld [vmem:[#allocation2 + $0x40] sm:$0xff]
      %v1140 = vld [vmem:[#allocation2 + $0x48] sm:$0xff]
      %v1141 = vld [vmem:[#allocation2 + $0x50] sm:$0xff]
      %v1142 = vld [vmem:[#allocation2 + $0x58] sm:$0xff]
      %v1143 = vld [vmem:[#allocation2 + $0x60] sm:$0xff]
      %v1144 = vld [vmem:[#allocation2 + $0x68] sm:$0xff]
      %v1145 = vld [vmem:[#allocation2 + $0x70] sm:$0xff]
      %v1146 = vld [vmem:[#allocation2 + $0x78] sm:$0xff]
      %v1147 = vld [vmem:[#allocation2 + $0x80] sm:$0xff]
      %v1148 = vld [vmem:[#allocation2 + $0x88] sm:$0xff]
      %v1149 = vld [vmem:[#allocation2 + $0x90] sm:$0xff]
      %v1150 = vld [vmem:[#allocation2 + $0x98] sm:$0xff]
      %v1151 = vld [vmem:[#allocation2 + $0xa0] sm:$0xff]
      %v1152 = vld [vmem:[#allocation2 + $0xa8] sm:$0xff]
      %v1153 = vld [vmem:[#allocation2 + $0xb0] sm:$0xff]
      %v1154 = vld [vmem:[#allocation2 + $0xb8] sm:$0xff]
      %v1155 = vld [vmem:[#allocation2 + $0xc0] sm:$0xff]
      %v1156 = vld [vmem:[#allocation2 + $0xc8] sm:$0xff]
      %v1157 = vld [vmem:[#allocation2 + $0xd0] sm:$0xff]
      %v1158 = vld [vmem:[#allocation2 + $0xd8] sm:$0xff]
      %v1159 = vld [vmem:[#allocation2 + $0xe0] sm:$0xff]
      %v1160 = vld [vmem:[#allocation2 + $0xe8] sm:$0xff]
      %v1161 = vld [vmem:[#allocation2 + $0xf0] sm:$0xff]
      %v1162 = vld [vmem:[#allocation2 + $0xf8] sm:$0xff]
      %v1163 = vld [vmem:[#allocation2 + $0x100] sm:$0xff]
      %v1164 = vld [vmem:[#allocation2 + $0x108] sm:$0xff]
      %v1165 = vld [vmem:[#allocation2 + $0x110] sm:$0xff]
      %v1166 = vld [vmem:[#allocation2 + $0x118] sm:$0x3f]
      %v1167 = vadd.f32 %v1131, %v989
      %v1168 = vadd.f32 %v1132, %v992
      %v1169 = vadd.f32 %v1133, %v997
      %v1170 = vadd.f32 %v1134, %v1000
      %v1171 = vadd.f32 %v1135, %v1005
      %v1172 = vadd.f32 %v1136, %v1008
      %v1173 = vadd.f32 %v1137, %v1013
      %v1174 = vadd.f32 %v1138, %v1016
      %v1175 = vadd.f32 %v1139, %v1021
      %v1176 = vadd.f32 %v1140, %v1024
      %v1177 = vadd.f32 %v1141, %v1029
      %v1178 = vadd.f32 %v1142, %v1032
      %v1179 = vadd.f32 %v1143, %v1037
      %v1180 = vadd.f32 %v1144, %v1040
      %v1181 = vadd.f32 %v1145, %v1045
      %v1182 = vadd.f32 %v1146, %v1048
      %v1183 = vadd.f32 %v1147, %v1053
      %v1184 = vadd.f32 %v1148, %v1056
      %v1185 = vadd.f32 %v1149, %v1061
      %v1186 = vadd.f32 %v1150, %v1064
      %v1187 = vadd.f32 %v1151, %v1069
      %v1188 = vadd.f32 %v1152, %v1072
      %v1189 = vadd.f32 %v1153, %v1077
      %v1190 = vadd.f32 %v1154, %v1080
      %v1191 = vadd.f32 %v1155, %v1085
      %v1192 = vadd.f32 %v1156, %v1088
      %v1193 = vadd.f32 %v1157, %v1093
      %v1194 = vadd.f32 %v1158, %v1096
      %v1195 = vadd.f32 %v1159, %v1101
      %v1196 = vadd.f32 %v1160, %v1104
      %v1197 = vadd.f32 %v1161, %v1109
      %v1198 = vadd.f32 %v1162, %v1112
      %v1199 = vadd.f32 %v1163, %v1117
      %v1200 = vadd.f32 %v1164, %v1120
      %v1201 = vadd.f32 %v1165, %v1125
      %v1202 = vadd.f32 %v1166, %v1128
      %1203 = vst [vmem:[#allocation2] sm:$0xff] %v1167
      %1204 = vst [vmem:[#allocation2 + $0x8] sm:$0xff] %v1168
      %1205 = vst [vmem:[#allocation2 + $0x10] sm:$0xff] %v1169
      %1206 = vst [vmem:[#allocation2 + $0x18] sm:$0xff] %v1170
      %1207 = vst [vmem:[#allocation2 + $0x20] sm:$0xff] %v1171
      %1208 = vst [vmem:[#allocation2 + $0x28] sm:$0xff] %v1172
      %1209 = vst [vmem:[#allocation2 + $0x30] sm:$0xff] %v1173
      %1210 = vst [vmem:[#allocation2 + $0x38] sm:$0xff] %v1174
      %1211 = vst [vmem:[#allocation2 + $0x40] sm:$0xff] %v1175
      %1212 = vst [vmem:[#allocation2 + $0x48] sm:$0xff] %v1176
      %1213 = vst [vmem:[#allocation2 + $0x50] sm:$0xff] %v1177
      %1214 = vst [vmem:[#allocation2 + $0x58] sm:$0xff] %v1178
      %1215 = vst [vmem:[#allocation2 + $0x60] sm:$0xff] %v1179
      %1216 = vst [vmem:[#allocation2 + $0x68] sm:$0xff] %v1180
      %1217 = vst [vmem:[#allocation2 + $0x70] sm:$0xff] %v1181
      %1218 = vst [vmem:[#allocation2 + $0x78] sm:$0xff] %v1182
      %1219 = vst [vmem:[#allocation2 + $0x80] sm:$0xff] %v1183
      %1220 = vst [vmem:[#allocation2 + $0x88] sm:$0xff] %v1184
      %1221 = vst [vmem:[#allocation2 + $0x90] sm:$0xff] %v1185
      %1222 = vst [vmem:[#allocation2 + $0x98] sm:$0xff] %v1186
      %1223 = vst [vmem:[#allocation2 + $0xa0] sm:$0xff] %v1187
      %1224 = vst [vmem:[#allocation2 + $0xa8] sm:$0xff] %v1188
      %1225 = vst [vmem:[#allocation2 + $0xb0] sm:$0xff] %v1189
      %1226 = vst [vmem:[#allocation2 + $0xb8] sm:$0xff] %v1190
      %1227 = vst [vmem:[#allocation2 + $0xc0] sm:$0xff] %v1191
      %1228 = vst [vmem:[#allocation2 + $0xc8] sm:$0xff] %v1192
      %1229 = vst [vmem:[#allocation2 + $0xd0] sm:$0xff] %v1193
      %1230 = vst [vmem:[#allocation2 + $0xd8] sm:$0xff] %v1194
      %1231 = vst [vmem:[#allocation2 + $0xe0] sm:$0xff] %v1195
      %1232 = vst [vmem:[#allocation2 + $0xe8] sm:$0xff] %v1196
      %1233 = vst [vmem:[#allocation2 + $0xf0] sm:$0xff] %v1197
      %1234 = vst [vmem:[#allocation2 + $0xf8] sm:$0xff] %v1198
      %1235 = vst [vmem:[#allocation2 + $0x100] sm:$0xff] %v1199
      %1236 = vst [vmem:[#allocation2 + $0x108] sm:$0xff] %v1200
      %1237 = vst [vmem:[#allocation2 + $0x110] sm:$0xff] %v1201
      %1238 = vst [vmem:[#allocation2 + $0x118] sm:$0x3f] %v1202
      %v1239 = vld [vmem:[%s208] sm:$0xe]
      %v1240 = vld [vmem:[%s208 + $0x4] sm:$0xf]
      %v1241 = vld [vmem:[%s208 + $0x8] sm:$0xf]
      %v1242 = vld [vmem:[%s208 + $0xc] sm:$0xf]
      %v1243 = vld [vmem:[%s208 + $0x10] sm:$0xf]
      %v1244 = vld [vmem:[%s208 + $0x14] sm:$0xf]
      %v1245 = vld [vmem:[%s208 + $0x18] sm:$0xf]
      %v1246 = vld [vmem:[%s208 + $0x1c] sm:$0xf]
      %v1247 = vld [vmem:[%s208 + $0x20] sm:$0xf]
      %v1248 = vld [vmem:[%s208 + $0x24] sm:$0xf]
      %v1249 = vld [vmem:[%s208 + $0x28] sm:$0xf]
      %v1250 = vld [vmem:[%s208 + $0x2c] sm:$0xf]
      %v1251 = vld [vmem:[%s208 + $0x30] sm:$0xf]
      %v1252 = vld [vmem:[%s208 + $0x34] sm:$0xf]
      %v1253 = vld [vmem:[%s208 + $0x38] sm:$0xf]
      %v1254 = vld [vmem:[%s208 + $0x3c] sm:$0xf]
      %v1255 = vld [vmem:[%s208 + $0x40] sm:$0xf]
      %v1256 = vld [vmem:[%s208 + $0x44] sm:$0xf]
      %v1257 = vld [vmem:[%s208 + $0x48] sm:$0xf]
      %v1258 = vld [vmem:[%s208 + $0x4c] sm:$0xf]
      %v1259 = vld [vmem:[%s208 + $0x50] sm:$0xf]
      %v1260 = vld [vmem:[%s208 + $0x54] sm:$0xf]
      %v1261 = vld [vmem:[%s208 + $0x58] sm:$0xf]
      %v1262 = vld [vmem:[%s208 + $0x5c] sm:$0xf]
      %v1263 = vld [vmem:[%s208 + $0x60] sm:$0xf]
      %v1264 = vld [vmem:[%s208 + $0x64] sm:$0xf]
      %v1265 = vld [vmem:[%s208 + $0x68] sm:$0xf]
      %v1266 = vld [vmem:[%s208 + $0x6c] sm:$0xf]
      %v1267 = vld [vmem:[%s208 + $0x70] sm:$0xf]
      %v1268 = vld [vmem:[%s208 + $0x74] sm:$0xf]
      %v1269 = vld [vmem:[%s208 + $0x78] sm:$0xf]
      %v1270 = vld [vmem:[%s208 + $0x7c] sm:$0xf]
      %v1271 = vld [vmem:[%s208 + $0x80] sm:$0xf]
      %v1272 = vld [vmem:[%s208 + $0x84] sm:$0xf]
      %v1273 = vld [vmem:[%s208 + $0x88] sm:$0xf]
      %v1274 = vld [vmem:[%s208 + $0x8c] sm:$0xf]
      %s1275 = scalar_lea.vmem %s212, 8
      %v1276 = vld [vmem:[%s1275] sm:$0xf]
      %v1313 = vunpack.c.l.b16 %v1239
      %v1314 = vunpack.c.l.b16 %v1240
      %v1315 = vunpack.c.l.b16 %v1241
      %v1316 = vunpack.c.l.b16 %v1242
      %v1317 = vunpack.c.l.b16 %v1243
      %v1318 = vunpack.c.l.b16 %v1244
      %v1319 = vunpack.c.l.b16 %v1245
      %v1320 = vunpack.c.l.b16 %v1246
      %v1321 = vunpack.c.l.b16 %v1247
      %v1322 = vunpack.c.l.b16 %v1248
      %v1323 = vunpack.c.l.b16 %v1249
      %v1324 = vunpack.c.l.b16 %v1250
      %v1325 = vunpack.c.l.b16 %v1251
      %v1326 = vunpack.c.l.b16 %v1252
      %v1327 = vunpack.c.l.b16 %v1253
      %v1328 = vunpack.c.l.b16 %v1254
      %v1329 = vunpack.c.l.b16 %v1255
      %v1330 = vunpack.c.l.b16 %v1256
      %v1331 = vunpack.c.l.b16 %v1257
      %v1332 = vunpack.c.l.b16 %v1258
      %v1333 = vunpack.c.l.b16 %v1259
      %v1334 = vunpack.c.l.b16 %v1260
      %v1335 = vunpack.c.l.b16 %v1261
      %v1336 = vunpack.c.l.b16 %v1262
      %v1337 = vunpack.c.l.b16 %v1263
      %v1338 = vunpack.c.l.b16 %v1264
      %v1339 = vunpack.c.l.b16 %v1265
      %v1340 = vunpack.c.l.b16 %v1266
      %v1341 = vunpack.c.l.b16 %v1267
      %v1342 = vunpack.c.l.b16 %v1268
      %v1343 = vunpack.c.l.b16 %v1269
      %v1344 = vunpack.c.l.b16 %v1270
      %v1345 = vunpack.c.l.b16 %v1271
      %v1346 = vunpack.c.l.b16 %v1272
      %v1347 = vunpack.c.l.b16 %v1273
      %v1348 = vunpack.c.l.b16 %v1274
      %v1349 = vpack.c.b16 %v1314, %v1313
      %v1350 = vpack.c.b16 %v1316, %v1315
      %v1351 = vpack.c.b16 %v1318, %v1317
      %v1352 = vpack.c.b16 %v1320, %v1319
      %v1353 = vpack.c.b16 %v1322, %v1321
      %v1354 = vpack.c.b16 %v1324, %v1323
      %v1355 = vpack.c.b16 %v1326, %v1325
      %v1356 = vpack.c.b16 %v1328, %v1327
      %v1357 = vpack.c.b16 %v1330, %v1329
      %v1358 = vpack.c.b16 %v1332, %v1331
      %v1359 = vpack.c.b16 %v1334, %v1333
      %v1360 = vpack.c.b16 %v1336, %v1335
      %v1361 = vpack.c.b16 %v1338, %v1337
      %v1362 = vpack.c.b16 %v1340, %v1339
      %v1363 = vpack.c.b16 %v1342, %v1341
      %v1364 = vpack.c.b16 %v1344, %v1343
      %v1365 = vpack.c.b16 %v1346, %v1345
      %v1366 = vpack.c.b16 %v1348, %v1347
      %vm1367 = vcmask 1046528
      %v1368 = vrot.slane %v1349, 1
      %v1369 = vrot.slane %v1350, 1
      %v1370 = vsel %vm1367, %v1368, %v1369
      %v1371 = vrot.slane %v1351, 1
      %v1372 = vsel %vm1367, %v1369, %v1371
      %v1373 = vrot.slane %v1352, 1
      %v1374 = vsel %vm1367, %v1371, %v1373
      %v1375 = vrot.slane %v1353, 1
      %v1376 = vsel %vm1367, %v1373, %v1375
      %v1377 = vrot.slane %v1354, 1
      %v1378 = vsel %vm1367, %v1375, %v1377
      %v1379 = vrot.slane %v1355, 1
      %v1380 = vsel %vm1367, %v1377, %v1379
      %v1381 = vrot.slane %v1356, 1
      %v1382 = vsel %vm1367, %v1379, %v1381
      %v1383 = vrot.slane %v1357, 1
      %v1384 = vsel %vm1367, %v1381, %v1383
      %v1385 = vrot.slane %v1358, 1
      %v1386 = vsel %vm1367, %v1383, %v1385
      %v1387 = vrot.slane %v1359, 1
      %v1388 = vsel %vm1367, %v1385, %v1387
      %v1389 = vrot.slane %v1360, 1
      %v1390 = vsel %vm1367, %v1387, %v1389
      %v1391 = vrot.slane %v1361, 1
      %v1392 = vsel %vm1367, %v1389, %v1391
      %v1393 = vrot.slane %v1362, 1
      %v1394 = vsel %vm1367, %v1391, %v1393
      %v1395 = vrot.slane %v1363, 1
      %v1396 = vsel %vm1367, %v1393, %v1395
      %v1397 = vrot.slane %v1364, 1
      %v1398 = vsel %vm1367, %v1395, %v1397
      %v1399 = vrot.slane %v1365, 1
      %v1400 = vsel %vm1367, %v1397, %v1399
      %v1401 = vrot.slane %v1366, 1
      %v1402 = vsel %vm1367, %v1399, %v1401
      %v1404 = vsel %vm353, %v1370, 0
      %v1407 = vsel %vm353, %v1372, 0
      %v1410 = vsel %vm353, %v1374, 0
      %v1413 = vsel %vm353, %v1376, 0
      %v1416 = vsel %vm353, %v1378, 0
      %v1419 = vsel %vm353, %v1380, 0
      %v1422 = vsel %vm353, %v1382, 0
      %v1425 = vsel %vm353, %v1384, 0
      %v1428 = vsel %vm353, %v1386, 0
      %v1431 = vsel %vm353, %v1388, 0
      %v1434 = vsel %vm353, %v1390, 0
      %v1437 = vsel %vm353, %v1392, 0
      %v1440 = vsel %vm353, %v1394, 0
      %v1443 = vsel %vm353, %v1396, 0
      %v1446 = vsel %vm353, %v1398, 0
      %v1449 = vsel %vm353, %v1400, 0
      %v1452 = vsel %vm353, %v1402, 0
      %v1455 = vsel %vm353, %v1401, 0
      %v1458 = vsel %vm408, %v1276, 0
      %1460 = vmatprep.subr.bf16.mxu0 0
      %1461 = vmatpush1.bf16.msra.mxu0 %v1458
      %1462 = vmatprep.subr.bf16.mxu0 0
      %1463 = vmatpush1.bf16.msra.mxu0 0
      %1464 = vmatprep.subr.bf16.mxu0 0
      %1465 = vmatpush1.bf16.msra.mxu0 0
      %1466 = vmatprep.subr.bf16.mxu0 0
      %1467 = vmatpush1.bf16.msra.mxu0 0
      %1468 = vmatprep.subr.bf16.mxu0 0
      %1469 = vmatpush1.bf16.msra.mxu0 0
      %1470 = vmatprep.subr.bf16.mxu0 0
      %1471 = vmatpush1.bf16.msra.mxu0 0
      %1472 = vmatprep.subr.bf16.mxu0 0
      %1473 = vmatpush1.bf16.msra.mxu0 0
      %1474 = vmatprep.subr.bf16.mxu0 0
      %1475 = vmatpush1.bf16.msra.mxu0 0
      %1476 = vmatprep.subr.bf16.mxu0 0
      %1477 = vmatpush1.bf16.msra.mxu0 0
      %1478 = vmatprep.subr.bf16.mxu0 0
      %1479 = vmatpush1.bf16.msra.mxu0 0
      %1480 = vmatprep.subr.bf16.mxu0 0
      %1481 = vmatpush1.bf16.msra.mxu0 0
      %1482 = vmatprep.subr.bf16.mxu0 0
      %1483 = vmatpush1.bf16.msra.mxu0 0
      %1484 = vmatprep.subr.bf16.mxu0 0
      %1485 = vmatpush1.bf16.msra.mxu0 0
      %1486 = vmatprep.subr.bf16.mxu0 0
      %1487 = vmatpush1.bf16.msra.mxu0 0
      %1488 = vmatprep.subr.bf16.mxu0 0
      %1489 = vmatpush1.bf16.msra.mxu0 0
      %1490 = vmatprep.subr.bf16.mxu0 0
      %1491 = vmatpush1.bf16.msra.mxu0 0
      %1492 = vmatprep.mubr.bf16.mxu0 0
      %1493 = vmatmul.mubr.bf16.gmra.mrb[0].mxu0 %v1404
      %v1494 = vpop.f32.mrb[0].mxu0
      %v1495 = vadd.f32 0.0, %v1494
      %v1496 = vpop.f32.mrb[0].mxu0
      %v1497 = vpop.f32.mrb[0].mxu0
      %v1498 = vadd.f32 0.0, %v1497
      %v1499 = vpop.f32.mrb[0].mxu0
      %1500 = vmatprep.mubr.bf16.mxu0 0
      %1501 = vmatmul.mubr.bf16.gmra.mrb[0].mxu0 %v1407
      %v1502 = vpop.f32.mrb[0].mxu0
      %v1503 = vadd.f32 0.0, %v1502
      %v1504 = vpop.f32.mrb[0].mxu0
      %v1505 = vpop.f32.mrb[0].mxu0
      %v1506 = vadd.f32 0.0, %v1505
      %v1507 = vpop.f32.mrb[0].mxu0
      %1508 = vmatprep.mubr.bf16.mxu0 0
      %1509 = vmatmul.mubr.bf16.gmra.mrb[0].mxu0 %v1410
      %v1510 = vpop.f32.mrb[0].mxu0
      %v1511 = vadd.f32 0.0, %v1510
      %v1512 = vpop.f32.mrb[0].mxu0
      %v1513 = vpop.f32.mrb[0].mxu0
      %v1514 = vadd.f32 0.0, %v1513
      %v1515 = vpop.f32.mrb[0].mxu0
      %1516 = vmatprep.mubr.bf16.mxu0 0
      %1517 = vmatmul.mubr.bf16.gmra.mrb[0].mxu0 %v1413
      %v1518 = vpop.f32.mrb[0].mxu0
      %v1519 = vadd.f32 0.0, %v1518
      %v1520 = vpop.f32.mrb[0].mxu0
      %v1521 = vpop.f32.mrb[0].mxu0
      %v1522 = vadd.f32 0.0, %v1521
      %v1523 = vpop.f32.mrb[0].mxu0
      %1524 = vmatprep.mubr.bf16.mxu0 0
      %1525 = vmatmul.mubr.bf16.gmra.mrb[0].mxu0 %v1416
      %v1526 = vpop.f32.mrb[0].mxu0
      %v1527 = vadd.f32 0.0, %v1526
      %v1528 = vpop.f32.mrb[0].mxu0
      %v1529 = vpop.f32.mrb[0].mxu0
      %v1530 = vadd.f32 0.0, %v1529
      %v1531 = vpop.f32.mrb[0].mxu0
      %1532 = vmatprep.mubr.bf16.mxu0 0
      %1533 = vmatmul.mubr.bf16.gmra.mrb[0].mxu0 %v1419
      %v1534 = vpop.f32.mrb[0].mxu0
      %v1535 = vadd.f32 0.0, %v1534
      %v1536 = vpop.f32.mrb[0].mxu0
      %v1537 = vpop.f32.mrb[0].mxu0
      %v1538 = vadd.f32 0.0, %v1537
      %v1539 = vpop.f32.mrb[0].mxu0
      %1540 = vmatprep.mubr.bf16.mxu0 0
      %1541 = vmatmul.mubr.bf16.gmra.mrb[0].mxu0 %v1422
      %v1542 = vpop.f32.mrb[0].mxu0
      %v1543 = vadd.f32 0.0, %v1542
      %v1544 = vpop.f32.mrb[0].mxu0
      %v1545 = vpop.f32.mrb[0].mxu0
      %v1546 = vadd.f32 0.0, %v1545
      %v1547 = vpop.f32.mrb[0].mxu0
      %1548 = vmatprep.mubr.bf16.mxu0 0
      %1549 = vmatmul.mubr.bf16.gmra.mrb[0].mxu0 %v1425
      %v1550 = vpop.f32.mrb[0].mxu0
      %v1551 = vadd.f32 0.0, %v1550
      %v1552 = vpop.f32.mrb[0].mxu0
      %v1553 = vpop.f32.mrb[0].mxu0
      %v1554 = vadd.f32 0.0, %v1553
      %v1555 = vpop.f32.mrb[0].mxu0
      %1556 = vmatprep.mubr.bf16.mxu0 0
      %1557 = vmatmul.mubr.bf16.gmra.mrb[0].mxu0 %v1428
      %v1558 = vpop.f32.mrb[0].mxu0
      %v1559 = vadd.f32 0.0, %v1558
      %v1560 = vpop.f32.mrb[0].mxu0
      %v1561 = vpop.f32.mrb[0].mxu0
      %v1562 = vadd.f32 0.0, %v1561
      %v1563 = vpop.f32.mrb[0].mxu0
      %1564 = vmatprep.mubr.bf16.mxu0 0
      %1565 = vmatmul.mubr.bf16.gmra.mrb[0].mxu0 %v1431
      %v1566 = vpop.f32.mrb[0].mxu0
      %v1567 = vadd.f32 0.0, %v1566
      %v1568 = vpop.f32.mrb[0].mxu0
      %v1569 = vpop.f32.mrb[0].mxu0
      %v1570 = vadd.f32 0.0, %v1569
      %v1571 = vpop.f32.mrb[0].mxu0
      %1572 = vmatprep.mubr.bf16.mxu0 0
      %1573 = vmatmul.mubr.bf16.gmra.mrb[0].mxu0 %v1434
      %v1574 = vpop.f32.mrb[0].mxu0
      %v1575 = vadd.f32 0.0, %v1574
      %v1576 = vpop.f32.mrb[0].mxu0
      %v1577 = vpop.f32.mrb[0].mxu0
      %v1578 = vadd.f32 0.0, %v1577
      %v1579 = vpop.f32.mrb[0].mxu0
      %1580 = vmatprep.mubr.bf16.mxu0 0
      %1581 = vmatmul.mubr.bf16.gmra.mrb[0].mxu0 %v1437
      %v1582 = vpop.f32.mrb[0].mxu0
      %v1583 = vadd.f32 0.0, %v1582
      %v1584 = vpop.f32.mrb[0].mxu0
      %v1585 = vpop.f32.mrb[0].mxu0
      %v1586 = vadd.f32 0.0, %v1585
      %v1587 = vpop.f32.mrb[0].mxu0
      %1588 = vmatprep.mubr.bf16.mxu0 0
      %1589 = vmatmul.mubr.bf16.gmra.mrb[0].mxu0 %v1440
      %v1590 = vpop.f32.mrb[0].mxu0
      %v1591 = vadd.f32 0.0, %v1590
      %v1592 = vpop.f32.mrb[0].mxu0
      %v1593 = vpop.f32.mrb[0].mxu0
      %v1594 = vadd.f32 0.0, %v1593
      %v1595 = vpop.f32.mrb[0].mxu0
      %1596 = vmatprep.mubr.bf16.mxu0 0
      %1597 = vmatmul.mubr.bf16.gmra.mrb[0].mxu0 %v1443
      %v1598 = vpop.f32.mrb[0].mxu0
      %v1599 = vadd.f32 0.0, %v1598
      %v1600 = vpop.f32.mrb[0].mxu0
      %v1601 = vpop.f32.mrb[0].mxu0
      %v1602 = vadd.f32 0.0, %v1601
      %v1603 = vpop.f32.mrb[0].mxu0
      %1604 = vmatprep.mubr.bf16.mxu0 0
      %1605 = vmatmul.mubr.bf16.gmra.mrb[0].mxu0 %v1446
      %v1606 = vpop.f32.mrb[0].mxu0
      %v1607 = vadd.f32 0.0, %v1606
      %v1608 = vpop.f32.mrb[0].mxu0
      %v1609 = vpop.f32.mrb[0].mxu0
      %v1610 = vadd.f32 0.0, %v1609
      %v1611 = vpop.f32.mrb[0].mxu0
      %1612 = vmatprep.mubr.bf16.mxu0 0
      %1613 = vmatmul.mubr.bf16.gmra.mrb[0].mxu0 %v1449
      %v1614 = vpop.f32.mrb[0].mxu0
      %v1615 = vadd.f32 0.0, %v1614
      %v1616 = vpop.f32.mrb[0].mxu0
      %v1617 = vpop.f32.mrb[0].mxu0
      %v1618 = vadd.f32 0.0, %v1617
      %v1619 = vpop.f32.mrb[0].mxu0
      %1620 = vmatprep.mubr.bf16.mxu0 0
      %1621 = vmatmul.mubr.bf16.gmra.mrb[0].mxu0 %v1452
      %v1622 = vpop.f32.mrb[0].mxu0
      %v1623 = vadd.f32 0.0, %v1622
      %v1624 = vpop.f32.mrb[0].mxu0
      %v1625 = vpop.f32.mrb[0].mxu0
      %v1626 = vadd.f32 0.0, %v1625
      %v1627 = vpop.f32.mrb[0].mxu0
      %1628 = vmatprep.mubr.bf16.mxu0 0
      %1629 = vmatmul.mubr.bf16.gmra.mrb[0].mxu0 %v1455
      %v1630 = vpop.f32.mrb[0].mxu0
      %v1631 = vadd.f32 0.0, %v1630
      %v1632 = vpop.f32.mrb[0].mxu0
      %v1633 = vpop.f32.mrb[0].mxu0
      %v1634 = vadd.f32 0.0, %v1633
      %v1635 = vpop.f32.mrb[0].mxu0
      %1636 = vdwg.mxu0
      %v1637 = vld [vmem:[#allocation2] sm:$0xff]
      %v1638 = vld [vmem:[#allocation2 + $0x8] sm:$0xff]
      %v1639 = vld [vmem:[#allocation2 + $0x10] sm:$0xff]
      %v1640 = vld [vmem:[#allocation2 + $0x18] sm:$0xff]
      %v1641 = vld [vmem:[#allocation2 + $0x20] sm:$0xff]
      %v1642 = vld [vmem:[#allocation2 + $0x28] sm:$0xff]
      %v1643 = vld [vmem:[#allocation2 + $0x30] sm:$0xff]
      %v1644 = vld [vmem:[#allocation2 + $0x38] sm:$0xff]
      %v1645 = vld [vmem:[#allocation2 + $0x40] sm:$0xff]
      %v1646 = vld [vmem:[#allocation2 + $0x48] sm:$0xff]
      %v1647 = vld [vmem:[#allocation2 + $0x50] sm:$0xff]
      %v1648 = vld [vmem:[#allocation2 + $0x58] sm:$0xff]
      %v1649 = vld [vmem:[#allocation2 + $0x60] sm:$0xff]
      %v1650 = vld [vmem:[#allocation2 + $0x68] sm:$0xff]
      %v1651 = vld [vmem:[#allocation2 + $0x70] sm:$0xff]
      %v1652 = vld [vmem:[#allocation2 + $0x78] sm:$0xff]
      %v1653 = vld [vmem:[#allocation2 + $0x80] sm:$0xff]
      %v1654 = vld [vmem:[#allocation2 + $0x88] sm:$0xff]
      %v1655 = vld [vmem:[#allocation2 + $0x90] sm:$0xff]
      %v1656 = vld [vmem:[#allocation2 + $0x98] sm:$0xff]
      %v1657 = vld [vmem:[#allocation2 + $0xa0] sm:$0xff]
      %v1658 = vld [vmem:[#allocation2 + $0xa8] sm:$0xff]
      %v1659 = vld [vmem:[#allocation2 + $0xb0] sm:$0xff]
      %v1660 = vld [vmem:[#allocation2 + $0xb8] sm:$0xff]
      %v1661 = vld [vmem:[#allocation2 + $0xc0] sm:$0xff]
      %v1662 = vld [vmem:[#allocation2 + $0xc8] sm:$0xff]
      %v1663 = vld [vmem:[#allocation2 + $0xd0] sm:$0xff]
      %v1664 = vld [vmem:[#allocation2 + $0xd8] sm:$0xff]
      %v1665 = vld [vmem:[#allocation2 + $0xe0] sm:$0xff]
      %v1666 = vld [vmem:[#allocation2 + $0xe8] sm:$0xff]
      %v1667 = vld [vmem:[#allocation2 + $0xf0] sm:$0xff]
      %v1668 = vld [vmem:[#allocation2 + $0xf8] sm:$0xff]
      %v1669 = vld [vmem:[#allocation2 + $0x100] sm:$0xff]
      %v1670 = vld [vmem:[#allocation2 + $0x108] sm:$0xff]
      %v1671 = vld [vmem:[#allocation2 + $0x110] sm:$0xff]
      %v1672 = vld [vmem:[#allocation2 + $0x118] sm:$0x3f]
      %v1673 = vadd.f32 %v1637, %v1495
      %v1674 = vadd.f32 %v1638, %v1498
      %v1675 = vadd.f32 %v1639, %v1503
      %v1676 = vadd.f32 %v1640, %v1506
      %v1677 = vadd.f32 %v1641, %v1511
      %v1678 = vadd.f32 %v1642, %v1514
      %v1679 = vadd.f32 %v1643, %v1519
      %v1680 = vadd.f32 %v1644, %v1522
      %v1681 = vadd.f32 %v1645, %v1527
      %v1682 = vadd.f32 %v1646, %v1530
      %v1683 = vadd.f32 %v1647, %v1535
      %v1684 = vadd.f32 %v1648, %v1538
      %v1685 = vadd.f32 %v1649, %v1543
      %v1686 = vadd.f32 %v1650, %v1546
      %v1687 = vadd.f32 %v1651, %v1551
      %v1688 = vadd.f32 %v1652, %v1554
      %v1689 = vadd.f32 %v1653, %v1559
      %v1690 = vadd.f32 %v1654, %v1562
      %v1691 = vadd.f32 %v1655, %v1567
      %v1692 = vadd.f32 %v1656, %v1570
      %v1693 = vadd.f32 %v1657, %v1575
      %v1694 = vadd.f32 %v1658, %v1578
      %v1695 = vadd.f32 %v1659, %v1583
      %v1696 = vadd.f32 %v1660, %v1586
      %v1697 = vadd.f32 %v1661, %v1591
      %v1698 = vadd.f32 %v1662, %v1594
      %v1699 = vadd.f32 %v1663, %v1599
      %v1700 = vadd.f32 %v1664, %v1602
      %v1701 = vadd.f32 %v1665, %v1607
      %v1702 = vadd.f32 %v1666, %v1610
      %v1703 = vadd.f32 %v1667, %v1615
      %v1704 = vadd.f32 %v1668, %v1618
      %v1705 = vadd.f32 %v1669, %v1623
      %v1706 = vadd.f32 %v1670, %v1626
      %v1707 = vadd.f32 %v1671, %v1631
      %v1708 = vadd.f32 %v1672, %v1634
      %1709 = vst [vmem:[#allocation2] sm:$0xff] %v1673
      %1710 = vst [vmem:[#allocation2 + $0x8] sm:$0xff] %v1674
      %1711 = vst [vmem:[#allocation2 + $0x10] sm:$0xff] %v1675
      %1712 = vst [vmem:[#allocation2 + $0x18] sm:$0xff] %v1676
      %1713 = vst [vmem:[#allocation2 + $0x20] sm:$0xff] %v1677
      %1714 = vst [vmem:[#allocation2 + $0x28] sm:$0xff] %v1678
      %1715 = vst [vmem:[#allocation2 + $0x30] sm:$0xff] %v1679
      %1716 = vst [vmem:[#allocation2 + $0x38] sm:$0xff] %v1680
      %1717 = vst [vmem:[#allocation2 + $0x40] sm:$0xff] %v1681
      %1718 = vst [vmem:[#allocation2 + $0x48] sm:$0xff] %v1682
      %1719 = vst [vmem:[#allocation2 + $0x50] sm:$0xff] %v1683
      %1720 = vst [vmem:[#allocation2 + $0x58] sm:$0xff] %v1684
      %1721 = vst [vmem:[#allocation2 + $0x60] sm:$0xff] %v1685
      %1722 = vst [vmem:[#allocation2 + $0x68] sm:$0xff] %v1686
      %1723 = vst [vmem:[#allocation2 + $0x70] sm:$0xff] %v1687
      %1724 = vst [vmem:[#allocation2 + $0x78] sm:$0xff] %v1688
      %1725 = vst [vmem:[#allocation2 + $0x80] sm:$0xff] %v1689
      %1726 = vst [vmem:[#allocation2 + $0x88] sm:$0xff] %v1690
      %1727 = vst [vmem:[#allocation2 + $0x90] sm:$0xff] %v1691
      %1728 = vst [vmem:[#allocation2 + $0x98] sm:$0xff] %v1692
      %1729 = vst [vmem:[#allocation2 + $0xa0] sm:$0xff] %v1693
      %1730 = vst [vmem:[#allocation2 + $0xa8] sm:$0xff] %v1694
      %1731 = vst [vmem:[#allocation2 + $0xb0] sm:$0xff] %v1695
      %1732 = vst [vmem:[#allocation2 + $0xb8] sm:$0xff] %v1696
      %1733 = vst [vmem:[#allocation2 + $0xc0] sm:$0xff] %v1697
      %1734 = vst [vmem:[#allocation2 + $0xc8] sm:$0xff] %v1698
      %1735 = vst [vmem:[#allocation2 + $0xd0] sm:$0xff] %v1699
      %1736 = vst [vmem:[#allocation2 + $0xd8] sm:$0xff] %v1700
      %1737 = vst [vmem:[#allocation2 + $0xe0] sm:$0xff] %v1701
      %1738 = vst [vmem:[#allocation2 + $0xe8] sm:$0xff] %v1702
      %1739 = vst [vmem:[#allocation2 + $0xf0] sm:$0xff] %v1703
      %1740 = vst [vmem:[#allocation2 + $0xf8] sm:$0xff] %v1704
      %1741 = vst [vmem:[#allocation2 + $0x100] sm:$0xff] %v1705
      %1742 = vst [vmem:[#allocation2 + $0x108] sm:$0xff] %v1706
      %1743 = vst [vmem:[#allocation2 + $0x110] sm:$0xff] %v1707
      %1744 = vst [vmem:[#allocation2 + $0x118] sm:$0x3f] %v1708
      %v1745 = vld [vmem:[%s208 + $0x8] sm:$0xe]
      %v1746 = vld [vmem:[%s208 + $0xc] sm:$0xf]
      %v1747 = vld [vmem:[%s208 + $0x10] sm:$0xf]
      %v1748 = vld [vmem:[%s208 + $0x14] sm:$0xf]
      %v1749 = vld [vmem:[%s208 + $0x18] sm:$0xf]
      %v1750 = vld [vmem:[%s208 + $0x1c] sm:$0xf]
      %v1751 = vld [vmem:[%s208 + $0x20] sm:$0xf]
      %v1752 = vld [vmem:[%s208 + $0x24] sm:$0xf]
      %v1753 = vld [vmem:[%s208 + $0x28] sm:$0xf]
      %v1754 = vld [vmem:[%s208 + $0x2c] sm:$0xf]
      %v1755 = vld [vmem:[%s208 + $0x30] sm:$0xf]
      %v1756 = vld [vmem:[%s208 + $0x34] sm:$0xf]
      %v1757 = vld [vmem:[%s208 + $0x38] sm:$0xf]
      %v1758 = vld [vmem:[%s208 + $0x3c] sm:$0xf]
      %v1759 = vld [vmem:[%s208 + $0x40] sm:$0xf]
      %v1760 = vld [vmem:[%s208 + $0x44] sm:$0xf]
      %v1761 = vld [vmem:[%s208 + $0x48] sm:$0xf]
      %v1762 = vld [vmem:[%s208 + $0x4c] sm:$0xf]
      %v1763 = vld [vmem:[%s208 + $0x50] sm:$0xf]
      %v1764 = vld [vmem:[%s208 + $0x54] sm:$0xf]
      %v1765 = vld [vmem:[%s208 + $0x58] sm:$0xf]
      %v1766 = vld [vmem:[%s208 + $0x5c] sm:$0xf]
      %v1767 = vld [vmem:[%s208 + $0x60] sm:$0xf]
      %v1768 = vld [vmem:[%s208 + $0x64] sm:$0xf]
      %v1769 = vld [vmem:[%s208 + $0x68] sm:$0xf]
      %v1770 = vld [vmem:[%s208 + $0x6c] sm:$0xf]
      %v1771 = vld [vmem:[%s208 + $0x70] sm:$0xf]
      %v1772 = vld [vmem:[%s208 + $0x74] sm:$0xf]
      %v1773 = vld [vmem:[%s208 + $0x78] sm:$0xf]
      %v1774 = vld [vmem:[%s208 + $0x7c] sm:$0xf]
      %v1775 = vld [vmem:[%s208 + $0x80] sm:$0xf]
      %v1776 = vld [vmem:[%s208 + $0x84] sm:$0xf]
      %v1777 = vld [vmem:[%s208 + $0x88] sm:$0xf]
      %v1778 = vld [vmem:[%s208 + $0x8c] sm:$0xf]
      %v1779 = vld [vmem:[%s208 + $0x90] sm:$0xf]
      %v1780 = vld [vmem:[%s208 + $0x94] sm:$0xf]
      %s1781 = scalar_lea.vmem %s212, 12
      %v1782 = vld [vmem:[%s1781] sm:$0xf]
      %v1819 = vunpack.c.l.b16 %v1745
      %v1820 = vunpack.c.l.b16 %v1746
      %v1821 = vunpack.c.l.b16 %v1747
      %v1822 = vunpack.c.l.b16 %v1748
      %v1823 = vunpack.c.l.b16 %v1749
      %v1824 = vunpack.c.l.b16 %v1750
      %v1825 = vunpack.c.l.b16 %v1751
      %v1826 = vunpack.c.l.b16 %v1752
      %v1827 = vunpack.c.l.b16 %v1753
      %v1828 = vunpack.c.l.b16 %v1754
      %v1829 = vunpack.c.l.b16 %v1755
      %v1830 = vunpack.c.l.b16 %v1756
      %v1831 = vunpack.c.l.b16 %v1757
      %v1832 = vunpack.c.l.b16 %v1758
      %v1833 = vunpack.c.l.b16 %v1759
      %v1834 = vunpack.c.l.b16 %v1760
      %v1835 = vunpack.c.l.b16 %v1761
      %v1836 = vunpack.c.l.b16 %v1762
      %v1837 = vunpack.c.l.b16 %v1763
      %v1838 = vunpack.c.l.b16 %v1764
      %v1839 = vunpack.c.l.b16 %v1765
      %v1840 = vunpack.c.l.b16 %v1766
      %v1841 = vunpack.c.l.b16 %v1767
      %v1842 = vunpack.c.l.b16 %v1768
      %v1843 = vunpack.c.l.b16 %v1769
      %v1844 = vunpack.c.l.b16 %v1770
      %v1845 = vunpack.c.l.b16 %v1771
      %v1846 = vunpack.c.l.b16 %v1772
      %v1847 = vunpack.c.l.b16 %v1773
      %v1848 = vunpack.c.l.b16 %v1774
      %v1849 = vunpack.c.l.b16 %v1775
      %v1850 = vunpack.c.l.b16 %v1776
      %v1851 = vunpack.c.l.b16 %v1777
      %v1852 = vunpack.c.l.b16 %v1778
      %v1853 = vunpack.c.l.b16 %v1779
      %v1854 = vunpack.c.l.b16 %v1780
      %v1855 = vpack.c.b16 %v1820, %v1819
      %v1856 = vpack.c.b16 %v1822, %v1821
      %v1857 = vpack.c.b16 %v1824, %v1823
      %v1858 = vpack.c.b16 %v1826, %v1825
      %v1859 = vpack.c.b16 %v1828, %v1827
      %v1860 = vpack.c.b16 %v1830, %v1829
      %v1861 = vpack.c.b16 %v1832, %v1831
      %v1862 = vpack.c.b16 %v1834, %v1833
      %v1863 = vpack.c.b16 %v1836, %v1835
      %v1864 = vpack.c.b16 %v1838, %v1837
      %v1865 = vpack.c.b16 %v1840, %v1839
      %v1866 = vpack.c.b16 %v1842, %v1841
      %v1867 = vpack.c.b16 %v1844, %v1843
      %v1868 = vpack.c.b16 %v1846, %v1845
      %v1869 = vpack.c.b16 %v1848, %v1847
      %v1870 = vpack.c.b16 %v1850, %v1849
      %v1871 = vpack.c.b16 %v1852, %v1851
      %v1872 = vpack.c.b16 %v1854, %v1853
      %v1873 = vrot.slane %v1855, 1
      %v1874 = vrot.slane %v1856, 1
      %v1875 = vsel %vm1367, %v1873, %v1874
      %v1876 = vrot.slane %v1857, 1
      %v1877 = vsel %vm1367, %v1874, %v1876
      %v1878 = vrot.slane %v1858, 1
      %v1879 = vsel %vm1367, %v1876, %v1878
      %v1880 = vrot.slane %v1859, 1
      %v1881 = vsel %vm1367, %v1878, %v1880
      %v1882 = vrot.slane %v1860, 1
      %v1883 = vsel %vm1367, %v1880, %v1882
      %v1884 = vrot.slane %v1861, 1
      %v1885 = vsel %vm1367, %v1882, %v1884
      %v1886 = vrot.slane %v1862, 1
      %v1887 = vsel %vm1367, %v1884, %v1886
      %v1888 = vrot.slane %v1863, 1
      %v1889 = vsel %vm1367, %v1886, %v1888
      %v1890 = vrot.slane %v1864, 1
      %v1891 = vsel %vm1367, %v1888, %v1890
      %v1892 = vrot.slane %v1865, 1
      %v1893 = vsel %vm1367, %v1890, %v1892
      %v1894 = vrot.slane %v1866, 1
      %v1895 = vsel %vm1367, %v1892, %v1894
      %v1896 = vrot.slane %v1867, 1
      %v1897 = vsel %vm1367, %v1894, %v1896
      %v1898 = vrot.slane %v1868, 1
      %v1899 = vsel %vm1367, %v1896, %v1898
      %v1900 = vrot.slane %v1869, 1
      %v1901 = vsel %vm1367, %v1898, %v1900
      %v1902 = vrot.slane %v1870, 1
      %v1903 = vsel %vm1367, %v1900, %v1902
      %v1904 = vrot.slane %v1871, 1
      %v1905 = vsel %vm1367, %v1902, %v1904
      %v1906 = vrot.slane %v1872, 1
      %v1907 = vsel %vm1367, %v1904, %v1906
      %v1909 = vsel %vm353, %v1875, 0
      %v1912 = vsel %vm353, %v1877, 0
      %v1915 = vsel %vm353, %v1879, 0
      %v1918 = vsel %vm353, %v1881, 0
      %v1921 = vsel %vm353, %v1883, 0
      %v1924 = vsel %vm353, %v1885, 0
      %v1927 = vsel %vm353, %v1887, 0
      %v1930 = vsel %vm353, %v1889, 0
      %v1933 = vsel %vm353, %v1891, 0
      %v1936 = vsel %vm353, %v1893, 0
      %v1939 = vsel %vm353, %v1895, 0
      %v1942 = vsel %vm353, %v1897, 0
      %v1945 = vsel %vm353, %v1899, 0
      %v1948 = vsel %vm353, %v1901, 0
      %v1951 = vsel %vm353, %v1903, 0
      %v1954 = vsel %vm353, %v1905, 0
      %v1957 = vsel %vm353, %v1907, 0
      %v1960 = vsel %vm353, %v1906, 0
      %v1963 = vsel %vm408, %v1782, 0
      %1965 = vmatprep.subr.bf16.mxu0 0
      %1966 = vmatpush1.bf16.msra.mxu0 %v1963
      %1967 = vmatprep.subr.bf16.mxu0 0
      %1968 = vmatpush1.bf16.msra.mxu0 0
      %1969 = vmatprep.subr.bf16.mxu0 0
      %1970 = vmatpush1.bf16.msra.mxu0 0
      %1971 = vmatprep.subr.bf16.mxu0 0
      %1972 = vmatpush1.bf16.msra.mxu0 0
      %1973 = vmatprep.subr.bf16.mxu0 0
      %1974 = vmatpush1.bf16.msra.mxu0 0
      %1975 = vmatprep.subr.bf16.mxu0 0
      %1976 = vmatpush1.bf16.msra.mxu0 0
      %1977 = vmatprep.subr.bf16.mxu0 0
      %1978 = vmatpush1.bf16.msra.mxu0 0
      %1979 = vmatprep.subr.bf16.mxu0 0
      %1980 = vmatpush1.bf16.msra.mxu0 0
      %1981 = vmatprep.subr.bf16.mxu0 0
      %1982 = vmatpush1.bf16.msra.mxu0 0
      %1983 = vmatprep.subr.bf16.mxu0 0
      %1984 = vmatpush1.bf16.msra.mxu0 0
      %1985 = vmatprep.subr.bf16.mxu0 0
      %1986 = vmatpush1.bf16.msra.mxu0 0
      %1987 = vmatprep.subr.bf16.mxu0 0
      %1988 = vmatpush1.bf16.msra.mxu0 0
      %1989 = vmatprep.subr.bf16.mxu0 0
      %1990 = vmatpush1.bf16.msra.mxu0 0
      %1991 = vmatprep.subr.bf16.mxu0 0
      %1992 = vmatpush1.bf16.msra.mxu0 0
      %1993 = vmatprep.subr.bf16.mxu0 0
      %1994 = vmatpush1.bf16.msra.mxu0 0
      %1995 = vmatprep.subr.bf16.mxu0 0
      %1996 = vmatpush1.bf16.msra.mxu0 0
      %1997 = vmatprep.mubr.bf16.mxu0 0
      %1998 = vmatmul.mubr.bf16.gmra.mrb[0].mxu0 %v1909
      %v1999 = vpop.f32.mrb[0].mxu0
      %v2000 = vadd.f32 0.0, %v1999
      %v2001 = vpop.f32.mrb[0].mxu0
      %v2002 = vpop.f32.mrb[0].mxu0
      %v2003 = vadd.f32 0.0, %v2002
      %v2004 = vpop.f32.mrb[0].mxu0
      %2005 = vmatprep.mubr.bf16.mxu0 0
      %2006 = vmatmul.mubr.bf16.gmra.mrb[0].mxu0 %v1912
      %v2007 = vpop.f32.mrb[0].mxu0
      %v2008 = vadd.f32 0.0, %v2007
      %v2009 = vpop.f32.mrb[0].mxu0
      %v2010 = vpop.f32.mrb[0].mxu0
      %v2011 = vadd.f32 0.0, %v2010
      %v2012 = vpop.f32.mrb[0].mxu0
      %2013 = vmatprep.mubr.bf16.mxu0 0
      %2014 = vmatmul.mubr.bf16.gmra.mrb[0].mxu0 %v1915
      %v2015 = vpop.f32.mrb[0].mxu0
      %v2016 = vadd.f32 0.0, %v2015
      %v2017 = vpop.f32.mrb[0].mxu0
      %v2018 = vpop.f32.mrb[0].mxu0
      %v2019 = vadd.f32 0.0, %v2018
      %v2020 = vpop.f32.mrb[0].mxu0
      %2021 = vmatprep.mubr.bf16.mxu0 0
      %2022 = vmatmul.mubr.bf16.gmra.mrb[0].mxu0 %v1918
      %v2023 = vpop.f32.mrb[0].mxu0
      %v2024 = vadd.f32 0.0, %v2023
      %v2025 = vpop.f32.mrb[0].mxu0
      %v2026 = vpop.f32.mrb[0].mxu0
      %v2027 = vadd.f32 0.0, %v2026
      %v2028 = vpop.f32.mrb[0].mxu0
      %2029 = vmatprep.mubr.bf16.mxu0 0
      %2030 = vmatmul.mubr.bf16.gmra.mrb[0].mxu0 %v1921
      %v2031 = vpop.f32.mrb[0].mxu0
      %v2032 = vadd.f32 0.0, %v2031
      %v2033 = vpop.f32.mrb[0].mxu0
      %v2034 = vpop.f32.mrb[0].mxu0
      %v2035 = vadd.f32 0.0, %v2034
      %v2036 = vpop.f32.mrb[0].mxu0
      %2037 = vmatprep.mubr.bf16.mxu0 0
      %2038 = vmatmul.mubr.bf16.gmra.mrb[0].mxu0 %v1924
      %v2039 = vpop.f32.mrb[0].mxu0
      %v2040 = vadd.f32 0.0, %v2039
      %v2041 = vpop.f32.mrb[0].mxu0
      %v2042 = vpop.f32.mrb[0].mxu0
      %v2043 = vadd.f32 0.0, %v2042
      %v2044 = vpop.f32.mrb[0].mxu0
      %2045 = vmatprep.mubr.bf16.mxu0 0
      %2046 = vmatmul.mubr.bf16.gmra.mrb[0].mxu0 %v1927
      %v2047 = vpop.f32.mrb[0].mxu0
      %v2048 = vadd.f32 0.0, %v2047
      %v2049 = vpop.f32.mrb[0].mxu0
      %v2050 = vpop.f32.mrb[0].mxu0
      %v2051 = vadd.f32 0.0, %v2050
      %v2052 = vpop.f32.mrb[0].mxu0
      %2053 = vmatprep.mubr.bf16.mxu0 0
      %2054 = vmatmul.mubr.bf16.gmra.mrb[0].mxu0 %v1930
      %v2055 = vpop.f32.mrb[0].mxu0
      %v2056 = vadd.f32 0.0, %v2055
      %v2057 = vpop.f32.mrb[0].mxu0
      %v2058 = vpop.f32.mrb[0].mxu0
      %v2059 = vadd.f32 0.0, %v2058
      %v2060 = vpop.f32.mrb[0].mxu0
      %2061 = vmatprep.mubr.bf16.mxu0 0
      %2062 = vmatmul.mubr.bf16.gmra.mrb[0].mxu0 %v1933
      %v2063 = vpop.f32.mrb[0].mxu0
      %v2064 = vadd.f32 0.0, %v2063
      %v2065 = vpop.f32.mrb[0].mxu0
      %v2066 = vpop.f32.mrb[0].mxu0
      %v2067 = vadd.f32 0.0, %v2066
      %v2068 = vpop.f32.mrb[0].mxu0
      %2069 = vmatprep.mubr.bf16.mxu0 0
      %2070 = vmatmul.mubr.bf16.gmra.mrb[0].mxu0 %v1936
      %v2071 = vpop.f32.mrb[0].mxu0
      %v2072 = vadd.f32 0.0, %v2071
      %v2073 = vpop.f32.mrb[0].mxu0
      %v2074 = vpop.f32.mrb[0].mxu0
      %v2075 = vadd.f32 0.0, %v2074
      %v2076 = vpop.f32.mrb[0].mxu0
      %2077 = vmatprep.mubr.bf16.mxu0 0
      %2078 = vmatmul.mubr.bf16.gmra.mrb[0].mxu0 %v1939
      %v2079 = vpop.f32.mrb[0].mxu0
      %v2080 = vadd.f32 0.0, %v2079
      %v2081 = vpop.f32.mrb[0].mxu0
      %v2082 = vpop.f32.mrb[0].mxu0
      %v2083 = vadd.f32 0.0, %v2082
      %v2084 = vpop.f32.mrb[0].mxu0
      %2085 = vmatprep.mubr.bf16.mxu0 0
      %2086 = vmatmul.mubr.bf16.gmra.mrb[0].mxu0 %v1942
      %v2087 = vpop.f32.mrb[0].mxu0
      %v2088 = vadd.f32 0.0, %v2087
      %v2089 = vpop.f32.mrb[0].mxu0
      %v2090 = vpop.f32.mrb[0].mxu0
      %v2091 = vadd.f32 0.0, %v2090
      %v2092 = vpop.f32.mrb[0].mxu0
      %2093 = vmatprep.mubr.bf16.mxu0 0
      %2094 = vmatmul.mubr.bf16.gmra.mrb[0].mxu0 %v1945
      %v2095 = vpop.f32.mrb[0].mxu0
      %v2096 = vadd.f32 0.0, %v2095
      %v2097 = vpop.f32.mrb[0].mxu0
      %v2098 = vpop.f32.mrb[0].mxu0
      %v2099 = vadd.f32 0.0, %v2098
      %v2100 = vpop.f32.mrb[0].mxu0
      %2101 = vmatprep.mubr.bf16.mxu0 0
      %2102 = vmatmul.mubr.bf16.gmra.mrb[0].mxu0 %v1948
      %v2103 = vpop.f32.mrb[0].mxu0
      %v2104 = vadd.f32 0.0, %v2103
      %v2105 = vpop.f32.mrb[0].mxu0
      %v2106 = vpop.f32.mrb[0].mxu0
      %v2107 = vadd.f32 0.0, %v2106
      %v2108 = vpop.f32.mrb[0].mxu0
      %2109 = vmatprep.mubr.bf16.mxu0 0
      %2110 = vmatmul.mubr.bf16.gmra.mrb[0].mxu0 %v1951
      %v2111 = vpop.f32.mrb[0].mxu0
      %v2112 = vadd.f32 0.0, %v2111
      %v2113 = vpop.f32.mrb[0].mxu0
      %v2114 = vpop.f32.mrb[0].mxu0
      %v2115 = vadd.f32 0.0, %v2114
      %v2116 = vpop.f32.mrb[0].mxu0
      %2117 = vmatprep.mubr.bf16.mxu0 0
      %2118 = vmatmul.mubr.bf16.gmra.mrb[0].mxu0 %v1954
      %v2119 = vpop.f32.mrb[0].mxu0
      %v2120 = vadd.f32 0.0, %v2119
      %v2121 = vpop.f32.mrb[0].mxu0
      %v2122 = vpop.f32.mrb[0].mxu0
      %v2123 = vadd.f32 0.0, %v2122
      %v2124 = vpop.f32.mrb[0].mxu0
      %2125 = vmatprep.mubr.bf16.mxu0 0
      %2126 = vmatmul.mubr.bf16.gmra.mrb[0].mxu0 %v1957
      %v2127 = vpop.f32.mrb[0].mxu0
      %v2128 = vadd.f32 0.0, %v2127
      %v2129 = vpop.f32.mrb[0].mxu0
      %v2130 = vpop.f32.mrb[0].mxu0
      %v2131 = vadd.f32 0.0, %v2130
      %v2132 = vpop.f32.mrb[0].mxu0
      %2133 = vmatprep.mubr.bf16.mxu0 0
      %2134 = vmatmul.mubr.bf16.gmra.mrb[0].mxu0 %v1960
      %v2135 = vpop.f32.mrb[0].mxu0
      %v2136 = vadd.f32 0.0, %v2135
      %v2137 = vpop.f32.mrb[0].mxu0
      %v2138 = vpop.f32.mrb[0].mxu0
      %v2139 = vadd.f32 0.0, %v2138
      %v2140 = vpop.f32.mrb[0].mxu0
      %2141 = vdwg.mxu0
      %v2142 = vld [vmem:[#allocation2] sm:$0xff]
      %v2143 = vld [vmem:[#allocation2 + $0x8] sm:$0xff]
      %v2144 = vld [vmem:[#allocation2 + $0x10] sm:$0xff]
      %v2145 = vld [vmem:[#allocation2 + $0x18] sm:$0xff]
      %v2146 = vld [vmem:[#allocation2 + $0x20] sm:$0xff]
      %v2147 = vld [vmem:[#allocation2 + $0x28] sm:$0xff]
      %v2148 = vld [vmem:[#allocation2 + $0x30] sm:$0xff]
      %v2149 = vld [vmem:[#allocation2 + $0x38] sm:$0xff]
      %v2150 = vld [vmem:[#allocation2 + $0x40] sm:$0xff]
      %v2151 = vld [vmem:[#allocation2 + $0x48] sm:$0xff]
      %v2152 = vld [vmem:[#allocation2 + $0x50] sm:$0xff]
      %v2153 = vld [vmem:[#allocation2 + $0x58] sm:$0xff]
      %v2154 = vld [vmem:[#allocation2 + $0x60] sm:$0xff]
      %v2155 = vld [vmem:[#allocation2 + $0x68] sm:$0xff]
      %v2156 = vld [vmem:[#allocation2 + $0x70] sm:$0xff]
      %v2157 = vld [vmem:[#allocation2 + $0x78] sm:$0xff]
      %v2158 = vld [vmem:[#allocation2 + $0x80] sm:$0xff]
      %v2159 = vld [vmem:[#allocation2 + $0x88] sm:$0xff]
      %v2160 = vld [vmem:[#allocation2 + $0x90] sm:$0xff]
      %v2161 = vld [vmem:[#allocation2 + $0x98] sm:$0xff]
      %v2162 = vld [vmem:[#allocation2 + $0xa0] sm:$0xff]
      %v2163 = vld [vmem:[#allocation2 + $0xa8] sm:$0xff]
      %v2164 = vld [vmem:[#allocation2 + $0xb0] sm:$0xff]
      %v2165 = vld [vmem:[#allocation2 + $0xb8] sm:$0xff]
      %v2166 = vld [vmem:[#allocation2 + $0xc0] sm:$0xff]
      %v2167 = vld [vmem:[#allocation2 + $0xc8] sm:$0xff]
      %v2168 = vld [vmem:[#allocation2 + $0xd0] sm:$0xff]
      %v2169 = vld [vmem:[#allocation2 + $0xd8] sm:$0xff]
      %v2170 = vld [vmem:[#allocation2 + $0xe0] sm:$0xff]
      %v2171 = vld [vmem:[#allocation2 + $0xe8] sm:$0xff]
      %v2172 = vld [vmem:[#allocation2 + $0xf0] sm:$0xff]
      %v2173 = vld [vmem:[#allocation2 + $0xf8] sm:$0xff]
      %v2174 = vld [vmem:[#allocation2 + $0x100] sm:$0xff]
      %v2175 = vld [vmem:[#allocation2 + $0x108] sm:$0xff]
      %v2176 = vld [vmem:[#allocation2 + $0x110] sm:$0xff]
      %v2177 = vld [vmem:[#allocation2 + $0x118] sm:$0x3f]
      %v2178 = vadd.f32 %v2142, %v2000
      %v2179 = vadd.f32 %v2143, %v2003
      %v2180 = vadd.f32 %v2144, %v2008
      %v2181 = vadd.f32 %v2145, %v2011
      %v2182 = vadd.f32 %v2146, %v2016
      %v2183 = vadd.f32 %v2147, %v2019
      %v2184 = vadd.f32 %v2148, %v2024
      %v2185 = vadd.f32 %v2149, %v2027
      %v2186 = vadd.f32 %v2150, %v2032
      %v2187 = vadd.f32 %v2151, %v2035
      %v2188 = vadd.f32 %v2152, %v2040
      %v2189 = vadd.f32 %v2153, %v2043
      %v2190 = vadd.f32 %v2154, %v2048
      %v2191 = vadd.f32 %v2155, %v2051
      %v2192 = vadd.f32 %v2156, %v2056
      %v2193 = vadd.f32 %v2157, %v2059
      %v2194 = vadd.f32 %v2158, %v2064
      %v2195 = vadd.f32 %v2159, %v2067
      %v2196 = vadd.f32 %v2160, %v2072
      %v2197 = vadd.f32 %v2161, %v2075
      %v2198 = vadd.f32 %v2162, %v2080
      %v2199 = vadd.f32 %v2163, %v2083
      %v2200 = vadd.f32 %v2164, %v2088
      %v2201 = vadd.f32 %v2165, %v2091
      %v2202 = vadd.f32 %v2166, %v2096
      %v2203 = vadd.f32 %v2167, %v2099
      %v2204 = vadd.f32 %v2168, %v2104
      %v2205 = vadd.f32 %v2169, %v2107
      %v2206 = vadd.f32 %v2170, %v2112
      %v2207 = vadd.f32 %v2171, %v2115
      %v2208 = vadd.f32 %v2172, %v2120
      %v2209 = vadd.f32 %v2173, %v2123
      %v2210 = vadd.f32 %v2174, %v2128
      %v2211 = vadd.f32 %v2175, %v2131
      %v2212 = vadd.f32 %v2176, %v2136
      %v2213 = vadd.f32 %v2177, %v2139
      %2214 = vst [vmem:[#allocation2] sm:$0xff] %v2178
      %2215 = vst [vmem:[#allocation2 + $0x8] sm:$0xff] %v2179
      %2216 = vst [vmem:[#allocation2 + $0x10] sm:$0xff] %v2180
      %2217 = vst [vmem:[#allocation2 + $0x18] sm:$0xff] %v2181
      %2218 = vst [vmem:[#allocation2 + $0x20] sm:$0xff] %v2182
      %2219 = vst [vmem:[#allocation2 + $0x28] sm:$0xff] %v2183
      %2220 = vst [vmem:[#allocation2 + $0x30] sm:$0xff] %v2184
      %2221 = vst [vmem:[#allocation2 + $0x38] sm:$0xff] %v2185
      %2222 = vst [vmem:[#allocation2 + $0x40] sm:$0xff] %v2186
      %2223 = vst [vmem:[#allocation2 + $0x48] sm:$0xff] %v2187
      %2224 = vst [vmem:[#allocation2 + $0x50] sm:$0xff] %v2188
      %2225 = vst [vmem:[#allocation2 + $0x58] sm:$0xff] %v2189
      %2226 = vst [vmem:[#allocation2 + $0x60] sm:$0xff] %v2190
      %2227 = vst [vmem:[#allocation2 + $0x68] sm:$0xff] %v2191
      %2228 = vst [vmem:[#allocation2 + $0x70] sm:$0xff] %v2192
      %2229 = vst [vmem:[#allocation2 + $0x78] sm:$0xff] %v2193
      %2230 = vst [vmem:[#allocation2 + $0x80] sm:$0xff] %v2194
      %2231 = vst [vmem:[#allocation2 + $0x88] sm:$0xff] %v2195
      %2232 = vst [vmem:[#allocation2 + $0x90] sm:$0xff] %v2196
      %2233 = vst [vmem:[#allocation2 + $0x98] sm:$0xff] %v2197
      %2234 = vst [vmem:[#allocation2 + $0xa0] sm:$0xff] %v2198
      %2235 = vst [vmem:[#allocation2 + $0xa8] sm:$0xff] %v2199
      %2236 = vst [vmem:[#allocation2 + $0xb0] sm:$0xff] %v2200
      %2237 = vst [vmem:[#allocation2 + $0xb8] sm:$0xff] %v2201
      %2238 = vst [vmem:[#allocation2 + $0xc0] sm:$0xff] %v2202
      %2239 = vst [vmem:[#allocation2 + $0xc8] sm:$0xff] %v2203
      %2240 = vst [vmem:[#allocation2 + $0xd0] sm:$0xff] %v2204
      %2241 = vst [vmem:[#allocation2 + $0xd8] sm:$0xff] %v2205
      %2242 = vst [vmem:[#allocation2 + $0xe0] sm:$0xff] %v2206
      %2243 = vst [vmem:[#allocation2 + $0xe8] sm:$0xff] %v2207
      %2244 = vst [vmem:[#allocation2 + $0xf0] sm:$0xff] %v2208
      %2245 = vst [vmem:[#allocation2 + $0xf8] sm:$0xff] %v2209
      %2246 = vst [vmem:[#allocation2 + $0x100] sm:$0xff] %v2210
      %2247 = vst [vmem:[#allocation2 + $0x108] sm:$0xff] %v2211
      %2248 = vst [vmem:[#allocation2 + $0x110] sm:$0xff] %v2212
      %2249 = vst [vmem:[#allocation2 + $0x118] sm:$0x3f] %v2213
      %v2250 = vld [vmem:[%s208 + $0x8] sm:$0xe]
      %v2251 = vld [vmem:[%s208 + $0xc] sm:$0xf]
      %v2252 = vld [vmem:[%s208 + $0x10] sm:$0xf]
      %v2253 = vld [vmem:[%s208 + $0x14] sm:$0xf]
      %v2254 = vld [vmem:[%s208 + $0x18] sm:$0xf]
      %v2255 = vld [vmem:[%s208 + $0x1c] sm:$0xf]
      %v2256 = vld [vmem:[%s208 + $0x20] sm:$0xf]
      %v2257 = vld [vmem:[%s208 + $0x24] sm:$0xf]
      %v2258 = vld [vmem:[%s208 + $0x28] sm:$0xf]
      %v2259 = vld [vmem:[%s208 + $0x2c] sm:$0xf]
      %v2260 = vld [vmem:[%s208 + $0x30] sm:$0xf]
      %v2261 = vld [vmem:[%s208 + $0x34] sm:$0xf]
      %v2262 = vld [vmem:[%s208 + $0x38] sm:$0xf]
      %v2263 = vld [vmem:[%s208 + $0x3c] sm:$0xf]
      %v2264 = vld [vmem:[%s208 + $0x40] sm:$0xf]
      %v2265 = vld [vmem:[%s208 + $0x44] sm:$0xf]
      %v2266 = vld [vmem:[%s208 + $0x48] sm:$0xf]
      %v2267 = vld [vmem:[%s208 + $0x4c] sm:$0xf]
      %v2268 = vld [vmem:[%s208 + $0x50] sm:$0xf]
      %v2269 = vld [vmem:[%s208 + $0x54] sm:$0xf]
      %v2270 = vld [vmem:[%s208 + $0x58] sm:$0xf]
      %v2271 = vld [vmem:[%s208 + $0x5c] sm:$0xf]
      %v2272 = vld [vmem:[%s208 + $0x60] sm:$0xf]
      %v2273 = vld [vmem:[%s208 + $0x64] sm:$0xf]
      %v2274 = vld [vmem:[%s208 + $0x68] sm:$0xf]
      %v2275 = vld [vmem:[%s208 + $0x6c] sm:$0xf]
      %v2276 = vld [vmem:[%s208 + $0x70] sm:$0xf]
      %v2277 = vld [vmem:[%s208 + $0x74] sm:$0xf]
      %v2278 = vld [vmem:[%s208 + $0x78] sm:$0xf]
      %v2279 = vld [vmem:[%s208 + $0x7c] sm:$0xf]
      %v2280 = vld [vmem:[%s208 + $0x80] sm:$0xf]
      %v2281 = vld [vmem:[%s208 + $0x84] sm:$0xf]
      %v2282 = vld [vmem:[%s208 + $0x88] sm:$0xf]
      %v2283 = vld [vmem:[%s208 + $0x8c] sm:$0xf]
      %v2284 = vld [vmem:[%s208 + $0x90] sm:$0xf]
      %v2285 = vld [vmem:[%s208 + $0x94] sm:$0xf]
      %v2286 = vld [vmem:[%s208 + $0x98] sm:$0x1]
      %s2287 = scalar_lea.vmem %s212, 16
      %v2288 = vld [vmem:[%s2287] sm:$0xf]
      %v2326 = vunpack.c.l.b16 %v2250
      %v2327 = vunpack.c.l.b16 %v2251
      %v2328 = vunpack.c.l.b16 %v2252
      %v2329 = vunpack.c.l.b16 %v2253
      %v2330 = vunpack.c.l.b16 %v2254
      %v2331 = vunpack.c.l.b16 %v2255
      %v2332 = vunpack.c.l.b16 %v2256
      %v2333 = vunpack.c.l.b16 %v2257
      %v2334 = vunpack.c.l.b16 %v2258
      %v2335 = vunpack.c.l.b16 %v2259
      %v2336 = vunpack.c.l.b16 %v2260
      %v2337 = vunpack.c.l.b16 %v2261
      %v2338 = vunpack.c.l.b16 %v2262
      %v2339 = vunpack.c.l.b16 %v2263
      %v2340 = vunpack.c.l.b16 %v2264
      %v2341 = vunpack.c.l.b16 %v2265
      %v2342 = vunpack.c.l.b16 %v2266
      %v2343 = vunpack.c.l.b16 %v2267
      %v2344 = vunpack.c.l.b16 %v2268
      %v2345 = vunpack.c.l.b16 %v2269
      %v2346 = vunpack.c.l.b16 %v2270
      %v2347 = vunpack.c.l.b16 %v2271
      %v2348 = vunpack.c.l.b16 %v2272
      %v2349 = vunpack.c.l.b16 %v2273
      %v2350 = vunpack.c.l.b16 %v2274
      %v2351 = vunpack.c.l.b16 %v2275
      %v2352 = vunpack.c.l.b16 %v2276
      %v2353 = vunpack.c.l.b16 %v2277
      %v2354 = vunpack.c.l.b16 %v2278
      %v2355 = vunpack.c.l.b16 %v2279
      %v2356 = vunpack.c.l.b16 %v2280
      %v2357 = vunpack.c.l.b16 %v2281
      %v2358 = vunpack.c.l.b16 %v2282
      %v2359 = vunpack.c.l.b16 %v2283
      %v2360 = vunpack.c.l.b16 %v2284
      %v2361 = vunpack.c.l.b16 %v2285
      %v2362 = vunpack.c.l.b16 %v2286
      %v2363 = vpack.c.b16 %v2327, %v2326
      %v2364 = vpack.c.b16 %v2329, %v2328
      %v2365 = vpack.c.b16 %v2331, %v2330
      %v2366 = vpack.c.b16 %v2333, %v2332
      %v2367 = vpack.c.b16 %v2335, %v2334
      %v2368 = vpack.c.b16 %v2337, %v2336
      %v2369 = vpack.c.b16 %v2339, %v2338
      %v2370 = vpack.c.b16 %v2341, %v2340
      %v2371 = vpack.c.b16 %v2343, %v2342
      %v2372 = vpack.c.b16 %v2345, %v2344
      %v2373 = vpack.c.b16 %v2347, %v2346
      %v2374 = vpack.c.b16 %v2349, %v2348
      %v2375 = vpack.c.b16 %v2351, %v2350
      %v2376 = vpack.c.b16 %v2353, %v2352
      %v2377 = vpack.c.b16 %v2355, %v2354
      %v2378 = vpack.c.b16 %v2357, %v2356
      %v2379 = vpack.c.b16 %v2359, %v2358
      %v2380 = vpack.c.b16 %v2361, %v2360
      %v2381 = vpack.c.b16 %v2362, %v2362
      %vm2382 = vsmask.f32 6400
      %v2384 = vshrl.u32 %v2363, 16
      %v2386 = vrot.slane %v2384, 1
      %v2387 = vshll.u32 %v2363, 16
      %v2389 = vrot.slane %v2387, 2
      %v2390 = vor.u32 %v2386, %v2389
      %v2392 = vshrl.u32 %v2364, 16
      %v2394 = vrot.slane %v2392, 1
      %v2395 = vshll.u32 %v2364, 16
      %v2397 = vrot.slane %v2395, 2
      %v2398 = vor.u32 %v2394, %v2397
      %v2399 = vsel %vm2382, %v2390, %v2398
      %v2401 = vshrl.u32 %v2365, 16
      %v2403 = vrot.slane %v2401, 1
      %v2404 = vshll.u32 %v2365, 16
      %v2406 = vrot.slane %v2404, 2
      %v2407 = vor.u32 %v2403, %v2406
      %v2408 = vsel %vm2382, %v2398, %v2407
      %v2410 = vshrl.u32 %v2366, 16
      %v2412 = vrot.slane %v2410, 1
      %v2413 = vshll.u32 %v2366, 16
      %v2415 = vrot.slane %v2413, 2
      %v2416 = vor.u32 %v2412, %v2415
      %v2417 = vsel %vm2382, %v2407, %v2416
      %v2419 = vshrl.u32 %v2367, 16
      %v2421 = vrot.slane %v2419, 1
      %v2422 = vshll.u32 %v2367, 16
      %v2424 = vrot.slane %v2422, 2
      %v2425 = vor.u32 %v2421, %v2424
      %v2426 = vsel %vm2382, %v2416, %v2425
      %v2428 = vshrl.u32 %v2368, 16
      %v2430 = vrot.slane %v2428, 1
      %v2431 = vshll.u32 %v2368, 16
      %v2433 = vrot.slane %v2431, 2
      %v2434 = vor.u32 %v2430, %v2433
      %v2435 = vsel %vm2382, %v2425, %v2434
      %v2437 = vshrl.u32 %v2369, 16
      %v2439 = vrot.slane %v2437, 1
      %v2440 = vshll.u32 %v2369, 16
      %v2442 = vrot.slane %v2440, 2
      %v2443 = vor.u32 %v2439, %v2442
      %v2444 = vsel %vm2382, %v2434, %v2443
      %v2446 = vshrl.u32 %v2370, 16
      %v2448 = vrot.slane %v2446, 1
      %v2449 = vshll.u32 %v2370, 16
      %v2451 = vrot.slane %v2449, 2
      %v2452 = vor.u32 %v2448, %v2451
      %v2453 = vsel %vm2382, %v2443, %v2452
      %v2455 = vshrl.u32 %v2371, 16
      %v2457 = vrot.slane %v2455, 1
      %v2458 = vshll.u32 %v2371, 16
      %v2460 = vrot.slane %v2458, 2
      %v2461 = vor.u32 %v2457, %v2460
      %v2462 = vsel %vm2382, %v2452, %v2461
      %v2464 = vshrl.u32 %v2372, 16
      %v2466 = vrot.slane %v2464, 1
      %v2467 = vshll.u32 %v2372, 16
      %v2469 = vrot.slane %v2467, 2
      %v2470 = vor.u32 %v2466, %v2469
      %v2471 = vsel %vm2382, %v2461, %v2470
      %v2473 = vshrl.u32 %v2373, 16
      %v2475 = vrot.slane %v2473, 1
      %v2476 = vshll.u32 %v2373, 16
      %v2478 = vrot.slane %v2476, 2
      %v2479 = vor.u32 %v2475, %v2478
      %v2480 = vsel %vm2382, %v2470, %v2479
      %v2482 = vshrl.u32 %v2374, 16
      %v2484 = vrot.slane %v2482, 1
      %v2485 = vshll.u32 %v2374, 16
      %v2487 = vrot.slane %v2485, 2
      %v2488 = vor.u32 %v2484, %v2487
      %v2489 = vsel %vm2382, %v2479, %v2488
      %v2491 = vshrl.u32 %v2375, 16
      %v2493 = vrot.slane %v2491, 1
      %v2494 = vshll.u32 %v2375, 16
      %v2496 = vrot.slane %v2494, 2
      %v2497 = vor.u32 %v2493, %v2496
      %v2498 = vsel %vm2382, %v2488, %v2497
      %v2500 = vshrl.u32 %v2376, 16
      %v2502 = vrot.slane %v2500, 1
      %v2503 = vshll.u32 %v2376, 16
      %v2505 = vrot.slane %v2503, 2
      %v2506 = vor.u32 %v2502, %v2505
      %v2507 = vsel %vm2382, %v2497, %v2506
      %v2509 = vshrl.u32 %v2377, 16
      %v2511 = vrot.slane %v2509, 1
      %v2512 = vshll.u32 %v2377, 16
      %v2514 = vrot.slane %v2512, 2
      %v2515 = vor.u32 %v2511, %v2514
      %v2516 = vsel %vm2382, %v2506, %v2515
      %v2518 = vshrl.u32 %v2378, 16
      %v2520 = vrot.slane %v2518, 1
      %v2521 = vshll.u32 %v2378, 16
      %v2523 = vrot.slane %v2521, 2
      %v2524 = vor.u32 %v2520, %v2523
      %v2525 = vsel %vm2382, %v2515, %v2524
      %v2527 = vshrl.u32 %v2379, 16
      %v2529 = vrot.slane %v2527, 1
      %v2530 = vshll.u32 %v2379, 16
      %v2532 = vrot.slane %v2530, 2
      %v2533 = vor.u32 %v2529, %v2532
      %v2534 = vsel %vm2382, %v2524, %v2533
      %v2536 = vshrl.u32 %v2380, 16
      %v2538 = vrot.slane %v2536, 1
      %v2539 = vshll.u32 %v2380, 16
      %v2541 = vrot.slane %v2539, 2
      %v2542 = vor.u32 %v2538, %v2541
      %v2543 = vsel %vm2382, %v2533, %v2542
      %v2545 = vshll.u32 %v2381, 16
      %v2547 = vrot.slane %v2545, 2
      %v2548 = vsel %vm2382, %v2542, %v2547
      %v2550 = vsel %vm353, %v2399, 0
      %v2553 = vsel %vm353, %v2408, 0
      %v2556 = vsel %vm353, %v2417, 0
      %v2559 = vsel %vm353, %v2426, 0
      %v2562 = vsel %vm353, %v2435, 0
      %v2565 = vsel %vm353, %v2444, 0
      %v2568 = vsel %vm353, %v2453, 0
      %v2571 = vsel %vm353, %v2462, 0
      %v2574 = vsel %vm353, %v2471, 0
      %v2577 = vsel %vm353, %v2480, 0
      %v2580 = vsel %vm353, %v2489, 0
      %v2583 = vsel %vm353, %v2498, 0
      %v2586 = vsel %vm353, %v2507, 0
      %v2589 = vsel %vm353, %v2516, 0
      %v2592 = vsel %vm353, %v2525, 0
      %v2595 = vsel %vm353, %v2534, 0
      %v2598 = vsel %vm353, %v2543, 0
      %v2601 = vsel %vm353, %v2548, 0
      %v2604 = vsel %vm408, %v2288, 0
      %2606 = vmatprep.subr.bf16.mxu0 0
      %2607 = vmatpush1.bf16.msra.mxu0 %v2604
      %2608 = vmatprep.subr.bf16.mxu0 0
      %2609 = vmatpush1.bf16.msra.mxu0 0
      %2610 = vmatprep.subr.bf16.mxu0 0
      %2611 = vmatpush1.bf16.msra.mxu0 0
      %2612 = vmatprep.subr.bf16.mxu0 0
      %2613 = vmatpush1.bf16.msra.mxu0 0
      %2614 = vmatprep.subr.bf16.mxu0 0
      %2615 = vmatpush1.bf16.msra.mxu0 0
      %2616 = vmatprep.subr.bf16.mxu0 0
      %2617 = vmatpush1.bf16.msra.mxu0 0
      %2618 = vmatprep.subr.bf16.mxu0 0
      %2619 = vmatpush1.bf16.msra.mxu0 0
      %2620 = vmatprep.subr.bf16.mxu0 0
      %2621 = vmatpush1.bf16.msra.mxu0 0
      %2622 = vmatprep.subr.bf16.mxu0 0
      %2623 = vmatpush1.bf16.msra.mxu0 0
      %2624 = vmatprep.subr.bf16.mxu0 0
      %2625 = vmatpush1.bf16.msra.mxu0 0
      %2626 = vmatprep.subr.bf16.mxu0 0
      %2627 = vmatpush1.bf16.msra.mxu0 0
      %2628 = vmatprep.subr.bf16.mxu0 0
      %2629 = vmatpush1.bf16.msra.mxu0 0
      %2630 = vmatprep.subr.bf16.mxu0 0
      %2631 = vmatpush1.bf16.msra.mxu0 0
      %2632 = vmatprep.subr.bf16.mxu0 0
      %2633 = vmatpush1.bf16.msra.mxu0 0
      %2634 = vmatprep.subr.bf16.mxu0 0
      %2635 = vmatpush1.bf16.msra.mxu0 0
      %2636 = vmatprep.subr.bf16.mxu0 0
      %2637 = vmatpush1.bf16.msra.mxu0 0
      %2638 = vmatprep.mubr.bf16.mxu0 0
      %2639 = vmatmul.mubr.bf16.gmra.mrb[0].mxu0 %v2550
      %v2640 = vpop.f32.mrb[0].mxu0
      %v2641 = vadd.f32 0.0, %v2640
      %v2642 = vpop.f32.mrb[0].mxu0
      %v2643 = vpop.f32.mrb[0].mxu0
      %v2644 = vadd.f32 0.0, %v2643
      %v2645 = vpop.f32.mrb[0].mxu0
      %2646 = vmatprep.mubr.bf16.mxu0 0
      %2647 = vmatmul.mubr.bf16.gmra.mrb[0].mxu0 %v2553
      %v2648 = vpop.f32.mrb[0].mxu0
      %v2649 = vadd.f32 0.0, %v2648
      %v2650 = vpop.f32.mrb[0].mxu0
      %v2651 = vpop.f32.mrb[0].mxu0
      %v2652 = vadd.f32 0.0, %v2651
      %v2653 = vpop.f32.mrb[0].mxu0
      %2654 = vmatprep.mubr.bf16.mxu0 0
      %2655 = vmatmul.mubr.bf16.gmra.mrb[0].mxu0 %v2556
      %v2656 = vpop.f32.mrb[0].mxu0
      %v2657 = vadd.f32 0.0, %v2656
      %v2658 = vpop.f32.mrb[0].mxu0
      %v2659 = vpop.f32.mrb[0].mxu0
      %v2660 = vadd.f32 0.0, %v2659
      %v2661 = vpop.f32.mrb[0].mxu0
      %2662 = vmatprep.mubr.bf16.mxu0 0
      %2663 = vmatmul.mubr.bf16.gmra.mrb[0].mxu0 %v2559
      %v2664 = vpop.f32.mrb[0].mxu0
      %v2665 = vadd.f32 0.0, %v2664
      %v2666 = vpop.f32.mrb[0].mxu0
      %v2667 = vpop.f32.mrb[0].mxu0
      %v2668 = vadd.f32 0.0, %v2667
      %v2669 = vpop.f32.mrb[0].mxu0
      %2670 = vmatprep.mubr.bf16.mxu0 0
      %2671 = vmatmul.mubr.bf16.gmra.mrb[0].mxu0 %v2562
      %v2672 = vpop.f32.mrb[0].mxu0
      %v2673 = vadd.f32 0.0, %v2672
      %v2674 = vpop.f32.mrb[0].mxu0
      %v2675 = vpop.f32.mrb[0].mxu0
      %v2676 = vadd.f32 0.0, %v2675
      %v2677 = vpop.f32.mrb[0].mxu0
      %2678 = vmatprep.mubr.bf16.mxu0 0
      %2679 = vmatmul.mubr.bf16.gmra.mrb[0].mxu0 %v2565
      %v2680 = vpop.f32.mrb[0].mxu0
      %v2681 = vadd.f32 0.0, %v2680
      %v2682 = vpop.f32.mrb[0].mxu0
      %v2683 = vpop.f32.mrb[0].mxu0
      %v2684 = vadd.f32 0.0, %v2683
      %v2685 = vpop.f32.mrb[0].mxu0
      %2686 = vmatprep.mubr.bf16.mxu0 0
      %2687 = vmatmul.mubr.bf16.gmra.mrb[0].mxu0 %v2568
      %v2688 = vpop.f32.mrb[0].mxu0
      %v2689 = vadd.f32 0.0, %v2688
      %v2690 = vpop.f32.mrb[0].mxu0
      %v2691 = vpop.f32.mrb[0].mxu0
      %v2692 = vadd.f32 0.0, %v2691
      %v2693 = vpop.f32.mrb[0].mxu0
      %2694 = vmatprep.mubr.bf16.mxu0 0
      %2695 = vmatmul.mubr.bf16.gmra.mrb[0].mxu0 %v2571
      %v2696 = vpop.f32.mrb[0].mxu0
      %v2697 = vadd.f32 0.0, %v2696
      %v2698 = vpop.f32.mrb[0].mxu0
      %v2699 = vpop.f32.mrb[0].mxu0
      %v2700 = vadd.f32 0.0, %v2699
      %v2701 = vpop.f32.mrb[0].mxu0
      %2702 = vmatprep.mubr.bf16.mxu0 0
      %2703 = vmatmul.mubr.bf16.gmra.mrb[0].mxu0 %v2574
      %v2704 = vpop.f32.mrb[0].mxu0
      %v2705 = vadd.f32 0.0, %v2704
      %v2706 = vpop.f32.mrb[0].mxu0
      %v2707 = vpop.f32.mrb[0].mxu0
      %v2708 = vadd.f32 0.0, %v2707
      %v2709 = vpop.f32.mrb[0].mxu0
      %2710 = vmatprep.mubr.bf16.mxu0 0
      %2711 = vmatmul.mubr.bf16.gmra.mrb[0].mxu0 %v2577
      %v2712 = vpop.f32.mrb[0].mxu0
      %v2713 = vadd.f32 0.0, %v2712
      %v2714 = vpop.f32.mrb[0].mxu0
      %v2715 = vpop.f32.mrb[0].mxu0
      %v2716 = vadd.f32 0.0, %v2715
      %v2717 = vpop.f32.mrb[0].mxu0
      %2718 = vmatprep.mubr.bf16.mxu0 0
      %2719 = vmatmul.mubr.bf16.gmra.mrb[0].mxu0 %v2580
      %v2720 = vpop.f32.mrb[0].mxu0
      %v2721 = vadd.f32 0.0, %v2720
      %v2722 = vpop.f32.mrb[0].mxu0
      %v2723 = vpop.f32.mrb[0].mxu0
      %v2724 = vadd.f32 0.0, %v2723
      %v2725 = vpop.f32.mrb[0].mxu0
      %2726 = vmatprep.mubr.bf16.mxu0 0
      %2727 = vmatmul.mubr.bf16.gmra.mrb[0].mxu0 %v2583
      %v2728 = vpop.f32.mrb[0].mxu0
      %v2729 = vadd.f32 0.0, %v2728
      %v2730 = vpop.f32.mrb[0].mxu0
      %v2731 = vpop.f32.mrb[0].mxu0
      %v2732 = vadd.f32 0.0, %v2731
      %v2733 = vpop.f32.mrb[0].mxu0
      %2734 = vmatprep.mubr.bf16.mxu0 0
      %2735 = vmatmul.mubr.bf16.gmra.mrb[0].mxu0 %v2586
      %v2736 = vpop.f32.mrb[0].mxu0
      %v2737 = vadd.f32 0.0, %v2736
      %v2738 = vpop.f32.mrb[0].mxu0
      %v2739 = vpop.f32.mrb[0].mxu0
      %v2740 = vadd.f32 0.0, %v2739
      %v2741 = vpop.f32.mrb[0].mxu0
      %2742 = vmatprep.mubr.bf16.mxu0 0
      %2743 = vmatmul.mubr.bf16.gmra.mrb[0].mxu0 %v2589
      %v2744 = vpop.f32.mrb[0].mxu0
      %v2745 = vadd.f32 0.0, %v2744
      %v2746 = vpop.f32.mrb[0].mxu0
      %v2747 = vpop.f32.mrb[0].mxu0
      %v2748 = vadd.f32 0.0, %v2747
      %v2749 = vpop.f32.mrb[0].mxu0
      %2750 = vmatprep.mubr.bf16.mxu0 0
      %2751 = vmatmul.mubr.bf16.gmra.mrb[0].mxu0 %v2592
      %v2752 = vpop.f32.mrb[0].mxu0
      %v2753 = vadd.f32 0.0, %v2752
      %v2754 = vpop.f32.mrb[0].mxu0
      %v2755 = vpop.f32.mrb[0].mxu0
      %v2756 = vadd.f32 0.0, %v2755
      %v2757 = vpop.f32.mrb[0].mxu0
      %2758 = vmatprep.mubr.bf16.mxu0 0
      %2759 = vmatmul.mubr.bf16.gmra.mrb[0].mxu0 %v2595
      %v2760 = vpop.f32.mrb[0].mxu0
      %v2761 = vadd.f32 0.0, %v2760
      %v2762 = vpop.f32.mrb[0].mxu0
      %v2763 = vpop.f32.mrb[0].mxu0
      %v2764 = vadd.f32 0.0, %v2763
      %v2765 = vpop.f32.mrb[0].mxu0
      %2766 = vmatprep.mubr.bf16.mxu0 0
      %2767 = vmatmul.mubr.bf16.gmra.mrb[0].mxu0 %v2598
      %v2768 = vpop.f32.mrb[0].mxu0
      %v2769 = vadd.f32 0.0, %v2768
      %v2770 = vpop.f32.mrb[0].mxu0
      %v2771 = vpop.f32.mrb[0].mxu0
      %v2772 = vadd.f32 0.0, %v2771
      %v2773 = vpop.f32.mrb[0].mxu0
      %2774 = vmatprep.mubr.bf16.mxu0 0
      %2775 = vmatmul.mubr.bf16.gmra.mrb[0].mxu0 %v2601
      %v2776 = vpop.f32.mrb[0].mxu0
      %v2777 = vadd.f32 0.0, %v2776
      %v2778 = vpop.f32.mrb[0].mxu0
      %v2779 = vpop.f32.mrb[0].mxu0
      %v2780 = vadd.f32 0.0, %v2779
      %v2781 = vpop.f32.mrb[0].mxu0
      %2782 = vdwg.mxu0
      %v2783 = vld [vmem:[#allocation2] sm:$0xff]
      %v2784 = vld [vmem:[#allocation2 + $0x8] sm:$0xff]
      %v2785 = vld [vmem:[#allocation2 + $0x10] sm:$0xff]
      %v2786 = vld [vmem:[#allocation2 + $0x18] sm:$0xff]
      %v2787 = vld [vmem:[#allocation2 + $0x20] sm:$0xff]
      %v2788 = vld [vmem:[#allocation2 + $0x28] sm:$0xff]
      %v2789 = vld [vmem:[#allocation2 + $0x30] sm:$0xff]
      %v2790 = vld [vmem:[#allocation2 + $0x38] sm:$0xff]
      %v2791 = vld [vmem:[#allocation2 + $0x40] sm:$0xff]
      %v2792 = vld [vmem:[#allocation2 + $0x48] sm:$0xff]
      %v2793 = vld [vmem:[#allocation2 + $0x50] sm:$0xff]
      %v2794 = vld [vmem:[#allocation2 + $0x58] sm:$0xff]
      %v2795 = vld [vmem:[#allocation2 + $0x60] sm:$0xff]
      %v2796 = vld [vmem:[#allocation2 + $0x68] sm:$0xff]
      %v2797 = vld [vmem:[#allocation2 + $0x70] sm:$0xff]
      %v2798 = vld [vmem:[#allocation2 + $0x78] sm:$0xff]
      %v2799 = vld [vmem:[#allocation2 + $0x80] sm:$0xff]
      %v2800 = vld [vmem:[#allocation2 + $0x88] sm:$0xff]
      %v2801 = vld [vmem:[#allocation2 + $0x90] sm:$0xff]
      %v2802 = vld [vmem:[#allocation2 + $0x98] sm:$0xff]
      %v2803 = vld [vmem:[#allocation2 + $0xa0] sm:$0xff]
      %v2804 = vld [vmem:[#allocation2 + $0xa8] sm:$0xff]
      %v2805 = vld [vmem:[#allocation2 + $0xb0] sm:$0xff]
      %v2806 = vld [vmem:[#allocation2 + $0xb8] sm:$0xff]
      %v2807 = vld [vmem:[#allocation2 + $0xc0] sm:$0xff]
      %v2808 = vld [vmem:[#allocation2 + $0xc8] sm:$0xff]
      %v2809 = vld [vmem:[#allocation2 + $0xd0] sm:$0xff]
      %v2810 = vld [vmem:[#allocation2 + $0xd8] sm:$0xff]
      %v2811 = vld [vmem:[#allocation2 + $0xe0] sm:$0xff]
      %v2812 = vld [vmem:[#allocation2 + $0xe8] sm:$0xff]
      %v2813 = vld [vmem:[#allocation2 + $0xf0] sm:$0xff]
      %v2814 = vld [vmem:[#allocation2 + $0xf8] sm:$0xff]
      %v2815 = vld [vmem:[#allocation2 + $0x100] sm:$0xff]
      %v2816 = vld [vmem:[#allocation2 + $0x108] sm:$0xff]
      %v2817 = vld [vmem:[#allocation2 + $0x110] sm:$0xff]
      %v2818 = vld [vmem:[#allocation2 + $0x118] sm:$0x3f]
      %v2819 = vadd.f32 %v2783, %v2641
      %v2820 = vadd.f32 %v2784, %v2644
      %v2821 = vadd.f32 %v2785, %v2649
      %v2822 = vadd.f32 %v2786, %v2652
      %v2823 = vadd.f32 %v2787, %v2657
      %v2824 = vadd.f32 %v2788, %v2660
      %v2825 = vadd.f32 %v2789, %v2665
      %v2826 = vadd.f32 %v2790, %v2668
      %v2827 = vadd.f32 %v2791, %v2673
      %v2828 = vadd.f32 %v2792, %v2676
      %v2829 = vadd.f32 %v2793, %v2681
      %v2830 = vadd.f32 %v2794, %v2684
      %v2831 = vadd.f32 %v2795, %v2689
      %v2832 = vadd.f32 %v2796, %v2692
      %v2833 = vadd.f32 %v2797, %v2697
      %v2834 = vadd.f32 %v2798, %v2700
      %v2835 = vadd.f32 %v2799, %v2705
      %v2836 = vadd.f32 %v2800, %v2708
      %v2837 = vadd.f32 %v2801, %v2713
      %v2838 = vadd.f32 %v2802, %v2716
      %v2839 = vadd.f32 %v2803, %v2721
      %v2840 = vadd.f32 %v2804, %v2724
      %v2841 = vadd.f32 %v2805, %v2729
      %v2842 = vadd.f32 %v2806, %v2732
      %v2843 = vadd.f32 %v2807, %v2737
      %v2844 = vadd.f32 %v2808, %v2740
      %v2845 = vadd.f32 %v2809, %v2745
      %v2846 = vadd.f32 %v2810, %v2748
      %v2847 = vadd.f32 %v2811, %v2753
      %v2848 = vadd.f32 %v2812, %v2756
      %v2849 = vadd.f32 %v2813, %v2761
      %v2850 = vadd.f32 %v2814, %v2764
      %v2851 = vadd.f32 %v2815, %v2769
      %v2852 = vadd.f32 %v2816, %v2772
      %v2853 = vadd.f32 %v2817, %v2777
      %v2854 = vadd.f32 %v2818, %v2780
      %2855 = vst [vmem:[#allocation2] sm:$0xff] %v2819
      %2856 = vst [vmem:[#allocation2 + $0x8] sm:$0xff] %v2820
      %2857 = vst [vmem:[#allocation2 + $0x10] sm:$0xff] %v2821
      %2858 = vst [vmem:[#allocation2 + $0x18] sm:$0xff] %v2822
      %2859 = vst [vmem:[#allocation2 + $0x20] sm:$0xff] %v2823
      %2860 = vst [vmem:[#allocation2 + $0x28] sm:$0xff] %v2824
      %2861 = vst [vmem:[#allocation2 + $0x30] sm:$0xff] %v2825
      %2862 = vst [vmem:[#allocation2 + $0x38] sm:$0xff] %v2826
      %2863 = vst [vmem:[#allocation2 + $0x40] sm:$0xff] %v2827
      %2864 = vst [vmem:[#allocation2 + $0x48] sm:$0xff] %v2828
      %2865 = vst [vmem:[#allocation2 + $0x50] sm:$0xff] %v2829
      %2866 = vst [vmem:[#allocation2 + $0x58] sm:$0xff] %v2830
      %2867 = vst [vmem:[#allocation2 + $0x60] sm:$0xff] %v2831
      %2868 = vst [vmem:[#allocation2 + $0x68] sm:$0xff] %v2832
      %2869 = vst [vmem:[#allocation2 + $0x70] sm:$0xff] %v2833
      %2870 = vst [vmem:[#allocation2 + $0x78] sm:$0xff] %v2834
      %2871 = vst [vmem:[#allocation2 + $0x80] sm:$0xff] %v2835
      %2872 = vst [vmem:[#allocation2 + $0x88] sm:$0xff] %v2836
      %2873 = vst [vmem:[#allocation2 + $0x90] sm:$0xff] %v2837
      %2874 = vst [vmem:[#allocation2 + $0x98] sm:$0xff] %v2838
      %2875 = vst [vmem:[#allocation2 + $0xa0] sm:$0xff] %v2839
      %2876 = vst [vmem:[#allocation2 + $0xa8] sm:$0xff] %v2840
      %2877 = vst [vmem:[#allocation2 + $0xb0] sm:$0xff] %v2841
      %2878 = vst [vmem:[#allocation2 + $0xb8] sm:$0xff] %v2842
      %2879 = vst [vmem:[#allocation2 + $0xc0] sm:$0xff] %v2843
      %2880 = vst [vmem:[#allocation2 + $0xc8] sm:$0xff] %v2844
      %2881 = vst [vmem:[#allocation2 + $0xd0] sm:$0xff] %v2845
      %2882 = vst [vmem:[#allocation2 + $0xd8] sm:$0xff] %v2846
      %2883 = vst [vmem:[#allocation2 + $0xe0] sm:$0xff] %v2847
      %2884 = vst [vmem:[#allocation2 + $0xe8] sm:$0xff] %v2848
      %2885 = vst [vmem:[#allocation2 + $0xf0] sm:$0xff] %v2849
      %2886 = vst [vmem:[#allocation2 + $0xf8] sm:$0xff] %v2850
      %2887 = vst [vmem:[#allocation2 + $0x100] sm:$0xff] %v2851
      %2888 = vst [vmem:[#allocation2 + $0x108] sm:$0xff] %v2852
      %2889 = vst [vmem:[#allocation2 + $0x110] sm:$0xff] %v2853
      %2890 = vst [vmem:[#allocation2 + $0x118] sm:$0x3f] %v2854
      %v2891 = vld [vmem:[%s208 + $0x8] sm:$0xc]
      %v2892 = vld [vmem:[%s208 + $0xc] sm:$0xf]
      %v2893 = vld [vmem:[%s208 + $0x10] sm:$0xf]
      %v2894 = vld [vmem:[%s208 + $0x14] sm:$0xf]
      %v2895 = vld [vmem:[%s208 + $0x18] sm:$0xf]
      %v2896 = vld [vmem:[%s208 + $0x1c] sm:$0xf]
      %v2897 = vld [vmem:[%s208 + $0x20] sm:$0xf]
      %v2898 = vld [vmem:[%s208 + $0x24] sm:$0xf]
      %v2899 = vld [vmem:[%s208 + $0x28] sm:$0xf]
      %v2900 = vld [vmem:[%s208 + $0x2c] sm:$0xf]
      %v2901 = vld [vmem:[%s208 + $0x30] sm:$0xf]
      %v2902 = vld [vmem:[%s208 + $0x34] sm:$0xf]
      %v2903 = vld [vmem:[%s208 + $0x38] sm:$0xf]
      %v2904 = vld [vmem:[%s208 + $0x3c] sm:$0xf]
      %v2905 = vld [vmem:[%s208 + $0x40] sm:$0xf]
      %v2906 = vld [vmem:[%s208 + $0x44] sm:$0xf]
      %v2907 = vld [vmem:[%s208 + $0x48] sm:$0xf]
      %v2908 = vld [vmem:[%s208 + $0x4c] sm:$0xf]
      %v2909 = vld [vmem:[%s208 + $0x50] sm:$0xf]
      %v2910 = vld [vmem:[%s208 + $0x54] sm:$0xf]
      %v2911 = vld [vmem:[%s208 + $0x58] sm:$0xf]
      %v2912 = vld [vmem:[%s208 + $0x5c] sm:$0xf]
      %v2913 = vld [vmem:[%s208 + $0x60] sm:$0xf]
      %v2914 = vld [vmem:[%s208 + $0x64] sm:$0xf]
      %v2915 = vld [vmem:[%s208 + $0x68] sm:$0xf]
      %v2916 = vld [vmem:[%s208 + $0x6c] sm:$0xf]
      %v2917 = vld [vmem:[%s208 + $0x70] sm:$0xf]
      %v2918 = vld [vmem:[%s208 + $0x74] sm:$0xf]
      %v2919 = vld [vmem:[%s208 + $0x78] sm:$0xf]
      %v2920 = vld [vmem:[%s208 + $0x7c] sm:$0xf]
      %v2921 = vld [vmem:[%s208 + $0x80] sm:$0xf]
      %v2922 = vld [vmem:[%s208 + $0x84] sm:$0xf]
      %v2923 = vld [vmem:[%s208 + $0x88] sm:$0xf]
      %v2924 = vld [vmem:[%s208 + $0x8c] sm:$0xf]
      %v2925 = vld [vmem:[%s208 + $0x90] sm:$0xf]
      %v2926 = vld [vmem:[%s208 + $0x94] sm:$0xf]
      %v2927 = vld [vmem:[%s208 + $0x98] sm:$0x1]
      %s2928 = scalar_lea.vmem %s212, 20
      %v2929 = vld [vmem:[%s2928] sm:$0xf]
      %v2967 = vunpack.c.l.b16 %v2891
      %v2968 = vunpack.c.l.b16 %v2892
      %v2969 = vunpack.c.l.b16 %v2893
      %v2970 = vunpack.c.l.b16 %v2894
      %v2971 = vunpack.c.l.b16 %v2895
      %v2972 = vunpack.c.l.b16 %v2896
      %v2973 = vunpack.c.l.b16 %v2897
      %v2974 = vunpack.c.l.b16 %v2898
      %v2975 = vunpack.c.l.b16 %v2899
      %v2976 = vunpack.c.l.b16 %v2900
      %v2977 = vunpack.c.l.b16 %v2901
      %v2978 = vunpack.c.l.b16 %v2902
      %v2979 = vunpack.c.l.b16 %v2903
      %v2980 = vunpack.c.l.b16 %v2904
      %v2981 = vunpack.c.l.b16 %v2905
      %v2982 = vunpack.c.l.b16 %v2906
      %v2983 = vunpack.c.l.b16 %v2907
      %v2984 = vunpack.c.l.b16 %v2908
      %v2985 = vunpack.c.l.b16 %v2909
      %v2986 = vunpack.c.l.b16 %v2910
      %v2987 = vunpack.c.l.b16 %v2911
      %v2988 = vunpack.c.l.b16 %v2912
      %v2989 = vunpack.c.l.b16 %v2913
      %v2990 = vunpack.c.l.b16 %v2914
      %v2991 = vunpack.c.l.b16 %v2915
      %v2992 = vunpack.c.l.b16 %v2916
      %v2993 = vunpack.c.l.b16 %v2917
      %v2994 = vunpack.c.l.b16 %v2918
      %v2995 = vunpack.c.l.b16 %v2919
      %v2996 = vunpack.c.l.b16 %v2920
      %v2997 = vunpack.c.l.b16 %v2921
      %v2998 = vunpack.c.l.b16 %v2922
      %v2999 = vunpack.c.l.b16 %v2923
      %v3000 = vunpack.c.l.b16 %v2924
      %v3001 = vunpack.c.l.b16 %v2925
      %v3002 = vunpack.c.l.b16 %v2926
      %v3003 = vunpack.c.l.b16 %v2927
      %v3004 = vpack.c.b16 %v2968, %v2967
      %v3005 = vpack.c.b16 %v2970, %v2969
      %v3006 = vpack.c.b16 %v2972, %v2971
      %v3007 = vpack.c.b16 %v2974, %v2973
      %v3008 = vpack.c.b16 %v2976, %v2975
      %v3009 = vpack.c.b16 %v2978, %v2977
      %v3010 = vpack.c.b16 %v2980, %v2979
      %v3011 = vpack.c.b16 %v2982, %v2981
      %v3012 = vpack.c.b16 %v2984, %v2983
      %v3013 = vpack.c.b16 %v2986, %v2985
      %v3014 = vpack.c.b16 %v2988, %v2987
      %v3015 = vpack.c.b16 %v2990, %v2989
      %v3016 = vpack.c.b16 %v2992, %v2991
      %v3017 = vpack.c.b16 %v2994, %v2993
      %v3018 = vpack.c.b16 %v2996, %v2995
      %v3019 = vpack.c.b16 %v2998, %v2997
      %v3020 = vpack.c.b16 %v3000, %v2999
      %v3021 = vpack.c.b16 %v3002, %v3001
      %v3022 = vpack.c.b16 %v3003, %v3003
      %vm3023 = vcmask 1045504
      %v3024 = vrot.slane %v3004, 2
      %v3025 = vrot.slane %v3005, 2
      %v3026 = vsel %vm3023, %v3024, %v3025
      %v3027 = vrot.slane %v3006, 2
      %v3028 = vsel %vm3023, %v3025, %v3027
      %v3029 = vrot.slane %v3007, 2
      %v3030 = vsel %vm3023, %v3027, %v3029
      %v3031 = vrot.slane %v3008, 2
      %v3032 = vsel %vm3023, %v3029, %v3031
      %v3033 = vrot.slane %v3009, 2
      %v3034 = vsel %vm3023, %v3031, %v3033
      %v3035 = vrot.slane %v3010, 2
      %v3036 = vsel %vm3023, %v3033, %v3035
      %v3037 = vrot.slane %v3011, 2
      %v3038 = vsel %vm3023, %v3035, %v3037
      %v3039 = vrot.slane %v3012, 2
      %v3040 = vsel %vm3023, %v3037, %v3039
      %v3041 = vrot.slane %v3013, 2
      %v3042 = vsel %vm3023, %v3039, %v3041
      %v3043 = vrot.slane %v3014, 2
      %v3044 = vsel %vm3023, %v3041, %v3043
      %v3045 = vrot.slane %v3015, 2
      %v3046 = vsel %vm3023, %v3043, %v3045
      %v3047 = vrot.slane %v3016, 2
      %v3048 = vsel %vm3023, %v3045, %v3047
      %v3049 = vrot.slane %v3017, 2
      %v3050 = vsel %vm3023, %v3047, %v3049
      %v3051 = vrot.slane %v3018, 2
      %v3052 = vsel %vm3023, %v3049, %v3051
      %v3053 = vrot.slane %v3019, 2
      %v3054 = vsel %vm3023, %v3051, %v3053
      %v3055 = vrot.slane %v3020, 2
      %v3056 = vsel %vm3023, %v3053, %v3055
      %v3057 = vrot.slane %v3021, 2
      %v3058 = vsel %vm3023, %v3055, %v3057
      %v3059 = vrot.slane %v3022, 2
      %v3060 = vsel %vm3023, %v3057, %v3059
      %v3062 = vsel %vm353, %v3026, 0
      %v3065 = vsel %vm353, %v3028, 0
      %v3068 = vsel %vm353, %v3030, 0
      %v3071 = vsel %vm353, %v3032, 0
      %v3074 = vsel %vm353, %v3034, 0
      %v3077 = vsel %vm353, %v3036, 0
      %v3080 = vsel %vm353, %v3038, 0
      %v3083 = vsel %vm353, %v3040, 0
      %v3086 = vsel %vm353, %v3042, 0
      %v3089 = vsel %vm353, %v3044, 0
      %v3092 = vsel %vm353, %v3046, 0
      %v3095 = vsel %vm353, %v3048, 0
      %v3098 = vsel %vm353, %v3050, 0
      %v3101 = vsel %vm353, %v3052, 0
      %v3104 = vsel %vm353, %v3054, 0
      %v3107 = vsel %vm353, %v3056, 0
      %v3110 = vsel %vm353, %v3058, 0
      %v3113 = vsel %vm353, %v3060, 0
      %v3116 = vsel %vm408, %v2929, 0
      %3118 = vmatprep.subr.bf16.mxu0 0
      %3119 = vmatpush1.bf16.msra.mxu0 %v3116
      %3120 = vmatprep.subr.bf16.mxu0 0
      %3121 = vmatpush1.bf16.msra.mxu0 0
      %3122 = vmatprep.subr.bf16.mxu0 0
      %3123 = vmatpush1.bf16.msra.mxu0 0
      %3124 = vmatprep.subr.bf16.mxu0 0
      %3125 = vmatpush1.bf16.msra.mxu0 0
      %3126 = vmatprep.subr.bf16.mxu0 0
      %3127 = vmatpush1.bf16.msra.mxu0 0
      %3128 = vmatprep.subr.bf16.mxu0 0
      %3129 = vmatpush1.bf16.msra.mxu0 0
      %3130 = vmatprep.subr.bf16.mxu0 0
      %3131 = vmatpush1.bf16.msra.mxu0 0
      %3132 = vmatprep.subr.bf16.mxu0 0
      %3133 = vmatpush1.bf16.msra.mxu0 0
      %3134 = vmatprep.subr.bf16.mxu0 0
      %3135 = vmatpush1.bf16.msra.mxu0 0
      %3136 = vmatprep.subr.bf16.mxu0 0
      %3137 = vmatpush1.bf16.msra.mxu0 0
      %3138 = vmatprep.subr.bf16.mxu0 0
      %3139 = vmatpush1.bf16.msra.mxu0 0
      %3140 = vmatprep.subr.bf16.mxu0 0
      %3141 = vmatpush1.bf16.msra.mxu0 0
      %3142 = vmatprep.subr.bf16.mxu0 0
      %3143 = vmatpush1.bf16.msra.mxu0 0
      %3144 = vmatprep.subr.bf16.mxu0 0
      %3145 = vmatpush1.bf16.msra.mxu0 0
      %3146 = vmatprep.subr.bf16.mxu0 0
      %3147 = vmatpush1.bf16.msra.mxu0 0
      %3148 = vmatprep.subr.bf16.mxu0 0
      %3149 = vmatpush1.bf16.msra.mxu0 0
      %3150 = vmatprep.mubr.bf16.mxu0 0
      %3151 = vmatmul.mubr.bf16.gmra.mrb[0].mxu0 %v3062
      %v3152 = vpop.f32.mrb[0].mxu0
      %v3153 = vadd.f32 0.0, %v3152
      %v3154 = vpop.f32.mrb[0].mxu0
      %v3155 = vpop.f32.mrb[0].mxu0
      %v3156 = vadd.f32 0.0, %v3155
      %v3157 = vpop.f32.mrb[0].mxu0
      %3158 = vmatprep.mubr.bf16.mxu0 0
      %3159 = vmatmul.mubr.bf16.gmra.mrb[0].mxu0 %v3065
      %v3160 = vpop.f32.mrb[0].mxu0
      %v3161 = vadd.f32 0.0, %v3160
      %v3162 = vpop.f32.mrb[0].mxu0
      %v3163 = vpop.f32.mrb[0].mxu0
      %v3164 = vadd.f32 0.0, %v3163
      %v3165 = vpop.f32.mrb[0].mxu0
      %3166 = vmatprep.mubr.bf16.mxu0 0
      %3167 = vmatmul.mubr.bf16.gmra.mrb[0].mxu0 %v3068
      %v3168 = vpop.f32.mrb[0].mxu0
      %v3169 = vadd.f32 0.0, %v3168
      %v3170 = vpop.f32.mrb[0].mxu0
      %v3171 = vpop.f32.mrb[0].mxu0
      %v3172 = vadd.f32 0.0, %v3171
      %v3173 = vpop.f32.mrb[0].mxu0
      %3174 = vmatprep.mubr.bf16.mxu0 0
      %3175 = vmatmul.mubr.bf16.gmra.mrb[0].mxu0 %v3071
      %v3176 = vpop.f32.mrb[0].mxu0
      %v3177 = vadd.f32 0.0, %v3176
      %v3178 = vpop.f32.mrb[0].mxu0
      %v3179 = vpop.f32.mrb[0].mxu0
      %v3180 = vadd.f32 0.0, %v3179
      %v3181 = vpop.f32.mrb[0].mxu0
      %3182 = vmatprep.mubr.bf16.mxu0 0
      %3183 = vmatmul.mubr.bf16.gmra.mrb[0].mxu0 %v3074
      %v3184 = vpop.f32.mrb[0].mxu0
      %v3185 = vadd.f32 0.0, %v3184
      %v3186 = vpop.f32.mrb[0].mxu0
      %v3187 = vpop.f32.mrb[0].mxu0
      %v3188 = vadd.f32 0.0, %v3187
      %v3189 = vpop.f32.mrb[0].mxu0
      %3190 = vmatprep.mubr.bf16.mxu0 0
      %3191 = vmatmul.mubr.bf16.gmra.mrb[0].mxu0 %v3077
      %v3192 = vpop.f32.mrb[0].mxu0
      %v3193 = vadd.f32 0.0, %v3192
      %v3194 = vpop.f32.mrb[0].mxu0
      %v3195 = vpop.f32.mrb[0].mxu0
      %v3196 = vadd.f32 0.0, %v3195
      %v3197 = vpop.f32.mrb[0].mxu0
      %3198 = vmatprep.mubr.bf16.mxu0 0
      %3199 = vmatmul.mubr.bf16.gmra.mrb[0].mxu0 %v3080
      %v3200 = vpop.f32.mrb[0].mxu0
      %v3201 = vadd.f32 0.0, %v3200
      %v3202 = vpop.f32.mrb[0].mxu0
      %v3203 = vpop.f32.mrb[0].mxu0
      %v3204 = vadd.f32 0.0, %v3203
      %v3205 = vpop.f32.mrb[0].mxu0
      %3206 = vmatprep.mubr.bf16.mxu0 0
      %3207 = vmatmul.mubr.bf16.gmra.mrb[0].mxu0 %v3083
      %v3208 = vpop.f32.mrb[0].mxu0
      %v3209 = vadd.f32 0.0, %v3208
      %v3210 = vpop.f32.mrb[0].mxu0
      %v3211 = vpop.f32.mrb[0].mxu0
      %v3212 = vadd.f32 0.0, %v3211
      %v3213 = vpop.f32.mrb[0].mxu0
      %3214 = vmatprep.mubr.bf16.mxu0 0
      %3215 = vmatmul.mubr.bf16.gmra.mrb[0].mxu0 %v3086
      %v3216 = vpop.f32.mrb[0].mxu0
      %v3217 = vadd.f32 0.0, %v3216
      %v3218 = vpop.f32.mrb[0].mxu0
      %v3219 = vpop.f32.mrb[0].mxu0
      %v3220 = vadd.f32 0.0, %v3219
      %v3221 = vpop.f32.mrb[0].mxu0
      %3222 = vmatprep.mubr.bf16.mxu0 0
      %3223 = vmatmul.mubr.bf16.gmra.mrb[0].mxu0 %v3089
      %v3224 = vpop.f32.mrb[0].mxu0
      %v3225 = vadd.f32 0.0, %v3224
      %v3226 = vpop.f32.mrb[0].mxu0
      %v3227 = vpop.f32.mrb[0].mxu0
      %v3228 = vadd.f32 0.0, %v3227
      %v3229 = vpop.f32.mrb[0].mxu0
      %3230 = vmatprep.mubr.bf16.mxu0 0
      %3231 = vmatmul.mubr.bf16.gmra.mrb[0].mxu0 %v3092
      %v3232 = vpop.f32.mrb[0].mxu0
      %v3233 = vadd.f32 0.0, %v3232
      %v3234 = vpop.f32.mrb[0].mxu0
      %v3235 = vpop.f32.mrb[0].mxu0
      %v3236 = vadd.f32 0.0, %v3235
      %v3237 = vpop.f32.mrb[0].mxu0
      %3238 = vmatprep.mubr.bf16.mxu0 0
      %3239 = vmatmul.mubr.bf16.gmra.mrb[0].mxu0 %v3095
      %v3240 = vpop.f32.mrb[0].mxu0
      %v3241 = vadd.f32 0.0, %v3240
      %v3242 = vpop.f32.mrb[0].mxu0
      %v3243 = vpop.f32.mrb[0].mxu0
      %v3244 = vadd.f32 0.0, %v3243
      %v3245 = vpop.f32.mrb[0].mxu0
      %3246 = vmatprep.mubr.bf16.mxu0 0
      %3247 = vmatmul.mubr.bf16.gmra.mrb[0].mxu0 %v3098
      %v3248 = vpop.f32.mrb[0].mxu0
      %v3249 = vadd.f32 0.0, %v3248
      %v3250 = vpop.f32.mrb[0].mxu0
      %v3251 = vpop.f32.mrb[0].mxu0
      %v3252 = vadd.f32 0.0, %v3251
      %v3253 = vpop.f32.mrb[0].mxu0
      %3254 = vmatprep.mubr.bf16.mxu0 0
      %3255 = vmatmul.mubr.bf16.gmra.mrb[0].mxu0 %v3101
      %v3256 = vpop.f32.mrb[0].mxu0
      %v3257 = vadd.f32 0.0, %v3256
      %v3258 = vpop.f32.mrb[0].mxu0
      %v3259 = vpop.f32.mrb[0].mxu0
      %v3260 = vadd.f32 0.0, %v3259
      %v3261 = vpop.f32.mrb[0].mxu0
      %3262 = vmatprep.mubr.bf16.mxu0 0
      %3263 = vmatmul.mubr.bf16.gmra.mrb[0].mxu0 %v3104
      %v3264 = vpop.f32.mrb[0].mxu0
      %v3265 = vadd.f32 0.0, %v3264
      %v3266 = vpop.f32.mrb[0].mxu0
      %v3267 = vpop.f32.mrb[0].mxu0
      %v3268 = vadd.f32 0.0, %v3267
      %v3269 = vpop.f32.mrb[0].mxu0
      %3270 = vmatprep.mubr.bf16.mxu0 0
      %3271 = vmatmul.mubr.bf16.gmra.mrb[0].mxu0 %v3107
      %v3272 = vpop.f32.mrb[0].mxu0
      %v3273 = vadd.f32 0.0, %v3272
      %v3274 = vpop.f32.mrb[0].mxu0
      %v3275 = vpop.f32.mrb[0].mxu0
      %v3276 = vadd.f32 0.0, %v3275
      %v3277 = vpop.f32.mrb[0].mxu0
      %3278 = vmatprep.mubr.bf16.mxu0 0
      %3279 = vmatmul.mubr.bf16.gmra.mrb[0].mxu0 %v3110
      %v3280 = vpop.f32.mrb[0].mxu0
      %v3281 = vadd.f32 0.0, %v3280
      %v3282 = vpop.f32.mrb[0].mxu0
      %v3283 = vpop.f32.mrb[0].mxu0
      %v3284 = vadd.f32 0.0, %v3283
      %v3285 = vpop.f32.mrb[0].mxu0
      %3286 = vmatprep.mubr.bf16.mxu0 0
      %3287 = vmatmul.mubr.bf16.gmra.mrb[0].mxu0 %v3113
      %v3288 = vpop.f32.mrb[0].mxu0
      %v3289 = vadd.f32 0.0, %v3288
      %v3290 = vpop.f32.mrb[0].mxu0
      %v3291 = vpop.f32.mrb[0].mxu0
      %v3292 = vadd.f32 0.0, %v3291
      %v3293 = vpop.f32.mrb[0].mxu0
      %3294 = vdwg.mxu0
      %v3295 = vld [vmem:[#allocation2] sm:$0xff]
      %v3296 = vld [vmem:[#allocation2 + $0x8] sm:$0xff]
      %v3297 = vld [vmem:[#allocation2 + $0x10] sm:$0xff]
      %v3298 = vld [vmem:[#allocation2 + $0x18] sm:$0xff]
      %v3299 = vld [vmem:[#allocation2 + $0x20] sm:$0xff]
      %v3300 = vld [vmem:[#allocation2 + $0x28] sm:$0xff]
      %v3301 = vld [vmem:[#allocation2 + $0x30] sm:$0xff]
      %v3302 = vld [vmem:[#allocation2 + $0x38] sm:$0xff]
      %v3303 = vld [vmem:[#allocation2 + $0x40] sm:$0xff]
      %v3304 = vld [vmem:[#allocation2 + $0x48] sm:$0xff]
      %v3305 = vld [vmem:[#allocation2 + $0x50] sm:$0xff]
      %v3306 = vld [vmem:[#allocation2 + $0x58] sm:$0xff]
      %v3307 = vld [vmem:[#allocation2 + $0x60] sm:$0xff]
      %v3308 = vld [vmem:[#allocation2 + $0x68] sm:$0xff]
      %v3309 = vld [vmem:[#allocation2 + $0x70] sm:$0xff]
      %v3310 = vld [vmem:[#allocation2 + $0x78] sm:$0xff]
      %v3311 = vld [vmem:[#allocation2 + $0x80] sm:$0xff]
      %v3312 = vld [vmem:[#allocation2 + $0x88] sm:$0xff]
      %v3313 = vld [vmem:[#allocation2 + $0x90] sm:$0xff]
      %v3314 = vld [vmem:[#allocation2 + $0x98] sm:$0xff]
      %v3315 = vld [vmem:[#allocation2 + $0xa0] sm:$0xff]
      %v3316 = vld [vmem:[#allocation2 + $0xa8] sm:$0xff]
      %v3317 = vld [vmem:[#allocation2 + $0xb0] sm:$0xff]
      %v3318 = vld [vmem:[#allocation2 + $0xb8] sm:$0xff]
      %v3319 = vld [vmem:[#allocation2 + $0xc0] sm:$0xff]
      %v3320 = vld [vmem:[#allocation2 + $0xc8] sm:$0xff]
      %v3321 = vld [vmem:[#allocation2 + $0xd0] sm:$0xff]
      %v3322 = vld [vmem:[#allocation2 + $0xd8] sm:$0xff]
      %v3323 = vld [vmem:[#allocation2 + $0xe0] sm:$0xff]
      %v3324 = vld [vmem:[#allocation2 + $0xe8] sm:$0xff]
      %v3325 = vld [vmem:[#allocation2 + $0xf0] sm:$0xff]
      %v3326 = vld [vmem:[#allocation2 + $0xf8] sm:$0xff]
      %v3327 = vld [vmem:[#allocation2 + $0x100] sm:$0xff]
      %v3328 = vld [vmem:[#allocation2 + $0x108] sm:$0xff]
      %v3329 = vld [vmem:[#allocation2 + $0x110] sm:$0xff]
      %v3330 = vld [vmem:[#allocation2 + $0x118] sm:$0x3f]
      %v3331 = vadd.f32 %v3295, %v3153
      %v3332 = vadd.f32 %v3296, %v3156
      %v3333 = vadd.f32 %v3297, %v3161
      %v3334 = vadd.f32 %v3298, %v3164
      %v3335 = vadd.f32 %v3299, %v3169
      %v3336 = vadd.f32 %v3300, %v3172
      %v3337 = vadd.f32 %v3301, %v3177
      %v3338 = vadd.f32 %v3302, %v3180
      %v3339 = vadd.f32 %v3303, %v3185
      %v3340 = vadd.f32 %v3304, %v3188
      %v3341 = vadd.f32 %v3305, %v3193
      %v3342 = vadd.f32 %v3306, %v3196
      %v3343 = vadd.f32 %v3307, %v3201
      %v3344 = vadd.f32 %v3308, %v3204
      %v3345 = vadd.f32 %v3309, %v3209
      %v3346 = vadd.f32 %v3310, %v3212
      %v3347 = vadd.f32 %v3311, %v3217
      %v3348 = vadd.f32 %v3312, %v3220
      %v3349 = vadd.f32 %v3313, %v3225
      %v3350 = vadd.f32 %v3314, %v3228
      %v3351 = vadd.f32 %v3315, %v3233
      %v3352 = vadd.f32 %v3316, %v3236
      %v3353 = vadd.f32 %v3317, %v3241
      %v3354 = vadd.f32 %v3318, %v3244
      %v3355 = vadd.f32 %v3319, %v3249
      %v3356 = vadd.f32 %v3320, %v3252
      %v3357 = vadd.f32 %v3321, %v3257
      %v3358 = vadd.f32 %v3322, %v3260
      %v3359 = vadd.f32 %v3323, %v3265
      %v3360 = vadd.f32 %v3324, %v3268
      %v3361 = vadd.f32 %v3325, %v3273
      %v3362 = vadd.f32 %v3326, %v3276
      %v3363 = vadd.f32 %v3327, %v3281
      %v3364 = vadd.f32 %v3328, %v3284
      %v3365 = vadd.f32 %v3329, %v3289
      %v3366 = vadd.f32 %v3330, %v3292
      %3367 = vst [vmem:[#allocation2] sm:$0xff] %v3331
      %3368 = vst [vmem:[#allocation2 + $0x8] sm:$0xff] %v3332
      %3369 = vst [vmem:[#allocation2 + $0x10] sm:$0xff] %v3333
      %3370 = vst [vmem:[#allocation2 + $0x18] sm:$0xff] %v3334
      %3371 = vst [vmem:[#allocation2 + $0x20] sm:$0xff] %v3335
      %3372 = vst [vmem:[#allocation2 + $0x28] sm:$0xff] %v3336
      %3373 = vst [vmem:[#allocation2 + $0x30] sm:$0xff] %v3337
      %3374 = vst [vmem:[#allocation2 + $0x38] sm:$0xff] %v3338
      %3375 = vst [vmem:[#allocation2 + $0x40] sm:$0xff] %v3339
      %3376 = vst [vmem:[#allocation2 + $0x48] sm:$0xff] %v3340
      %3377 = vst [vmem:[#allocation2 + $0x50] sm:$0xff] %v3341
      %3378 = vst [vmem:[#allocation2 + $0x58] sm:$0xff] %v3342
      %3379 = vst [vmem:[#allocation2 + $0x60] sm:$0xff] %v3343
      %3380 = vst [vmem:[#allocation2 + $0x68] sm:$0xff] %v3344
      %3381 = vst [vmem:[#allocation2 + $0x70] sm:$0xff] %v3345
      %3382 = vst [vmem:[#allocation2 + $0x78] sm:$0xff] %v3346
      %3383 = vst [vmem:[#allocation2 + $0x80] sm:$0xff] %v3347
      %3384 = vst [vmem:[#allocation2 + $0x88] sm:$0xff] %v3348
      %3385 = vst [vmem:[#allocation2 + $0x90] sm:$0xff] %v3349
      %3386 = vst [vmem:[#allocation2 + $0x98] sm:$0xff] %v3350
      %3387 = vst [vmem:[#allocation2 + $0xa0] sm:$0xff] %v3351
      %3388 = vst [vmem:[#allocation2 + $0xa8] sm:$0xff] %v3352
      %3389 = vst [vmem:[#allocation2 + $0xb0] sm:$0xff] %v3353
      %3390 = vst [vmem:[#allocation2 + $0xb8] sm:$0xff] %v3354
      %3391 = vst [vmem:[#allocation2 + $0xc0] sm:$0xff] %v3355
      %3392 = vst [vmem:[#allocation2 + $0xc8] sm:$0xff] %v3356
      %3393 = vst [vmem:[#allocation2 + $0xd0] sm:$0xff] %v3357
      %3394 = vst [vmem:[#allocation2 + $0xd8] sm:$0xff] %v3358
      %3395 = vst [vmem:[#allocation2 + $0xe0] sm:$0xff] %v3359
      %3396 = vst [vmem:[#allocation2 + $0xe8] sm:$0xff] %v3360
      %3397 = vst [vmem:[#allocation2 + $0xf0] sm:$0xff] %v3361
      %3398 = vst [vmem:[#allocation2 + $0xf8] sm:$0xff] %v3362
      %3399 = vst [vmem:[#allocation2 + $0x100] sm:$0xff] %v3363
      %3400 = vst [vmem:[#allocation2 + $0x108] sm:$0xff] %v3364
      %3401 = vst [vmem:[#allocation2 + $0x110] sm:$0xff] %v3365
      %3402 = vst [vmem:[#allocation2 + $0x118] sm:$0x3f] %v3366
      %v3403 = vld [vmem:[%s208 + $0x10] sm:$0xc]
      %v3404 = vld [vmem:[%s208 + $0x14] sm:$0xf]
      %v3405 = vld [vmem:[%s208 + $0x18] sm:$0xf]
      %v3406 = vld [vmem:[%s208 + $0x1c] sm:$0xf]
      %v3407 = vld [vmem:[%s208 + $0x20] sm:$0xf]
      %v3408 = vld [vmem:[%s208 + $0x24] sm:$0xf]
      %v3409 = vld [vmem:[%s208 + $0x28] sm:$0xf]
      %v3410 = vld [vmem:[%s208 + $0x2c] sm:$0xf]
      %v3411 = vld [vmem:[%s208 + $0x30] sm:$0xf]
      %v3412 = vld [vmem:[%s208 + $0x34] sm:$0xf]
      %v3413 = vld [vmem:[%s208 + $0x38] sm:$0xf]
      %v3414 = vld [vmem:[%s208 + $0x3c] sm:$0xf]
      %v3415 = vld [vmem:[%s208 + $0x40] sm:$0xf]
      %v3416 = vld [vmem:[%s208 + $0x44] sm:$0xf]
      %v3417 = vld [vmem:[%s208 + $0x48] sm:$0xf]
      %v3418 = vld [vmem:[%s208 + $0x4c] sm:$0xf]
      %v3419 = vld [vmem:[%s208 + $0x50] sm:$0xf]
      %v3420 = vld [vmem:[%s208 + $0x54] sm:$0xf]
      %v3421 = vld [vmem:[%s208 + $0x58] sm:$0xf]
      %v3422 = vld [vmem:[%s208 + $0x5c] sm:$0xf]
      %v3423 = vld [vmem:[%s208 + $0x60] sm:$0xf]
      %v3424 = vld [vmem:[%s208 + $0x64] sm:$0xf]
      %v3425 = vld [vmem:[%s208 + $0x68] sm:$0xf]
      %v3426 = vld [vmem:[%s208 + $0x6c] sm:$0xf]
      %v3427 = vld [vmem:[%s208 + $0x70] sm:$0xf]
      %v3428 = vld [vmem:[%s208 + $0x74] sm:$0xf]
      %v3429 = vld [vmem:[%s208 + $0x78] sm:$0xf]
      %v3430 = vld [vmem:[%s208 + $0x7c] sm:$0xf]
      %v3431 = vld [vmem:[%s208 + $0x80] sm:$0xf]
      %v3432 = vld [vmem:[%s208 + $0x84] sm:$0xf]
      %v3433 = vld [vmem:[%s208 + $0x88] sm:$0xf]
      %v3434 = vld [vmem:[%s208 + $0x8c] sm:$0xf]
      %v3435 = vld [vmem:[%s208 + $0x90] sm:$0xf]
      %v3436 = vld [vmem:[%s208 + $0x94] sm:$0xf]
      %v3437 = vld [vmem:[%s208 + $0x98] sm:$0xf]
      %v3438 = vld [vmem:[%s208 + $0x9c] sm:$0xf]
      %v3439 = vld [vmem:[%s208 + $0xa0] sm:$0x1]
      %s3440 = scalar_lea.vmem %s212, 24
      %v3441 = vld [vmem:[%s3440] sm:$0xf]
      %v3479 = vunpack.c.l.b16 %v3403
      %v3480 = vunpack.c.l.b16 %v3404
      %v3481 = vunpack.c.l.b16 %v3405
      %v3482 = vunpack.c.l.b16 %v3406
      %v3483 = vunpack.c.l.b16 %v3407
      %v3484 = vunpack.c.l.b16 %v3408
      %v3485 = vunpack.c.l.b16 %v3409
      %v3486 = vunpack.c.l.b16 %v3410
      %v3487 = vunpack.c.l.b16 %v3411
      %v3488 = vunpack.c.l.b16 %v3412
      %v3489 = vunpack.c.l.b16 %v3413
      %v3490 = vunpack.c.l.b16 %v3414
      %v3491 = vunpack.c.l.b16 %v3415
      %v3492 = vunpack.c.l.b16 %v3416
      %v3493 = vunpack.c.l.b16 %v3417
      %v3494 = vunpack.c.l.b16 %v3418
      %v3495 = vunpack.c.l.b16 %v3419
      %v3496 = vunpack.c.l.b16 %v3420
      %v3497 = vunpack.c.l.b16 %v3421
      %v3498 = vunpack.c.l.b16 %v3422
      %v3499 = vunpack.c.l.b16 %v3423
      %v3500 = vunpack.c.l.b16 %v3424
      %v3501 = vunpack.c.l.b16 %v3425
      %v3502 = vunpack.c.l.b16 %v3426
      %v3503 = vunpack.c.l.b16 %v3427
      %v3504 = vunpack.c.l.b16 %v3428
      %v3505 = vunpack.c.l.b16 %v3429
      %v3506 = vunpack.c.l.b16 %v3430
      %v3507 = vunpack.c.l.b16 %v3431
      %v3508 = vunpack.c.l.b16 %v3432
      %v3509 = vunpack.c.l.b16 %v3433
      %v3510 = vunpack.c.l.b16 %v3434
      %v3511 = vunpack.c.l.b16 %v3435
      %v3512 = vunpack.c.l.b16 %v3436
      %v3513 = vunpack.c.l.b16 %v3437
      %v3514 = vunpack.c.l.b16 %v3438
      %v3515 = vunpack.c.l.b16 %v3439
      %v3516 = vpack.c.b16 %v3480, %v3479
      %v3517 = vpack.c.b16 %v3482, %v3481
      %v3518 = vpack.c.b16 %v3484, %v3483
      %v3519 = vpack.c.b16 %v3486, %v3485
      %v3520 = vpack.c.b16 %v3488, %v3487
      %v3521 = vpack.c.b16 %v3490, %v3489
      %v3522 = vpack.c.b16 %v3492, %v3491
      %v3523 = vpack.c.b16 %v3494, %v3493
      %v3524 = vpack.c.b16 %v3496, %v3495
      %v3525 = vpack.c.b16 %v3498, %v3497
      %v3526 = vpack.c.b16 %v3500, %v3499
      %v3527 = vpack.c.b16 %v3502, %v3501
      %v3528 = vpack.c.b16 %v3504, %v3503
      %v3529 = vpack.c.b16 %v3506, %v3505
      %v3530 = vpack.c.b16 %v3508, %v3507
      %v3531 = vpack.c.b16 %v3510, %v3509
      %v3532 = vpack.c.b16 %v3512, %v3511
      %v3533 = vpack.c.b16 %v3514, %v3513
      %v3534 = vpack.c.b16 %v3515, %v3515
      %v3535 = vrot.slane %v3516, 2
      %v3536 = vrot.slane %v3517, 2
      %v3537 = vsel %vm3023, %v3535, %v3536
      %v3538 = vrot.slane %v3518, 2
      %v3539 = vsel %vm3023, %v3536, %v3538
      %v3540 = vrot.slane %v3519, 2
      %v3541 = vsel %vm3023, %v3538, %v3540
      %v3542 = vrot.slane %v3520, 2
      %v3543 = vsel %vm3023, %v3540, %v3542
      %v3544 = vrot.slane %v3521, 2
      %v3545 = vsel %vm3023, %v3542, %v3544
      %v3546 = vrot.slane %v3522, 2
      %v3547 = vsel %vm3023, %v3544, %v3546
      %v3548 = vrot.slane %v3523, 2
      %v3549 = vsel %vm3023, %v3546, %v3548
      %v3550 = vrot.slane %v3524, 2
      %v3551 = vsel %vm3023, %v3548, %v3550
      %v3552 = vrot.slane %v3525, 2
      %v3553 = vsel %vm3023, %v3550, %v3552
      %v3554 = vrot.slane %v3526, 2
      %v3555 = vsel %vm3023, %v3552, %v3554
      %v3556 = vrot.slane %v3527, 2
      %v3557 = vsel %vm3023, %v3554, %v3556
      %v3558 = vrot.slane %v3528, 2
      %v3559 = vsel %vm3023, %v3556, %v3558
      %v3560 = vrot.slane %v3529, 2
      %v3561 = vsel %vm3023, %v3558, %v3560
      %v3562 = vrot.slane %v3530, 2
      %v3563 = vsel %vm3023, %v3560, %v3562
      %v3564 = vrot.slane %v3531, 2
      %v3565 = vsel %vm3023, %v3562, %v3564
      %v3566 = vrot.slane %v3532, 2
      %v3567 = vsel %vm3023, %v3564, %v3566
      %v3568 = vrot.slane %v3533, 2
      %v3569 = vsel %vm3023, %v3566, %v3568
      %v3570 = vrot.slane %v3534, 2
      %v3571 = vsel %vm3023, %v3568, %v3570
      %v3573 = vsel %vm353, %v3537, 0
      %v3576 = vsel %vm353, %v3539, 0
      %v3579 = vsel %vm353, %v3541, 0
      %v3582 = vsel %vm353, %v3543, 0
      %v3585 = vsel %vm353, %v3545, 0
      %v3588 = vsel %vm353, %v3547, 0
      %v3591 = vsel %vm353, %v3549, 0
      %v3594 = vsel %vm353, %v3551, 0
      %v3597 = vsel %vm353, %v3553, 0
      %v3600 = vsel %vm353, %v3555, 0
      %v3603 = vsel %vm353, %v3557, 0
      %v3606 = vsel %vm353, %v3559, 0
      %v3609 = vsel %vm353, %v3561, 0
      %v3612 = vsel %vm353, %v3563, 0
      %v3615 = vsel %vm353, %v3565, 0
      %v3618 = vsel %vm353, %v3567, 0
      %v3621 = vsel %vm353, %v3569, 0
      %v3624 = vsel %vm353, %v3571, 0
      %v3627 = vsel %vm408, %v3441, 0
      %3629 = vmatprep.subr.bf16.mxu0 0
      %3630 = vmatpush1.bf16.msra.mxu0 %v3627
      %3631 = vmatprep.subr.bf16.mxu0 0
      %3632 = vmatpush1.bf16.msra.mxu0 0
      %3633 = vmatprep.subr.bf16.mxu0 0
      %3634 = vmatpush1.bf16.msra.mxu0 0
      %3635 = vmatprep.subr.bf16.mxu0 0
      %3636 = vmatpush1.bf16.msra.mxu0 0
      %3637 = vmatprep.subr.bf16.mxu0 0
      %3638 = vmatpush1.bf16.msra.mxu0 0
      %3639 = vmatprep.subr.bf16.mxu0 0
      %3640 = vmatpush1.bf16.msra.mxu0 0
      %3641 = vmatprep.subr.bf16.mxu0 0
      %3642 = vmatpush1.bf16.msra.mxu0 0
      %3643 = vmatprep.subr.bf16.mxu0 0
      %3644 = vmatpush1.bf16.msra.mxu0 0
      %3645 = vmatprep.subr.bf16.mxu0 0
      %3646 = vmatpush1.bf16.msra.mxu0 0
      %3647 = vmatprep.subr.bf16.mxu0 0
      %3648 = vmatpush1.bf16.msra.mxu0 0
      %3649 = vmatprep.subr.bf16.mxu0 0
      %3650 = vmatpush1.bf16.msra.mxu0 0
      %3651 = vmatprep.subr.bf16.mxu0 0
      %3652 = vmatpush1.bf16.msra.mxu0 0
      %3653 = vmatprep.subr.bf16.mxu0 0
      %3654 = vmatpush1.bf16.msra.mxu0 0
      %3655 = vmatprep.subr.bf16.mxu0 0
      %3656 = vmatpush1.bf16.msra.mxu0 0
      %3657 = vmatprep.subr.bf16.mxu0 0
      %3658 = vmatpush1.bf16.msra.mxu0 0
      %3659 = vmatprep.subr.bf16.mxu0 0
      %3660 = vmatpush1.bf16.msra.mxu0 0
      %3661 = vmatprep.mubr.bf16.mxu0 0
      %3662 = vmatmul.mubr.bf16.gmra.mrb[0].mxu0 %v3573
      %v3663 = vpop.f32.mrb[0].mxu0
      %v3664 = vadd.f32 0.0, %v3663
      %v3665 = vpop.f32.mrb[0].mxu0
      %v3666 = vpop.f32.mrb[0].mxu0
      %v3667 = vadd.f32 0.0, %v3666
      %v3668 = vpop.f32.mrb[0].mxu0
      %3669 = vmatprep.mubr.bf16.mxu0 0
      %3670 = vmatmul.mubr.bf16.gmra.mrb[0].mxu0 %v3576
      %v3671 = vpop.f32.mrb[0].mxu0
      %v3672 = vadd.f32 0.0, %v3671
      %v3673 = vpop.f32.mrb[0].mxu0
      %v3674 = vpop.f32.mrb[0].mxu0
      %v3675 = vadd.f32 0.0, %v3674
      %v3676 = vpop.f32.mrb[0].mxu0
      %3677 = vmatprep.mubr.bf16.mxu0 0
      %3678 = vmatmul.mubr.bf16.gmra.mrb[0].mxu0 %v3579
      %v3679 = vpop.f32.mrb[0].mxu0
      %v3680 = vadd.f32 0.0, %v3679
      %v3681 = vpop.f32.mrb[0].mxu0
      %v3682 = vpop.f32.mrb[0].mxu0
      %v3683 = vadd.f32 0.0, %v3682
      %v3684 = vpop.f32.mrb[0].mxu0
      %3685 = vmatprep.mubr.bf16.mxu0 0
      %3686 = vmatmul.mubr.bf16.gmra.mrb[0].mxu0 %v3582
      %v3687 = vpop.f32.mrb[0].mxu0
      %v3688 = vadd.f32 0.0, %v3687
      %v3689 = vpop.f32.mrb[0].mxu0
      %v3690 = vpop.f32.mrb[0].mxu0
      %v3691 = vadd.f32 0.0, %v3690
      %v3692 = vpop.f32.mrb[0].mxu0
      %3693 = vmatprep.mubr.bf16.mxu0 0
      %3694 = vmatmul.mubr.bf16.gmra.mrb[0].mxu0 %v3585
      %v3695 = vpop.f32.mrb[0].mxu0
      %v3696 = vadd.f32 0.0, %v3695
      %v3697 = vpop.f32.mrb[0].mxu0
      %v3698 = vpop.f32.mrb[0].mxu0
      %v3699 = vadd.f32 0.0, %v3698
      %v3700 = vpop.f32.mrb[0].mxu0
      %3701 = vmatprep.mubr.bf16.mxu0 0
      %3702 = vmatmul.mubr.bf16.gmra.mrb[0].mxu0 %v3588
      %v3703 = vpop.f32.mrb[0].mxu0
      %v3704 = vadd.f32 0.0, %v3703
      %v3705 = vpop.f32.mrb[0].mxu0
      %v3706 = vpop.f32.mrb[0].mxu0
      %v3707 = vadd.f32 0.0, %v3706
      %v3708 = vpop.f32.mrb[0].mxu0
      %3709 = vmatprep.mubr.bf16.mxu0 0
      %3710 = vmatmul.mubr.bf16.gmra.mrb[0].mxu0 %v3591
      %v3711 = vpop.f32.mrb[0].mxu0
      %v3712 = vadd.f32 0.0, %v3711
      %v3713 = vpop.f32.mrb[0].mxu0
      %v3714 = vpop.f32.mrb[0].mxu0
      %v3715 = vadd.f32 0.0, %v3714
      %v3716 = vpop.f32.mrb[0].mxu0
      %3717 = vmatprep.mubr.bf16.mxu0 0
      %3718 = vmatmul.mubr.bf16.gmra.mrb[0].mxu0 %v3594
      %v3719 = vpop.f32.mrb[0].mxu0
      %v3720 = vadd.f32 0.0, %v3719
      %v3721 = vpop.f32.mrb[0].mxu0
      %v3722 = vpop.f32.mrb[0].mxu0
      %v3723 = vadd.f32 0.0, %v3722
      %v3724 = vpop.f32.mrb[0].mxu0
      %3725 = vmatprep.mubr.bf16.mxu0 0
      %3726 = vmatmul.mubr.bf16.gmra.mrb[0].mxu0 %v3597
      %v3727 = vpop.f32.mrb[0].mxu0
      %v3728 = vadd.f32 0.0, %v3727
      %v3729 = vpop.f32.mrb[0].mxu0
      %v3730 = vpop.f32.mrb[0].mxu0
      %v3731 = vadd.f32 0.0, %v3730
      %v3732 = vpop.f32.mrb[0].mxu0
      %3733 = vmatprep.mubr.bf16.mxu0 0
      %3734 = vmatmul.mubr.bf16.gmra.mrb[0].mxu0 %v3600
      %v3735 = vpop.f32.mrb[0].mxu0
      %v3736 = vadd.f32 0.0, %v3735
      %v3737 = vpop.f32.mrb[0].mxu0
      %v3738 = vpop.f32.mrb[0].mxu0
      %v3739 = vadd.f32 0.0, %v3738
      %v3740 = vpop.f32.mrb[0].mxu0
      %3741 = vmatprep.mubr.bf16.mxu0 0
      %3742 = vmatmul.mubr.bf16.gmra.mrb[0].mxu0 %v3603
      %v3743 = vpop.f32.mrb[0].mxu0
      %v3744 = vadd.f32 0.0, %v3743
      %v3745 = vpop.f32.mrb[0].mxu0
      %v3746 = vpop.f32.mrb[0].mxu0
      %v3747 = vadd.f32 0.0, %v3746
      %v3748 = vpop.f32.mrb[0].mxu0
      %3749 = vmatprep.mubr.bf16.mxu0 0
      %3750 = vmatmul.mubr.bf16.gmra.mrb[0].mxu0 %v3606
      %v3751 = vpop.f32.mrb[0].mxu0
      %v3752 = vadd.f32 0.0, %v3751
      %v3753 = vpop.f32.mrb[0].mxu0
      %v3754 = vpop.f32.mrb[0].mxu0
      %v3755 = vadd.f32 0.0, %v3754
      %v3756 = vpop.f32.mrb[0].mxu0
      %3757 = vmatprep.mubr.bf16.mxu0 0
      %3758 = vmatmul.mubr.bf16.gmra.mrb[0].mxu0 %v3609
      %v3759 = vpop.f32.mrb[0].mxu0
      %v3760 = vadd.f32 0.0, %v3759
      %v3761 = vpop.f32.mrb[0].mxu0
      %v3762 = vpop.f32.mrb[0].mxu0
      %v3763 = vadd.f32 0.0, %v3762
      %v3764 = vpop.f32.mrb[0].mxu0
      %3765 = vmatprep.mubr.bf16.mxu0 0
      %3766 = vmatmul.mubr.bf16.gmra.mrb[0].mxu0 %v3612
      %v3767 = vpop.f32.mrb[0].mxu0
      %v3768 = vadd.f32 0.0, %v3767
      %v3769 = vpop.f32.mrb[0].mxu0
      %v3770 = vpop.f32.mrb[0].mxu0
      %v3771 = vadd.f32 0.0, %v3770
      %v3772 = vpop.f32.mrb[0].mxu0
      %3773 = vmatprep.mubr.bf16.mxu0 0
      %3774 = vmatmul.mubr.bf16.gmra.mrb[0].mxu0 %v3615
      %v3775 = vpop.f32.mrb[0].mxu0
      %v3776 = vadd.f32 0.0, %v3775
      %v3777 = vpop.f32.mrb[0].mxu0
      %v3778 = vpop.f32.mrb[0].mxu0
      %v3779 = vadd.f32 0.0, %v3778
      %v3780 = vpop.f32.mrb[0].mxu0
      %3781 = vmatprep.mubr.bf16.mxu0 0
      %3782 = vmatmul.mubr.bf16.gmra.mrb[0].mxu0 %v3618
      %v3783 = vpop.f32.mrb[0].mxu0
      %v3784 = vadd.f32 0.0, %v3783
      %v3785 = vpop.f32.mrb[0].mxu0
      %v3786 = vpop.f32.mrb[0].mxu0
      %v3787 = vadd.f32 0.0, %v3786
      %v3788 = vpop.f32.mrb[0].mxu0
      %3789 = vmatprep.mubr.bf16.mxu0 0
      %3790 = vmatmul.mubr.bf16.gmra.mrb[0].mxu0 %v3621
      %v3791 = vpop.f32.mrb[0].mxu0
      %v3792 = vadd.f32 0.0, %v3791
      %v3793 = vpop.f32.mrb[0].mxu0
      %v3794 = vpop.f32.mrb[0].mxu0
      %v3795 = vadd.f32 0.0, %v3794
      %v3796 = vpop.f32.mrb[0].mxu0
      %3797 = vmatprep.mubr.bf16.mxu0 0
      %3798 = vmatmul.mubr.bf16.gmra.mrb[0].mxu0 %v3624
      %v3799 = vpop.f32.mrb[0].mxu0
      %v3800 = vadd.f32 0.0, %v3799
      %v3801 = vpop.f32.mrb[0].mxu0
      %v3802 = vpop.f32.mrb[0].mxu0
      %v3803 = vadd.f32 0.0, %v3802
      %v3804 = vpop.f32.mrb[0].mxu0
      %3805 = vdwg.mxu0
      %v3806 = vld [vmem:[#allocation2] sm:$0xff]
      %v3807 = vld [vmem:[#allocation2 + $0x8] sm:$0xff]
      %v3808 = vld [vmem:[#allocation2 + $0x10] sm:$0xff]
      %v3809 = vld [vmem:[#allocation2 + $0x18] sm:$0xff]
      %v3810 = vld [vmem:[#allocation2 + $0x20] sm:$0xff]
      %v3811 = vld [vmem:[#allocation2 + $0x28] sm:$0xff]
      %v3812 = vld [vmem:[#allocation2 + $0x30] sm:$0xff]
      %v3813 = vld [vmem:[#allocation2 + $0x38] sm:$0xff]
      %v3814 = vld [vmem:[#allocation2 + $0x40] sm:$0xff]
      %v3815 = vld [vmem:[#allocation2 + $0x48] sm:$0xff]
      %v3816 = vld [vmem:[#allocation2 + $0x50] sm:$0xff]
      %v3817 = vld [vmem:[#allocation2 + $0x58] sm:$0xff]
      %v3818 = vld [vmem:[#allocation2 + $0x60] sm:$0xff]
      %v3819 = vld [vmem:[#allocation2 + $0x68] sm:$0xff]
      %v3820 = vld [vmem:[#allocation2 + $0x70] sm:$0xff]
      %v3821 = vld [vmem:[#allocation2 + $0x78] sm:$0xff]
      %v3822 = vld [vmem:[#allocation2 + $0x80] sm:$0xff]
      %v3823 = vld [vmem:[#allocation2 + $0x88] sm:$0xff]
      %v3824 = vld [vmem:[#allocation2 + $0x90] sm:$0xff]
      %v3825 = vld [vmem:[#allocation2 + $0x98] sm:$0xff]
      %v3826 = vld [vmem:[#allocation2 + $0xa0] sm:$0xff]
      %v3827 = vld [vmem:[#allocation2 + $0xa8] sm:$0xff]
      %v3828 = vld [vmem:[#allocation2 + $0xb0] sm:$0xff]
      %v3829 = vld [vmem:[#allocation2 + $0xb8] sm:$0xff]
      %v3830 = vld [vmem:[#allocation2 + $0xc0] sm:$0xff]
      %v3831 = vld [vmem:[#allocation2 + $0xc8] sm:$0xff]
      %v3832 = vld [vmem:[#allocation2 + $0xd0] sm:$0xff]
      %v3833 = vld [vmem:[#allocation2 + $0xd8] sm:$0xff]
      %v3834 = vld [vmem:[#allocation2 + $0xe0] sm:$0xff]
      %v3835 = vld [vmem:[#allocation2 + $0xe8] sm:$0xff]
      %v3836 = vld [vmem:[#allocation2 + $0xf0] sm:$0xff]
      %v3837 = vld [vmem:[#allocation2 + $0xf8] sm:$0xff]
      %v3838 = vld [vmem:[#allocation2 + $0x100] sm:$0xff]
      %v3839 = vld [vmem:[#allocation2 + $0x108] sm:$0xff]
      %v3840 = vld [vmem:[#allocation2 + $0x110] sm:$0xff]
      %v3841 = vld [vmem:[#allocation2 + $0x118] sm:$0x3f]
      %v3842 = vadd.f32 %v3806, %v3664
      %v3843 = vadd.f32 %v3807, %v3667
      %v3844 = vadd.f32 %v3808, %v3672
      %v3845 = vadd.f32 %v3809, %v3675
      %v3846 = vadd.f32 %v3810, %v3680
      %v3847 = vadd.f32 %v3811, %v3683
      %v3848 = vadd.f32 %v3812, %v3688
      %v3849 = vadd.f32 %v3813, %v3691
      %v3850 = vadd.f32 %v3814, %v3696
      %v3851 = vadd.f32 %v3815, %v3699
      %v3852 = vadd.f32 %v3816, %v3704
      %v3853 = vadd.f32 %v3817, %v3707
      %v3854 = vadd.f32 %v3818, %v3712
      %v3855 = vadd.f32 %v3819, %v3715
      %v3856 = vadd.f32 %v3820, %v3720
      %v3857 = vadd.f32 %v3821, %v3723
      %v3858 = vadd.f32 %v3822, %v3728
      %v3859 = vadd.f32 %v3823, %v3731
      %v3860 = vadd.f32 %v3824, %v3736
      %v3861 = vadd.f32 %v3825, %v3739
      %v3862 = vadd.f32 %v3826, %v3744
      %v3863 = vadd.f32 %v3827, %v3747
      %v3864 = vadd.f32 %v3828, %v3752
      %v3865 = vadd.f32 %v3829, %v3755
      %v3866 = vadd.f32 %v3830, %v3760
      %v3867 = vadd.f32 %v3831, %v3763
      %v3868 = vadd.f32 %v3832, %v3768
      %v3869 = vadd.f32 %v3833, %v3771
      %v3870 = vadd.f32 %v3834, %v3776
      %v3871 = vadd.f32 %v3835, %v3779
      %v3872 = vadd.f32 %v3836, %v3784
      %v3873 = vadd.f32 %v3837, %v3787
      %v3874 = vadd.f32 %v3838, %v3792
      %v3875 = vadd.f32 %v3839, %v3795
      %v3876 = vadd.f32 %v3840, %v3800
      %v3877 = vadd.f32 %v3841, %v3803
      %3878 = vst [vmem:[#allocation2] sm:$0xff] %v3842
      %3879 = vst [vmem:[#allocation2 + $0x8] sm:$0xff] %v3843
      %3880 = vst [vmem:[#allocation2 + $0x10] sm:$0xff] %v3844
      %3881 = vst [vmem:[#allocation2 + $0x18] sm:$0xff] %v3845
      %3882 = vst [vmem:[#allocation2 + $0x20] sm:$0xff] %v3846
      %3883 = vst [vmem:[#allocation2 + $0x28] sm:$0xff] %v3847
      %3884 = vst [vmem:[#allocation2 + $0x30] sm:$0xff] %v3848
      %3885 = vst [vmem:[#allocation2 + $0x38] sm:$0xff] %v3849
      %3886 = vst [vmem:[#allocation2 + $0x40] sm:$0xff] %v3850
      %3887 = vst [vmem:[#allocation2 + $0x48] sm:$0xff] %v3851
      %3888 = vst [vmem:[#allocation2 + $0x50] sm:$0xff] %v3852
      %3889 = vst [vmem:[#allocation2 + $0x58] sm:$0xff] %v3853
      %3890 = vst [vmem:[#allocation2 + $0x60] sm:$0xff] %v3854
      %3891 = vst [vmem:[#allocation2 + $0x68] sm:$0xff] %v3855
      %3892 = vst [vmem:[#allocation2 + $0x70] sm:$0xff] %v3856
      %3893 = vst [vmem:[#allocation2 + $0x78] sm:$0xff] %v3857
      %3894 = vst [vmem:[#allocation2 + $0x80] sm:$0xff] %v3858
      %3895 = vst [vmem:[#allocation2 + $0x88] sm:$0xff] %v3859
      %3896 = vst [vmem:[#allocation2 + $0x90] sm:$0xff] %v3860
      %3897 = vst [vmem:[#allocation2 + $0x98] sm:$0xff] %v3861
      %3898 = vst [vmem:[#allocation2 + $0xa0] sm:$0xff] %v3862
      %3899 = vst [vmem:[#allocation2 + $0xa8] sm:$0xff] %v3863
      %3900 = vst [vmem:[#allocation2 + $0xb0] sm:$0xff] %v3864
      %3901 = vst [vmem:[#allocation2 + $0xb8] sm:$0xff] %v3865
      %3902 = vst [vmem:[#allocation2 + $0xc0] sm:$0xff] %v3866
      %3903 = vst [vmem:[#allocation2 + $0xc8] sm:$0xff] %v3867
      %3904 = vst [vmem:[#allocation2 + $0xd0] sm:$0xff] %v3868
      %3905 = vst [vmem:[#allocation2 + $0xd8] sm:$0xff] %v3869
      %3906 = vst [vmem:[#allocation2 + $0xe0] sm:$0xff] %v3870
      %3907 = vst [vmem:[#allocation2 + $0xe8] sm:$0xff] %v3871
      %3908 = vst [vmem:[#allocation2 + $0xf0] sm:$0xff] %v3872
      %3909 = vst [vmem:[#allocation2 + $0xf8] sm:$0xff] %v3873
      %3910 = vst [vmem:[#allocation2 + $0x100] sm:$0xff] %v3874
      %3911 = vst [vmem:[#allocation2 + $0x108] sm:$0xff] %v3875
      %3912 = vst [vmem:[#allocation2 + $0x110] sm:$0xff] %v3876
      %3913 = vst [vmem:[#allocation2 + $0x118] sm:$0x3f] %v3877
      %v3914 = vld [vmem:[%s208 + $0x10] sm:$0xc]
      %v3915 = vld [vmem:[%s208 + $0x14] sm:$0xf]
      %v3916 = vld [vmem:[%s208 + $0x18] sm:$0xf]
      %v3917 = vld [vmem:[%s208 + $0x1c] sm:$0xf]
      %v3918 = vld [vmem:[%s208 + $0x20] sm:$0xf]
      %v3919 = vld [vmem:[%s208 + $0x24] sm:$0xf]
      %v3920 = vld [vmem:[%s208 + $0x28] sm:$0xf]
      %v3921 = vld [vmem:[%s208 + $0x2c] sm:$0xf]
      %v3922 = vld [vmem:[%s208 + $0x30] sm:$0xf]
      %v3923 = vld [vmem:[%s208 + $0x34] sm:$0xf]
      %v3924 = vld [vmem:[%s208 + $0x38] sm:$0xf]
      %v3925 = vld [vmem:[%s208 + $0x3c] sm:$0xf]
      %v3926 = vld [vmem:[%s208 + $0x40] sm:$0xf]
      %v3927 = vld [vmem:[%s208 + $0x44] sm:$0xf]
      %v3928 = vld [vmem:[%s208 + $0x48] sm:$0xf]
      %v3929 = vld [vmem:[%s208 + $0x4c] sm:$0xf]
      %v3930 = vld [vmem:[%s208 + $0x50] sm:$0xf]
      %v3931 = vld [vmem:[%s208 + $0x54] sm:$0xf]
      %v3932 = vld [vmem:[%s208 + $0x58] sm:$0xf]
      %v3933 = vld [vmem:[%s208 + $0x5c] sm:$0xf]
      %v3934 = vld [vmem:[%s208 + $0x60] sm:$0xf]
      %v3935 = vld [vmem:[%s208 + $0x64] sm:$0xf]
      %v3936 = vld [vmem:[%s208 + $0x68] sm:$0xf]
      %v3937 = vld [vmem:[%s208 + $0x6c] sm:$0xf]
      %v3938 = vld [vmem:[%s208 + $0x70] sm:$0xf]
      %v3939 = vld [vmem:[%s208 + $0x74] sm:$0xf]
      %v3940 = vld [vmem:[%s208 + $0x78] sm:$0xf]
      %v3941 = vld [vmem:[%s208 + $0x7c] sm:$0xf]
      %v3942 = vld [vmem:[%s208 + $0x80] sm:$0xf]
      %v3943 = vld [vmem:[%s208 + $0x84] sm:$0xf]
      %v3944 = vld [vmem:[%s208 + $0x88] sm:$0xf]
      %v3945 = vld [vmem:[%s208 + $0x8c] sm:$0xf]
      %v3946 = vld [vmem:[%s208 + $0x90] sm:$0xf]
      %v3947 = vld [vmem:[%s208 + $0x94] sm:$0xf]
      %v3948 = vld [vmem:[%s208 + $0x98] sm:$0xf]
      %v3949 = vld [vmem:[%s208 + $0x9c] sm:$0xf]
      %v3950 = vld [vmem:[%s208 + $0xa0] sm:$0x3]
      %s3951 = scalar_lea.vmem %s212, 28
      %v3952 = vld [vmem:[%s3951] sm:$0xf]
      %v3990 = vunpack.c.l.b16 %v3914
      %v3991 = vunpack.c.l.b16 %v3915
      %v3992 = vunpack.c.l.b16 %v3916
      %v3993 = vunpack.c.l.b16 %v3917
      %v3994 = vunpack.c.l.b16 %v3918
      %v3995 = vunpack.c.l.b16 %v3919
      %v3996 = vunpack.c.l.b16 %v3920
      %v3997 = vunpack.c.l.b16 %v3921
      %v3998 = vunpack.c.l.b16 %v3922
      %v3999 = vunpack.c.l.b16 %v3923
      %v4000 = vunpack.c.l.b16 %v3924
      %v4001 = vunpack.c.l.b16 %v3925
      %v4002 = vunpack.c.l.b16 %v3926
      %v4003 = vunpack.c.l.b16 %v3927
      %v4004 = vunpack.c.l.b16 %v3928
      %v4005 = vunpack.c.l.b16 %v3929
      %v4006 = vunpack.c.l.b16 %v3930
      %v4007 = vunpack.c.l.b16 %v3931
      %v4008 = vunpack.c.l.b16 %v3932
      %v4009 = vunpack.c.l.b16 %v3933
      %v4010 = vunpack.c.l.b16 %v3934
      %v4011 = vunpack.c.l.b16 %v3935
      %v4012 = vunpack.c.l.b16 %v3936
      %v4013 = vunpack.c.l.b16 %v3937
      %v4014 = vunpack.c.l.b16 %v3938
      %v4015 = vunpack.c.l.b16 %v3939
      %v4016 = vunpack.c.l.b16 %v3940
      %v4017 = vunpack.c.l.b16 %v3941
      %v4018 = vunpack.c.l.b16 %v3942
      %v4019 = vunpack.c.l.b16 %v3943
      %v4020 = vunpack.c.l.b16 %v3944
      %v4021 = vunpack.c.l.b16 %v3945
      %v4022 = vunpack.c.l.b16 %v3946
      %v4023 = vunpack.c.l.b16 %v3947
      %v4024 = vunpack.c.l.b16 %v3948
      %v4025 = vunpack.c.l.b16 %v3949
      %v4026 = vunpack.c.l.b16 %v3950
      %v4027 = vpack.c.b16 %v3991, %v3990
      %v4028 = vpack.c.b16 %v3993, %v3992
      %v4029 = vpack.c.b16 %v3995, %v3994
      %v4030 = vpack.c.b16 %v3997, %v3996
      %v4031 = vpack.c.b16 %v3999, %v3998
      %v4032 = vpack.c.b16 %v4001, %v4000
      %v4033 = vpack.c.b16 %v4003, %v4002
      %v4034 = vpack.c.b16 %v4005, %v4004
      %v4035 = vpack.c.b16 %v4007, %v4006
      %v4036 = vpack.c.b16 %v4009, %v4008
      %v4037 = vpack.c.b16 %v4011, %v4010
      %v4038 = vpack.c.b16 %v4013, %v4012
      %v4039 = vpack.c.b16 %v4015, %v4014
      %v4040 = vpack.c.b16 %v4017, %v4016
      %v4041 = vpack.c.b16 %v4019, %v4018
      %v4042 = vpack.c.b16 %v4021, %v4020
      %v4043 = vpack.c.b16 %v4023, %v4022
      %v4044 = vpack.c.b16 %v4025, %v4024
      %v4045 = vpack.c.b16 %v4026, %v4026
      %vm4046 = vsmask.f32 5376
      %v4048 = vshrl.u32 %v4027, 16
      %v4050 = vrot.slane %v4048, 2
      %v4051 = vshll.u32 %v4027, 16
      %v4053 = vrot.slane %v4051, 3
      %v4054 = vor.u32 %v4050, %v4053
      %v4056 = vshrl.u32 %v4028, 16
      %v4058 = vrot.slane %v4056, 2
      %v4059 = vshll.u32 %v4028, 16
      %v4061 = vrot.slane %v4059, 3
      %v4062 = vor.u32 %v4058, %v4061
      %v4063 = vsel %vm4046, %v4054, %v4062
      %v4065 = vshrl.u32 %v4029, 16
      %v4067 = vrot.slane %v4065, 2
      %v4068 = vshll.u32 %v4029, 16
      %v4070 = vrot.slane %v4068, 3
      %v4071 = vor.u32 %v4067, %v4070
      %v4072 = vsel %vm4046, %v4062, %v4071
      %v4074 = vshrl.u32 %v4030, 16
      %v4076 = vrot.slane %v4074, 2
      %v4077 = vshll.u32 %v4030, 16
      %v4079 = vrot.slane %v4077, 3
      %v4080 = vor.u32 %v4076, %v4079
      %v4081 = vsel %vm4046, %v4071, %v4080
      %v4083 = vshrl.u32 %v4031, 16
      %v4085 = vrot.slane %v4083, 2
      %v4086 = vshll.u32 %v4031, 16
      %v4088 = vrot.slane %v4086, 3
      %v4089 = vor.u32 %v4085, %v4088
      %v4090 = vsel %vm4046, %v4080, %v4089
      %v4092 = vshrl.u32 %v4032, 16
      %v4094 = vrot.slane %v4092, 2
      %v4095 = vshll.u32 %v4032, 16
      %v4097 = vrot.slane %v4095, 3
      %v4098 = vor.u32 %v4094, %v4097
      %v4099 = vsel %vm4046, %v4089, %v4098
      %v4101 = vshrl.u32 %v4033, 16
      %v4103 = vrot.slane %v4101, 2
      %v4104 = vshll.u32 %v4033, 16
      %v4106 = vrot.slane %v4104, 3
      %v4107 = vor.u32 %v4103, %v4106
      %v4108 = vsel %vm4046, %v4098, %v4107
      %v4110 = vshrl.u32 %v4034, 16
      %v4112 = vrot.slane %v4110, 2
      %v4113 = vshll.u32 %v4034, 16
      %v4115 = vrot.slane %v4113, 3
      %v4116 = vor.u32 %v4112, %v4115
      %v4117 = vsel %vm4046, %v4107, %v4116
      %v4119 = vshrl.u32 %v4035, 16
      %v4121 = vrot.slane %v4119, 2
      %v4122 = vshll.u32 %v4035, 16
      %v4124 = vrot.slane %v4122, 3
      %v4125 = vor.u32 %v4121, %v4124
      %v4126 = vsel %vm4046, %v4116, %v4125
      %v4128 = vshrl.u32 %v4036, 16
      %v4130 = vrot.slane %v4128, 2
      %v4131 = vshll.u32 %v4036, 16
      %v4133 = vrot.slane %v4131, 3
      %v4134 = vor.u32 %v4130, %v4133
      %v4135 = vsel %vm4046, %v4125, %v4134
      %v4137 = vshrl.u32 %v4037, 16
      %v4139 = vrot.slane %v4137, 2
      %v4140 = vshll.u32 %v4037, 16
      %v4142 = vrot.slane %v4140, 3
      %v4143 = vor.u32 %v4139, %v4142
      %v4144 = vsel %vm4046, %v4134, %v4143
      %v4146 = vshrl.u32 %v4038, 16
      %v4148 = vrot.slane %v4146, 2
      %v4149 = vshll.u32 %v4038, 16
      %v4151 = vrot.slane %v4149, 3
      %v4152 = vor.u32 %v4148, %v4151
      %v4153 = vsel %vm4046, %v4143, %v4152
      %v4155 = vshrl.u32 %v4039, 16
      %v4157 = vrot.slane %v4155, 2
      %v4158 = vshll.u32 %v4039, 16
      %v4160 = vrot.slane %v4158, 3
      %v4161 = vor.u32 %v4157, %v4160
      %v4162 = vsel %vm4046, %v4152, %v4161
      %v4164 = vshrl.u32 %v4040, 16
      %v4166 = vrot.slane %v4164, 2
      %v4167 = vshll.u32 %v4040, 16
      %v4169 = vrot.slane %v4167, 3
      %v4170 = vor.u32 %v4166, %v4169
      %v4171 = vsel %vm4046, %v4161, %v4170
      %v4173 = vshrl.u32 %v4041, 16
      %v4175 = vrot.slane %v4173, 2
      %v4176 = vshll.u32 %v4041, 16
      %v4178 = vrot.slane %v4176, 3
      %v4179 = vor.u32 %v4175, %v4178
      %v4180 = vsel %vm4046, %v4170, %v4179
      %v4182 = vshrl.u32 %v4042, 16
      %v4184 = vrot.slane %v4182, 2
      %v4185 = vshll.u32 %v4042, 16
      %v4187 = vrot.slane %v4185, 3
      %v4188 = vor.u32 %v4184, %v4187
      %v4189 = vsel %vm4046, %v4179, %v4188
      %v4191 = vshrl.u32 %v4043, 16
      %v4193 = vrot.slane %v4191, 2
      %v4194 = vshll.u32 %v4043, 16
      %v4196 = vrot.slane %v4194, 3
      %v4197 = vor.u32 %v4193, %v4196
      %v4198 = vsel %vm4046, %v4188, %v4197
      %v4200 = vshrl.u32 %v4044, 16
      %v4202 = vrot.slane %v4200, 2
      %v4203 = vshll.u32 %v4044, 16
      %v4205 = vrot.slane %v4203, 3
      %v4206 = vor.u32 %v4202, %v4205
      %v4207 = vsel %vm4046, %v4197, %v4206
      %v4209 = vshrl.u32 %v4045, 16
      %v4211 = vrot.slane %v4209, 2
      %v4212 = vshll.u32 %v4045, 16
      %v4214 = vrot.slane %v4212, 3
      %v4215 = vor.u32 %v4211, %v4214
      %v4216 = vsel %vm4046, %v4206, %v4215
      %v4218 = vsel %vm353, %v4063, 0
      %v4221 = vsel %vm353, %v4072, 0
      %v4224 = vsel %vm353, %v4081, 0
      %v4227 = vsel %vm353, %v4090, 0
      %v4230 = vsel %vm353, %v4099, 0
      %v4233 = vsel %vm353, %v4108, 0
      %v4236 = vsel %vm353, %v4117, 0
      %v4239 = vsel %vm353, %v4126, 0
      %v4242 = vsel %vm353, %v4135, 0
      %v4245 = vsel %vm353, %v4144, 0
      %v4248 = vsel %vm353, %v4153, 0
      %v4251 = vsel %vm353, %v4162, 0
      %v4254 = vsel %vm353, %v4171, 0
      %v4257 = vsel %vm353, %v4180, 0
      %v4260 = vsel %vm353, %v4189, 0
      %v4263 = vsel %vm353, %v4198, 0
      %v4266 = vsel %vm353, %v4207, 0
      %v4269 = vsel %vm353, %v4216, 0
      %v4272 = vsel %vm408, %v3952, 0
      %4274 = vmatprep.subr.bf16.mxu0 0
      %4275 = vmatpush1.bf16.msra.mxu0 %v4272
      %4276 = vmatprep.subr.bf16.mxu0 0
      %4277 = vmatpush1.bf16.msra.mxu0 0
      %4278 = vmatprep.subr.bf16.mxu0 0
      %4279 = vmatpush1.bf16.msra.mxu0 0
      %4280 = vmatprep.subr.bf16.mxu0 0
      %4281 = vmatpush1.bf16.msra.mxu0 0
      %4282 = vmatprep.subr.bf16.mxu0 0
      %4283 = vmatpush1.bf16.msra.mxu0 0
      %4284 = vmatprep.subr.bf16.mxu0 0
      %4285 = vmatpush1.bf16.msra.mxu0 0
      %4286 = vmatprep.subr.bf16.mxu0 0
      %4287 = vmatpush1.bf16.msra.mxu0 0
      %4288 = vmatprep.subr.bf16.mxu0 0
      %4289 = vmatpush1.bf16.msra.mxu0 0
      %4290 = vmatprep.subr.bf16.mxu0 0
      %4291 = vmatpush1.bf16.msra.mxu0 0
      %4292 = vmatprep.subr.bf16.mxu0 0
      %4293 = vmatpush1.bf16.msra.mxu0 0
      %4294 = vmatprep.subr.bf16.mxu0 0
      %4295 = vmatpush1.bf16.msra.mxu0 0
      %4296 = vmatprep.subr.bf16.mxu0 0
      %4297 = vmatpush1.bf16.msra.mxu0 0
      %4298 = vmatprep.subr.bf16.mxu0 0
      %4299 = vmatpush1.bf16.msra.mxu0 0
      %4300 = vmatprep.subr.bf16.mxu0 0
      %4301 = vmatpush1.bf16.msra.mxu0 0
      %4302 = vmatprep.subr.bf16.mxu0 0
      %4303 = vmatpush1.bf16.msra.mxu0 0
      %4304 = vmatprep.subr.bf16.mxu0 0
      %4305 = vmatpush1.bf16.msra.mxu0 0
      %4306 = vmatprep.mubr.bf16.mxu0 0
      %4307 = vmatmul.mubr.bf16.gmra.mrb[0].mxu0 %v4218
      %v4308 = vpop.f32.mrb[0].mxu0
      %v4309 = vadd.f32 0.0, %v4308
      %v4310 = vpop.f32.mrb[0].mxu0
      %v4311 = vpop.f32.mrb[0].mxu0
      %v4312 = vadd.f32 0.0, %v4311
      %v4313 = vpop.f32.mrb[0].mxu0
      %4314 = vmatprep.mubr.bf16.mxu0 0
      %4315 = vmatmul.mubr.bf16.gmra.mrb[0].mxu0 %v4221
      %v4316 = vpop.f32.mrb[0].mxu0
      %v4317 = vadd.f32 0.0, %v4316
      %v4318 = vpop.f32.mrb[0].mxu0
      %v4319 = vpop.f32.mrb[0].mxu0
      %v4320 = vadd.f32 0.0, %v4319
      %v4321 = vpop.f32.mrb[0].mxu0
      %4322 = vmatprep.mubr.bf16.mxu0 0
      %4323 = vmatmul.mubr.bf16.gmra.mrb[0].mxu0 %v4224
      %v4324 = vpop.f32.mrb[0].mxu0
      %v4325 = vadd.f32 0.0, %v4324
      %v4326 = vpop.f32.mrb[0].mxu0
      %v4327 = vpop.f32.mrb[0].mxu0
      %v4328 = vadd.f32 0.0, %v4327
      %v4329 = vpop.f32.mrb[0].mxu0
      %4330 = vmatprep.mubr.bf16.mxu0 0
      %4331 = vmatmul.mubr.bf16.gmra.mrb[0].mxu0 %v4227
      %v4332 = vpop.f32.mrb[0].mxu0
      %v4333 = vadd.f32 0.0, %v4332
      %v4334 = vpop.f32.mrb[0].mxu0
      %v4335 = vpop.f32.mrb[0].mxu0
      %v4336 = vadd.f32 0.0, %v4335
      %v4337 = vpop.f32.mrb[0].mxu0
      %4338 = vmatprep.mubr.bf16.mxu0 0
      %4339 = vmatmul.mubr.bf16.gmra.mrb[0].mxu0 %v4230
      %v4340 = vpop.f32.mrb[0].mxu0
      %v4341 = vadd.f32 0.0, %v4340
      %v4342 = vpop.f32.mrb[0].mxu0
      %v4343 = vpop.f32.mrb[0].mxu0
      %v4344 = vadd.f32 0.0, %v4343
      %v4345 = vpop.f32.mrb[0].mxu0
      %4346 = vmatprep.mubr.bf16.mxu0 0
      %4347 = vmatmul.mubr.bf16.gmra.mrb[0].mxu0 %v4233
      %v4348 = vpop.f32.mrb[0].mxu0
      %v4349 = vadd.f32 0.0, %v4348
      %v4350 = vpop.f32.mrb[0].mxu0
      %v4351 = vpop.f32.mrb[0].mxu0
      %v4352 = vadd.f32 0.0, %v4351
      %v4353 = vpop.f32.mrb[0].mxu0
      %4354 = vmatprep.mubr.bf16.mxu0 0
      %4355 = vmatmul.mubr.bf16.gmra.mrb[0].mxu0 %v4236
      %v4356 = vpop.f32.mrb[0].mxu0
      %v4357 = vadd.f32 0.0, %v4356
      %v4358 = vpop.f32.mrb[0].mxu0
      %v4359 = vpop.f32.mrb[0].mxu0
      %v4360 = vadd.f32 0.0, %v4359
      %v4361 = vpop.f32.mrb[0].mxu0
      %4362 = vmatprep.mubr.bf16.mxu0 0
      %4363 = vmatmul.mubr.bf16.gmra.mrb[0].mxu0 %v4239
      %v4364 = vpop.f32.mrb[0].mxu0
      %v4365 = vadd.f32 0.0, %v4364
      %v4366 = vpop.f32.mrb[0].mxu0
      %v4367 = vpop.f32.mrb[0].mxu0
      %v4368 = vadd.f32 0.0, %v4367
      %v4369 = vpop.f32.mrb[0].mxu0
      %4370 = vmatprep.mubr.bf16.mxu0 0
      %4371 = vmatmul.mubr.bf16.gmra.mrb[0].mxu0 %v4242
      %v4372 = vpop.f32.mrb[0].mxu0
      %v4373 = vadd.f32 0.0, %v4372
      %v4374 = vpop.f32.mrb[0].mxu0
      %v4375 = vpop.f32.mrb[0].mxu0
      %v4376 = vadd.f32 0.0, %v4375
      %v4377 = vpop.f32.mrb[0].mxu0
      %4378 = vmatprep.mubr.bf16.mxu0 0
      %4379 = vmatmul.mubr.bf16.gmra.mrb[0].mxu0 %v4245
      %v4380 = vpop.f32.mrb[0].mxu0
      %v4381 = vadd.f32 0.0, %v4380
      %v4382 = vpop.f32.mrb[0].mxu0
      %v4383 = vpop.f32.mrb[0].mxu0
      %v4384 = vadd.f32 0.0, %v4383
      %v4385 = vpop.f32.mrb[0].mxu0
      %4386 = vmatprep.mubr.bf16.mxu0 0
      %4387 = vmatmul.mubr.bf16.gmra.mrb[0].mxu0 %v4248
      %v4388 = vpop.f32.mrb[0].mxu0
      %v4389 = vadd.f32 0.0, %v4388
      %v4390 = vpop.f32.mrb[0].mxu0
      %v4391 = vpop.f32.mrb[0].mxu0
      %v4392 = vadd.f32 0.0, %v4391
      %v4393 = vpop.f32.mrb[0].mxu0
      %4394 = vmatprep.mubr.bf16.mxu0 0
      %4395 = vmatmul.mubr.bf16.gmra.mrb[0].mxu0 %v4251
      %v4396 = vpop.f32.mrb[0].mxu0
      %v4397 = vadd.f32 0.0, %v4396
      %v4398 = vpop.f32.mrb[0].mxu0
      %v4399 = vpop.f32.mrb[0].mxu0
      %v4400 = vadd.f32 0.0, %v4399
      %v4401 = vpop.f32.mrb[0].mxu0
      %4402 = vmatprep.mubr.bf16.mxu0 0
      %4403 = vmatmul.mubr.bf16.gmra.mrb[0].mxu0 %v4254
      %v4404 = vpop.f32.mrb[0].mxu0
      %v4405 = vadd.f32 0.0, %v4404
      %v4406 = vpop.f32.mrb[0].mxu0
      %v4407 = vpop.f32.mrb[0].mxu0
      %v4408 = vadd.f32 0.0, %v4407
      %v4409 = vpop.f32.mrb[0].mxu0
      %4410 = vmatprep.mubr.bf16.mxu0 0
      %4411 = vmatmul.mubr.bf16.gmra.mrb[0].mxu0 %v4257
      %v4412 = vpop.f32.mrb[0].mxu0
      %v4413 = vadd.f32 0.0, %v4412
      %v4414 = vpop.f32.mrb[0].mxu0
      %v4415 = vpop.f32.mrb[0].mxu0
      %v4416 = vadd.f32 0.0, %v4415
      %v4417 = vpop.f32.mrb[0].mxu0
      %4418 = vmatprep.mubr.bf16.mxu0 0
      %4419 = vmatmul.mubr.bf16.gmra.mrb[0].mxu0 %v4260
      %v4420 = vpop.f32.mrb[0].mxu0
      %v4421 = vadd.f32 0.0, %v4420
      %v4422 = vpop.f32.mrb[0].mxu0
      %v4423 = vpop.f32.mrb[0].mxu0
      %v4424 = vadd.f32 0.0, %v4423
      %v4425 = vpop.f32.mrb[0].mxu0
      %4426 = vmatprep.mubr.bf16.mxu0 0
      %4427 = vmatmul.mubr.bf16.gmra.mrb[0].mxu0 %v4263
      %v4428 = vpop.f32.mrb[0].mxu0
      %v4429 = vadd.f32 0.0, %v4428
      %v4430 = vpop.f32.mrb[0].mxu0
      %v4431 = vpop.f32.mrb[0].mxu0
      %v4432 = vadd.f32 0.0, %v4431
      %v4433 = vpop.f32.mrb[0].mxu0
      %4434 = vmatprep.mubr.bf16.mxu0 0
      %4435 = vmatmul.mubr.bf16.gmra.mrb[0].mxu0 %v4266
      %v4436 = vpop.f32.mrb[0].mxu0
      %v4437 = vadd.f32 0.0, %v4436
      %v4438 = vpop.f32.mrb[0].mxu0
      %v4439 = vpop.f32.mrb[0].mxu0
      %v4440 = vadd.f32 0.0, %v4439
      %v4441 = vpop.f32.mrb[0].mxu0
      %4442 = vmatprep.mubr.bf16.mxu0 0
      %4443 = vmatmul.mubr.bf16.gmra.mrb[0].mxu0 %v4269
      %v4444 = vpop.f32.mrb[0].mxu0
      %v4445 = vadd.f32 0.0, %v4444
      %v4446 = vpop.f32.mrb[0].mxu0
      %v4447 = vpop.f32.mrb[0].mxu0
      %v4448 = vadd.f32 0.0, %v4447
      %v4449 = vpop.f32.mrb[0].mxu0
      %4450 = vdwg.mxu0
      %v4451 = vld [vmem:[#allocation2] sm:$0xff]
      %v4452 = vld [vmem:[#allocation2 + $0x8] sm:$0xff]
      %v4453 = vld [vmem:[#allocation2 + $0x10] sm:$0xff]
      %v4454 = vld [vmem:[#allocation2 + $0x18] sm:$0xff]
      %v4455 = vld [vmem:[#allocation2 + $0x20] sm:$0xff]
      %v4456 = vld [vmem:[#allocation2 + $0x28] sm:$0xff]
      %v4457 = vld [vmem:[#allocation2 + $0x30] sm:$0xff]
      %v4458 = vld [vmem:[#allocation2 + $0x38] sm:$0xff]
      %v4459 = vld [vmem:[#allocation2 + $0x40] sm:$0xff]
      %v4460 = vld [vmem:[#allocation2 + $0x48] sm:$0xff]
      %v4461 = vld [vmem:[#allocation2 + $0x50] sm:$0xff]
      %v4462 = vld [vmem:[#allocation2 + $0x58] sm:$0xff]
      %v4463 = vld [vmem:[#allocation2 + $0x60] sm:$0xff]
      %v4464 = vld [vmem:[#allocation2 + $0x68] sm:$0xff]
      %v4465 = vld [vmem:[#allocation2 + $0x70] sm:$0xff]
      %v4466 = vld [vmem:[#allocation2 + $0x78] sm:$0xff]
      %v4467 = vld [vmem:[#allocation2 + $0x80] sm:$0xff]
      %v4468 = vld [vmem:[#allocation2 + $0x88] sm:$0xff]
      %v4469 = vld [vmem:[#allocation2 + $0x90] sm:$0xff]
      %v4470 = vld [vmem:[#allocation2 + $0x98] sm:$0xff]
      %v4471 = vld [vmem:[#allocation2 + $0xa0] sm:$0xff]
      %v4472 = vld [vmem:[#allocation2 + $0xa8] sm:$0xff]
      %v4473 = vld [vmem:[#allocation2 + $0xb0] sm:$0xff]
      %v4474 = vld [vmem:[#allocation2 + $0xb8] sm:$0xff]
      %v4475 = vld [vmem:[#allocation2 + $0xc0] sm:$0xff]
      %v4476 = vld [vmem:[#allocation2 + $0xc8] sm:$0xff]
      %v4477 = vld [vmem:[#allocation2 + $0xd0] sm:$0xff]
      %v4478 = vld [vmem:[#allocation2 + $0xd8] sm:$0xff]
      %v4479 = vld [vmem:[#allocation2 + $0xe0] sm:$0xff]
      %v4480 = vld [vmem:[#allocation2 + $0xe8] sm:$0xff]
      %v4481 = vld [vmem:[#allocation2 + $0xf0] sm:$0xff]
      %v4482 = vld [vmem:[#allocation2 + $0xf8] sm:$0xff]
      %v4483 = vld [vmem:[#allocation2 + $0x100] sm:$0xff]
      %v4484 = vld [vmem:[#allocation2 + $0x108] sm:$0xff]
      %v4485 = vld [vmem:[#allocation2 + $0x110] sm:$0xff]
      %v4486 = vld [vmem:[#allocation2 + $0x118] sm:$0x3f]
      %v4487 = vadd.f32 %v4451, %v4309
      %v4488 = vadd.f32 %v4452, %v4312
      %v4489 = vadd.f32 %v4453, %v4317
      %v4490 = vadd.f32 %v4454, %v4320
      %v4491 = vadd.f32 %v4455, %v4325
      %v4492 = vadd.f32 %v4456, %v4328
      %v4493 = vadd.f32 %v4457, %v4333
      %v4494 = vadd.f32 %v4458, %v4336
      %v4495 = vadd.f32 %v4459, %v4341
      %v4496 = vadd.f32 %v4460, %v4344
      %v4497 = vadd.f32 %v4461, %v4349
      %v4498 = vadd.f32 %v4462, %v4352
      %v4499 = vadd.f32 %v4463, %v4357
      %v4500 = vadd.f32 %v4464, %v4360
      %v4501 = vadd.f32 %v4465, %v4365
      %v4502 = vadd.f32 %v4466, %v4368
      %v4503 = vadd.f32 %v4467, %v4373
      %v4504 = vadd.f32 %v4468, %v4376
      %v4505 = vadd.f32 %v4469, %v4381
      %v4506 = vadd.f32 %v4470, %v4384
      %v4507 = vadd.f32 %v4471, %v4389
      %v4508 = vadd.f32 %v4472, %v4392
      %v4509 = vadd.f32 %v4473, %v4397
      %v4510 = vadd.f32 %v4474, %v4400
      %v4511 = vadd.f32 %v4475, %v4405
      %v4512 = vadd.f32 %v4476, %v4408
      %v4513 = vadd.f32 %v4477, %v4413
      %v4514 = vadd.f32 %v4478, %v4416
      %v4515 = vadd.f32 %v4479, %v4421
      %v4516 = vadd.f32 %v4480, %v4424
      %v4517 = vadd.f32 %v4481, %v4429
      %v4518 = vadd.f32 %v4482, %v4432
      %v4519 = vadd.f32 %v4483, %v4437
      %v4520 = vadd.f32 %v4484, %v4440
      %v4521 = vadd.f32 %v4485, %v4445
      %v4522 = vadd.f32 %v4486, %v4448
      %4523 = vst [vmem:[#allocation2] sm:$0xff] %v4487
      %4524 = vst [vmem:[#allocation2 + $0x8] sm:$0xff] %v4488
      %4525 = vst [vmem:[#allocation2 + $0x10] sm:$0xff] %v4489
      %4526 = vst [vmem:[#allocation2 + $0x18] sm:$0xff] %v4490
      %4527 = vst [vmem:[#allocation2 + $0x20] sm:$0xff] %v4491
      %4528 = vst [vmem:[#allocation2 + $0x28] sm:$0xff] %v4492
      %4529 = vst [vmem:[#allocation2 + $0x30] sm:$0xff] %v4493
      %4530 = vst [vmem:[#allocation2 + $0x38] sm:$0xff] %v4494
      %4531 = vst [vmem:[#allocation2 + $0x40] sm:$0xff] %v4495
      %4532 = vst [vmem:[#allocation2 + $0x48] sm:$0xff] %v4496
      %4533 = vst [vmem:[#allocation2 + $0x50] sm:$0xff] %v4497
      %4534 = vst [vmem:[#allocation2 + $0x58] sm:$0xff] %v4498
      %4535 = vst [vmem:[#allocation2 + $0x60] sm:$0xff] %v4499
      %4536 = vst [vmem:[#allocation2 + $0x68] sm:$0xff] %v4500
      %4537 = vst [vmem:[#allocation2 + $0x70] sm:$0xff] %v4501
      %4538 = vst [vmem:[#allocation2 + $0x78] sm:$0xff] %v4502
      %4539 = vst [vmem:[#allocation2 + $0x80] sm:$0xff] %v4503
      %4540 = vst [vmem:[#allocation2 + $0x88] sm:$0xff] %v4504
      %4541 = vst [vmem:[#allocation2 + $0x90] sm:$0xff] %v4505
      %4542 = vst [vmem:[#allocation2 + $0x98] sm:$0xff] %v4506
      %4543 = vst [vmem:[#allocation2 + $0xa0] sm:$0xff] %v4507
      %4544 = vst [vmem:[#allocation2 + $0xa8] sm:$0xff] %v4508
      %4545 = vst [vmem:[#allocation2 + $0xb0] sm:$0xff] %v4509
      %4546 = vst [vmem:[#allocation2 + $0xb8] sm:$0xff] %v4510
      %4547 = vst [vmem:[#allocation2 + $0xc0] sm:$0xff] %v4511
      %4548 = vst [vmem:[#allocation2 + $0xc8] sm:$0xff] %v4512
      %4549 = vst [vmem:[#allocation2 + $0xd0] sm:$0xff] %v4513
      %4550 = vst [vmem:[#allocation2 + $0xd8] sm:$0xff] %v4514
      %4551 = vst [vmem:[#allocation2 + $0xe0] sm:$0xff] %v4515
      %4552 = vst [vmem:[#allocation2 + $0xe8] sm:$0xff] %v4516
      %4553 = vst [vmem:[#allocation2 + $0xf0] sm:$0xff] %v4517
      %4554 = vst [vmem:[#allocation2 + $0xf8] sm:$0xff] %v4518
      %4555 = vst [vmem:[#allocation2 + $0x100] sm:$0xff] %v4519
      %4556 = vst [vmem:[#allocation2 + $0x108] sm:$0xff] %v4520
      %4557 = vst [vmem:[#allocation2 + $0x110] sm:$0xff] %v4521
      %4558 = vst [vmem:[#allocation2 + $0x118] sm:$0x3f] %v4522
      %v4559 = vld [vmem:[%s208 + $0x10] sm:$0x8]
      %v4560 = vld [vmem:[%s208 + $0x14] sm:$0xf]
      %v4561 = vld [vmem:[%s208 + $0x18] sm:$0xf]
      %v4562 = vld [vmem:[%s208 + $0x1c] sm:$0xf]
      %v4563 = vld [vmem:[%s208 + $0x20] sm:$0xf]
      %v4564 = vld [vmem:[%s208 + $0x24] sm:$0xf]
      %v4565 = vld [vmem:[%s208 + $0x28] sm:$0xf]
      %v4566 = vld [vmem:[%s208 + $0x2c] sm:$0xf]
      %v4567 = vld [vmem:[%s208 + $0x30] sm:$0xf]
      %v4568 = vld [vmem:[%s208 + $0x34] sm:$0xf]
      %v4569 = vld [vmem:[%s208 + $0x38] sm:$0xf]
      %v4570 = vld [vmem:[%s208 + $0x3c] sm:$0xf]
      %v4571 = vld [vmem:[%s208 + $0x40] sm:$0xf]
      %v4572 = vld [vmem:[%s208 + $0x44] sm:$0xf]
      %v4573 = vld [vmem:[%s208 + $0x48] sm:$0xf]
      %v4574 = vld [vmem:[%s208 + $0x4c] sm:$0xf]
      %v4575 = vld [vmem:[%s208 + $0x50] sm:$0xf]
      %v4576 = vld [vmem:[%s208 + $0x54] sm:$0xf]
      %v4577 = vld [vmem:[%s208 + $0x58] sm:$0xf]
      %v4578 = vld [vmem:[%s208 + $0x5c] sm:$0xf]
      %v4579 = vld [vmem:[%s208 + $0x60] sm:$0xf]
      %v4580 = vld [vmem:[%s208 + $0x64] sm:$0xf]
      %v4581 = vld [vmem:[%s208 + $0x68] sm:$0xf]
      %v4582 = vld [vmem:[%s208 + $0x6c] sm:$0xf]
      %v4583 = vld [vmem:[%s208 + $0x70] sm:$0xf]
      %v4584 = vld [vmem:[%s208 + $0x74] sm:$0xf]
      %v4585 = vld [vmem:[%s208 + $0x78] sm:$0xf]
      %v4586 = vld [vmem:[%s208 + $0x7c] sm:$0xf]
      %v4587 = vld [vmem:[%s208 + $0x80] sm:$0xf]
      %v4588 = vld [vmem:[%s208 + $0x84] sm:$0xf]
      %v4589 = vld [vmem:[%s208 + $0x88] sm:$0xf]
      %v4590 = vld [vmem:[%s208 + $0x8c] sm:$0xf]
      %v4591 = vld [vmem:[%s208 + $0x90] sm:$0xf]
      %v4592 = vld [vmem:[%s208 + $0x94] sm:$0xf]
      %v4593 = vld [vmem:[%s208 + $0x98] sm:$0xf]
      %v4594 = vld [vmem:[%s208 + $0x9c] sm:$0xf]
      %v4595 = vld [vmem:[%s208 + $0xa0] sm:$0x3]
      %s4596 = scalar_lea.vmem %s212, 32
      %v4597 = vld [vmem:[%s4596] sm:$0xf]
      %v4635 = vunpack.c.l.b16 %v4559
      %v4636 = vunpack.c.l.b16 %v4560
      %v4637 = vunpack.c.l.b16 %v4561
      %v4638 = vunpack.c.l.b16 %v4562
      %v4639 = vunpack.c.l.b16 %v4563
      %v4640 = vunpack.c.l.b16 %v4564
      %v4641 = vunpack.c.l.b16 %v4565
      %v4642 = vunpack.c.l.b16 %v4566
      %v4643 = vunpack.c.l.b16 %v4567
      %v4644 = vunpack.c.l.b16 %v4568
      %v4645 = vunpack.c.l.b16 %v4569
      %v4646 = vunpack.c.l.b16 %v4570
      %v4647 = vunpack.c.l.b16 %v4571
      %v4648 = vunpack.c.l.b16 %v4572
      %v4649 = vunpack.c.l.b16 %v4573
      %v4650 = vunpack.c.l.b16 %v4574
      %v4651 = vunpack.c.l.b16 %v4575
      %v4652 = vunpack.c.l.b16 %v4576
      %v4653 = vunpack.c.l.b16 %v4577
      %v4654 = vunpack.c.l.b16 %v4578
      %v4655 = vunpack.c.l.b16 %v4579
      %v4656 = vunpack.c.l.b16 %v4580
      %v4657 = vunpack.c.l.b16 %v4581
      %v4658 = vunpack.c.l.b16 %v4582
      %v4659 = vunpack.c.l.b16 %v4583
      %v4660 = vunpack.c.l.b16 %v4584
      %v4661 = vunpack.c.l.b16 %v4585
      %v4662 = vunpack.c.l.b16 %v4586
      %v4663 = vunpack.c.l.b16 %v4587
      %v4664 = vunpack.c.l.b16 %v4588
      %v4665 = vunpack.c.l.b16 %v4589
      %v4666 = vunpack.c.l.b16 %v4590
      %v4667 = vunpack.c.l.b16 %v4591
      %v4668 = vunpack.c.l.b16 %v4592
      %v4669 = vunpack.c.l.b16 %v4593
      %v4670 = vunpack.c.l.b16 %v4594
      %v4671 = vunpack.c.l.b16 %v4595
      %v4672 = vpack.c.b16 %v4636, %v4635
      %v4673 = vpack.c.b16 %v4638, %v4637
      %v4674 = vpack.c.b16 %v4640, %v4639
      %v4675 = vpack.c.b16 %v4642, %v4641
      %v4676 = vpack.c.b16 %v4644, %v4643
      %v4677 = vpack.c.b16 %v4646, %v4645
      %v4678 = vpack.c.b16 %v4648, %v4647
      %v4679 = vpack.c.b16 %v4650, %v4649
      %v4680 = vpack.c.b16 %v4652, %v4651
      %v4681 = vpack.c.b16 %v4654, %v4653
      %v4682 = vpack.c.b16 %v4656, %v4655
      %v4683 = vpack.c.b16 %v4658, %v4657
      %v4684 = vpack.c.b16 %v4660, %v4659
      %v4685 = vpack.c.b16 %v4662, %v4661
      %v4686 = vpack.c.b16 %v4664, %v4663
      %v4687 = vpack.c.b16 %v4666, %v4665
      %v4688 = vpack.c.b16 %v4668, %v4667
      %v4689 = vpack.c.b16 %v4670, %v4669
      %v4690 = vpack.c.b16 %v4671, %v4671
      %vm4691 = vcmask 1044480
      %v4692 = vrot.slane %v4672, 3
      %v4693 = vrot.slane %v4673, 3
      %v4694 = vsel %vm4691, %v4692, %v4693
      %v4695 = vrot.slane %v4674, 3
      %v4696 = vsel %vm4691, %v4693, %v4695
      %v4697 = vrot.slane %v4675, 3
      %v4698 = vsel %vm4691, %v4695, %v4697
      %v4699 = vrot.slane %v4676, 3
      %v4700 = vsel %vm4691, %v4697, %v4699
      %v4701 = vrot.slane %v4677, 3
      %v4702 = vsel %vm4691, %v4699, %v4701
      %v4703 = vrot.slane %v4678, 3
      %v4704 = vsel %vm4691, %v4701, %v4703
      %v4705 = vrot.slane %v4679, 3
      %v4706 = vsel %vm4691, %v4703, %v4705
      %v4707 = vrot.slane %v4680, 3
      %v4708 = vsel %vm4691, %v4705, %v4707
      %v4709 = vrot.slane %v4681, 3
      %v4710 = vsel %vm4691, %v4707, %v4709
      %v4711 = vrot.slane %v4682, 3
      %v4712 = vsel %vm4691, %v4709, %v4711
      %v4713 = vrot.slane %v4683, 3
      %v4714 = vsel %vm4691, %v4711, %v4713
      %v4715 = vrot.slane %v4684, 3
      %v4716 = vsel %vm4691, %v4713, %v4715
      %v4717 = vrot.slane %v4685, 3
      %v4718 = vsel %vm4691, %v4715, %v4717
      %v4719 = vrot.slane %v4686, 3
      %v4720 = vsel %vm4691, %v4717, %v4719
      %v4721 = vrot.slane %v4687, 3
      %v4722 = vsel %vm4691, %v4719, %v4721
      %v4723 = vrot.slane %v4688, 3
      %v4724 = vsel %vm4691, %v4721, %v4723
      %v4725 = vrot.slane %v4689, 3
      %v4726 = vsel %vm4691, %v4723, %v4725
      %v4727 = vrot.slane %v4690, 3
      %v4728 = vsel %vm4691, %v4725, %v4727
      %v4730 = vsel %vm353, %v4694, 0
      %v4733 = vsel %vm353, %v4696, 0
      %v4736 = vsel %vm353, %v4698, 0
      %v4739 = vsel %vm353, %v4700, 0
      %v4742 = vsel %vm353, %v4702, 0
      %v4745 = vsel %vm353, %v4704, 0
      %v4748 = vsel %vm353, %v4706, 0
      %v4751 = vsel %vm353, %v4708, 0
      %v4754 = vsel %vm353, %v4710, 0
      %v4757 = vsel %vm353, %v4712, 0
      %v4760 = vsel %vm353, %v4714, 0
      %v4763 = vsel %vm353, %v4716, 0
      %v4766 = vsel %vm353, %v4718, 0
      %v4769 = vsel %vm353, %v4720, 0
      %v4772 = vsel %vm353, %v4722, 0
      %v4775 = vsel %vm353, %v4724, 0
      %v4778 = vsel %vm353, %v4726, 0
      %v4781 = vsel %vm353, %v4728, 0
      %v4784 = vsel %vm408, %v4597, 0
      %4786 = vmatprep.subr.bf16.mxu0 0
      %4787 = vmatpush1.bf16.msra.mxu0 %v4784
      %4788 = vmatprep.subr.bf16.mxu0 0
      %4789 = vmatpush1.bf16.msra.mxu0 0
      %4790 = vmatprep.subr.bf16.mxu0 0
      %4791 = vmatpush1.bf16.msra.mxu0 0
      %4792 = vmatprep.subr.bf16.mxu0 0
      %4793 = vmatpush1.bf16.msra.mxu0 0
      %4794 = vmatprep.subr.bf16.mxu0 0
      %4795 = vmatpush1.bf16.msra.mxu0 0
      %4796 = vmatprep.subr.bf16.mxu0 0
      %4797 = vmatpush1.bf16.msra.mxu0 0
      %4798 = vmatprep.subr.bf16.mxu0 0
      %4799 = vmatpush1.bf16.msra.mxu0 0
      %4800 = vmatprep.subr.bf16.mxu0 0
      %4801 = vmatpush1.bf16.msra.mxu0 0
      %4802 = vmatprep.subr.bf16.mxu0 0
      %4803 = vmatpush1.bf16.msra.mxu0 0
      %4804 = vmatprep.subr.bf16.mxu0 0
      %4805 = vmatpush1.bf16.msra.mxu0 0
      %4806 = vmatprep.subr.bf16.mxu0 0
      %4807 = vmatpush1.bf16.msra.mxu0 0
      %4808 = vmatprep.subr.bf16.mxu0 0
      %4809 = vmatpush1.bf16.msra.mxu0 0
      %4810 = vmatprep.subr.bf16.mxu0 0
      %4811 = vmatpush1.bf16.msra.mxu0 0
      %4812 = vmatprep.subr.bf16.mxu0 0
      %4813 = vmatpush1.bf16.msra.mxu0 0
      %4814 = vmatprep.subr.bf16.mxu0 0
      %4815 = vmatpush1.bf16.msra.mxu0 0
      %4816 = vmatprep.subr.bf16.mxu0 0
      %4817 = vmatpush1.bf16.msra.mxu0 0
      %4818 = vmatprep.mubr.bf16.mxu0 0
      %4819 = vmatmul.mubr.bf16.gmra.mrb[0].mxu0 %v4730
      %v4820 = vpop.f32.mrb[0].mxu0
      %v4821 = vadd.f32 0.0, %v4820
      %v4822 = vpop.f32.mrb[0].mxu0
      %v4823 = vpop.f32.mrb[0].mxu0
      %v4824 = vadd.f32 0.0, %v4823
      %v4825 = vpop.f32.mrb[0].mxu0
      %4826 = vmatprep.mubr.bf16.mxu0 0
      %4827 = vmatmul.mubr.bf16.gmra.mrb[0].mxu0 %v4733
      %v4828 = vpop.f32.mrb[0].mxu0
      %v4829 = vadd.f32 0.0, %v4828
      %v4830 = vpop.f32.mrb[0].mxu0
      %v4831 = vpop.f32.mrb[0].mxu0
      %v4832 = vadd.f32 0.0, %v4831
      %v4833 = vpop.f32.mrb[0].mxu0
      %4834 = vmatprep.mubr.bf16.mxu0 0
      %4835 = vmatmul.mubr.bf16.gmra.mrb[0].mxu0 %v4736
      %v4836 = vpop.f32.mrb[0].mxu0
      %v4837 = vadd.f32 0.0, %v4836
      %v4838 = vpop.f32.mrb[0].mxu0
      %v4839 = vpop.f32.mrb[0].mxu0
      %v4840 = vadd.f32 0.0, %v4839
      %v4841 = vpop.f32.mrb[0].mxu0
      %4842 = vmatprep.mubr.bf16.mxu0 0
      %4843 = vmatmul.mubr.bf16.gmra.mrb[0].mxu0 %v4739
      %v4844 = vpop.f32.mrb[0].mxu0
      %v4845 = vadd.f32 0.0, %v4844
      %v4846 = vpop.f32.mrb[0].mxu0
      %v4847 = vpop.f32.mrb[0].mxu0
      %v4848 = vadd.f32 0.0, %v4847
      %v4849 = vpop.f32.mrb[0].mxu0
      %4850 = vmatprep.mubr.bf16.mxu0 0
      %4851 = vmatmul.mubr.bf16.gmra.mrb[0].mxu0 %v4742
      %v4852 = vpop.f32.mrb[0].mxu0
      %v4853 = vadd.f32 0.0, %v4852
      %v4854 = vpop.f32.mrb[0].mxu0
      %v4855 = vpop.f32.mrb[0].mxu0
      %v4856 = vadd.f32 0.0, %v4855
      %v4857 = vpop.f32.mrb[0].mxu0
      %4858 = vmatprep.mubr.bf16.mxu0 0
      %4859 = vmatmul.mubr.bf16.gmra.mrb[0].mxu0 %v4745
      %v4860 = vpop.f32.mrb[0].mxu0
      %v4861 = vadd.f32 0.0, %v4860
      %v4862 = vpop.f32.mrb[0].mxu0
      %v4863 = vpop.f32.mrb[0].mxu0
      %v4864 = vadd.f32 0.0, %v4863
      %v4865 = vpop.f32.mrb[0].mxu0
      %4866 = vmatprep.mubr.bf16.mxu0 0
      %4867 = vmatmul.mubr.bf16.gmra.mrb[0].mxu0 %v4748
      %v4868 = vpop.f32.mrb[0].mxu0
      %v4869 = vadd.f32 0.0, %v4868
      %v4870 = vpop.f32.mrb[0].mxu0
      %v4871 = vpop.f32.mrb[0].mxu0
      %v4872 = vadd.f32 0.0, %v4871
      %v4873 = vpop.f32.mrb[0].mxu0
      %4874 = vmatprep.mubr.bf16.mxu0 0
      %4875 = vmatmul.mubr.bf16.gmra.mrb[0].mxu0 %v4751
      %v4876 = vpop.f32.mrb[0].mxu0
      %v4877 = vadd.f32 0.0, %v4876
      %v4878 = vpop.f32.mrb[0].mxu0
      %v4879 = vpop.f32.mrb[0].mxu0
      %v4880 = vadd.f32 0.0, %v4879
      %v4881 = vpop.f32.mrb[0].mxu0
      %4882 = vmatprep.mubr.bf16.mxu0 0
      %4883 = vmatmul.mubr.bf16.gmra.mrb[0].mxu0 %v4754
      %v4884 = vpop.f32.mrb[0].mxu0
      %v4885 = vadd.f32 0.0, %v4884
      %v4886 = vpop.f32.mrb[0].mxu0
      %v4887 = vpop.f32.mrb[0].mxu0
      %v4888 = vadd.f32 0.0, %v4887
      %v4889 = vpop.f32.mrb[0].mxu0
      %4890 = vmatprep.mubr.bf16.mxu0 0
      %4891 = vmatmul.mubr.bf16.gmra.mrb[0].mxu0 %v4757
      %v4892 = vpop.f32.mrb[0].mxu0
      %v4893 = vadd.f32 0.0, %v4892
      %v4894 = vpop.f32.mrb[0].mxu0
      %v4895 = vpop.f32.mrb[0].mxu0
      %v4896 = vadd.f32 0.0, %v4895
      %v4897 = vpop.f32.mrb[0].mxu0
      %4898 = vmatprep.mubr.bf16.mxu0 0
      %4899 = vmatmul.mubr.bf16.gmra.mrb[0].mxu0 %v4760
      %v4900 = vpop.f32.mrb[0].mxu0
      %v4901 = vadd.f32 0.0, %v4900
      %v4902 = vpop.f32.mrb[0].mxu0
      %v4903 = vpop.f32.mrb[0].mxu0
      %v4904 = vadd.f32 0.0, %v4903
      %v4905 = vpop.f32.mrb[0].mxu0
      %4906 = vmatprep.mubr.bf16.mxu0 0
      %4907 = vmatmul.mubr.bf16.gmra.mrb[0].mxu0 %v4763
      %v4908 = vpop.f32.mrb[0].mxu0
      %v4909 = vadd.f32 0.0, %v4908
      %v4910 = vpop.f32.mrb[0].mxu0
      %v4911 = vpop.f32.mrb[0].mxu0
      %v4912 = vadd.f32 0.0, %v4911
      %v4913 = vpop.f32.mrb[0].mxu0
      %4914 = vmatprep.mubr.bf16.mxu0 0
      %4915 = vmatmul.mubr.bf16.gmra.mrb[0].mxu0 %v4766
      %v4916 = vpop.f32.mrb[0].mxu0
      %v4917 = vadd.f32 0.0, %v4916
      %v4918 = vpop.f32.mrb[0].mxu0
      %v4919 = vpop.f32.mrb[0].mxu0
      %v4920 = vadd.f32 0.0, %v4919
      %v4921 = vpop.f32.mrb[0].mxu0
      %4922 = vmatprep.mubr.bf16.mxu0 0
      %4923 = vmatmul.mubr.bf16.gmra.mrb[0].mxu0 %v4769
      %v4924 = vpop.f32.mrb[0].mxu0
      %v4925 = vadd.f32 0.0, %v4924
      %v4926 = vpop.f32.mrb[0].mxu0
      %v4927 = vpop.f32.mrb[0].mxu0
      %v4928 = vadd.f32 0.0, %v4927
      %v4929 = vpop.f32.mrb[0].mxu0
      %4930 = vmatprep.mubr.bf16.mxu0 0
      %4931 = vmatmul.mubr.bf16.gmra.mrb[0].mxu0 %v4772
      %v4932 = vpop.f32.mrb[0].mxu0
      %v4933 = vadd.f32 0.0, %v4932
      %v4934 = vpop.f32.mrb[0].mxu0
      %v4935 = vpop.f32.mrb[0].mxu0
      %v4936 = vadd.f32 0.0, %v4935
      %v4937 = vpop.f32.mrb[0].mxu0
      %4938 = vmatprep.mubr.bf16.mxu0 0
      %4939 = vmatmul.mubr.bf16.gmra.mrb[0].mxu0 %v4775
      %v4940 = vpop.f32.mrb[0].mxu0
      %v4941 = vadd.f32 0.0, %v4940
      %v4942 = vpop.f32.mrb[0].mxu0
      %v4943 = vpop.f32.mrb[0].mxu0
      %v4944 = vadd.f32 0.0, %v4943
      %v4945 = vpop.f32.mrb[0].mxu0
      %4946 = vmatprep.mubr.bf16.mxu0 0
      %4947 = vmatmul.mubr.bf16.gmra.mrb[0].mxu0 %v4778
      %v4948 = vpop.f32.mrb[0].mxu0
      %v4949 = vadd.f32 0.0, %v4948
      %v4950 = vpop.f32.mrb[0].mxu0
      %v4951 = vpop.f32.mrb[0].mxu0
      %v4952 = vadd.f32 0.0, %v4951
      %v4953 = vpop.f32.mrb[0].mxu0
      %4954 = vmatprep.mubr.bf16.mxu0 0
      %4955 = vmatmul.mubr.bf16.gmra.mrb[0].mxu0 %v4781
      %v4956 = vpop.f32.mrb[0].mxu0
      %v4957 = vadd.f32 0.0, %v4956
      %v4958 = vpop.f32.mrb[0].mxu0
      %v4959 = vpop.f32.mrb[0].mxu0
      %v4960 = vadd.f32 0.0, %v4959
      %v4961 = vpop.f32.mrb[0].mxu0
      %4962 = vdwg.mxu0
      %v4963 = vld [vmem:[#allocation2] sm:$0xff]
      %v4964 = vld [vmem:[#allocation2 + $0x8] sm:$0xff]
      %v4965 = vld [vmem:[#allocation2 + $0x10] sm:$0xff]
      %v4966 = vld [vmem:[#allocation2 + $0x18] sm:$0xff]
      %v4967 = vld [vmem:[#allocation2 + $0x20] sm:$0xff]
      %v4968 = vld [vmem:[#allocation2 + $0x28] sm:$0xff]
      %v4969 = vld [vmem:[#allocation2 + $0x30] sm:$0xff]
      %v4970 = vld [vmem:[#allocation2 + $0x38] sm:$0xff]
      %v4971 = vld [vmem:[#allocation2 + $0x40] sm:$0xff]
      %v4972 = vld [vmem:[#allocation2 + $0x48] sm:$0xff]
      %v4973 = vld [vmem:[#allocation2 + $0x50] sm:$0xff]
      %v4974 = vld [vmem:[#allocation2 + $0x58] sm:$0xff]
      %v4975 = vld [vmem:[#allocation2 + $0x60] sm:$0xff]
      %v4976 = vld [vmem:[#allocation2 + $0x68] sm:$0xff]
      %v4977 = vld [vmem:[#allocation2 + $0x70] sm:$0xff]
      %v4978 = vld [vmem:[#allocation2 + $0x78] sm:$0xff]
      %v4979 = vld [vmem:[#allocation2 + $0x80] sm:$0xff]
      %v4980 = vld [vmem:[#allocation2 + $0x88] sm:$0xff]
      %v4981 = vld [vmem:[#allocation2 + $0x90] sm:$0xff]
      %v4982 = vld [vmem:[#allocation2 + $0x98] sm:$0xff]
      %v4983 = vld [vmem:[#allocation2 + $0xa0] sm:$0xff]
      %v4984 = vld [vmem:[#allocation2 + $0xa8] sm:$0xff]
      %v4985 = vld [vmem:[#allocation2 + $0xb0] sm:$0xff]
      %v4986 = vld [vmem:[#allocation2 + $0xb8] sm:$0xff]
      %v4987 = vld [vmem:[#allocation2 + $0xc0] sm:$0xff]
      %v4988 = vld [vmem:[#allocation2 + $0xc8] sm:$0xff]
      %v4989 = vld [vmem:[#allocation2 + $0xd0] sm:$0xff]
      %v4990 = vld [vmem:[#allocation2 + $0xd8] sm:$0xff]
      %v4991 = vld [vmem:[#allocation2 + $0xe0] sm:$0xff]
      %v4992 = vld [vmem:[#allocation2 + $0xe8] sm:$0xff]
      %v4993 = vld [vmem:[#allocation2 + $0xf0] sm:$0xff]
      %v4994 = vld [vmem:[#allocation2 + $0xf8] sm:$0xff]
      %v4995 = vld [vmem:[#allocation2 + $0x100] sm:$0xff]
      %v4996 = vld [vmem:[#allocation2 + $0x108] sm:$0xff]
      %v4997 = vld [vmem:[#allocation2 + $0x110] sm:$0xff]
      %v4998 = vld [vmem:[#allocation2 + $0x118] sm:$0x3f]
      %v4999 = vadd.f32 %v4963, %v4821
      %v5000 = vadd.f32 %v4964, %v4824
      %v5001 = vadd.f32 %v4965, %v4829
      %v5002 = vadd.f32 %v4966, %v4832
      %v5003 = vadd.f32 %v4967, %v4837
      %v5004 = vadd.f32 %v4968, %v4840
      %v5005 = vadd.f32 %v4969, %v4845
      %v5006 = vadd.f32 %v4970, %v4848
      %v5007 = vadd.f32 %v4971, %v4853
      %v5008 = vadd.f32 %v4972, %v4856
      %v5009 = vadd.f32 %v4973, %v4861
      %v5010 = vadd.f32 %v4974, %v4864
      %v5011 = vadd.f32 %v4975, %v4869
      %v5012 = vadd.f32 %v4976, %v4872
      %v5013 = vadd.f32 %v4977, %v4877
      %v5014 = vadd.f32 %v4978, %v4880
      %v5015 = vadd.f32 %v4979, %v4885
      %v5016 = vadd.f32 %v4980, %v4888
      %v5017 = vadd.f32 %v4981, %v4893
      %v5018 = vadd.f32 %v4982, %v4896
      %v5019 = vadd.f32 %v4983, %v4901
      %v5020 = vadd.f32 %v4984, %v4904
      %v5021 = vadd.f32 %v4985, %v4909
      %v5022 = vadd.f32 %v4986, %v4912
      %v5023 = vadd.f32 %v4987, %v4917
      %v5024 = vadd.f32 %v4988, %v4920
      %v5025 = vadd.f32 %v4989, %v4925
      %v5026 = vadd.f32 %v4990, %v4928
      %v5027 = vadd.f32 %v4991, %v4933
      %v5028 = vadd.f32 %v4992, %v4936
      %v5029 = vadd.f32 %v4993, %v4941
      %v5030 = vadd.f32 %v4994, %v4944
      %v5031 = vadd.f32 %v4995, %v4949
      %v5032 = vadd.f32 %v4996, %v4952
      %v5033 = vadd.f32 %v4997, %v4957
      %v5034 = vadd.f32 %v4998, %v4960
      %5035 = vst [vmem:[#allocation2] sm:$0xff] %v4999
      %5036 = vst [vmem:[#allocation2 + $0x8] sm:$0xff] %v5000
      %5037 = vst [vmem:[#allocation2 + $0x10] sm:$0xff] %v5001
      %5038 = vst [vmem:[#allocation2 + $0x18] sm:$0xff] %v5002
      %5039 = vst [vmem:[#allocation2 + $0x20] sm:$0xff] %v5003
      %5040 = vst [vmem:[#allocation2 + $0x28] sm:$0xff] %v5004
      %5041 = vst [vmem:[#allocation2 + $0x30] sm:$0xff] %v5005
      %5042 = vst [vmem:[#allocation2 + $0x38] sm:$0xff] %v5006
      %5043 = vst [vmem:[#allocation2 + $0x40] sm:$0xff] %v5007
      %5044 = vst [vmem:[#allocation2 + $0x48] sm:$0xff] %v5008
      %5045 = vst [vmem:[#allocation2 + $0x50] sm:$0xff] %v5009
      %5046 = vst [vmem:[#allocation2 + $0x58] sm:$0xff] %v5010
      %5047 = vst [vmem:[#allocation2 + $0x60] sm:$0xff] %v5011
      %5048 = vst [vmem:[#allocation2 + $0x68] sm:$0xff] %v5012
      %5049 = vst [vmem:[#allocation2 + $0x70] sm:$0xff] %v5013
      %5050 = vst [vmem:[#allocation2 + $0x78] sm:$0xff] %v5014
      %5051 = vst [vmem:[#allocation2 + $0x80] sm:$0xff] %v5015
      %5052 = vst [vmem:[#allocation2 + $0x88] sm:$0xff] %v5016
      %5053 = vst [vmem:[#allocation2 + $0x90] sm:$0xff] %v5017
      %5054 = vst [vmem:[#allocation2 + $0x98] sm:$0xff] %v5018
      %5055 = vst [vmem:[#allocation2 + $0xa0] sm:$0xff] %v5019
      %5056 = vst [vmem:[#allocation2 + $0xa8] sm:$0xff] %v5020
      %5057 = vst [vmem:[#allocation2 + $0xb0] sm:$0xff] %v5021
      %5058 = vst [vmem:[#allocation2 + $0xb8] sm:$0xff] %v5022
      %5059 = vst [vmem:[#allocation2 + $0xc0] sm:$0xff] %v5023
      %5060 = vst [vmem:[#allocation2 + $0xc8] sm:$0xff] %v5024
      %5061 = vst [vmem:[#allocation2 + $0xd0] sm:$0xff] %v5025
      %5062 = vst [vmem:[#allocation2 + $0xd8] sm:$0xff] %v5026
      %5063 = vst [vmem:[#allocation2 + $0xe0] sm:$0xff] %v5027
      %5064 = vst [vmem:[#allocation2 + $0xe8] sm:$0xff] %v5028
      %5065 = vst [vmem:[#allocation2 + $0xf0] sm:$0xff] %v5029
      %5066 = vst [vmem:[#allocation2 + $0xf8] sm:$0xff] %v5030
      %5067 = vst [vmem:[#allocation2 + $0x100] sm:$0xff] %v5031
      %5068 = vst [vmem:[#allocation2 + $0x108] sm:$0xff] %v5032
      %5069 = vst [vmem:[#allocation2 + $0x110] sm:$0xff] %v5033
      %5070 = vst [vmem:[#allocation2 + $0x118] sm:$0x3f] %v5034
      %v5071 = vld [vmem:[#allocation2] sm:$0xff]
      %v5072 = vld [vmem:[#allocation2 + $0x8] sm:$0xff]
      %v5073 = vld [vmem:[#allocation2 + $0x10] sm:$0xff]
      %v5074 = vld [vmem:[#allocation2 + $0x18] sm:$0xff]
      %v5075 = vld [vmem:[#allocation2 + $0x20] sm:$0xff]
      %v5076 = vld [vmem:[#allocation2 + $0x28] sm:$0xff]
      %v5077 = vld [vmem:[#allocation2 + $0x30] sm:$0xff]
      %v5078 = vld [vmem:[#allocation2 + $0x38] sm:$0xff]
      %v5079 = vld [vmem:[#allocation2 + $0x40] sm:$0xff]
      %v5080 = vld [vmem:[#allocation2 + $0x48] sm:$0xff]
      %v5081 = vld [vmem:[#allocation2 + $0x50] sm:$0xff]
      %v5082 = vld [vmem:[#allocation2 + $0x58] sm:$0xff]
      %v5083 = vld [vmem:[#allocation2 + $0x60] sm:$0xff]
      %v5084 = vld [vmem:[#allocation2 + $0x68] sm:$0xff]
      %v5085 = vld [vmem:[#allocation2 + $0x70] sm:$0xff]
      %v5086 = vld [vmem:[#allocation2 + $0x78] sm:$0xff]
      %v5087 = vld [vmem:[#allocation2 + $0x80] sm:$0xff]
      %v5088 = vld [vmem:[#allocation2 + $0x88] sm:$0xff]
      %v5089 = vld [vmem:[#allocation2 + $0x90] sm:$0xff]
      %v5090 = vld [vmem:[#allocation2 + $0x98] sm:$0xff]
      %v5091 = vld [vmem:[#allocation2 + $0xa0] sm:$0xff]
      %v5092 = vld [vmem:[#allocation2 + $0xa8] sm:$0xff]
      %v5093 = vld [vmem:[#allocation2 + $0xb0] sm:$0xff]
      %v5094 = vld [vmem:[#allocation2 + $0xb8] sm:$0xff]
      %v5095 = vld [vmem:[#allocation2 + $0xc0] sm:$0xff]
      %v5096 = vld [vmem:[#allocation2 + $0xc8] sm:$0xff]
      %v5097 = vld [vmem:[#allocation2 + $0xd0] sm:$0xff]
      %v5098 = vld [vmem:[#allocation2 + $0xd8] sm:$0xff]
      %v5099 = vld [vmem:[#allocation2 + $0xe0] sm:$0xff]
      %v5100 = vld [vmem:[#allocation2 + $0xe8] sm:$0xff]
      %v5101 = vld [vmem:[#allocation2 + $0xf0] sm:$0xff]
      %v5102 = vld [vmem:[#allocation2 + $0xf8] sm:$0xff]
      %v5103 = vld [vmem:[#allocation2 + $0x100] sm:$0xff]
      %v5104 = vld [vmem:[#allocation2 + $0x108] sm:$0xff]
      %v5105 = vld [vmem:[#allocation2 + $0x110] sm:$0xff]
      %v5106 = vld [vmem:[#allocation2 + $0x118] sm:$0x3f]
      %v5107 = vld [vmem:[%s216] sm:$0x1]
      %v5108 = vlaneseq
      %v5109 = vshrl.u32 %v5108, 7
      %v5110 = vsub.s32 0, %v5109
      %v5111 = vrot.slane %v5107, %v5110
      %v5112 = vmul.f32 %v5071, %v5111
      %v5113 = vmul.f32 %v5072, %v5111
      %v5114 = vmul.f32 %v5073, %v5111
      %v5115 = vmul.f32 %v5074, %v5111
      %v5116 = vmul.f32 %v5075, %v5111
      %v5117 = vmul.f32 %v5076, %v5111
      %v5118 = vmul.f32 %v5077, %v5111
      %v5119 = vmul.f32 %v5078, %v5111
      %v5120 = vmul.f32 %v5079, %v5111
      %v5121 = vmul.f32 %v5080, %v5111
      %v5122 = vmul.f32 %v5081, %v5111
      %v5123 = vmul.f32 %v5082, %v5111
      %v5124 = vmul.f32 %v5083, %v5111
      %v5125 = vmul.f32 %v5084, %v5111
      %v5126 = vmul.f32 %v5085, %v5111
      %v5127 = vmul.f32 %v5086, %v5111
      %v5128 = vmul.f32 %v5087, %v5111
      %v5129 = vmul.f32 %v5088, %v5111
      %v5130 = vmul.f32 %v5089, %v5111
      %v5131 = vmul.f32 %v5090, %v5111
      %v5132 = vmul.f32 %v5091, %v5111
      %v5133 = vmul.f32 %v5092, %v5111
      %v5134 = vmul.f32 %v5093, %v5111
      %v5135 = vmul.f32 %v5094, %v5111
      %v5136 = vmul.f32 %v5095, %v5111
      %v5137 = vmul.f32 %v5096, %v5111
      %v5138 = vmul.f32 %v5097, %v5111
      %v5139 = vmul.f32 %v5098, %v5111
      %v5140 = vmul.f32 %v5099, %v5111
      %v5141 = vmul.f32 %v5100, %v5111
      %v5142 = vmul.f32 %v5101, %v5111
      %v5143 = vmul.f32 %v5102, %v5111
      %v5144 = vmul.f32 %v5103, %v5111
      %v5145 = vmul.f32 %v5104, %v5111
      %v5146 = vmul.f32 %v5105, %v5111
      %v5147 = vmul.f32 %v5106, %v5111
      %v5148 = vld [vmem:[%s216 + $0x1] sm:$0x1]
      %v5149 = vlaneseq
      %v5150 = vshrl.u32 %v5149, 7
      %v5151 = vsub.s32 0, %v5150
      %v5152 = vrot.slane %v5148, %v5151
      %v5153 = vadd.f32 %v5112, %v5152
      %v5154 = vadd.f32 %v5113, %v5152
      %v5155 = vadd.f32 %v5114, %v5152
      %v5156 = vadd.f32 %v5115, %v5152
      %v5157 = vadd.f32 %v5116, %v5152
      %v5158 = vadd.f32 %v5117, %v5152
      %v5159 = vadd.f32 %v5118, %v5152
      %v5160 = vadd.f32 %v5119, %v5152
      %v5161 = vadd.f32 %v5120, %v5152
      %v5162 = vadd.f32 %v5121, %v5152
      %v5163 = vadd.f32 %v5122, %v5152
      %v5164 = vadd.f32 %v5123, %v5152
      %v5165 = vadd.f32 %v5124, %v5152
      %v5166 = vadd.f32 %v5125, %v5152
      %v5167 = vadd.f32 %v5126, %v5152
      %v5168 = vadd.f32 %v5127, %v5152
      %v5169 = vadd.f32 %v5128, %v5152
      %v5170 = vadd.f32 %v5129, %v5152
      %v5171 = vadd.f32 %v5130, %v5152
      %v5172 = vadd.f32 %v5131, %v5152
      %v5173 = vadd.f32 %v5132, %v5152
      %v5174 = vadd.f32 %v5133, %v5152
      %v5175 = vadd.f32 %v5134, %v5152
      %v5176 = vadd.f32 %v5135, %v5152
      %v5177 = vadd.f32 %v5136, %v5152
      %v5178 = vadd.f32 %v5137, %v5152
      %v5179 = vadd.f32 %v5138, %v5152
      %v5180 = vadd.f32 %v5139, %v5152
      %v5181 = vadd.f32 %v5140, %v5152
      %v5182 = vadd.f32 %v5141, %v5152
      %v5183 = vadd.f32 %v5142, %v5152
      %v5184 = vadd.f32 %v5143, %v5152
      %v5185 = vadd.f32 %v5144, %v5152
      %v5186 = vadd.f32 %v5145, %v5152
      %v5187 = vadd.f32 %v5146, %v5152
      %v5188 = vadd.f32 %v5147, %v5152
      %v5189 = vmul.f32 %v5153, 0.5
      %v5190 = vmul.f32 %v5154, 0.5
      %v5191 = vmul.f32 %v5155, 0.5
      %v5192 = vmul.f32 %v5156, 0.5
      %v5193 = vmul.f32 %v5157, 0.5
      %v5194 = vmul.f32 %v5158, 0.5
      %v5195 = vmul.f32 %v5159, 0.5
      %v5196 = vmul.f32 %v5160, 0.5
      %v5197 = vmul.f32 %v5161, 0.5
      %v5198 = vmul.f32 %v5162, 0.5
      %v5199 = vmul.f32 %v5163, 0.5
      %v5200 = vmul.f32 %v5164, 0.5
      %v5201 = vmul.f32 %v5165, 0.5
      %v5202 = vmul.f32 %v5166, 0.5
      %v5203 = vmul.f32 %v5167, 0.5
      %v5204 = vmul.f32 %v5168, 0.5
      %v5205 = vmul.f32 %v5169, 0.5
      %v5206 = vmul.f32 %v5170, 0.5
      %v5207 = vmul.f32 %v5171, 0.5
      %v5208 = vmul.f32 %v5172, 0.5
      %v5209 = vmul.f32 %v5173, 0.5
      %v5210 = vmul.f32 %v5174, 0.5
      %v5211 = vmul.f32 %v5175, 0.5
      %v5212 = vmul.f32 %v5176, 0.5
      %v5213 = vmul.f32 %v5177, 0.5
      %v5214 = vmul.f32 %v5178, 0.5
      %v5215 = vmul.f32 %v5179, 0.5
      %v5216 = vmul.f32 %v5180, 0.5
      %v5217 = vmul.f32 %v5181, 0.5
      %v5218 = vmul.f32 %v5182, 0.5
      %v5219 = vmul.f32 %v5183, 0.5
      %v5220 = vmul.f32 %v5184, 0.5
      %v5221 = vmul.f32 %v5185, 0.5
      %v5222 = vmul.f32 %v5186, 0.5
      %v5223 = vmul.f32 %v5187, 0.5
      %v5224 = vmul.f32 %v5188, 0.5
      %v5225 = vtanh.pop %v5189
      %v5226 = vtanh.pop %v5190
      %v5227 = vtanh.pop %v5191
      %v5228 = vtanh.pop %v5192
      %v5229 = vtanh.pop %v5193
      %v5230 = vtanh.pop %v5194
      %v5231 = vtanh.pop %v5195
      %v5232 = vtanh.pop %v5196
      %v5233 = vtanh.pop %v5197
      %v5234 = vtanh.pop %v5198
      %v5235 = vtanh.pop %v5199
      %v5236 = vtanh.pop %v5200
      %v5237 = vtanh.pop %v5201
      %v5238 = vtanh.pop %v5202
      %v5239 = vtanh.pop %v5203
      %v5240 = vtanh.pop %v5204
      %v5241 = vtanh.pop %v5205
      %v5242 = vtanh.pop %v5206
      %v5243 = vtanh.pop %v5207
      %v5244 = vtanh.pop %v5208
      %v5245 = vtanh.pop %v5209
      %v5246 = vtanh.pop %v5210
      %v5247 = vtanh.pop %v5211
      %v5248 = vtanh.pop %v5212
      %v5249 = vtanh.pop %v5213
      %v5250 = vtanh.pop %v5214
      %v5251 = vtanh.pop %v5215
      %v5252 = vtanh.pop %v5216
      %v5253 = vtanh.pop %v5217
      %v5254 = vtanh.pop %v5218
      %v5255 = vtanh.pop %v5219
      %v5256 = vtanh.pop %v5220
      %v5257 = vtanh.pop %v5221
      %v5258 = vtanh.pop %v5222
      %v5259 = vtanh.pop %v5223
      %v5260 = vtanh.pop %v5224
      %v5261 = vmul.f32 %v5225, 0.5
      %v5262 = vmul.f32 %v5226, 0.5
      %v5263 = vmul.f32 %v5227, 0.5
      %v5264 = vmul.f32 %v5228, 0.5
      %v5265 = vmul.f32 %v5229, 0.5
      %v5266 = vmul.f32 %v5230, 0.5
      %v5267 = vmul.f32 %v5231, 0.5
      %v5268 = vmul.f32 %v5232, 0.5
      %v5269 = vmul.f32 %v5233, 0.5
      %v5270 = vmul.f32 %v5234, 0.5
      %v5271 = vmul.f32 %v5235, 0.5
      %v5272 = vmul.f32 %v5236, 0.5
      %v5273 = vmul.f32 %v5237, 0.5
      %v5274 = vmul.f32 %v5238, 0.5
      %v5275 = vmul.f32 %v5239, 0.5
      %v5276 = vmul.f32 %v5240, 0.5
      %v5277 = vmul.f32 %v5241, 0.5
      %v5278 = vmul.f32 %v5242, 0.5
      %v5279 = vmul.f32 %v5243, 0.5
      %v5280 = vmul.f32 %v5244, 0.5
      %v5281 = vmul.f32 %v5245, 0.5
      %v5282 = vmul.f32 %v5246, 0.5
      %v5283 = vmul.f32 %v5247, 0.5
      %v5284 = vmul.f32 %v5248, 0.5
      %v5285 = vmul.f32 %v5249, 0.5
      %v5286 = vmul.f32 %v5250, 0.5
      %v5287 = vmul.f32 %v5251, 0.5
      %v5288 = vmul.f32 %v5252, 0.5
      %v5289 = vmul.f32 %v5253, 0.5
      %v5290 = vmul.f32 %v5254, 0.5
      %v5291 = vmul.f32 %v5255, 0.5
      %v5292 = vmul.f32 %v5256, 0.5
      %v5293 = vmul.f32 %v5257, 0.5
      %v5294 = vmul.f32 %v5258, 0.5
      %v5295 = vmul.f32 %v5259, 0.5
      %v5296 = vmul.f32 %v5260, 0.5
      %v5297 = vadd.f32 %v5261, 0.5
      %v5298 = vadd.f32 %v5262, 0.5
      %v5299 = vadd.f32 %v5263, 0.5
      %v5300 = vadd.f32 %v5264, 0.5
      %v5301 = vadd.f32 %v5265, 0.5
      %v5302 = vadd.f32 %v5266, 0.5
      %v5303 = vadd.f32 %v5267, 0.5
      %v5304 = vadd.f32 %v5268, 0.5
      %v5305 = vadd.f32 %v5269, 0.5
      %v5306 = vadd.f32 %v5270, 0.5
      %v5307 = vadd.f32 %v5271, 0.5
      %v5308 = vadd.f32 %v5272, 0.5
      %v5309 = vadd.f32 %v5273, 0.5
      %v5310 = vadd.f32 %v5274, 0.5
      %v5311 = vadd.f32 %v5275, 0.5
      %v5312 = vadd.f32 %v5276, 0.5
      %v5313 = vadd.f32 %v5277, 0.5
      %v5314 = vadd.f32 %v5278, 0.5
      %v5315 = vadd.f32 %v5279, 0.5
      %v5316 = vadd.f32 %v5280, 0.5
      %v5317 = vadd.f32 %v5281, 0.5
      %v5318 = vadd.f32 %v5282, 0.5
      %v5319 = vadd.f32 %v5283, 0.5
      %v5320 = vadd.f32 %v5284, 0.5
      %v5321 = vadd.f32 %v5285, 0.5
      %v5322 = vadd.f32 %v5286, 0.5
      %v5323 = vadd.f32 %v5287, 0.5
      %v5324 = vadd.f32 %v5288, 0.5
      %v5325 = vadd.f32 %v5289, 0.5
      %v5326 = vadd.f32 %v5290, 0.5
      %v5327 = vadd.f32 %v5291, 0.5
      %v5328 = vadd.f32 %v5292, 0.5
      %v5329 = vadd.f32 %v5293, 0.5
      %v5330 = vadd.f32 %v5294, 0.5
      %v5331 = vadd.f32 %v5295, 0.5
      %v5332 = vadd.f32 %v5296, 0.5
      %v5333 = vmul.f32 %v5153, %v5297
      %v5334 = vmul.f32 %v5154, %v5298
      %v5335 = vmul.f32 %v5155, %v5299
      %v5336 = vmul.f32 %v5156, %v5300
      %v5337 = vmul.f32 %v5157, %v5301
      %v5338 = vmul.f32 %v5158, %v5302
      %v5339 = vmul.f32 %v5159, %v5303
      %v5340 = vmul.f32 %v5160, %v5304
      %v5341 = vmul.f32 %v5161, %v5305
      %v5342 = vmul.f32 %v5162, %v5306
      %v5343 = vmul.f32 %v5163, %v5307
      %v5344 = vmul.f32 %v5164, %v5308
      %v5345 = vmul.f32 %v5165, %v5309
      %v5346 = vmul.f32 %v5166, %v5310
      %v5347 = vmul.f32 %v5167, %v5311
      %v5348 = vmul.f32 %v5168, %v5312
      %v5349 = vmul.f32 %v5169, %v5313
      %v5350 = vmul.f32 %v5170, %v5314
      %v5351 = vmul.f32 %v5171, %v5315
      %v5352 = vmul.f32 %v5172, %v5316
      %v5353 = vmul.f32 %v5173, %v5317
      %v5354 = vmul.f32 %v5174, %v5318
      %v5355 = vmul.f32 %v5175, %v5319
      %v5356 = vmul.f32 %v5176, %v5320
      %v5357 = vmul.f32 %v5177, %v5321
      %v5358 = vmul.f32 %v5178, %v5322
      %v5359 = vmul.f32 %v5179, %v5323
      %v5360 = vmul.f32 %v5180, %v5324
      %v5361 = vmul.f32 %v5181, %v5325
      %v5362 = vmul.f32 %v5182, %v5326
      %v5363 = vmul.f32 %v5183, %v5327
      %v5364 = vmul.f32 %v5184, %v5328
      %v5365 = vmul.f32 %v5185, %v5329
      %v5366 = vmul.f32 %v5186, %v5330
      %v5367 = vmul.f32 %v5187, %v5331
      %v5368 = vmul.f32 %v5188, %v5332
      %v5369 = vpack.c.bf16 %v5334, %v5333
      %v5370 = vpack.c.bf16 %v5336, %v5335
      %v5371 = vpack.c.bf16 %v5338, %v5337
      %v5372 = vpack.c.bf16 %v5340, %v5339
      %v5373 = vpack.c.bf16 %v5342, %v5341
      %v5374 = vpack.c.bf16 %v5344, %v5343
      %v5375 = vpack.c.bf16 %v5346, %v5345
      %v5376 = vpack.c.bf16 %v5348, %v5347
      %v5377 = vpack.c.bf16 %v5350, %v5349
      %v5378 = vpack.c.bf16 %v5352, %v5351
      %v5379 = vpack.c.bf16 %v5354, %v5353
      %v5380 = vpack.c.bf16 %v5356, %v5355
      %v5381 = vpack.c.bf16 %v5358, %v5357
      %v5382 = vpack.c.bf16 %v5360, %v5359
      %v5383 = vpack.c.bf16 %v5362, %v5361
      %v5384 = vpack.c.bf16 %v5364, %v5363
      %v5385 = vpack.c.bf16 %v5366, %v5365
      %v5386 = vpack.c.bf16 %v5368, %v5367
      %v5405 = vunpack.c.l.b16 %v5369
      %v5406 = vunpack.c.h.b16 %v5369
      %v5407 = vunpack.c.l.b16 %v5370
      %v5408 = vunpack.c.h.b16 %v5370
      %v5409 = vunpack.c.l.b16 %v5371
      %v5410 = vunpack.c.h.b16 %v5371
      %v5411 = vunpack.c.l.b16 %v5372
      %v5412 = vunpack.c.h.b16 %v5372
      %v5413 = vunpack.c.l.b16 %v5373
      %v5414 = vunpack.c.h.b16 %v5373
      %v5415 = vunpack.c.l.b16 %v5374
      %v5416 = vunpack.c.h.b16 %v5374
      %v5417 = vunpack.c.l.b16 %v5375
      %v5418 = vunpack.c.h.b16 %v5375
      %v5419 = vunpack.c.l.b16 %v5376
      %v5420 = vunpack.c.h.b16 %v5376
      %v5421 = vunpack.c.l.b16 %v5377
      %v5422 = vunpack.c.h.b16 %v5377
      %v5423 = vunpack.c.l.b16 %v5378
      %v5424 = vunpack.c.h.b16 %v5378
      %v5425 = vunpack.c.l.b16 %v5379
      %v5426 = vunpack.c.h.b16 %v5379
      %v5427 = vunpack.c.l.b16 %v5380
      %v5428 = vunpack.c.h.b16 %v5380
      %v5429 = vunpack.c.l.b16 %v5381
      %v5430 = vunpack.c.h.b16 %v5381
      %v5431 = vunpack.c.l.b16 %v5382
      %v5432 = vunpack.c.h.b16 %v5382
      %v5433 = vunpack.c.l.b16 %v5383
      %v5434 = vunpack.c.h.b16 %v5383
      %v5435 = vunpack.c.l.b16 %v5384
      %v5436 = vunpack.c.h.b16 %v5384
      %v5437 = vunpack.c.l.b16 %v5385
      %v5438 = vunpack.c.h.b16 %v5385
      %v5439 = vunpack.c.l.b16 %v5386
      %v5440 = vunpack.c.h.b16 %v5386
      %v5441 = vpack.c.b16 %v5405, %v5405
      %v5442 = vpack.c.b16 %v5406, %v5406
      %v5443 = vpack.c.b16 %v5407, %v5407
      %v5444 = vpack.c.b16 %v5408, %v5408
      %v5445 = vpack.c.b16 %v5409, %v5409
      %v5446 = vpack.c.b16 %v5410, %v5410
      %v5447 = vpack.c.b16 %v5411, %v5411
      %v5448 = vpack.c.b16 %v5412, %v5412
      %v5449 = vpack.c.b16 %v5413, %v5413
      %v5450 = vpack.c.b16 %v5414, %v5414
      %v5451 = vpack.c.b16 %v5415, %v5415
      %v5452 = vpack.c.b16 %v5416, %v5416
      %v5453 = vpack.c.b16 %v5417, %v5417
      %v5454 = vpack.c.b16 %v5418, %v5418
      %v5455 = vpack.c.b16 %v5419, %v5419
      %v5456 = vpack.c.b16 %v5420, %v5420
      %v5457 = vpack.c.b16 %v5421, %v5421
      %v5458 = vpack.c.b16 %v5422, %v5422
      %v5459 = vpack.c.b16 %v5423, %v5423
      %v5460 = vpack.c.b16 %v5424, %v5424
      %v5461 = vpack.c.b16 %v5425, %v5425
      %v5462 = vpack.c.b16 %v5426, %v5426
      %v5463 = vpack.c.b16 %v5427, %v5427
      %v5464 = vpack.c.b16 %v5428, %v5428
      %v5465 = vpack.c.b16 %v5429, %v5429
      %v5466 = vpack.c.b16 %v5430, %v5430
      %v5467 = vpack.c.b16 %v5431, %v5431
      %v5468 = vpack.c.b16 %v5432, %v5432
      %v5469 = vpack.c.b16 %v5433, %v5433
      %v5470 = vpack.c.b16 %v5434, %v5434
      %v5471 = vpack.c.b16 %v5435, %v5435
      %v5472 = vpack.c.b16 %v5436, %v5436
      %v5473 = vpack.c.b16 %v5437, %v5437
      %v5474 = vpack.c.b16 %v5438, %v5438
      %v5475 = vpack.c.b16 %v5439, %v5439
      %v5476 = vpack.c.b16 %v5440, %v5440
      %5513 = vst [vmem:[%s224] sm:$0xf] %v5441
      %5514 = vst [vmem:[%s224 + $0x4] sm:$0xf] %v5442
      %5515 = vst [vmem:[%s224 + $0x8] sm:$0xf] %v5443
      %5516 = vst [vmem:[%s224 + $0xc] sm:$0xf] %v5444
      %5517 = vst [vmem:[%s224 + $0x10] sm:$0xf] %v5445
      %5518 = vst [vmem:[%s224 + $0x14] sm:$0xf] %v5446
      %5519 = vst [vmem:[%s224 + $0x18] sm:$0xf] %v5447
      %5520 = vst [vmem:[%s224 + $0x1c] sm:$0xf] %v5448
      %5521 = vst [vmem:[%s224 + $0x20] sm:$0xf] %v5449
      %5522 = vst [vmem:[%s224 + $0x24] sm:$0xf] %v5450
      %5523 = vst [vmem:[%s224 + $0x28] sm:$0xf] %v5451
      %5524 = vst [vmem:[%s224 + $0x2c] sm:$0xf] %v5452
      %5525 = vst [vmem:[%s224 + $0x30] sm:$0xf] %v5453
      %5526 = vst [vmem:[%s224 + $0x34] sm:$0xf] %v5454
      %5527 = vst [vmem:[%s224 + $0x38] sm:$0xf] %v5455
      %5528 = vst [vmem:[%s224 + $0x3c] sm:$0xf] %v5456
      %5529 = vst [vmem:[%s224 + $0x40] sm:$0xf] %v5457
      %5530 = vst [vmem:[%s224 + $0x44] sm:$0xf] %v5458
      %5531 = vst [vmem:[%s224 + $0x48] sm:$0xf] %v5459
      %5532 = vst [vmem:[%s224 + $0x4c] sm:$0xf] %v5460
      %5533 = vst [vmem:[%s224 + $0x50] sm:$0xf] %v5461
      %5534 = vst [vmem:[%s224 + $0x54] sm:$0xf] %v5462
      %5535 = vst [vmem:[%s224 + $0x58] sm:$0xf] %v5463
      %5536 = vst [vmem:[%s224 + $0x5c] sm:$0xf] %v5464
      %5537 = vst [vmem:[%s224 + $0x60] sm:$0xf] %v5465
      %5538 = vst [vmem:[%s224 + $0x64] sm:$0xf] %v5466
      %5539 = vst [vmem:[%s224 + $0x68] sm:$0xf] %v5467
      %5540 = vst [vmem:[%s224 + $0x6c] sm:$0xf] %v5468
      %5541 = vst [vmem:[%s224 + $0x70] sm:$0xf] %v5469
      %5542 = vst [vmem:[%s224 + $0x74] sm:$0xf] %v5470
      %5543 = vst [vmem:[%s224 + $0x78] sm:$0xf] %v5471
      %5544 = vst [vmem:[%s224 + $0x7c] sm:$0xf] %v5472
      %5545 = vst [vmem:[%s224 + $0x80] sm:$0xf] %v5473
      %5546 = vst [vmem:[%s224 + $0x84] sm:$0xf] %v5474
      %5547 = vst [vmem:[%s224 + $0x88] sm:$0xf] %v5475
      %5548 = vst [vmem:[%s224 + $0x8c] sm:$0x7] %v5476
      %p5549 = scmp.lt.s32.totalorder %s18, 1
      %s5550 = scalar_select %p5549, %s18, 1
      %p5551 = scmp.lt.s32.totalorder %s19, 0
      %s5552 = scalar_select %p5551, %s19, 0
      %s5553 = smul.addr %s5550, 36
      %s5554 = sadd.s32 %s5552, %s5553
      %s5555 = smul.addr %s5554, 4
      %s5556 = scalar_lea.vmem %s3, %s5555
      // Predicated region
      $region33: #{tpu_custom_call.1} parent=31 // pred_check
        %p5557 = pneg %p124
      $region34: #{tpu_custom_call.1} parent=31 // pred_check_branch
        %5559 = sbr.rel (%p5557) target = $region36
      $region35: #{tpu_custom_call.1} parent=31 // pred_region
        _
      $region36: #{tpu_custom_call.1} parent=31 // pred_fallthru
        _
    $region32: #{tpu_custom_call.1} parent=5 // pred_fallthru
      _
    %p5560 = scmp.le.s32.totalorder 2, %s9
    // Predicated region
    $region37: #{tpu_custom_call.1} parent=5 // pred_check
      %p5561 = pneg %p5560
    $region38: #{tpu_custom_call.1} parent=5 // pred_check_branch
      %5563 = sbr.rel (%p5561) target = $region40
    $region39: #{tpu_custom_call.1} parent=5 // pred_region
      %s5564 = ssub.s32 %s9, 2
      // Predicated region
      $region41: #{tpu_custom_call.1} parent=39 // pred_check
        %p5565 = pneg %p130
      $region42: #{tpu_custom_call.1} parent=39 // pred_check_branch
        %5567 = sbr.rel (%p5565) target = $region44
      $region43: #{tpu_custom_call.1} parent=39 // pred_region
        %p5568 = scmp.lt.s32.totalorder %s20, 1
        %s5569 = scalar_select %p5568, %s20, 1
        %p5570 = scmp.lt.s32.totalorder %s21, 0
        %s5571 = scalar_select %p5570, %s21, 0
        %s5572 = smul.addr %s5569, 36
        %s5573 = sadd.s32 %s5571, %s5572
        %s5574 = smul.addr %s5573, 4
        %s5575 = scalar_lea.vmem %s3, %s5574
      $region44: #{tpu_custom_call.1} parent=39 // pred_fallthru
        _
    $region40: #{tpu_custom_call.1} parent=5 // pred_fallthru
      _
  $region6: #{tpu_custom_call.1} parent=0 // loop_footer
    %s13 = sadd.s32 1, %s9
  $region7: #{tpu_custom_call.1} parent=0 // loop_footer_branch
    %8 = sbr.rel target = $region3
  $region8: #{tpu_custom_call.1} parent=0 // loop_exit
    _

// kernel: tpu_custom_call.1
$region0: #{tpu_custom_call.1}
  #allocation0 [shape = 'u32[]', space=smem, size = 0x4, offset = 0x4, fixed_abs, tag = 'smem constant byte address 0x4 - core index']
  #allocation1 [shape = 'u32[144,128]{1,0:T(1,128)}', space=vmem, size = 0x12000, scoped, tag = 'internal scratch']
  #allocation2 [shape = 'f32[286,128]{1,0:T(8,128)}', space=vmem, size = 0x24000, scoped, tag = 'scratch operand']
  %s0 = inlined_call_operand.vmem [shape: bf16[2,324,8], index: 0, kind: input, shape index: {}]
  %s1 = inlined_call_operand.vmem [shape: bf16[9,8,128], index: 1, kind: input, shape index: {}]
  %s2 = inlined_call_operand.vmem [shape: f32[2,128], index: 2, kind: input, shape index: {}]
  %s3 = inlined_call_operand.vmem [shape: bf16[2,286,128], index: 3, kind: output, shape index: {}]
  %s4 = sld [smem:[#allocation0]]
  $region45: #{tpu_custom_call.1} parent=0
    _
  %s6 = ssub.s32 1, %s4
  %s7 = scalar_select 0, %s6, %s4
  loop: start=0, step=1, limit=4
  $region2: #{tpu_custom_call.1} parent=0 // loop_pre_header
    _
  $region3: #{tpu_custom_call.1} parent=0 // loop_header
    %s9 = sphi 0, %s13
    %p10 = scmp.ge.s32.totalorder %s9, 4
    %s16 = sphi 0, %s28
    %s17 = sphi 0, %s24
    %s18 = sphi 0, %s16
    %s19 = sphi 0, %s17
    %s20 = sphi 0, %s18
    %s21 = sphi 0, %s19
    %s31 = sphi 0, %s33
    %s34 = sphi 0, %s31
    %s35 = sphi 0, %s34
    %s51 = sphi 0, %s35
    %s57 = sphi 0, %s59
    %s60 = sphi 0, %s57
    %s61 = sphi 0, %s60
    %s77 = sphi 0, %s61
    %s83 = sphi 0, %s85
    %s86 = sphi 0, %s83
    %s87 = sphi 0, %s86
    %s103 = sphi 0, %s87
    %s111 = sphi 0, %s113
    %s114 = sphi 0, %s111
    %s115 = sphi 0, %s114
    %s131 = sphi 0, %s115
  $region4: #{tpu_custom_call.1} parent=0 // loop_header_branch
    %12 = sbr.rel (%p10) target = $region8
  $region5: #{tpu_custom_call.1} parent=0 // loop_body
    %s14 = ssub.s32 %s9, 1
    %s15 = ssub.s32 %s9, 2
    %s22 = sadd.s32 1, %s17
    %p23 = scmp.ge.s32.totalorder %s22, 1
    %s24 = scalar_select %p23, 0, %s22
    %s25 = sadd.s32 1, %s16
    %s26 = scalar_select %p23, %s25, %s16
    %p27 = scmp.ge.s32.totalorder %s26, 2
    %s28 = scalar_select %p27, 0, %s26
    %s29 = ssub.s32 %s16, %s28
    %p30 = scmp.eq.s32.totalorder %s29, 0
    %s32 = sadd.s32 %s31, 1
    %s33 = scalar_select %p30, %s31, %s32
    %p36 = pneg %p30
    %p37 = scmp.eq.s32.totalorder %s9, 1
    %p38 = por %p36, %p37
    %p39 = scmp.ne.s32.totalorder %s31, %s34
    %p40 = scmp.eq.s32.totalorder %s9, 0
    %p41 = por %p39, %p40
    %p42 = scmp.ne.s32.totalorder %s31, %s34
    %p43 = scmp.eq.s32.totalorder %s14, 1
    %p44 = por %p42, %p43
    %p45 = scmp.ne.s32.totalorder %s34, %s35
    %p46 = scmp.eq.s32.totalorder %s14, 0
    %p47 = por %p45, %p46
    %p48 = scmp.ne.s32.totalorder %s34, %s35
    %p49 = scmp.eq.s32.totalorder %s15, 1
    %p50 = por %p48, %p49
    %p52 = scmp.ne.s32.totalorder %s35, %s51
    %p53 = scmp.eq.s32.totalorder %s15, 0
    %p54 = por %p52, %p53
    %s55 = ssub.s32 %s17, %s24
    %p56 = scmp.eq.s32.totalorder %s55, 0
    %s58 = sadd.s32 %s57, 1
    %s59 = scalar_select %p56, %s57, %s58
    %p62 = pneg %p56
    %p63 = scmp.eq.s32.totalorder %s9, 1
    %p64 = por %p62, %p63
    %p65 = scmp.ne.s32.totalorder %s57, %s60
    %p66 = scmp.eq.s32.totalorder %s9, 0
    %p67 = por %p65, %p66
    %p68 = scmp.ne.s32.totalorder %s57, %s60
    %p69 = scmp.eq.s32.totalorder %s14, 1
    %p70 = por %p68, %p69
    %p71 = scmp.ne.s32.totalorder %s60, %s61
    %p72 = scmp.eq.s32.totalorder %s14, 0
    %p73 = por %p71, %p72
    %p74 = scmp.ne.s32.totalorder %s60, %s61
    %p75 = scmp.eq.s32.totalorder %s15, 1
    %p76 = por %p74, %p75
    %p78 = scmp.ne.s32.totalorder %s61, %s77
    %p79 = scmp.eq.s32.totalorder %s15, 0
    %p80 = por %p78, %p79
    %s81 = ssub.s32 %s17, %s24
    %p82 = scmp.eq.s32.totalorder %s81, 0
    %s84 = sadd.s32 %s83, 1
    %s85 = scalar_select %p82, %s83, %s84
    %p88 = pneg %p82
    %p89 = scmp.eq.s32.totalorder %s9, 1
    %p90 = por %p88, %p89
    %p91 = scmp.ne.s32.totalorder %s83, %s86
    %p92 = scmp.eq.s32.totalorder %s9, 0
    %p93 = por %p91, %p92
    %p94 = scmp.ne.s32.totalorder %s83, %s86
    %p95 = scmp.eq.s32.totalorder %s14, 1
    %p96 = por %p94, %p95
    %p97 = scmp.ne.s32.totalorder %s86, %s87
    %p98 = scmp.eq.s32.totalorder %s14, 0
    %p99 = por %p97, %p98
    %p100 = scmp.ne.s32.totalorder %s86, %s87
    %p101 = scmp.eq.s32.totalorder %s15, 1
    %p102 = por %p100, %p101
    %p104 = scmp.ne.s32.totalorder %s87, %s103
    %p105 = scmp.eq.s32.totalorder %s15, 0
    %p106 = por %p104, %p105
    %s107 = ssub.s32 %s16, %s28
    %s108 = ssub.s32 %s17, %s24
    %s109 = sor.u32 %s107, %s108
    %p110 = scmp.eq.s32.totalorder %s109, 0
    %s112 = sadd.s32 %s111, 1
    %s113 = scalar_select %p110, %s111, %s112
    %p116 = pneg %p110
    %p117 = scmp.eq.s32.totalorder %s9, 1
    %p118 = por %p116, %p117
    %p119 = scmp.ne.s32.totalorder %s111, %s114
    %p120 = scmp.eq.s32.totalorder %s9, 0
    %p121 = por %p119, %p120
    %p122 = scmp.ne.s32.totalorder %s111, %s114
    %p123 = scmp.eq.s32.totalorder %s14, 1
    %p124 = por %p122, %p123
    %p125 = scmp.ne.s32.totalorder %s114, %s115
    %p126 = scmp.eq.s32.totalorder %s14, 0
    %p127 = por %p125, %p126
    %p128 = scmp.ne.s32.totalorder %s114, %s115
    %p129 = scmp.eq.s32.totalorder %s15, 1
    %p130 = por %p128, %p129
    %p132 = scmp.ne.s32.totalorder %s115, %s131
    %p133 = scmp.eq.s32.totalorder %s15, 0
    %p134 = por %p132, %p133
    %p135 = scmp.le.s32.totalorder 1, %s9
    %p136 = scmp.lt.s32.totalorder %s9, 3
    %p137 = pnand %p135, %p136
    %p138 = pneg %p137
    // Predicated region
    $region9: #{tpu_custom_call.1} parent=5 // pred_check
      _
    $region10: #{tpu_custom_call.1} parent=5 // pred_check_branch
      %140 = sbr.rel (%p137) target = $region12
    $region11: #{tpu_custom_call.1} parent=5 // pred_region
      %s141 = ssub.s32 %s9, 1
      // Predicated region
      $region13: #{tpu_custom_call.1} parent=11 // pred_check
        %p142 = pneg %p73
      $region14: #{tpu_custom_call.1} parent=11 // pred_check_branch
        %144 = sbr.rel (%p142) target = $region16
      $region15: #{tpu_custom_call.1} parent=11 // pred_region
        %p145 = scmp.lt.s32.totalorder %s19, 0
        %s146 = scalar_select %p145, %s19, 0
        %s147 = smul.addr %s146, 4
        %s148 = scalar_lea.vmem %s1, %s147
      $region16: #{tpu_custom_call.1} parent=11 // pred_fallthru
        _
      // Predicated region
      $region17: #{tpu_custom_call.1} parent=11 // pred_check
        %p149 = pneg %p99
      $region18: #{tpu_custom_call.1} parent=11 // pred_check_branch
        %151 = sbr.rel (%p149) target = $region20
      $region19: #{tpu_custom_call.1} parent=11 // pred_region
        %p152 = scmp.lt.s32.totalorder %s19, 0
        %s153 = scalar_select %p152, %s19, 0
        %s154 = smul.addr %s153, 2
        %s155 = scalar_lea.vmem %s2, %s154
      $region20: #{tpu_custom_call.1} parent=11 // pred_fallthru
        _
    $region12: #{tpu_custom_call.1} parent=5 // pred_fallthru
      _
    %p156 = scmp.lt.s32.totalorder %s9, 2
    // Predicated region
    $region21: #{tpu_custom_call.1} parent=5 // pred_check
      %p157 = pneg %p156
    $region22: #{tpu_custom_call.1} parent=5 // pred_check_branch
      %159 = sbr.rel (%p157) target = $region24
    $region23: #{tpu_custom_call.1} parent=5 // pred_region
      // Predicated region
      $region25: #{tpu_custom_call.1} parent=23 // pred_check
        %p160 = pneg %p41
      $region26: #{tpu_custom_call.1} parent=23 // pred_check_branch
        %162 = sbr.rel (%p160) target = $region28
      $region27: #{tpu_custom_call.1} parent=23 // pred_region
        %p163 = scmp.lt.s32.totalorder %s16, 1
        %s164 = scalar_select %p163, %s16, 1
        %s165 = smul.addr %s164, 41
        %s166 = smul.addr %s165, 4
        %s167 = scalar_lea.vmem %s0, %s166
      $region28: #{tpu_custom_call.1} parent=23 // pred_fallthru
        _
    $region24: #{tpu_custom_call.1} parent=5 // pred_fallthru
      _
    %p168 = scmp.le.s32.totalorder 1, %s9
    %p169 = scmp.lt.s32.totalorder %s9, 3
    %p170 = pnand %p168, %p169
    %p171 = pneg %p170
    // Predicated region
    $region29: #{tpu_custom_call.1} parent=5 // pred_check
      _
    $region30: #{tpu_custom_call.1} parent=5 // pred_check_branch
      %173 = sbr.rel (%p170) target = $region32
    $region31: #{tpu_custom_call.1} parent=5 // pred_region
      %s174 = ssub.s32 %s9, 1
      %p175 = scmp.lt.s32.totalorder %s18, 1
      %s176 = scalar_select %p175, %s18, 1
      %s177 = smul.addr %s176, 41
      %s178 = smul.addr %s177, 4
      %s179 = scalar_lea.vmem %s0, %s178
      %p180 = pneg %p47
      %p181 = pneg %p44
      %p182 = scmp.lt.s32.totalorder %s19, 0
      %s183 = scalar_select %p182, %s19, 0
      %s184 = smul.addr %s183, 4
      %s185 = scalar_lea.vmem %s1, %s184
      %p186 = pneg %p73
      %p187 = pneg %p70
      %p188 = scmp.lt.s32.totalorder %s19, 0
      %s189 = scalar_select %p188, %s19, 0
      %s190 = smul.addr %s189, 2
      %s191 = scalar_lea.vmem %s2, %s190
      %p192 = pneg %p99
      %p193 = pneg %p96
      %p194 = pneg %p127
      %p195 = pneg %p124
      %p196 = scmp.lt.s32.totalorder %s18, 1
      %s197 = scalar_select %p196, %s18, 1
      %p198 = scmp.lt.s32.totalorder %s19, 0
      %s199 = scalar_select %p198, %s19, 0
      %s200 = smul.addr %s197, 36
      %s201 = sadd.s32 %s199, %s200
      %s202 = smul.addr %s201, 4
      %s203 = scalar_lea.vmem %s3, %s202
      %p204 = scmp.lt.s32.totalorder %s18, 1
      %s205 = scalar_select %p204, %s18, 1
      %s206 = smul.addr %s205, 41
      %s207 = smul.addr %s206, 4
      %s208 = scalar_lea.vmem %s0, %s207
      %p209 = scmp.lt.s32.totalorder %s19, 0
      %s210 = scalar_select %p209, %s19, 0
      %s211 = smul.addr %s210, 4
      %s212 = scalar_lea.vmem %s1, %s211
      %p213 = scmp.lt.s32.totalorder %s19, 0
      %s214 = scalar_select %p213, %s19, 0
      %s215 = smul.addr %s214, 2
      %s216 = scalar_lea.vmem %s2, %s215
      %p217 = scmp.lt.s32.totalorder %s18, 1
      %s218 = scalar_select %p217, %s18, 1
      %p219 = scmp.lt.s32.totalorder %s19, 0
      %s220 = scalar_select %p219, %s19, 0
      %s221 = smul.addr %s218, 36
      %s222 = sadd.s32 %s220, %s221
      %s223 = smul.addr %s222, 4
      %s224 = scalar_lea.vmem %s3, %s223
      %v226 = vld [vmem:[%s208] sm:$0xf]
      %v227 = vld [vmem:[%s208 + $0x4] sm:$0xf]
      %v228 = vld [vmem:[%s208 + $0x8] sm:$0xf]
      %v229 = vld [vmem:[%s208 + $0xc] sm:$0xf]
      %v230 = vld [vmem:[%s208 + $0x10] sm:$0xf]
      %v231 = vld [vmem:[%s208 + $0x14] sm:$0xf]
      %v232 = vld [vmem:[%s208 + $0x18] sm:$0xf]
      %v233 = vld [vmem:[%s208 + $0x1c] sm:$0xf]
      %v234 = vld [vmem:[%s208 + $0x20] sm:$0xf]
      %v235 = vld [vmem:[%s208 + $0x24] sm:$0xf]
      %v236 = vld [vmem:[%s208 + $0x28] sm:$0xf]
      %v237 = vld [vmem:[%s208 + $0x2c] sm:$0xf]
      %v238 = vld [vmem:[%s208 + $0x30] sm:$0xf]
      %v239 = vld [vmem:[%s208 + $0x34] sm:$0xf]
      %v240 = vld [vmem:[%s208 + $0x38] sm:$0xf]
      %v241 = vld [vmem:[%s208 + $0x3c] sm:$0xf]
      %v242 = vld [vmem:[%s208 + $0x40] sm:$0xf]
      %v243 = vld [vmem:[%s208 + $0x44] sm:$0xf]
      %v244 = vld [vmem:[%s208 + $0x48] sm:$0xf]
      %v245 = vld [vmem:[%s208 + $0x4c] sm:$0xf]
      %v246 = vld [vmem:[%s208 + $0x50] sm:$0xf]
      %v247 = vld [vmem:[%s208 + $0x54] sm:$0xf]
      %v248 = vld [vmem:[%s208 + $0x58] sm:$0xf]
      %v249 = vld [vmem:[%s208 + $0x5c] sm:$0xf]
      %v250 = vld [vmem:[%s208 + $0x60] sm:$0xf]
      %v251 = vld [vmem:[%s208 + $0x64] sm:$0xf]
      %v252 = vld [vmem:[%s208 + $0x68] sm:$0xf]
      %v253 = vld [vmem:[%s208 + $0x6c] sm:$0xf]
      %v254 = vld [vmem:[%s208 + $0x70] sm:$0xf]
      %v255 = vld [vmem:[%s208 + $0x74] sm:$0xf]
      %v256 = vld [vmem:[%s208 + $0x78] sm:$0xf]
      %v257 = vld [vmem:[%s208 + $0x7c] sm:$0xf]
      %v258 = vld [vmem:[%s208 + $0x80] sm:$0xf]
      %v259 = vld [vmem:[%s208 + $0x84] sm:$0xf]
      %v260 = vld [vmem:[%s208 + $0x88] sm:$0xf]
      %v261 = vld [vmem:[%s208 + $0x8c] sm:$0x7]
      %v262 = vld [vmem:[%s212] sm:$0xf]
      %v299 = vunpack.c.l.b16 %v226
      %v300 = vunpack.c.l.b16 %v227
      %v301 = vunpack.c.l.b16 %v228
      %v302 = vunpack.c.l.b16 %v229
      %v303 = vunpack.c.l.b16 %v230
      %v304 = vunpack.c.l.b16 %v231
      %v305 = vunpack.c.l.b16 %v232
      %v306 = vunpack.c.l.b16 %v233
      %v307 = vunpack.c.l.b16 %v234
      %v308 = vunpack.c.l.b16 %v235
      %v309 = vunpack.c.l.b16 %v236
      %v310 = vunpack.c.l.b16 %v237
      %v311 = vunpack.c.l.b16 %v238
      %v312 = vunpack.c.l.b16 %v239
      %v313 = vunpack.c.l.b16 %v240
      %v314 = vunpack.c.l.b16 %v241
      %v315 = vunpack.c.l.b16 %v242
      %v316 = vunpack.c.l.b16 %v243
      %v317 = vunpack.c.l.b16 %v244
      %v318 = vunpack.c.l.b16 %v245
      %v319 = vunpack.c.l.b16 %v246
      %v320 = vunpack.c.l.b16 %v247
      %v321 = vunpack.c.l.b16 %v248
      %v322 = vunpack.c.l.b16 %v249
      %v323 = vunpack.c.l.b16 %v250
      %v324 = vunpack.c.l.b16 %v251
      %v325 = vunpack.c.l.b16 %v252
      %v326 = vunpack.c.l.b16 %v253
      %v327 = vunpack.c.l.b16 %v254
      %v328 = vunpack.c.l.b16 %v255
      %v329 = vunpack.c.l.b16 %v256
      %v330 = vunpack.c.l.b16 %v257
      %v331 = vunpack.c.l.b16 %v258
      %v332 = vunpack.c.l.b16 %v259
      %v333 = vunpack.c.l.b16 %v260
      %v334 = vunpack.c.l.b16 %v261
      %v335 = vpack.c.b16 %v300, %v299
      %v336 = vpack.c.b16 %v302, %v301
      %v337 = vpack.c.b16 %v304, %v303
      %v338 = vpack.c.b16 %v306, %v305
      %v339 = vpack.c.b16 %v308, %v307
      %v340 = vpack.c.b16 %v310, %v309
      %v341 = vpack.c.b16 %v312, %v311
      %v342 = vpack.c.b16 %v314, %v313
      %v343 = vpack.c.b16 %v316, %v315
      %v344 = vpack.c.b16 %v318, %v317
      %v345 = vpack.c.b16 %v320, %v319
      %v346 = vpack.c.b16 %v322, %v321
      %v347 = vpack.c.b16 %v324, %v323
      %v348 = vpack.c.b16 %v326, %v325
      %v349 = vpack.c.b16 %v328, %v327
      %v350 = vpack.c.b16 %v330, %v329
      %v351 = vpack.c.b16 %v332, %v331
      %v352 = vpack.c.b16 %v334, %v333
      %vm353 = vcmask 64512
      %v355 = vsel %vm353, %v335, 0
      %v358 = vsel %vm353, %v336, 0
      %v361 = vsel %vm353, %v337, 0
      %v364 = vsel %vm353, %v338, 0
      %v367 = vsel %vm353, %v339, 0
      %v370 = vsel %vm353, %v340, 0
      %v373 = vsel %vm353, %v341, 0
      %v376 = vsel %vm353, %v342, 0
      %v379 = vsel %vm353, %v343, 0
      %v382 = vsel %vm353, %v344, 0
      %v385 = vsel %vm353, %v345, 0
      %v388 = vsel %vm353, %v346, 0
      %v391 = vsel %vm353, %v347, 0
      %v394 = vsel %vm353, %v348, 0
      %v397 = vsel %vm353, %v349, 0
      %v400 = vsel %vm353, %v350, 0
      %v403 = vsel %vm353, %v351, 0
      %v406 = vsel %vm353, %v352, 0
      %vm408 = vcmask 1043456
      %v410 = vsel %vm408, %v262, 0
      %412 = vmatprep.subr.bf16.mxu0 0
      %413 = vmatpush1.bf16.msra.mxu0 %v410
      %414 = vmatprep.subr.bf16.mxu0 0
      %415 = vmatpush1.bf16.msra.mxu0 0
      %416 = vmatprep.subr.bf16.mxu0 0
      %417 = vmatpush1.bf16.msra.mxu0 0
      %418 = vmatprep.subr.bf16.mxu0 0
      %419 = vmatpush1.bf16.msra.mxu0 0
      %420 = vmatprep.subr.bf16.mxu0 0
      %421 = vmatpush1.bf16.msra.mxu0 0
      %422 = vmatprep.subr.bf16.mxu0 0
      %423 = vmatpush1.bf16.msra.mxu0 0
      %424 = vmatprep.subr.bf16.mxu0 0
      %425 = vmatpush1.bf16.msra.mxu0 0
      %426 = vmatprep.subr.bf16.mxu0 0
      %427 = vmatpush1.bf16.msra.mxu0 0
      %428 = vmatprep.subr.bf16.mxu0 0
      %429 = vmatpush1.bf16.msra.mxu0 0
      %430 = vmatprep.subr.bf16.mxu0 0
      %431 = vmatpush1.bf16.msra.mxu0 0
      %432 = vmatprep.subr.bf16.mxu0 0
      %433 = vmatpush1.bf16.msra.mxu0 0
      %434 = vmatprep.subr.bf16.mxu0 0
      %435 = vmatpush1.bf16.msra.mxu0 0
      %436 = vmatprep.subr.bf16.mxu0 0
      %437 = vmatpush1.bf16.msra.mxu0 0
      %438 = vmatprep.subr.bf16.mxu0 0
      %439 = vmatpush1.bf16.msra.mxu0 0
      %440 = vmatprep.subr.bf16.mxu0 0
      %441 = vmatpush1.bf16.msra.mxu0 0
      %442 = vmatprep.subr.bf16.mxu0 0
      %443 = vmatpush1.bf16.msra.mxu0 0
      %444 = vmatprep.mubr.bf16.mxu0 0
      %445 = vmatmul.mubr.bf16.gmra.mrb[0].mxu0 %v355
      %v446 = vpop.f32.mrb[0].mxu0
      %v447 = vadd.f32 0.0, %v446
      %v448 = vpop.f32.mrb[0].mxu0
      %v449 = vpop.f32.mrb[0].mxu0
      %v450 = vadd.f32 0.0, %v449
      %v451 = vpop.f32.mrb[0].mxu0
      %452 = vmatprep.mubr.bf16.mxu0 0
      %453 = vmatmul.mubr.bf16.gmra.mrb[0].mxu0 %v358
      %v454 = vpop.f32.mrb[0].mxu0
      %v455 = vadd.f32 0.0, %v454
      %v456 = vpop.f32.mrb[0].mxu0
      %v457 = vpop.f32.mrb[0].mxu0
      %v458 = vadd.f32 0.0, %v457
      %v459 = vpop.f32.mrb[0].mxu0
      %460 = vmatprep.mubr.bf16.mxu0 0
      %461 = vmatmul.mubr.bf16.gmra.mrb[0].mxu0 %v361
      %v462 = vpop.f32.mrb[0].mxu0
      %v463 = vadd.f32 0.0, %v462
      %v464 = vpop.f32.mrb[0].mxu0
      %v465 = vpop.f32.mrb[0].mxu0
      %v466 = vadd.f32 0.0, %v465
      %v467 = vpop.f32.mrb[0].mxu0
      %468 = vmatprep.mubr.bf16.mxu0 0
      %469 = vmatmul.mubr.bf16.gmra.mrb[0].mxu0 %v364
      %v470 = vpop.f32.mrb[0].mxu0
      %v471 = vadd.f32 0.0, %v470
      %v472 = vpop.f32.mrb[0].mxu0
      %v473 = vpop.f32.mrb[0].mxu0
      %v474 = vadd.f32 0.0, %v473
      %v475 = vpop.f32.mrb[0].mxu0
      %476 = vmatprep.mubr.bf16.mxu0 0
      %477 = vmatmul.mubr.bf16.gmra.mrb[0].mxu0 %v367
      %v478 = vpop.f32.mrb[0].mxu0
      %v479 = vadd.f32 0.0, %v478
      %v480 = vpop.f32.mrb[0].mxu0
      %v481 = vpop.f32.mrb[0].mxu0
      %v482 = vadd.f32 0.0, %v481
      %v483 = vpop.f32.mrb[0].mxu0
      %484 = vmatprep.mubr.bf16.mxu0 0
      %485 = vmatmul.mubr.bf16.gmra.mrb[0].mxu0 %v370
      %v486 = vpop.f32.mrb[0].mxu0
      %v487 = vadd.f32 0.0, %v486
      %v488 = vpop.f32.mrb[0].mxu0
      %v489 = vpop.f32.mrb[0].mxu0
      %v490 = vadd.f32 0.0, %v489
      %v491 = vpop.f32.mrb[0].mxu0
      %492 = vmatprep.mubr.bf16.mxu0 0
      %493 = vmatmul.mubr.bf16.gmra.mrb[0].mxu0 %v373
      %v494 = vpop.f32.mrb[0].mxu0
      %v495 = vadd.f32 0.0, %v494
      %v496 = vpop.f32.mrb[0].mxu0
      %v497 = vpop.f32.mrb[0].mxu0
      %v498 = vadd.f32 0.0, %v497
      %v499 = vpop.f32.mrb[0].mxu0
      %500 = vmatprep.mubr.bf16.mxu0 0
      %501 = vmatmul.mubr.bf16.gmra.mrb[0].mxu0 %v376
      %v502 = vpop.f32.mrb[0].mxu0
      %v503 = vadd.f32 0.0, %v502
      %v504 = vpop.f32.mrb[0].mxu0
      %v505 = vpop.f32.mrb[0].mxu0
      %v506 = vadd.f32 0.0, %v505
      %v507 = vpop.f32.mrb[0].mxu0
      %508 = vmatprep.mubr.bf16.mxu0 0
      %509 = vmatmul.mubr.bf16.gmra.mrb[0].mxu0 %v379
      %v510 = vpop.f32.mrb[0].mxu0
      %v511 = vadd.f32 0.0, %v510
      %v512 = vpop.f32.mrb[0].mxu0
      %v513 = vpop.f32.mrb[0].mxu0
      %v514 = vadd.f32 0.0, %v513
      %v515 = vpop.f32.mrb[0].mxu0
      %516 = vmatprep.mubr.bf16.mxu0 0
      %517 = vmatmul.mubr.bf16.gmra.mrb[0].mxu0 %v382
      %v518 = vpop.f32.mrb[0].mxu0
      %v519 = vadd.f32 0.0, %v518
      %v520 = vpop.f32.mrb[0].mxu0
      %v521 = vpop.f32.mrb[0].mxu0
      %v522 = vadd.f32 0.0, %v521
      %v523 = vpop.f32.mrb[0].mxu0
      %524 = vmatprep.mubr.bf16.mxu0 0
      %525 = vmatmul.mubr.bf16.gmra.mrb[0].mxu0 %v385
      %v526 = vpop.f32.mrb[0].mxu0
      %v527 = vadd.f32 0.0, %v526
      %v528 = vpop.f32.mrb[0].mxu0
      %v529 = vpop.f32.mrb[0].mxu0
      %v530 = vadd.f32 0.0, %v529
      %v531 = vpop.f32.mrb[0].mxu0
      %532 = vmatprep.mubr.bf16.mxu0 0
      %533 = vmatmul.mubr.bf16.gmra.mrb[0].mxu0 %v388
      %v534 = vpop.f32.mrb[0].mxu0
      %v535 = vadd.f32 0.0, %v534
      %v536 = vpop.f32.mrb[0].mxu0
      %v537 = vpop.f32.mrb[0].mxu0
      %v538 = vadd.f32 0.0, %v537
      %v539 = vpop.f32.mrb[0].mxu0
      %540 = vmatprep.mubr.bf16.mxu0 0
      %541 = vmatmul.mubr.bf16.gmra.mrb[0].mxu0 %v391
      %v542 = vpop.f32.mrb[0].mxu0
      %v543 = vadd.f32 0.0, %v542
      %v544 = vpop.f32.mrb[0].mxu0
      %v545 = vpop.f32.mrb[0].mxu0
      %v546 = vadd.f32 0.0, %v545
      %v547 = vpop.f32.mrb[0].mxu0
      %548 = vmatprep.mubr.bf16.mxu0 0
      %549 = vmatmul.mubr.bf16.gmra.mrb[0].mxu0 %v394
      %v550 = vpop.f32.mrb[0].mxu0
      %v551 = vadd.f32 0.0, %v550
      %v552 = vpop.f32.mrb[0].mxu0
      %v553 = vpop.f32.mrb[0].mxu0
      %v554 = vadd.f32 0.0, %v553
      %v555 = vpop.f32.mrb[0].mxu0
      %556 = vmatprep.mubr.bf16.mxu0 0
      %557 = vmatmul.mubr.bf16.gmra.mrb[0].mxu0 %v397
      %v558 = vpop.f32.mrb[0].mxu0
      %v559 = vadd.f32 0.0, %v558
      %v560 = vpop.f32.mrb[0].mxu0
      %v561 = vpop.f32.mrb[0].mxu0
      %v562 = vadd.f32 0.0, %v561
      %v563 = vpop.f32.mrb[0].mxu0
      %564 = vmatprep.mubr.bf16.mxu0 0
      %565 = vmatmul.mubr.bf16.gmra.mrb[0].mxu0 %v400
      %v566 = vpop.f32.mrb[0].mxu0
      %v567 = vadd.f32 0.0, %v566
      %v568 = vpop.f32.mrb[0].mxu0
      %v569 = vpop.f32.mrb[0].mxu0
      %v570 = vadd.f32 0.0, %v569
      %v571 = vpop.f32.mrb[0].mxu0
      %572 = vmatprep.mubr.bf16.mxu0 0
      %573 = vmatmul.mubr.bf16.gmra.mrb[0].mxu0 %v403
      %v574 = vpop.f32.mrb[0].mxu0
      %v575 = vadd.f32 0.0, %v574
      %v576 = vpop.f32.mrb[0].mxu0
      %v577 = vpop.f32.mrb[0].mxu0
      %v578 = vadd.f32 0.0, %v577
      %v579 = vpop.f32.mrb[0].mxu0
      %580 = vmatprep.mubr.bf16.mxu0 0
      %581 = vmatmul.mubr.bf16.gmra.mrb[0].mxu0 %v406
      %v582 = vpop.f32.mrb[0].mxu0
      %v583 = vadd.f32 0.0, %v582
      %v584 = vpop.f32.mrb[0].mxu0
      %v585 = vpop.f32.mrb[0].mxu0
      %v586 = vadd.f32 0.0, %v585
      %v587 = vpop.f32.mrb[0].mxu0
      %588 = vdwg.mxu0
      %589 = vst [vmem:[#allocation2] sm:$0xff] %v447
      %590 = vst [vmem:[#allocation2 + $0x8] sm:$0xff] %v450
      %591 = vst [vmem:[#allocation2 + $0x10] sm:$0xff] %v455
      %592 = vst [vmem:[#allocation2 + $0x18] sm:$0xff] %v458
      %593 = vst [vmem:[#allocation2 + $0x20] sm:$0xff] %v463
      %594 = vst [vmem:[#allocation2 + $0x28] sm:$0xff] %v466
      %595 = vst [vmem:[#allocation2 + $0x30] sm:$0xff] %v471
      %596 = vst [vmem:[#allocation2 + $0x38] sm:$0xff] %v474
      %597 = vst [vmem:[#allocation2 + $0x40] sm:$0xff] %v479
      %598 = vst [vmem:[#allocation2 + $0x48] sm:$0xff] %v482
      %599 = vst [vmem:[#allocation2 + $0x50] sm:$0xff] %v487
      %600 = vst [vmem:[#allocation2 + $0x58] sm:$0xff] %v490
      %601 = vst [vmem:[#allocation2 + $0x60] sm:$0xff] %v495
      %602 = vst [vmem:[#allocation2 + $0x68] sm:$0xff] %v498
      %603 = vst [vmem:[#allocation2 + $0x70] sm:$0xff] %v503
      %604 = vst [vmem:[#allocation2 + $0x78] sm:$0xff] %v506
      %605 = vst [vmem:[#allocation2 + $0x80] sm:$0xff] %v511
      %606 = vst [vmem:[#allocation2 + $0x88] sm:$0xff] %v514
      %607 = vst [vmem:[#allocation2 + $0x90] sm:$0xff] %v519
      %608 = vst [vmem:[#allocation2 + $0x98] sm:$0xff] %v522
      %609 = vst [vmem:[#allocation2 + $0xa0] sm:$0xff] %v527
      %610 = vst [vmem:[#allocation2 + $0xa8] sm:$0xff] %v530
      %611 = vst [vmem:[#allocation2 + $0xb0] sm:$0xff] %v535
      %612 = vst [vmem:[#allocation2 + $0xb8] sm:$0xff] %v538
      %613 = vst [vmem:[#allocation2 + $0xc0] sm:$0xff] %v543
      %614 = vst [vmem:[#allocation2 + $0xc8] sm:$0xff] %v546
      %615 = vst [vmem:[#allocation2 + $0xd0] sm:$0xff] %v551
      %616 = vst [vmem:[#allocation2 + $0xd8] sm:$0xff] %v554
      %617 = vst [vmem:[#allocation2 + $0xe0] sm:$0xff] %v559
      %618 = vst [vmem:[#allocation2 + $0xe8] sm:$0xff] %v562
      %619 = vst [vmem:[#allocation2 + $0xf0] sm:$0xff] %v567
      %620 = vst [vmem:[#allocation2 + $0xf8] sm:$0xff] %v570
      %621 = vst [vmem:[#allocation2 + $0x100] sm:$0xff] %v575
      %622 = vst [vmem:[#allocation2 + $0x108] sm:$0xff] %v578
      %623 = vst [vmem:[#allocation2 + $0x110] sm:$0xff] %v583
      %624 = vst [vmem:[#allocation2 + $0x118] sm:$0x3f] %v586
      %v625 = vld [vmem:[%s208] sm:$0xf]
      %v626 = vld [vmem:[%s208 + $0x4] sm:$0xf]
      %v627 = vld [vmem:[%s208 + $0x8] sm:$0xf]
      %v628 = vld [vmem:[%s208 + $0xc] sm:$0xf]
      %v629 = vld [vmem:[%s208 + $0x10] sm:$0xf]
      %v630 = vld [vmem:[%s208 + $0x14] sm:$0xf]
      %v631 = vld [vmem:[%s208 + $0x18] sm:$0xf]
      %v632 = vld [vmem:[%s208 + $0x1c] sm:$0xf]
      %v633 = vld [vmem:[%s208 + $0x20] sm:$0xf]
      %v634 = vld [vmem:[%s208 + $0x24] sm:$0xf]
      %v635 = vld [vmem:[%s208 + $0x28] sm:$0xf]
      %v636 = vld [vmem:[%s208 + $0x2c] sm:$0xf]
      %v637 = vld [vmem:[%s208 + $0x30] sm:$0xf]
      %v638 = vld [vmem:[%s208 + $0x34] sm:$0xf]
      %v639 = vld [vmem:[%s208 + $0x38] sm:$0xf]
      %v640 = vld [vmem:[%s208 + $0x3c] sm:$0xf]
      %v641 = vld [vmem:[%s208 + $0x40] sm:$0xf]
      %v642 = vld [vmem:[%s208 + $0x44] sm:$0xf]
      %v643 = vld [vmem:[%s208 + $0x48] sm:$0xf]
      %v644 = vld [vmem:[%s208 + $0x4c] sm:$0xf]
      %v645 = vld [vmem:[%s208 + $0x50] sm:$0xf]
      %v646 = vld [vmem:[%s208 + $0x54] sm:$0xf]
      %v647 = vld [vmem:[%s208 + $0x58] sm:$0xf]
      %v648 = vld [vmem:[%s208 + $0x5c] sm:$0xf]
      %v649 = vld [vmem:[%s208 + $0x60] sm:$0xf]
      %v650 = vld [vmem:[%s208 + $0x64] sm:$0xf]
      %v651 = vld [vmem:[%s208 + $0x68] sm:$0xf]
      %v652 = vld [vmem:[%s208 + $0x6c] sm:$0xf]
      %v653 = vld [vmem:[%s208 + $0x70] sm:$0xf]
      %v654 = vld [vmem:[%s208 + $0x74] sm:$0xf]
      %v655 = vld [vmem:[%s208 + $0x78] sm:$0xf]
      %v656 = vld [vmem:[%s208 + $0x7c] sm:$0xf]
      %v657 = vld [vmem:[%s208 + $0x80] sm:$0xf]
      %v658 = vld [vmem:[%s208 + $0x84] sm:$0xf]
      %v659 = vld [vmem:[%s208 + $0x88] sm:$0xf]
      %v660 = vld [vmem:[%s208 + $0x8c] sm:$0xf]
      %s661 = scalar_lea.vmem %s212, 4
      %v662 = vld [vmem:[%s661] sm:$0xf]
      %v699 = vunpack.c.l.b16 %v625
      %v700 = vunpack.c.l.b16 %v626
      %v701 = vunpack.c.l.b16 %v627
      %v702 = vunpack.c.l.b16 %v628
      %v703 = vunpack.c.l.b16 %v629
      %v704 = vunpack.c.l.b16 %v630
      %v705 = vunpack.c.l.b16 %v631
      %v706 = vunpack.c.l.b16 %v632
      %v707 = vunpack.c.l.b16 %v633
      %v708 = vunpack.c.l.b16 %v634
      %v709 = vunpack.c.l.b16 %v635
      %v710 = vunpack.c.l.b16 %v636
      %v711 = vunpack.c.l.b16 %v637
      %v712 = vunpack.c.l.b16 %v638
      %v713 = vunpack.c.l.b16 %v639
      %v714 = vunpack.c.l.b16 %v640
      %v715 = vunpack.c.l.b16 %v641
      %v716 = vunpack.c.l.b16 %v642
      %v717 = vunpack.c.l.b16 %v643
      %v718 = vunpack.c.l.b16 %v644
      %v719 = vunpack.c.l.b16 %v645
      %v720 = vunpack.c.l.b16 %v646
      %v721 = vunpack.c.l.b16 %v647
      %v722 = vunpack.c.l.b16 %v648
      %v723 = vunpack.c.l.b16 %v649
      %v724 = vunpack.c.l.b16 %v650
      %v725 = vunpack.c.l.b16 %v651
      %v726 = vunpack.c.l.b16 %v652
      %v727 = vunpack.c.l.b16 %v653
      %v728 = vunpack.c.l.b16 %v654
      %v729 = vunpack.c.l.b16 %v655
      %v730 = vunpack.c.l.b16 %v656
      %v731 = vunpack.c.l.b16 %v657
      %v732 = vunpack.c.l.b16 %v658
      %v733 = vunpack.c.l.b16 %v659
      %v734 = vunpack.c.l.b16 %v660
      %v735 = vpack.c.b16 %v700, %v699
      %v736 = vpack.c.b16 %v702, %v701
      %v737 = vpack.c.b16 %v704, %v703
      %v738 = vpack.c.b16 %v706, %v705
      %v739 = vpack.c.b16 %v708, %v707
      %v740 = vpack.c.b16 %v710, %v709
      %v741 = vpack.c.b16 %v712, %v711
      %v742 = vpack.c.b16 %v714, %v713
      %v743 = vpack.c.b16 %v716, %v715
      %v744 = vpack.c.b16 %v718, %v717
      %v745 = vpack.c.b16 %v720, %v719
      %v746 = vpack.c.b16 %v722, %v721
      %v747 = vpack.c.b16 %v724, %v723
      %v748 = vpack.c.b16 %v726, %v725
      %v749 = vpack.c.b16 %v728, %v727
      %v750 = vpack.c.b16 %v730, %v729
      %v751 = vpack.c.b16 %v732, %v731
      %v752 = vpack.c.b16 %v734, %v733
      %vm753 = vsmask.f32 7424
      %v755 = vshrl.u32 %v735, 16
      %v757 = vshll.u32 %v735, 16
      %v759 = vrot.slane %v757, 1
      %v760 = vor.u32 %v755, %v759
      %v762 = vshll.u32 %v736, 16
      %v764 = vrot.slane %v762, 1
      %v765 = vsel %vm753, %v760, %v764
      %v766 = vshrl.u32 %v736, 16
      %v768 = vor.u32 %v766, %v764
      %v770 = vshll.u32 %v737, 16
      %v772 = vrot.slane %v770, 1
      %v773 = vsel %vm753, %v768, %v772
      %v774 = vshrl.u32 %v737, 16
      %v776 = vor.u32 %v774, %v772
      %v778 = vshll.u32 %v738, 16
      %v780 = vrot.slane %v778, 1
      %v781 = vsel %vm753, %v776, %v780
      %v782 = vshrl.u32 %v738, 16
      %v784 = vor.u32 %v782, %v780
      %v786 = vshll.u32 %v739, 16
      %v788 = vrot.slane %v786, 1
      %v789 = vsel %vm753, %v784, %v788
      %v790 = vshrl.u32 %v739, 16
      %v792 = vor.u32 %v790, %v788
      %v794 = vshll.u32 %v740, 16
      %v796 = vrot.slane %v794, 1
      %v797 = vsel %vm753, %v792, %v796
      %v798 = vshrl.u32 %v740, 16
      %v800 = vor.u32 %v798, %v796
      %v802 = vshll.u32 %v741, 16
      %v804 = vrot.slane %v802, 1
      %v805 = vsel %vm753, %v800, %v804
      %v806 = vshrl.u32 %v741, 16
      %v808 = vor.u32 %v806, %v804
      %v810 = vshll.u32 %v742, 16
      %v812 = vrot.slane %v810, 1
      %v813 = vsel %vm753, %v808, %v812
      %v814 = vshrl.u32 %v742, 16
      %v816 = vor.u32 %v814, %v812
      %v818 = vshll.u32 %v743, 16
      %v820 = vrot.slane %v818, 1
      %v821 = vsel %vm753, %v816, %v820
      %v822 = vshrl.u32 %v743, 16
      %v824 = vor.u32 %v822, %v820
      %v826 = vshll.u32 %v744, 16
      %v828 = vrot.slane %v826, 1
      %v829 = vsel %vm753, %v824, %v828
      %v830 = vshrl.u32 %v744, 16
      %v832 = vor.u32 %v830, %v828
      %v834 = vshll.u32 %v745, 16
      %v836 = vrot.slane %v834, 1
      %v837 = vsel %vm753, %v832, %v836
      %v838 = vshrl.u32 %v745, 16
      %v840 = vor.u32 %v838, %v836
      %v842 = vshll.u32 %v746, 16
      %v844 = vrot.slane %v842, 1
      %v845 = vsel %vm753, %v840, %v844
      %v846 = vshrl.u32 %v746, 16
      %v848 = vor.u32 %v846, %v844
      %v850 = vshll.u32 %v747, 16
      %v852 = vrot.slane %v850, 1
      %v853 = vsel %vm753, %v848, %v852
      %v854 = vshrl.u32 %v747, 16
      %v856 = vor.u32 %v854, %v852
      %v858 = vshll.u32 %v748, 16
      %v860 = vrot.slane %v858, 1
      %v861 = vsel %vm753, %v856, %v860
      %v862 = vshrl.u32 %v748, 16
      %v864 = vor.u32 %v862, %v860
      %v866 = vshll.u32 %v749, 16
      %v868 = vrot.slane %v866, 1
      %v869 = vsel %vm753, %v864, %v868
      %v870 = vshrl.u32 %v749, 16
      %v872 = vor.u32 %v870, %v868
      %v874 = vshll.u32 %v750, 16
      %v876 = vrot.slane %v874, 1
      %v877 = vsel %vm753, %v872, %v876
      %v878 = vshrl.u32 %v750, 16
      %v880 = vor.u32 %v878, %v876
      %v882 = vshll.u32 %v751, 16
      %v884 = vrot.slane %v882, 1
      %v885 = vsel %vm753, %v880, %v884
      %v886 = vshrl.u32 %v751, 16
      %v888 = vor.u32 %v886, %v884
      %v890 = vshll.u32 %v752, 16
      %v892 = vrot.slane %v890, 1
      %v893 = vsel %vm753, %v888, %v892
      %v894 = vshrl.u32 %v752, 16
      %v896 = vor.u32 %v894, %v892
      %v898 = vsel %vm353, %v765, 0
      %v901 = vsel %vm353, %v773, 0
      %v904 = vsel %vm353, %v781, 0
      %v907 = vsel %vm353, %v789, 0
      %v910 = vsel %vm353, %v797, 0
      %v913 = vsel %vm353, %v805, 0
      %v916 = vsel %vm353, %v813, 0
      %v919 = vsel %vm353, %v821, 0
      %v922 = vsel %vm353, %v829, 0
      %v925 = vsel %vm353, %v837, 0
      %v928 = vsel %vm353, %v845, 0
      %v931 = vsel %vm353, %v853, 0
      %v934 = vsel %vm353, %v861, 0
      %v937 = vsel %vm353, %v869, 0
      %v940 = vsel %vm353, %v877, 0
      %v943 = vsel %vm353, %v885, 0
      %v946 = vsel %vm353, %v893, 0
      %v949 = vsel %vm353, %v896, 0
      %v952 = vsel %vm408, %v662, 0
      %954 = vmatprep.subr.bf16.mxu0 0
      %955 = vmatpush1.bf16.msra.mxu0 %v952
      %956 = vmatprep.subr.bf16.mxu0 0
      %957 = vmatpush1.bf16.msra.mxu0 0
      %958 = vmatprep.subr.bf16.mxu0 0
      %959 = vmatpush1.bf16.msra.mxu0 0
      %960 = vmatprep.subr.bf16.mxu0 0
      %961 = vmatpush1.bf16.msra.mxu0 0
      %962 = vmatprep.subr.bf16.mxu0 0
      %963 = vmatpush1.bf16.msra.mxu0 0
      %964 = vmatprep.subr.bf16.mxu0 0
      %965 = vmatpush1.bf16.msra.mxu0 0
      %966 = vmatprep.subr.bf16.mxu0 0
      %967 = vmatpush1.bf16.msra.mxu0 0
      %968 = vmatprep.subr.bf16.mxu0 0
      %969 = vmatpush1.bf16.msra.mxu0 0
      %970 = vmatprep.subr.bf16.mxu0 0
      %971 = vmatpush1.bf16.msra.mxu0 0
      %972 = vmatprep.subr.bf16.mxu0 0
      %973 = vmatpush1.bf16.msra.mxu0 0
      %974 = vmatprep.subr.bf16.mxu0 0
      %975 = vmatpush1.bf16.msra.mxu0 0
      %976 = vmatprep.subr.bf16.mxu0 0
      %977 = vmatpush1.bf16.msra.mxu0 0
      %978 = vmatprep.subr.bf16.mxu0 0
      %979 = vmatpush1.bf16.msra.mxu0 0
      %980 = vmatprep.subr.bf16.mxu0 0
      %981 = vmatpush1.bf16.msra.mxu0 0
      %982 = vmatprep.subr.bf16.mxu0 0
      %983 = vmatpush1.bf16.msra.mxu0 0
      %984 = vmatprep.subr.bf16.mxu0 0
      %985 = vmatpush1.bf16.msra.mxu0 0
      %986 = vmatprep.mubr.bf16.mxu0 0
      %987 = vmatmul.mubr.bf16.gmra.mrb[0].mxu0 %v898
      %v988 = vpop.f32.mrb[0].mxu0
      %v989 = vadd.f32 0.0, %v988
      %v990 = vpop.f32.mrb[0].mxu0
      %v991 = vpop.f32.mrb[0].mxu0
      %v992 = vadd.f32 0.0, %v991
      %v993 = vpop.f32.mrb[0].mxu0
      %994 = vmatprep.mubr.bf16.mxu0 0
      %995 = vmatmul.mubr.bf16.gmra.mrb[0].mxu0 %v901
      %v996 = vpop.f32.mrb[0].mxu0
      %v997 = vadd.f32 0.0, %v996
      %v998 = vpop.f32.mrb[0].mxu0
      %v999 = vpop.f32.mrb[0].mxu0
      %v1000 = vadd.f32 0.0, %v999
      %v1001 = vpop.f32.mrb[0].mxu0
      %1002 = vmatprep.mubr.bf16.mxu0 0
      %1003 = vmatmul.mubr.bf16.gmra.mrb[0].mxu0 %v904
      %v1004 = vpop.f32.mrb[0].mxu0
      %v1005 = vadd.f32 0.0, %v1004
      %v1006 = vpop.f32.mrb[0].mxu0
      %v1007 = vpop.f32.mrb[0].mxu0
      %v1008 = vadd.f32 0.0, %v1007
      %v1009 = vpop.f32.mrb[0].mxu0
      %1010 = vmatprep.mubr.bf16.mxu0 0
      %1011 = vmatmul.mubr.bf16.gmra.mrb[0].mxu0 %v907
      %v1012 = vpop.f32.mrb[0].mxu0
      %v1013 = vadd.f32 0.0, %v1012
      %v1014 = vpop.f32.mrb[0].mxu0
      %v1015 = vpop.f32.mrb[0].mxu0
      %v1016 = vadd.f32 0.0, %v1015
      %v1017 = vpop.f32.mrb[0].mxu0
      %1018 = vmatprep.mubr.bf16.mxu0 0
      %1019 = vmatmul.mubr.bf16.gmra.mrb[0].mxu0 %v910
      %v1020 = vpop.f32.mrb[0].mxu0
      %v1021 = vadd.f32 0.0, %v1020
      %v1022 = vpop.f32.mrb[0].mxu0
      %v1023 = vpop.f32.mrb[0].mxu0
      %v1024 = vadd.f32 0.0, %v1023
      %v1025 = vpop.f32.mrb[0].mxu0
      %1026 = vmatprep.mubr.bf16.mxu0 0
      %1027 = vmatmul.mubr.bf16.gmra.mrb[0].mxu0 %v913
      %v1028 = vpop.f32.mrb[0].mxu0
      %v1029 = vadd.f32 0.0, %v1028
      %v1030 = vpop.f32.mrb[0].mxu0
      %v1031 = vpop.f32.mrb[0].mxu0
      %v1032 = vadd.f32 0.0, %v1031
      %v1033 = vpop.f32.mrb[0].mxu0
      %1034 = vmatprep.mubr.bf16.mxu0 0
      %1035 = vmatmul.mubr.bf16.gmra.mrb[0].mxu0 %v916
      %v1036 = vpop.f32.mrb[0].mxu0
      %v1037 = vadd.f32 0.0, %v1036
      %v1038 = vpop.f32.mrb[0].mxu0
      %v1039 = vpop.f32.mrb[0].mxu0
      %v1040 = vadd.f32 0.0, %v1039
      %v1041 = vpop.f32.mrb[0].mxu0
      %1042 = vmatprep.mubr.bf16.mxu0 0
      %1043 = vmatmul.mubr.bf16.gmra.mrb[0].mxu0 %v919
      %v1044 = vpop.f32.mrb[0].mxu0
      %v1045 = vadd.f32 0.0, %v1044
      %v1046 = vpop.f32.mrb[0].mxu0
      %v1047 = vpop.f32.mrb[0].mxu0
      %v1048 = vadd.f32 0.0, %v1047
      %v1049 = vpop.f32.mrb[0].mxu0
      %1050 = vmatprep.mubr.bf16.mxu0 0
      %1051 = vmatmul.mubr.bf16.gmra.mrb[0].mxu0 %v922
      %v1052 = vpop.f32.mrb[0].mxu0
      %v1053 = vadd.f32 0.0, %v1052
      %v1054 = vpop.f32.mrb[0].mxu0
      %v1055 = vpop.f32.mrb[0].mxu0
      %v1056 = vadd.f32 0.0, %v1055
      %v1057 = vpop.f32.mrb[0].mxu0
      %1058 = vmatprep.mubr.bf16.mxu0 0
      %1059 = vmatmul.mubr.bf16.gmra.mrb[0].mxu0 %v925
      %v1060 = vpop.f32.mrb[0].mxu0
      %v1061 = vadd.f32 0.0, %v1060
      %v1062 = vpop.f32.mrb[0].mxu0
      %v1063 = vpop.f32.mrb[0].mxu0
      %v1064 = vadd.f32 0.0, %v1063
      %v1065 = vpop.f32.mrb[0].mxu0
      %1066 = vmatprep.mubr.bf16.mxu0 0
      %1067 = vmatmul.mubr.bf16.gmra.mrb[0].mxu0 %v928
      %v1068 = vpop.f32.mrb[0].mxu0
      %v1069 = vadd.f32 0.0, %v1068
      %v1070 = vpop.f32.mrb[0].mxu0
      %v1071 = vpop.f32.mrb[0].mxu0
      %v1072 = vadd.f32 0.0, %v1071
      %v1073 = vpop.f32.mrb[0].mxu0
      %1074 = vmatprep.mubr.bf16.mxu0 0
      %1075 = vmatmul.mubr.bf16.gmra.mrb[0].mxu0 %v931
      %v1076 = vpop.f32.mrb[0].mxu0
      %v1077 = vadd.f32 0.0, %v1076
      %v1078 = vpop.f32.mrb[0].mxu0
      %v1079 = vpop.f32.mrb[0].mxu0
      %v1080 = vadd.f32 0.0, %v1079
      %v1081 = vpop.f32.mrb[0].mxu0
      %1082 = vmatprep.mubr.bf16.mxu0 0
      %1083 = vmatmul.mubr.bf16.gmra.mrb[0].mxu0 %v934
      %v1084 = vpop.f32.mrb[0].mxu0
      %v1085 = vadd.f32 0.0, %v1084
      %v1086 = vpop.f32.mrb[0].mxu0
      %v1087 = vpop.f32.mrb[0].mxu0
      %v1088 = vadd.f32 0.0, %v1087
      %v1089 = vpop.f32.mrb[0].mxu0
      %1090 = vmatprep.mubr.bf16.mxu0 0
      %1091 = vmatmul.mubr.bf16.gmra.mrb[0].mxu0 %v937
      %v1092 = vpop.f32.mrb[0].mxu0
      %v1093 = vadd.f32 0.0, %v1092
      %v1094 = vpop.f32.mrb[0].mxu0
      %v1095 = vpop.f32.mrb[0].mxu0
      %v1096 = vadd.f32 0.0, %v1095
      %v1097 = vpop.f32.mrb[0].mxu0
      %1098 = vmatprep.mubr.bf16.mxu0 0
      %1099 = vmatmul.mubr.bf16.gmra.mrb[0].mxu0 %v940
      %v1100 = vpop.f32.mrb[0].mxu0
      %v1101 = vadd.f32 0.0, %v1100
      %v1102 = vpop.f32.mrb[0].mxu0
      %v1103 = vpop.f32.mrb[0].mxu0
      %v1104 = vadd.f32 0.0, %v1103
      %v1105 = vpop.f32.mrb[0].mxu0
      %1106 = vmatprep.mubr.bf16.mxu0 0
      %1107 = vmatmul.mubr.bf16.gmra.mrb[0].mxu0 %v943
      %v1108 = vpop.f32.mrb[0].mxu0
      %v1109 = vadd.f32 0.0, %v1108
      %v1110 = vpop.f32.mrb[0].mxu0
      %v1111 = vpop.f32.mrb[0].mxu0
      %v1112 = vadd.f32 0.0, %v1111
      %v1113 = vpop.f32.mrb[0].mxu0
      %1114 = vmatprep.mubr.bf16.mxu0 0
      %1115 = vmatmul.mubr.bf16.gmra.mrb[0].mxu0 %v946
      %v1116 = vpop.f32.mrb[0].mxu0
      %v1117 = vadd.f32 0.0, %v1116
      %v1118 = vpop.f32.mrb[0].mxu0
      %v1119 = vpop.f32.mrb[0].mxu0
      %v1120 = vadd.f32 0.0, %v1119
      %v1121 = vpop.f32.mrb[0].mxu0
      %1122 = vmatprep.mubr.bf16.mxu0 0
      %1123 = vmatmul.mubr.bf16.gmra.mrb[0].mxu0 %v949
      %v1124 = vpop.f32.mrb[0].mxu0
      %v1125 = vadd.f32 0.0, %v1124
      %v1126 = vpop.f32.mrb[0].mxu0
      %v1127 = vpop.f32.mrb[0].mxu0
      %v1128 = vadd.f32 0.0, %v1127
      %v1129 = vpop.f32.mrb[0].mxu0
      %1130 = vdwg.mxu0
      %v1131 = vld [vmem:[#allocation2] sm:$0xff]
      %v1132 = vld [vmem:[#allocation2 + $0x8] sm:$0xff]
      %v1133 = vld [vmem:[#allocation2 + $0x10] sm:$0xff]
      %v1134 = vld [vmem:[#allocation2 + $0x18] sm:$0xff]
      %v1135 = vld [vmem:[#allocation2 + $0x20] sm:$0xff]
      %v1136 = vld [vmem:[#allocation2 + $0x28] sm:$0xff]
      %v1137 = vld [vmem:[#allocation2 + $0x30] sm:$0xff]
      %v1138 = vld [vmem:[#allocation2 + $0x38] sm:$0xff]
      %v1139 = vld [vmem:[#allocation2 + $0x40] sm:$0xff]
      %v1140 = vld [vmem:[#allocation2 + $0x48] sm:$0xff]
      %v1141 = vld [vmem:[#allocation2 + $0x50] sm:$0xff]
      %v1142 = vld [vmem:[#allocation2 + $0x58] sm:$0xff]
      %v1143 = vld [vmem:[#allocation2 + $0x60] sm:$0xff]
      %v1144 = vld [vmem:[#allocation2 + $0x68] sm:$0xff]
      %v1145 = vld [vmem:[#allocation2 + $0x70] sm:$0xff]
      %v1146 = vld [vmem:[#allocation2 + $0x78] sm:$0xff]
      %v1147 = vld [vmem:[#allocation2 + $0x80] sm:$0xff]
      %v1148 = vld [vmem:[#allocation2 + $0x88] sm:$0xff]
      %v1149 = vld [vmem:[#allocation2 + $0x90] sm:$0xff]
      %v1150 = vld [vmem:[#allocation2 + $0x98] sm:$0xff]
      %v1151 = vld [vmem:[#allocation2 + $0xa0] sm:$0xff]
      %v1152 = vld [vmem:[#allocation2 + $0xa8] sm:$0xff]
      %v1153 = vld [vmem:[#allocation2 + $0xb0] sm:$0xff]
      %v1154 = vld [vmem:[#allocation2 + $0xb8] sm:$0xff]
      %v1155 = vld [vmem:[#allocation2 + $0xc0] sm:$0xff]
      %v1156 = vld [vmem:[#allocation2 + $0xc8] sm:$0xff]
      %v1157 = vld [vmem:[#allocation2 + $0xd0] sm:$0xff]
      %v1158 = vld [vmem:[#allocation2 + $0xd8] sm:$0xff]
      %v1159 = vld [vmem:[#allocation2 + $0xe0] sm:$0xff]
      %v1160 = vld [vmem:[#allocation2 + $0xe8] sm:$0xff]
      %v1161 = vld [vmem:[#allocation2 + $0xf0] sm:$0xff]
      %v1162 = vld [vmem:[#allocation2 + $0xf8] sm:$0xff]
      %v1163 = vld [vmem:[#allocation2 + $0x100] sm:$0xff]
      %v1164 = vld [vmem:[#allocation2 + $0x108] sm:$0xff]
      %v1165 = vld [vmem:[#allocation2 + $0x110] sm:$0xff]
      %v1166 = vld [vmem:[#allocation2 + $0x118] sm:$0x3f]
      %v1167 = vadd.f32 %v1131, %v989
      %v1168 = vadd.f32 %v1132, %v992
      %v1169 = vadd.f32 %v1133, %v997
      %v1170 = vadd.f32 %v1134, %v1000
      %v1171 = vadd.f32 %v1135, %v1005
      %v1172 = vadd.f32 %v1136, %v1008
      %v1173 = vadd.f32 %v1137, %v1013
      %v1174 = vadd.f32 %v1138, %v1016
      %v1175 = vadd.f32 %v1139, %v1021
      %v1176 = vadd.f32 %v1140, %v1024
      %v1177 = vadd.f32 %v1141, %v1029
      %v1178 = vadd.f32 %v1142, %v1032
      %v1179 = vadd.f32 %v1143, %v1037
      %v1180 = vadd.f32 %v1144, %v1040
      %v1181 = vadd.f32 %v1145, %v1045
      %v1182 = vadd.f32 %v1146, %v1048
      %v1183 = vadd.f32 %v1147, %v1053
      %v1184 = vadd.f32 %v1148, %v1056
      %v1185 = vadd.f32 %v1149, %v1061
      %v1186 = vadd.f32 %v1150, %v1064
      %v1187 = vadd.f32 %v1151, %v1069
      %v1188 = vadd.f32 %v1152, %v1072
      %v1189 = vadd.f32 %v1153, %v1077
      %v1190 = vadd.f32 %v1154, %v1080
      %v1191 = vadd.f32 %v1155, %v1085
      %v1192 = vadd.f32 %v1156, %v1088
      %v1193 = vadd.f32 %v1157, %v1093
      %v1194 = vadd.f32 %v1158, %v1096
      %v1195 = vadd.f32 %v1159, %v1101
      %v1196 = vadd.f32 %v1160, %v1104
      %v1197 = vadd.f32 %v1161, %v1109
      %v1198 = vadd.f32 %v1162, %v1112
      %v1199 = vadd.f32 %v1163, %v1117
      %v1200 = vadd.f32 %v1164, %v1120
      %v1201 = vadd.f32 %v1165, %v1125
      %v1202 = vadd.f32 %v1166, %v1128
      %1203 = vst [vmem:[#allocation2] sm:$0xff] %v1167
      %1204 = vst [vmem:[#allocation2 + $0x8] sm:$0xff] %v1168
      %1205 = vst [vmem:[#allocation2 + $0x10] sm:$0xff] %v1169
      %1206 = vst [vmem:[#allocation2 + $0x18] sm:$0xff] %v1170
      %1207 = vst [vmem:[#allocation2 + $0x20] sm:$0xff] %v1171
      %1208 = vst [vmem:[#allocation2 + $0x28] sm:$0xff] %v1172
      %1209 = vst [vmem:[#allocation2 + $0x30] sm:$0xff] %v1173
      %1210 = vst [vmem:[#allocation2 + $0x38] sm:$0xff] %v1174
      %1211 = vst [vmem:[#allocation2 + $0x40] sm:$0xff] %v1175
      %1212 = vst [vmem:[#allocation2 + $0x48] sm:$0xff] %v1176
      %1213 = vst [vmem:[#allocation2 + $0x50] sm:$0xff] %v1177
      %1214 = vst [vmem:[#allocation2 + $0x58] sm:$0xff] %v1178
      %1215 = vst [vmem:[#allocation2 + $0x60] sm:$0xff] %v1179
      %1216 = vst [vmem:[#allocation2 + $0x68] sm:$0xff] %v1180
      %1217 = vst [vmem:[#allocation2 + $0x70] sm:$0xff] %v1181
      %1218 = vst [vmem:[#allocation2 + $0x78] sm:$0xff] %v1182
      %1219 = vst [vmem:[#allocation2 + $0x80] sm:$0xff] %v1183
      %1220 = vst [vmem:[#allocation2 + $0x88] sm:$0xff] %v1184
      %1221 = vst [vmem:[#allocation2 + $0x90] sm:$0xff] %v1185
      %1222 = vst [vmem:[#allocation2 + $0x98] sm:$0xff] %v1186
      %1223 = vst [vmem:[#allocation2 + $0xa0] sm:$0xff] %v1187
      %1224 = vst [vmem:[#allocation2 + $0xa8] sm:$0xff] %v1188
      %1225 = vst [vmem:[#allocation2 + $0xb0] sm:$0xff] %v1189
      %1226 = vst [vmem:[#allocation2 + $0xb8] sm:$0xff] %v1190
      %1227 = vst [vmem:[#allocation2 + $0xc0] sm:$0xff] %v1191
      %1228 = vst [vmem:[#allocation2 + $0xc8] sm:$0xff] %v1192
      %1229 = vst [vmem:[#allocation2 + $0xd0] sm:$0xff] %v1193
      %1230 = vst [vmem:[#allocation2 + $0xd8] sm:$0xff] %v1194
      %1231 = vst [vmem:[#allocation2 + $0xe0] sm:$0xff] %v1195
      %1232 = vst [vmem:[#allocation2 + $0xe8] sm:$0xff] %v1196
      %1233 = vst [vmem:[#allocation2 + $0xf0] sm:$0xff] %v1197
      %1234 = vst [vmem:[#allocation2 + $0xf8] sm:$0xff] %v1198
      %1235 = vst [vmem:[#allocation2 + $0x100] sm:$0xff] %v1199
      %1236 = vst [vmem:[#allocation2 + $0x108] sm:$0xff] %v1200
      %1237 = vst [vmem:[#allocation2 + $0x110] sm:$0xff] %v1201
      %1238 = vst [vmem:[#allocation2 + $0x118] sm:$0x3f] %v1202
      %v1239 = vld [vmem:[%s208] sm:$0xe]
      %v1240 = vld [vmem:[%s208 + $0x4] sm:$0xf]
      %v1241 = vld [vmem:[%s208 + $0x8] sm:$0xf]
      %v1242 = vld [vmem:[%s208 + $0xc] sm:$0xf]
      %v1243 = vld [vmem:[%s208 + $0x10] sm:$0xf]
      %v1244 = vld [vmem:[%s208 + $0x14] sm:$0xf]
      %v1245 = vld [vmem:[%s208 + $0x18] sm:$0xf]
      %v1246 = vld [vmem:[%s208 + $0x1c] sm:$0xf]
      %v1247 = vld [vmem:[%s208 + $0x20] sm:$0xf]
      %v1248 = vld [vmem:[%s208 + $0x24] sm:$0xf]
      %v1249 = vld [vmem:[%s208 + $0x28] sm:$0xf]
      %v1250 = vld [vmem:[%s208 + $0x2c] sm:$0xf]
      %v1251 = vld [vmem:[%s208 + $0x30] sm:$0xf]
      %v1252 = vld [vmem:[%s208 + $0x34] sm:$0xf]
      %v1253 = vld [vmem:[%s208 + $0x38] sm:$0xf]
      %v1254 = vld [vmem:[%s208 + $0x3c] sm:$0xf]
      %v1255 = vld [vmem:[%s208 + $0x40] sm:$0xf]
      %v1256 = vld [vmem:[%s208 + $0x44] sm:$0xf]
      %v1257 = vld [vmem:[%s208 + $0x48] sm:$0xf]
      %v1258 = vld [vmem:[%s208 + $0x4c] sm:$0xf]
      %v1259 = vld [vmem:[%s208 + $0x50] sm:$0xf]
      %v1260 = vld [vmem:[%s208 + $0x54] sm:$0xf]
      %v1261 = vld [vmem:[%s208 + $0x58] sm:$0xf]
      %v1262 = vld [vmem:[%s208 + $0x5c] sm:$0xf]
      %v1263 = vld [vmem:[%s208 + $0x60] sm:$0xf]
      %v1264 = vld [vmem:[%s208 + $0x64] sm:$0xf]
      %v1265 = vld [vmem:[%s208 + $0x68] sm:$0xf]
      %v1266 = vld [vmem:[%s208 + $0x6c] sm:$0xf]
      %v1267 = vld [vmem:[%s208 + $0x70] sm:$0xf]
      %v1268 = vld [vmem:[%s208 + $0x74] sm:$0xf]
      %v1269 = vld [vmem:[%s208 + $0x78] sm:$0xf]
      %v1270 = vld [vmem:[%s208 + $0x7c] sm:$0xf]
      %v1271 = vld [vmem:[%s208 + $0x80] sm:$0xf]
      %v1272 = vld [vmem:[%s208 + $0x84] sm:$0xf]
      %v1273 = vld [vmem:[%s208 + $0x88] sm:$0xf]
      %v1274 = vld [vmem:[%s208 + $0x8c] sm:$0xf]
      %s1275 = scalar_lea.vmem %s212, 8
      %v1276 = vld [vmem:[%s1275] sm:$0xf]
      %v1313 = vunpack.c.l.b16 %v1239
      %v1314 = vunpack.c.l.b16 %v1240
      %v1315 = vunpack.c.l.b16 %v1241
      %v1316 = vunpack.c.l.b16 %v1242
      %v1317 = vunpack.c.l.b16 %v1243
      %v1318 = vunpack.c.l.b16 %v1244
      %v1319 = vunpack.c.l.b16 %v1245
      %v1320 = vunpack.c.l.b16 %v1246
      %v1321 = vunpack.c.l.b16 %v1247
      %v1322 = vunpack.c.l.b16 %v1248
      %v1323 = vunpack.c.l.b16 %v1249
      %v1324 = vunpack.c.l.b16 %v1250
      %v1325 = vunpack.c.l.b16 %v1251
      %v1326 = vunpack.c.l.b16 %v1252
      %v1327 = vunpack.c.l.b16 %v1253
      %v1328 = vunpack.c.l.b16 %v1254
      %v1329 = vunpack.c.l.b16 %v1255
      %v1330 = vunpack.c.l.b16 %v1256
      %v1331 = vunpack.c.l.b16 %v1257
      %v1332 = vunpack.c.l.b16 %v1258
      %v1333 = vunpack.c.l.b16 %v1259
      %v1334 = vunpack.c.l.b16 %v1260
      %v1335 = vunpack.c.l.b16 %v1261
      %v1336 = vunpack.c.l.b16 %v1262
      %v1337 = vunpack.c.l.b16 %v1263
      %v1338 = vunpack.c.l.b16 %v1264
      %v1339 = vunpack.c.l.b16 %v1265
      %v1340 = vunpack.c.l.b16 %v1266
      %v1341 = vunpack.c.l.b16 %v1267
      %v1342 = vunpack.c.l.b16 %v1268
      %v1343 = vunpack.c.l.b16 %v1269
      %v1344 = vunpack.c.l.b16 %v1270
      %v1345 = vunpack.c.l.b16 %v1271
      %v1346 = vunpack.c.l.b16 %v1272
      %v1347 = vunpack.c.l.b16 %v1273
      %v1348 = vunpack.c.l.b16 %v1274
      %v1349 = vpack.c.b16 %v1314, %v1313
      %v1350 = vpack.c.b16 %v1316, %v1315
      %v1351 = vpack.c.b16 %v1318, %v1317
      %v1352 = vpack.c.b16 %v1320, %v1319
      %v1353 = vpack.c.b16 %v1322, %v1321
      %v1354 = vpack.c.b16 %v1324, %v1323
      %v1355 = vpack.c.b16 %v1326, %v1325
      %v1356 = vpack.c.b16 %v1328, %v1327
      %v1357 = vpack.c.b16 %v1330, %v1329
      %v1358 = vpack.c.b16 %v1332, %v1331
      %v1359 = vpack.c.b16 %v1334, %v1333
      %v1360 = vpack.c.b16 %v1336, %v1335
      %v1361 = vpack.c.b16 %v1338, %v1337
      %v1362 = vpack.c.b16 %v1340, %v1339
      %v1363 = vpack.c.b16 %v1342, %v1341
      %v1364 = vpack.c.b16 %v1344, %v1343
      %v1365 = vpack.c.b16 %v1346, %v1345
      %v1366 = vpack.c.b16 %v1348, %v1347
      %vm1367 = vcmask 1046528
      %v1368 = vrot.slane %v1349, 1
      %v1369 = vrot.slane %v1350, 1
      %v1370 = vsel %vm1367, %v1368, %v1369
      %v1371 = vrot.slane %v1351, 1
      %v1372 = vsel %vm1367, %v1369, %v1371
      %v1373 = vrot.slane %v1352, 1
      %v1374 = vsel %vm1367, %v1371, %v1373
      %v1375 = vrot.slane %v1353, 1
      %v1376 = vsel %vm1367, %v1373, %v1375
      %v1377 = vrot.slane %v1354, 1
      %v1378 = vsel %vm1367, %v1375, %v1377
      %v1379 = vrot.slane %v1355, 1
      %v1380 = vsel %vm1367, %v1377, %v1379
      %v1381 = vrot.slane %v1356, 1
      %v1382 = vsel %vm1367, %v1379, %v1381
      %v1383 = vrot.slane %v1357, 1
      %v1384 = vsel %vm1367, %v1381, %v1383
      %v1385 = vrot.slane %v1358, 1
      %v1386 = vsel %vm1367, %v1383, %v1385
      %v1387 = vrot.slane %v1359, 1
      %v1388 = vsel %vm1367, %v1385, %v1387
      %v1389 = vrot.slane %v1360, 1
      %v1390 = vsel %vm1367, %v1387, %v1389
      %v1391 = vrot.slane %v1361, 1
      %v1392 = vsel %vm1367, %v1389, %v1391
      %v1393 = vrot.slane %v1362, 1
      %v1394 = vsel %vm1367, %v1391, %v1393
      %v1395 = vrot.slane %v1363, 1
      %v1396 = vsel %vm1367, %v1393, %v1395
      %v1397 = vrot.slane %v1364, 1
      %v1398 = vsel %vm1367, %v1395, %v1397
      %v1399 = vrot.slane %v1365, 1
      %v1400 = vsel %vm1367, %v1397, %v1399
      %v1401 = vrot.slane %v1366, 1
      %v1402 = vsel %vm1367, %v1399, %v1401
      %v1404 = vsel %vm353, %v1370, 0
      %v1407 = vsel %vm353, %v1372, 0
      %v1410 = vsel %vm353, %v1374, 0
      %v1413 = vsel %vm353, %v1376, 0
      %v1416 = vsel %vm353, %v1378, 0
      %v1419 = vsel %vm353, %v1380, 0
      %v1422 = vsel %vm353, %v1382, 0
      %v1425 = vsel %vm353, %v1384, 0
      %v1428 = vsel %vm353, %v1386, 0
      %v1431 = vsel %vm353, %v1388, 0
      %v1434 = vsel %vm353, %v1390, 0
      %v1437 = vsel %vm353, %v1392, 0
      %v1440 = vsel %vm353, %v1394, 0
      %v1443 = vsel %vm353, %v1396, 0
      %v1446 = vsel %vm353, %v1398, 0
      %v1449 = vsel %vm353, %v1400, 0
      %v1452 = vsel %vm353, %v1402, 0
      %v1455 = vsel %vm353, %v1401, 0
      %v1458 = vsel %vm408, %v1276, 0
      %1460 = vmatprep.subr.bf16.mxu0 0
      %1461 = vmatpush1.bf16.msra.mxu0 %v1458
      %1462 = vmatprep.subr.bf16.mxu0 0
      %1463 = vmatpush1.bf16.msra.mxu0 0
      %1464 = vmatprep.subr.bf16.mxu0 0
      %1465 = vmatpush1.bf16.msra.mxu0 0
      %1466 = vmatprep.subr.bf16.mxu0 0
      %1467 = vmatpush1.bf16.msra.mxu0 0
      %1468 = vmatprep.subr.bf16.mxu0 0
      %1469 = vmatpush1.bf16.msra.mxu0 0
      %1470 = vmatprep.subr.bf16.mxu0 0
      %1471 = vmatpush1.bf16.msra.mxu0 0
      %1472 = vmatprep.subr.bf16.mxu0 0
      %1473 = vmatpush1.bf16.msra.mxu0 0
      %1474 = vmatprep.subr.bf16.mxu0 0
      %1475 = vmatpush1.bf16.msra.mxu0 0
      %1476 = vmatprep.subr.bf16.mxu0 0
      %1477 = vmatpush1.bf16.msra.mxu0 0
      %1478 = vmatprep.subr.bf16.mxu0 0
      %1479 = vmatpush1.bf16.msra.mxu0 0
      %1480 = vmatprep.subr.bf16.mxu0 0
      %1481 = vmatpush1.bf16.msra.mxu0 0
      %1482 = vmatprep.subr.bf16.mxu0 0
      %1483 = vmatpush1.bf16.msra.mxu0 0
      %1484 = vmatprep.subr.bf16.mxu0 0
      %1485 = vmatpush1.bf16.msra.mxu0 0
      %1486 = vmatprep.subr.bf16.mxu0 0
      %1487 = vmatpush1.bf16.msra.mxu0 0
      %1488 = vmatprep.subr.bf16.mxu0 0
      %1489 = vmatpush1.bf16.msra.mxu0 0
      %1490 = vmatprep.subr.bf16.mxu0 0
      %1491 = vmatpush1.bf16.msra.mxu0 0
      %1492 = vmatprep.mubr.bf16.mxu0 0
      %1493 = vmatmul.mubr.bf16.gmra.mrb[0].mxu0 %v1404
      %v1494 = vpop.f32.mrb[0].mxu0
      %v1495 = vadd.f32 0.0, %v1494
      %v1496 = vpop.f32.mrb[0].mxu0
      %v1497 = vpop.f32.mrb[0].mxu0
      %v1498 = vadd.f32 0.0, %v1497
      %v1499 = vpop.f32.mrb[0].mxu0
      %1500 = vmatprep.mubr.bf16.mxu0 0
      %1501 = vmatmul.mubr.bf16.gmra.mrb[0].mxu0 %v1407
      %v1502 = vpop.f32.mrb[0].mxu0
      %v1503 = vadd.f32 0.0, %v1502
      %v1504 = vpop.f32.mrb[0].mxu0
      %v1505 = vpop.f32.mrb[0].mxu0
      %v1506 = vadd.f32 0.0, %v1505
      %v1507 = vpop.f32.mrb[0].mxu0
      %1508 = vmatprep.mubr.bf16.mxu0 0
      %1509 = vmatmul.mubr.bf16.gmra.mrb[0].mxu0 %v1410
      %v1510 = vpop.f32.mrb[0].mxu0
      %v1511 = vadd.f32 0.0, %v1510
      %v1512 = vpop.f32.mrb[0].mxu0
      %v1513 = vpop.f32.mrb[0].mxu0
      %v1514 = vadd.f32 0.0, %v1513
      %v1515 = vpop.f32.mrb[0].mxu0
      %1516 = vmatprep.mubr.bf16.mxu0 0
      %1517 = vmatmul.mubr.bf16.gmra.mrb[0].mxu0 %v1413
      %v1518 = vpop.f32.mrb[0].mxu0
      %v1519 = vadd.f32 0.0, %v1518
      %v1520 = vpop.f32.mrb[0].mxu0
      %v1521 = vpop.f32.mrb[0].mxu0
      %v1522 = vadd.f32 0.0, %v1521
      %v1523 = vpop.f32.mrb[0].mxu0
      %1524 = vmatprep.mubr.bf16.mxu0 0
      %1525 = vmatmul.mubr.bf16.gmra.mrb[0].mxu0 %v1416
      %v1526 = vpop.f32.mrb[0].mxu0
      %v1527 = vadd.f32 0.0, %v1526
      %v1528 = vpop.f32.mrb[0].mxu0
      %v1529 = vpop.f32.mrb[0].mxu0
      %v1530 = vadd.f32 0.0, %v1529
      %v1531 = vpop.f32.mrb[0].mxu0
      %1532 = vmatprep.mubr.bf16.mxu0 0
      %1533 = vmatmul.mubr.bf16.gmra.mrb[0].mxu0 %v1419
      %v1534 = vpop.f32.mrb[0].mxu0
      %v1535 = vadd.f32 0.0, %v1534
      %v1536 = vpop.f32.mrb[0].mxu0
      %v1537 = vpop.f32.mrb[0].mxu0
      %v1538 = vadd.f32 0.0, %v1537
      %v1539 = vpop.f32.mrb[0].mxu0
      %1540 = vmatprep.mubr.bf16.mxu0 0
      %1541 = vmatmul.mubr.bf16.gmra.mrb[0].mxu0 %v1422
      %v1542 = vpop.f32.mrb[0].mxu0
      %v1543 = vadd.f32 0.0, %v1542
      %v1544 = vpop.f32.mrb[0].mxu0
      %v1545 = vpop.f32.mrb[0].mxu0
      %v1546 = vadd.f32 0.0, %v1545
      %v1547 = vpop.f32.mrb[0].mxu0
      %1548 = vmatprep.mubr.bf16.mxu0 0
      %1549 = vmatmul.mubr.bf16.gmra.mrb[0].mxu0 %v1425
      %v1550 = vpop.f32.mrb[0].mxu0
      %v1551 = vadd.f32 0.0, %v1550
      %v1552 = vpop.f32.mrb[0].mxu0
      %v1553 = vpop.f32.mrb[0].mxu0
      %v1554 = vadd.f32 0.0, %v1553
      %v1555 = vpop.f32.mrb[0].mxu0
      %1556 = vmatprep.mubr.bf16.mxu0 0
      %1557 = vmatmul.mubr.bf16.gmra.mrb[0].mxu0 %v1428
      %v1558 = vpop.f32.mrb[0].mxu0
      %v1559 = vadd.f32 0.0, %v1558
      %v1560 = vpop.f32.mrb[0].mxu0
      %v1561 = vpop.f32.mrb[0].mxu0
      %v1562 = vadd.f32 0.0, %v1561
      %v1563 = vpop.f32.mrb[0].mxu0
      %1564 = vmatprep.mubr.bf16.mxu0 0
      %1565 = vmatmul.mubr.bf16.gmra.mrb[0].mxu0 %v1431
      %v1566 = vpop.f32.mrb[0].mxu0
      %v1567 = vadd.f32 0.0, %v1566
      %v1568 = vpop.f32.mrb[0].mxu0
      %v1569 = vpop.f32.mrb[0].mxu0
      %v1570 = vadd.f32 0.0, %v1569
      %v1571 = vpop.f32.mrb[0].mxu0
      %1572 = vmatprep.mubr.bf16.mxu0 0
      %1573 = vmatmul.mubr.bf16.gmra.mrb[0].mxu0 %v1434
      %v1574 = vpop.f32.mrb[0].mxu0
      %v1575 = vadd.f32 0.0, %v1574
      %v1576 = vpop.f32.mrb[0].mxu0
      %v1577 = vpop.f32.mrb[0].mxu0
      %v1578 = vadd.f32 0.0, %v1577
      %v1579 = vpop.f32.mrb[0].mxu0
      %1580 = vmatprep.mubr.bf16.mxu0 0
      %1581 = vmatmul.mubr.bf16.gmra.mrb[0].mxu0 %v1437
      %v1582 = vpop.f32.mrb[0].mxu0
      %v1583 = vadd.f32 0.0, %v1582
      %v1584 = vpop.f32.mrb[0].mxu0
      %v1585 = vpop.f32.mrb[0].mxu0
      %v1586 = vadd.f32 0.0, %v1585
      %v1587 = vpop.f32.mrb[0].mxu0
      %1588 = vmatprep.mubr.bf16.mxu0 0
      %1589 = vmatmul.mubr.bf16.gmra.mrb[0].mxu0 %v1440
      %v1590 = vpop.f32.mrb[0].mxu0
      %v1591 = vadd.f32 0.0, %v1590
      %v1592 = vpop.f32.mrb[0].mxu0
      %v1593 = vpop.f32.mrb[0].mxu0
      %v1594 = vadd.f32 0.0, %v1593
      %v1595 = vpop.f32.mrb[0].mxu0
      %1596 = vmatprep.mubr.bf16.mxu0 0
      %1597 = vmatmul.mubr.bf16.gmra.mrb[0].mxu0 %v1443
      %v1598 = vpop.f32.mrb[0].mxu0
      %v1599 = vadd.f32 0.0, %v1598
      %v1600 = vpop.f32.mrb[0].mxu0
      %v1601 = vpop.f32.mrb[0].mxu0
      %v1602 = vadd.f32 0.0, %v1601
      %v1603 = vpop.f32.mrb[0].mxu0
      %1604 = vmatprep.mubr.bf16.mxu0 0
      %1605 = vmatmul.mubr.bf16.gmra.mrb[0].mxu0 %v1446
      %v1606 = vpop.f32.mrb[0].mxu0
      %v1607 = vadd.f32 0.0, %v1606
      %v1608 = vpop.f32.mrb[0].mxu0
      %v1609 = vpop.f32.mrb[0].mxu0
      %v1610 = vadd.f32 0.0, %v1609
      %v1611 = vpop.f32.mrb[0].mxu0
      %1612 = vmatprep.mubr.bf16.mxu0 0
      %1613 = vmatmul.mubr.bf16.gmra.mrb[0].mxu0 %v1449
      %v1614 = vpop.f32.mrb[0].mxu0
      %v1615 = vadd.f32 0.0, %v1614
      %v1616 = vpop.f32.mrb[0].mxu0
      %v1617 = vpop.f32.mrb[0].mxu0
      %v1618 = vadd.f32 0.0, %v1617
      %v1619 = vpop.f32.mrb[0].mxu0
      %1620 = vmatprep.mubr.bf16.mxu0 0
      %1621 = vmatmul.mubr.bf16.gmra.mrb[0].mxu0 %v1452
      %v1622 = vpop.f32.mrb[0].mxu0
      %v1623 = vadd.f32 0.0, %v1622
      %v1624 = vpop.f32.mrb[0].mxu0
      %v1625 = vpop.f32.mrb[0].mxu0
      %v1626 = vadd.f32 0.0, %v1625
      %v1627 = vpop.f32.mrb[0].mxu0
      %1628 = vmatprep.mubr.bf16.mxu0 0
      %1629 = vmatmul.mubr.bf16.gmra.mrb[0].mxu0 %v1455
      %v1630 = vpop.f32.mrb[0].mxu0
      %v1631 = vadd.f32 0.0, %v1630
      %v1632 = vpop.f32.mrb[0].mxu0
      %v1633 = vpop.f32.mrb[0].mxu0
      %v1634 = vadd.f32 0.0, %v1633
      %v1635 = vpop.f32.mrb[0].mxu0
      %1636 = vdwg.mxu0
      %v1637 = vld [vmem:[#allocation2] sm:$0xff]
      %v1638 = vld [vmem:[#allocation2 + $0x8] sm:$0xff]
      %v1639 = vld [vmem:[#allocation2 + $0x10] sm:$0xff]
      %v1640 = vld [vmem:[#allocation2 + $0x18] sm:$0xff]
      %v1641 = vld [vmem:[#allocation2 + $0x20] sm:$0xff]
      %v1642 = vld [vmem:[#allocation2 + $0x28] sm:$0xff]
      %v1643 = vld [vmem:[#allocation2 + $0x30] sm:$0xff]
      %v1644 = vld [vmem:[#allocation2 + $0x38] sm:$0xff]
      %v1645 = vld [vmem:[#allocation2 + $0x40] sm:$0xff]
      %v1646 = vld [vmem:[#allocation2 + $0x48] sm:$0xff]
      %v1647 = vld [vmem:[#allocation2 + $0x50] sm:$0xff]
      %v1648 = vld [vmem:[#allocation2 + $0x58] sm:$0xff]
      %v1649 = vld [vmem:[#allocation2 + $0x60] sm:$0xff]
      %v1650 = vld [vmem:[#allocation2 + $0x68] sm:$0xff]
      %v1651 = vld [vmem:[#allocation2 + $0x70] sm:$0xff]
      %v1652 = vld [vmem:[#allocation2 + $0x78] sm:$0xff]
      %v1653 = vld [vmem:[#allocation2 + $0x80] sm:$0xff]
      %v1654 = vld [vmem:[#allocation2 + $0x88] sm:$0xff]
      %v1655 = vld [vmem:[#allocation2 + $0x90] sm:$0xff]
      %v1656 = vld [vmem:[#allocation2 + $0x98] sm:$0xff]
      %v1657 = vld [vmem:[#allocation2 + $0xa0] sm:$0xff]
      %v1658 = vld [vmem:[#allocation2 + $0xa8] sm:$0xff]
      %v1659 = vld [vmem:[#allocation2 + $0xb0] sm:$0xff]
      %v1660 = vld [vmem:[#allocation2 + $0xb8] sm:$0xff]
      %v1661 = vld [vmem:[#allocation2 + $0xc0] sm:$0xff]
      %v1662 = vld [vmem:[#allocation2 + $0xc8] sm:$0xff]
      %v1663 = vld [vmem:[#allocation2 + $0xd0] sm:$0xff]
      %v1664 = vld [vmem:[#allocation2 + $0xd8] sm:$0xff]
      %v1665 = vld [vmem:[#allocation2 + $0xe0] sm:$0xff]
      %v1666 = vld [vmem:[#allocation2 + $0xe8] sm:$0xff]
      %v1667 = vld [vmem:[#allocation2 + $0xf0] sm:$0xff]
      %v1668 = vld [vmem:[#allocation2 + $0xf8] sm:$0xff]
      %v1669 = vld [vmem:[#allocation2 + $0x100] sm:$0xff]
      %v1670 = vld [vmem:[#allocation2 + $0x108] sm:$0xff]
      %v1671 = vld [vmem:[#allocation2 + $0x110] sm:$0xff]
      %v1672 = vld [vmem:[#allocation2 + $0x118] sm:$0x3f]
      %v1673 = vadd.f32 %v1637, %v1495
      %v1674 = vadd.f32 %v1638, %v1498
      %v1675 = vadd.f32 %v1639, %v1503
      %v1676 = vadd.f32 %v1640, %v1506
      %v1677 = vadd.f32 %v1641, %v1511
      %v1678 = vadd.f32 %v1642, %v1514
      %v1679 = vadd.f32 %v1643, %v1519
      %v1680 = vadd.f32 %v1644, %v1522
      %v1681 = vadd.f32 %v1645, %v1527
      %v1682 = vadd.f32 %v1646, %v1530
      %v1683 = vadd.f32 %v1647, %v1535
      %v1684 = vadd.f32 %v1648, %v1538
      %v1685 = vadd.f32 %v1649, %v1543
      %v1686 = vadd.f32 %v1650, %v1546
      %v1687 = vadd.f32 %v1651, %v1551
      %v1688 = vadd.f32 %v1652, %v1554
      %v1689 = vadd.f32 %v1653, %v1559
      %v1690 = vadd.f32 %v1654, %v1562
      %v1691 = vadd.f32 %v1655, %v1567
      %v1692 = vadd.f32 %v1656, %v1570
      %v1693 = vadd.f32 %v1657, %v1575
      %v1694 = vadd.f32 %v1658, %v1578
      %v1695 = vadd.f32 %v1659, %v1583
      %v1696 = vadd.f32 %v1660, %v1586
      %v1697 = vadd.f32 %v1661, %v1591
      %v1698 = vadd.f32 %v1662, %v1594
      %v1699 = vadd.f32 %v1663, %v1599
      %v1700 = vadd.f32 %v1664, %v1602
      %v1701 = vadd.f32 %v1665, %v1607
      %v1702 = vadd.f32 %v1666, %v1610
      %v1703 = vadd.f32 %v1667, %v1615
      %v1704 = vadd.f32 %v1668, %v1618
      %v1705 = vadd.f32 %v1669, %v1623
      %v1706 = vadd.f32 %v1670, %v1626
      %v1707 = vadd.f32 %v1671, %v1631
      %v1708 = vadd.f32 %v1672, %v1634
      %1709 = vst [vmem:[#allocation2] sm:$0xff] %v1673
      %1710 = vst [vmem:[#allocation2 + $0x8] sm:$0xff] %v1674
      %1711 = vst [vmem:[#allocation2 + $0x10] sm:$0xff] %v1675
      %1712 = vst [vmem:[#allocation2 + $0x18] sm:$0xff] %v1676
      %1713 = vst [vmem:[#allocation2 + $0x20] sm:$0xff] %v1677
      %1714 = vst [vmem:[#allocation2 + $0x28] sm:$0xff] %v1678
      %1715 = vst [vmem:[#allocation2 + $0x30] sm:$0xff] %v1679
      %1716 = vst [vmem:[#allocation2 + $0x38] sm:$0xff] %v1680
      %1717 = vst [vmem:[#allocation2 + $0x40] sm:$0xff] %v1681
      %1718 = vst [vmem:[#allocation2 + $0x48] sm:$0xff] %v1682
      %1719 = vst [vmem:[#allocation2 + $0x50] sm:$0xff] %v1683
      %1720 = vst [vmem:[#allocation2 + $0x58] sm:$0xff] %v1684
      %1721 = vst [vmem:[#allocation2 + $0x60] sm:$0xff] %v1685
      %1722 = vst [vmem:[#allocation2 + $0x68] sm:$0xff] %v1686
      %1723 = vst [vmem:[#allocation2 + $0x70] sm:$0xff] %v1687
      %1724 = vst [vmem:[#allocation2 + $0x78] sm:$0xff] %v1688
      %1725 = vst [vmem:[#allocation2 + $0x80] sm:$0xff] %v1689
      %1726 = vst [vmem:[#allocation2 + $0x88] sm:$0xff] %v1690
      %1727 = vst [vmem:[#allocation2 + $0x90] sm:$0xff] %v1691
      %1728 = vst [vmem:[#allocation2 + $0x98] sm:$0xff] %v1692
      %1729 = vst [vmem:[#allocation2 + $0xa0] sm:$0xff] %v1693
      %1730 = vst [vmem:[#allocation2 + $0xa8] sm:$0xff] %v1694
      %1731 = vst [vmem:[#allocation2 + $0xb0] sm:$0xff] %v1695
      %1732 = vst [vmem:[#allocation2 + $0xb8] sm:$0xff] %v1696
      %1733 = vst [vmem:[#allocation2 + $0xc0] sm:$0xff] %v1697
      %1734 = vst [vmem:[#allocation2 + $0xc8] sm:$0xff] %v1698
      %1735 = vst [vmem:[#allocation2 + $0xd0] sm:$0xff] %v1699
      %1736 = vst [vmem:[#allocation2 + $0xd8] sm:$0xff] %v1700
      %1737 = vst [vmem:[#allocation2 + $0xe0] sm:$0xff] %v1701
      %1738 = vst [vmem:[#allocation2 + $0xe8] sm:$0xff] %v1702
      %1739 = vst [vmem:[#allocation2 + $0xf0] sm:$0xff] %v1703
      %1740 = vst [vmem:[#allocation2 + $0xf8] sm:$0xff] %v1704
      %1741 = vst [vmem:[#allocation2 + $0x100] sm:$0xff] %v1705
      %1742 = vst [vmem:[#allocation2 + $0x108] sm:$0xff] %v1706
      %1743 = vst [vmem:[#allocation2 + $0x110] sm:$0xff] %v1707
      %1744 = vst [vmem:[#allocation2 + $0x118] sm:$0x3f] %v1708
      %v1745 = vld [vmem:[%s208 + $0x8] sm:$0xe]
      %v1746 = vld [vmem:[%s208 + $0xc] sm:$0xf]
      %v1747 = vld [vmem:[%s208 + $0x10] sm:$0xf]
      %v1748 = vld [vmem:[%s208 + $0x14] sm:$0xf]
      %v1749 = vld [vmem:[%s208 + $0x18] sm:$0xf]
      %v1750 = vld [vmem:[%s208 + $0x1c] sm:$0xf]
      %v1751 = vld [vmem:[%s208 + $0x20] sm:$0xf]
      %v1752 = vld [vmem:[%s208 + $0x24] sm:$0xf]
      %v1753 = vld [vmem:[%s208 + $0x28] sm:$0xf]
      %v1754 = vld [vmem:[%s208 + $0x2c] sm:$0xf]
      %v1755 = vld [vmem:[%s208 + $0x30] sm:$0xf]
      %v1756 = vld [vmem:[%s208 + $0x34] sm:$0xf]
      %v1757 = vld [vmem:[%s208 + $0x38] sm:$0xf]
      %v1758 = vld [vmem:[%s208 + $0x3c] sm:$0xf]
      %v1759 = vld [vmem:[%s208 + $0x40] sm:$0xf]
      %v1760 = vld [vmem:[%s208 + $0x44] sm:$0xf]
      %v1761 = vld [vmem:[%s208 + $0x48] sm:$0xf]
      %v1762 = vld [vmem:[%s208 + $0x4c] sm:$0xf]
      %v1763 = vld [vmem:[%s208 + $0x50] sm:$0xf]
      %v1764 = vld [vmem:[%s208 + $0x54] sm:$0xf]
      %v1765 = vld [vmem:[%s208 + $0x58] sm:$0xf]
      %v1766 = vld [vmem:[%s208 + $0x5c] sm:$0xf]
      %v1767 = vld [vmem:[%s208 + $0x60] sm:$0xf]
      %v1768 = vld [vmem:[%s208 + $0x64] sm:$0xf]
      %v1769 = vld [vmem:[%s208 + $0x68] sm:$0xf]
      %v1770 = vld [vmem:[%s208 + $0x6c] sm:$0xf]
      %v1771 = vld [vmem:[%s208 + $0x70] sm:$0xf]
      %v1772 = vld [vmem:[%s208 + $0x74] sm:$0xf]
      %v1773 = vld [vmem:[%s208 + $0x78] sm:$0xf]
      %v1774 = vld [vmem:[%s208 + $0x7c] sm:$0xf]
      %v1775 = vld [vmem:[%s208 + $0x80] sm:$0xf]
      %v1776 = vld [vmem:[%s208 + $0x84] sm:$0xf]
      %v1777 = vld [vmem:[%s208 + $0x88] sm:$0xf]
      %v1778 = vld [vmem:[%s208 + $0x8c] sm:$0xf]
      %v1779 = vld [vmem:[%s208 + $0x90] sm:$0xf]
      %v1780 = vld [vmem:[%s208 + $0x94] sm:$0xf]
      %s1781 = scalar_lea.vmem %s212, 12
      %v1782 = vld [vmem:[%s1781] sm:$0xf]
      %v1819 = vunpack.c.l.b16 %v1745
      %v1820 = vunpack.c.l.b16 %v1746
      %v1821 = vunpack.c.l.b16 %v1747
      %v1822 = vunpack.c.l.b16 %v1748
      %v1823 = vunpack.c.l.b16 %v1749
      %v1824 = vunpack.c.l.b16 %v1750
      %v1825 = vunpack.c.l.b16 %v1751
      %v1826 = vunpack.c.l.b16 %v1752
      %v1827 = vunpack.c.l.b16 %v1753
      %v1828 = vunpack.c.l.b16 %v1754
      %v1829 = vunpack.c.l.b16 %v1755
      %v1830 = vunpack.c.l.b16 %v1756
      %v1831 = vunpack.c.l.b16 %v1757
      %v1832 = vunpack.c.l.b16 %v1758
      %v1833 = vunpack.c.l.b16 %v1759
      %v1834 = vunpack.c.l.b16 %v1760
      %v1835 = vunpack.c.l.b16 %v1761
      %v1836 = vunpack.c.l.b16 %v1762
      %v1837 = vunpack.c.l.b16 %v1763
      %v1838 = vunpack.c.l.b16 %v1764
      %v1839 = vunpack.c.l.b16 %v1765
      %v1840 = vunpack.c.l.b16 %v1766
      %v1841 = vunpack.c.l.b16 %v1767
      %v1842 = vunpack.c.l.b16 %v1768
      %v1843 = vunpack.c.l.b16 %v1769
      %v1844 = vunpack.c.l.b16 %v1770
      %v1845 = vunpack.c.l.b16 %v1771
      %v1846 = vunpack.c.l.b16 %v1772
      %v1847 = vunpack.c.l.b16 %v1773
      %v1848 = vunpack.c.l.b16 %v1774
      %v1849 = vunpack.c.l.b16 %v1775
      %v1850 = vunpack.c.l.b16 %v1776
      %v1851 = vunpack.c.l.b16 %v1777
      %v1852 = vunpack.c.l.b16 %v1778
      %v1853 = vunpack.c.l.b16 %v1779
      %v1854 = vunpack.c.l.b16 %v1780
      %v1855 = vpack.c.b16 %v1820, %v1819
      %v1856 = vpack.c.b16 %v1822, %v1821
      %v1857 = vpack.c.b16 %v1824, %v1823
      %v1858 = vpack.c.b16 %v1826, %v1825
      %v1859 = vpack.c.b16 %v1828, %v1827
      %v1860 = vpack.c.b16 %v1830, %v1829
      %v1861 = vpack.c.b16 %v1832, %v1831
      %v1862 = vpack.c.b16 %v1834, %v1833
      %v1863 = vpack.c.b16 %v1836, %v1835
      %v1864 = vpack.c.b16 %v1838, %v1837
      %v1865 = vpack.c.b16 %v1840, %v1839
      %v1866 = vpack.c.b16 %v1842, %v1841
      %v1867 = vpack.c.b16 %v1844, %v1843
      %v1868 = vpack.c.b16 %v1846, %v1845
      %v1869 = vpack.c.b16 %v1848, %v1847
      %v1870 = vpack.c.b16 %v1850, %v1849
      %v1871 = vpack.c.b16 %v1852, %v1851
      %v1872 = vpack.c.b16 %v1854, %v1853
      %v1873 = vrot.slane %v1855, 1
      %v1874 = vrot.slane %v1856, 1
      %v1875 = vsel %vm1367, %v1873, %v1874
      %v1876 = vrot.slane %v1857, 1
      %v1877 = vsel %vm1367, %v1874, %v1876
      %v1878 = vrot.slane %v1858, 1
      %v1879 = vsel %vm1367, %v1876, %v1878
      %v1880 = vrot.slane %v1859, 1
      %v1881 = vsel %vm1367, %v1878, %v1880
      %v1882 = vrot.slane %v1860, 1
      %v1883 = vsel %vm1367, %v1880, %v1882
      %v1884 = vrot.slane %v1861, 1
      %v1885 = vsel %vm1367, %v1882, %v1884
      %v1886 = vrot.slane %v1862, 1
      %v1887 = vsel %vm1367, %v1884, %v1886
      %v1888 = vrot.slane %v1863, 1
      %v1889 = vsel %vm1367, %v1886, %v1888
      %v1890 = vrot.slane %v1864, 1
      %v1891 = vsel %vm1367, %v1888, %v1890
      %v1892 = vrot.slane %v1865, 1
      %v1893 = vsel %vm1367, %v1890, %v1892
      %v1894 = vrot.slane %v1866, 1
      %v1895 = vsel %vm1367, %v1892, %v1894
      %v1896 = vrot.slane %v1867, 1
      %v1897 = vsel %vm1367, %v1894, %v1896
      %v1898 = vrot.slane %v1868, 1
      %v1899 = vsel %vm1367, %v1896, %v1898
      %v1900 = vrot.slane %v1869, 1
      %v1901 = vsel %vm1367, %v1898, %v1900
      %v1902 = vrot.slane %v1870, 1
      %v1903 = vsel %vm1367, %v1900, %v1902
      %v1904 = vrot.slane %v1871, 1
      %v1905 = vsel %vm1367, %v1902, %v1904
      %v1906 = vrot.slane %v1872, 1
      %v1907 = vsel %vm1367, %v1904, %v1906
      %v1909 = vsel %vm353, %v1875, 0
      %v1912 = vsel %vm353, %v1877, 0
      %v1915 = vsel %vm353, %v1879, 0
      %v1918 = vsel %vm353, %v1881, 0
      %v1921 = vsel %vm353, %v1883, 0
      %v1924 = vsel %vm353, %v1885, 0
      %v1927 = vsel %vm353, %v1887, 0
      %v1930 = vsel %vm353, %v1889, 0
      %v1933 = vsel %vm353, %v1891, 0
      %v1936 = vsel %vm353, %v1893, 0
      %v1939 = vsel %vm353, %v1895, 0
      %v1942 = vsel %vm353, %v1897, 0
      %v1945 = vsel %vm353, %v1899, 0
      %v1948 = vsel %vm353, %v1901, 0
      %v1951 = vsel %vm353, %v1903, 0
      %v1954 = vsel %vm353, %v1905, 0
      %v1957 = vsel %vm353, %v1907, 0
      %v1960 = vsel %vm353, %v1906, 0
      %v1963 = vsel %vm408, %v1782, 0
      %1965 = vmatprep.subr.bf16.mxu0 0
      %1966 = vmatpush1.bf16.msra.mxu0 %v1963
      %1967 = vmatprep.subr.bf16.mxu0 0
      %1968 = vmatpush1.bf16.msra.mxu0 0
      %1969 = vmatprep.subr.bf16.mxu0 0
      %1970 = vmatpush1.bf16.msra.mxu0 0
      %1971 = vmatprep.subr.bf16.mxu0 0
      %1972 = vmatpush1.bf16.msra.mxu0 0
      %1973 = vmatprep.subr.bf16.mxu0 0
      %1974 = vmatpush1.bf16.msra.mxu0 0
      %1975 = vmatprep.subr.bf16.mxu0 0
      %1976 = vmatpush1.bf16.msra.mxu0 0
      %1977 = vmatprep.subr.bf16.mxu0 0
      %1978 = vmatpush1.bf16.msra.mxu0 0
      %1979 = vmatprep.subr.bf16.mxu0 0
      %1980 = vmatpush1.bf16.msra.mxu0 0
      %1981 = vmatprep.subr.bf16.mxu0 0
      %1982 = vmatpush1.bf16.msra.mxu0 0
      %1983 = vmatprep.subr.bf16.mxu0 0
      %1984 = vmatpush1.bf16.msra.mxu0 0
      %1985 = vmatprep.subr.bf16.mxu0 0
      %1986 = vmatpush1.bf16.msra.mxu0 0
      %1987 = vmatprep.subr.bf16.mxu0 0
      %1988 = vmatpush1.bf16.msra.mxu0 0
      %1989 = vmatprep.subr.bf16.mxu0 0
      %1990 = vmatpush1.bf16.msra.mxu0 0
      %1991 = vmatprep.subr.bf16.mxu0 0
      %1992 = vmatpush1.bf16.msra.mxu0 0
      %1993 = vmatprep.subr.bf16.mxu0 0
      %1994 = vmatpush1.bf16.msra.mxu0 0
      %1995 = vmatprep.subr.bf16.mxu0 0
      %1996 = vmatpush1.bf16.msra.mxu0 0
      %1997 = vmatprep.mubr.bf16.mxu0 0
      %1998 = vmatmul.mubr.bf16.gmra.mrb[0].mxu0 %v1909
      %v1999 = vpop.f32.mrb[0].mxu0
      %v2000 = vadd.f32 0.0, %v1999
      %v2001 = vpop.f32.mrb[0].mxu0
      %v2002 = vpop.f32.mrb[0].mxu0
      %v2003 = vadd.f32 0.0, %v2002
      %v2004 = vpop.f32.mrb[0].mxu0
      %2005 = vmatprep.mubr.bf16.mxu0 0
      %2006 = vmatmul.mubr.bf16.gmra.mrb[0].mxu0 %v1912
      %v2007 = vpop.f32.mrb[0].mxu0
      %v2008 = vadd.f32 0.0, %v2007
      %v2009 = vpop.f32.mrb[0].mxu0
      %v2010 = vpop.f32.mrb[0].mxu0
      %v2011 = vadd.f32 0.0, %v2010
      %v2012 = vpop.f32.mrb[0].mxu0
      %2013 = vmatprep.mubr.bf16.mxu0 0
      %2014 = vmatmul.mubr.bf16.gmra.mrb[0].mxu0 %v1915
      %v2015 = vpop.f32.mrb[0].mxu0
      %v2016 = vadd.f32 0.0, %v2015
      %v2017 = vpop.f32.mrb[0].mxu0
      %v2018 = vpop.f32.mrb[0].mxu0
      %v2019 = vadd.f32 0.0, %v2018
      %v2020 = vpop.f32.mrb[0].mxu0
      %2021 = vmatprep.mubr.bf16.mxu0 0
      %2022 = vmatmul.mubr.bf16.gmra.mrb[0].mxu0 %v1918
      %v2023 = vpop.f32.mrb[0].mxu0
      %v2024 = vadd.f32 0.0, %v2023
      %v2025 = vpop.f32.mrb[0].mxu0
      %v2026 = vpop.f32.mrb[0].mxu0
      %v2027 = vadd.f32 0.0, %v2026
      %v2028 = vpop.f32.mrb[0].mxu0
      %2029 = vmatprep.mubr.bf16.mxu0 0
      %2030 = vmatmul.mubr.bf16.gmra.mrb[0].mxu0 %v1921
      %v2031 = vpop.f32.mrb[0].mxu0
      %v2032 = vadd.f32 0.0, %v2031
      %v2033 = vpop.f32.mrb[0].mxu0
      %v2034 = vpop.f32.mrb[0].mxu0
      %v2035 = vadd.f32 0.0, %v2034
      %v2036 = vpop.f32.mrb[0].mxu0
      %2037 = vmatprep.mubr.bf16.mxu0 0
      %2038 = vmatmul.mubr.bf16.gmra.mrb[0].mxu0 %v1924
      %v2039 = vpop.f32.mrb[0].mxu0
      %v2040 = vadd.f32 0.0, %v2039
      %v2041 = vpop.f32.mrb[0].mxu0
      %v2042 = vpop.f32.mrb[0].mxu0
      %v2043 = vadd.f32 0.0, %v2042
      %v2044 = vpop.f32.mrb[0].mxu0
      %2045 = vmatprep.mubr.bf16.mxu0 0
      %2046 = vmatmul.mubr.bf16.gmra.mrb[0].mxu0 %v1927
      %v2047 = vpop.f32.mrb[0].mxu0
      %v2048 = vadd.f32 0.0, %v2047
      %v2049 = vpop.f32.mrb[0].mxu0
      %v2050 = vpop.f32.mrb[0].mxu0
      %v2051 = vadd.f32 0.0, %v2050
      %v2052 = vpop.f32.mrb[0].mxu0
      %2053 = vmatprep.mubr.bf16.mxu0 0
      %2054 = vmatmul.mubr.bf16.gmra.mrb[0].mxu0 %v1930
      %v2055 = vpop.f32.mrb[0].mxu0
      %v2056 = vadd.f32 0.0, %v2055
      %v2057 = vpop.f32.mrb[0].mxu0
      %v2058 = vpop.f32.mrb[0].mxu0
      %v2059 = vadd.f32 0.0, %v2058
      %v2060 = vpop.f32.mrb[0].mxu0
      %2061 = vmatprep.mubr.bf16.mxu0 0
      %2062 = vmatmul.mubr.bf16.gmra.mrb[0].mxu0 %v1933
      %v2063 = vpop.f32.mrb[0].mxu0
      %v2064 = vadd.f32 0.0, %v2063
      %v2065 = vpop.f32.mrb[0].mxu0
      %v2066 = vpop.f32.mrb[0].mxu0
      %v2067 = vadd.f32 0.0, %v2066
      %v2068 = vpop.f32.mrb[0].mxu0
      %2069 = vmatprep.mubr.bf16.mxu0 0
      %2070 = vmatmul.mubr.bf16.gmra.mrb[0].mxu0 %v1936
      %v2071 = vpop.f32.mrb[0].mxu0
      %v2072 = vadd.f32 0.0, %v2071
      %v2073 = vpop.f32.mrb[0].mxu0
      %v2074 = vpop.f32.mrb[0].mxu0
      %v2075 = vadd.f32 0.0, %v2074
      %v2076 = vpop.f32.mrb[0].mxu0
      %2077 = vmatprep.mubr.bf16.mxu0 0
      %2078 = vmatmul.mubr.bf16.gmra.mrb[0].mxu0 %v1939
      %v2079 = vpop.f32.mrb[0].mxu0
      %v2080 = vadd.f32 0.0, %v2079
      %v2081 = vpop.f32.mrb[0].mxu0
      %v2082 = vpop.f32.mrb[0].mxu0
      %v2083 = vadd.f32 0.0, %v2082
      %v2084 = vpop.f32.mrb[0].mxu0
      %2085 = vmatprep.mubr.bf16.mxu0 0
      %2086 = vmatmul.mubr.bf16.gmra.mrb[0].mxu0 %v1942
      %v2087 = vpop.f32.mrb[0].mxu0
      %v2088 = vadd.f32 0.0, %v2087
      %v2089 = vpop.f32.mrb[0].mxu0
      %v2090 = vpop.f32.mrb[0].mxu0
      %v2091 = vadd.f32 0.0, %v2090
      %v2092 = vpop.f32.mrb[0].mxu0
      %2093 = vmatprep.mubr.bf16.mxu0 0
      %2094 = vmatmul.mubr.bf16.gmra.mrb[0].mxu0 %v1945
      %v2095 = vpop.f32.mrb[0].mxu0
      %v2096 = vadd.f32 0.0, %v2095
      %v2097 = vpop.f32.mrb[0].mxu0
      %v2098 = vpop.f32.mrb[0].mxu0
      %v2099 = vadd.f32 0.0, %v2098
      %v2100 = vpop.f32.mrb[0].mxu0
      %2101 = vmatprep.mubr.bf16.mxu0 0
      %2102 = vmatmul.mubr.bf16.gmra.mrb[0].mxu0 %v1948
      %v2103 = vpop.f32.mrb[0].mxu0
      %v2104 = vadd.f32 0.0, %v2103
      %v2105 = vpop.f32.mrb[0].mxu0
      %v2106 = vpop.f32.mrb[0].mxu0
      %v2107 = vadd.f32 0.0, %v2106
      %v2108 = vpop.f32.mrb[0].mxu0
      %2109 = vmatprep.mubr.bf16.mxu0 0
      %2110 = vmatmul.mubr.bf16.gmra.mrb[0].mxu0 %v1951
      %v2111 = vpop.f32.mrb[0].mxu0
      %v2112 = vadd.f32 0.0, %v2111
      %v2113 = vpop.f32.mrb[0].mxu0
      %v2114 = vpop.f32.mrb[0].mxu0
      %v2115 = vadd.f32 0.0, %v2114
      %v2116 = vpop.f32.mrb[0].mxu0
      %2117 = vmatprep.mubr.bf16.mxu0 0
      %2118 = vmatmul.mubr.bf16.gmra.mrb[0].mxu0 %v1954
      %v2119 = vpop.f32.mrb[0].mxu0
      %v2120 = vadd.f32 0.0, %v2119
      %v2121 = vpop.f32.mrb[0].mxu0
      %v2122 = vpop.f32.mrb[0].mxu0
      %v2123 = vadd.f32 0.0, %v2122
      %v2124 = vpop.f32.mrb[0].mxu0
      %2125 = vmatprep.mubr.bf16.mxu0 0
      %2126 = vmatmul.mubr.bf16.gmra.mrb[0].mxu0 %v1957
      %v2127 = vpop.f32.mrb[0].mxu0
      %v2128 = vadd.f32 0.0, %v2127
      %v2129 = vpop.f32.mrb[0].mxu0
      %v2130 = vpop.f32.mrb[0].mxu0
      %v2131 = vadd.f32 0.0, %v2130
      %v2132 = vpop.f32.mrb[0].mxu0
      %2133 = vmatprep.mubr.bf16.mxu0 0
      %2134 = vmatmul.mubr.bf16.gmra.mrb[0].mxu0 %v1960
      %v2135 = vpop.f32.mrb[0].mxu0
      %v2136 = vadd.f32 0.0, %v2135
      %v2137 = vpop.f32.mrb[0].mxu0
      %v2138 = vpop.f32.mrb[0].mxu0
      %v2139 = vadd.f32 0.0, %v2138
      %v2140 = vpop.f32.mrb[0].mxu0
      %2141 = vdwg.mxu0
      %v2142 = vld [vmem:[#allocation2] sm:$0xff]
      %v2143 = vld [vmem:[#allocation2 + $0x8] sm:$0xff]
      %v2144 = vld [vmem:[#allocation2 + $0x10] sm:$0xff]
      %v2145 = vld [vmem:[#allocation2 + $0x18] sm:$0xff]
      %v2146 = vld [vmem:[#allocation2 + $0x20] sm:$0xff]
      %v2147 = vld [vmem:[#allocation2 + $0x28] sm:$0xff]
      %v2148 = vld [vmem:[#allocation2 + $0x30] sm:$0xff]
      %v2149 = vld [vmem:[#allocation2 + $0x38] sm:$0xff]
      %v2150 = vld [vmem:[#allocation2 + $0x40] sm:$0xff]
      %v2151 = vld [vmem:[#allocation2 + $0x48] sm:$0xff]
      %v2152 = vld [vmem:[#allocation2 + $0x50] sm:$0xff]
      %v2153 = vld [vmem:[#allocation2 + $0x58] sm:$0xff]
      %v2154 = vld [vmem:[#allocation2 + $0x60] sm:$0xff]
      %v2155 = vld [vmem:[#allocation2 + $0x68] sm:$0xff]
      %v2156 = vld [vmem:[#allocation2 + $0x70] sm:$0xff]
      %v2157 = vld [vmem:[#allocation2 + $0x78] sm:$0xff]
      %v2158 = vld [vmem:[#allocation2 + $0x80] sm:$0xff]
      %v2159 = vld [vmem:[#allocation2 + $0x88] sm:$0xff]
      %v2160 = vld [vmem:[#allocation2 + $0x90] sm:$0xff]
      %v2161 = vld [vmem:[#allocation2 + $0x98] sm:$0xff]
      %v2162 = vld [vmem:[#allocation2 + $0xa0] sm:$0xff]
      %v2163 = vld [vmem:[#allocation2 + $0xa8] sm:$0xff]
      %v2164 = vld [vmem:[#allocation2 + $0xb0] sm:$0xff]
      %v2165 = vld [vmem:[#allocation2 + $0xb8] sm:$0xff]
      %v2166 = vld [vmem:[#allocation2 + $0xc0] sm:$0xff]
      %v2167 = vld [vmem:[#allocation2 + $0xc8] sm:$0xff]
      %v2168 = vld [vmem:[#allocation2 + $0xd0] sm:$0xff]
      %v2169 = vld [vmem:[#allocation2 + $0xd8] sm:$0xff]
      %v2170 = vld [vmem:[#allocation2 + $0xe0] sm:$0xff]
      %v2171 = vld [vmem:[#allocation2 + $0xe8] sm:$0xff]
      %v2172 = vld [vmem:[#allocation2 + $0xf0] sm:$0xff]
      %v2173 = vld [vmem:[#allocation2 + $0xf8] sm:$0xff]
      %v2174 = vld [vmem:[#allocation2 + $0x100] sm:$0xff]
      %v2175 = vld [vmem:[#allocation2 + $0x108] sm:$0xff]
      %v2176 = vld [vmem:[#allocation2 + $0x110] sm:$0xff]
      %v2177 = vld [vmem:[#allocation2 + $0x118] sm:$0x3f]
      %v2178 = vadd.f32 %v2142, %v2000
      %v2179 = vadd.f32 %v2143, %v2003
      %v2180 = vadd.f32 %v2144, %v2008
      %v2181 = vadd.f32 %v2145, %v2011
      %v2182 = vadd.f32 %v2146, %v2016
      %v2183 = vadd.f32 %v2147, %v2019
      %v2184 = vadd.f32 %v2148, %v2024
      %v2185 = vadd.f32 %v2149, %v2027
      %v2186 = vadd.f32 %v2150, %v2032
      %v2187 = vadd.f32 %v2151, %v2035
      %v2188 = vadd.f32 %v2152, %v2040
      %v2189 = vadd.f32 %v2153, %v2043
      %v2190 = vadd.f32 %v2154, %v2048
      %v2191 = vadd.f32 %v2155, %v2051
      %v2192 = vadd.f32 %v2156, %v2056
      %v2193 = vadd.f32 %v2157, %v2059
      %v2194 = vadd.f32 %v2158, %v2064
      %v2195 = vadd.f32 %v2159, %v2067
      %v2196 = vadd.f32 %v2160, %v2072
      %v2197 = vadd.f32 %v2161, %v2075
      %v2198 = vadd.f32 %v2162, %v2080
      %v2199 = vadd.f32 %v2163, %v2083
      %v2200 = vadd.f32 %v2164, %v2088
      %v2201 = vadd.f32 %v2165, %v2091
      %v2202 = vadd.f32 %v2166, %v2096
      %v2203 = vadd.f32 %v2167, %v2099
      %v2204 = vadd.f32 %v2168, %v2104
      %v2205 = vadd.f32 %v2169, %v2107
      %v2206 = vadd.f32 %v2170, %v2112
      %v2207 = vadd.f32 %v2171, %v2115
      %v2208 = vadd.f32 %v2172, %v2120
      %v2209 = vadd.f32 %v2173, %v2123
      %v2210 = vadd.f32 %v2174, %v2128
      %v2211 = vadd.f32 %v2175, %v2131
      %v2212 = vadd.f32 %v2176, %v2136
      %v2213 = vadd.f32 %v2177, %v2139
      %2214 = vst [vmem:[#allocation2] sm:$0xff] %v2178
      %2215 = vst [vmem:[#allocation2 + $0x8] sm:$0xff] %v2179
      %2216 = vst [vmem:[#allocation2 + $0x10] sm:$0xff] %v2180
      %2217 = vst [vmem:[#allocation2 + $0x18] sm:$0xff] %v2181
      %2218 = vst [vmem:[#allocation2 + $0x20] sm:$0xff] %v2182
      %2219 = vst [vmem:[#allocation2 + $0x28] sm:$0xff] %v2183
      %2220 = vst [vmem:[#allocation2 + $0x30] sm:$0xff] %v2184
      %2221 = vst [vmem:[#allocation2 + $0x38] sm:$0xff] %v2185
      %2222 = vst [vmem:[#allocation2 + $0x40] sm:$0xff] %v2186
      %2223 = vst [vmem:[#allocation2 + $0x48] sm:$0xff] %v2187
      %2224 = vst [vmem:[#allocation2 + $0x50] sm:$0xff] %v2188
      %2225 = vst [vmem:[#allocation2 + $0x58] sm:$0xff] %v2189
      %2226 = vst [vmem:[#allocation2 + $0x60] sm:$0xff] %v2190
      %2227 = vst [vmem:[#allocation2 + $0x68] sm:$0xff] %v2191
      %2228 = vst [vmem:[#allocation2 + $0x70] sm:$0xff] %v2192
      %2229 = vst [vmem:[#allocation2 + $0x78] sm:$0xff] %v2193
      %2230 = vst [vmem:[#allocation2 + $0x80] sm:$0xff] %v2194
      %2231 = vst [vmem:[#allocation2 + $0x88] sm:$0xff] %v2195
      %2232 = vst [vmem:[#allocation2 + $0x90] sm:$0xff] %v2196
      %2233 = vst [vmem:[#allocation2 + $0x98] sm:$0xff] %v2197
      %2234 = vst [vmem:[#allocation2 + $0xa0] sm:$0xff] %v2198
      %2235 = vst [vmem:[#allocation2 + $0xa8] sm:$0xff] %v2199
      %2236 = vst [vmem:[#allocation2 + $0xb0] sm:$0xff] %v2200
      %2237 = vst [vmem:[#allocation2 + $0xb8] sm:$0xff] %v2201
      %2238 = vst [vmem:[#allocation2 + $0xc0] sm:$0xff] %v2202
      %2239 = vst [vmem:[#allocation2 + $0xc8] sm:$0xff] %v2203
      %2240 = vst [vmem:[#allocation2 + $0xd0] sm:$0xff] %v2204
      %2241 = vst [vmem:[#allocation2 + $0xd8] sm:$0xff] %v2205
      %2242 = vst [vmem:[#allocation2 + $0xe0] sm:$0xff] %v2206
      %2243 = vst [vmem:[#allocation2 + $0xe8] sm:$0xff] %v2207
      %2244 = vst [vmem:[#allocation2 + $0xf0] sm:$0xff] %v2208
      %2245 = vst [vmem:[#allocation2 + $0xf8] sm:$0xff] %v2209
      %2246 = vst [vmem:[#allocation2 + $0x100] sm:$0xff] %v2210
      %2247 = vst [vmem:[#allocation2 + $0x108] sm:$0xff] %v2211
      %2248 = vst [vmem:[#allocation2 + $0x110] sm:$0xff] %v2212
      %2249 = vst [vmem:[#allocation2 + $0x118] sm:$0x3f] %v2213
      %v2250 = vld [vmem:[%s208 + $0x8] sm:$0xe]
      %v2251 = vld [vmem:[%s208 + $0xc] sm:$0xf]
      %v2252 = vld [vmem:[%s208 + $0x10] sm:$0xf]
      %v2253 = vld [vmem:[%s208 + $0x14] sm:$0xf]
      %v2254 = vld [vmem:[%s208 + $0x18] sm:$0xf]
      %v2255 = vld [vmem:[%s208 + $0x1c] sm:$0xf]
      %v2256 = vld [vmem:[%s208 + $0x20] sm:$0xf]
      %v2257 = vld [vmem:[%s208 + $0x24] sm:$0xf]
      %v2258 = vld [vmem:[%s208 + $0x28] sm:$0xf]
      %v2259 = vld [vmem:[%s208 + $0x2c] sm:$0xf]
      %v2260 = vld [vmem:[%s208 + $0x30] sm:$0xf]
      %v2261 = vld [vmem:[%s208 + $0x34] sm:$0xf]
      %v2262 = vld [vmem:[%s208 + $0x38] sm:$0xf]
      %v2263 = vld [vmem:[%s208 + $0x3c] sm:$0xf]
      %v2264 = vld [vmem:[%s208 + $0x40] sm:$0xf]
      %v2265 = vld [vmem:[%s208 + $0x44] sm:$0xf]
      %v2266 = vld [vmem:[%s208 + $0x48] sm:$0xf]
      %v2267 = vld [vmem:[%s208 + $0x4c] sm:$0xf]
      %v2268 = vld [vmem:[%s208 + $0x50] sm:$0xf]
      %v2269 = vld [vmem:[%s208 + $0x54] sm:$0xf]
      %v2270 = vld [vmem:[%s208 + $0x58] sm:$0xf]
      %v2271 = vld [vmem:[%s208 + $0x5c] sm:$0xf]
      %v2272 = vld [vmem:[%s208 + $0x60] sm:$0xf]
      %v2273 = vld [vmem:[%s208 + $0x64] sm:$0xf]
      %v2274 = vld [vmem:[%s208 + $0x68] sm:$0xf]
      %v2275 = vld [vmem:[%s208 + $0x6c] sm:$0xf]
      %v2276 = vld [vmem:[%s208 + $0x70] sm:$0xf]
      %v2277 = vld [vmem:[%s208 + $0x74] sm:$0xf]
      %v2278 = vld [vmem:[%s208 + $0x78] sm:$0xf]
      %v2279 = vld [vmem:[%s208 + $0x7c] sm:$0xf]
      %v2280 = vld [vmem:[%s208 + $0x80] sm:$0xf]
      %v2281 = vld [vmem:[%s208 + $0x84] sm:$0xf]
      %v2282 = vld [vmem:[%s208 + $0x88] sm:$0xf]
      %v2283 = vld [vmem:[%s208 + $0x8c] sm:$0xf]
      %v2284 = vld [vmem:[%s208 + $0x90] sm:$0xf]
      %v2285 = vld [vmem:[%s208 + $0x94] sm:$0xf]
      %v2286 = vld [vmem:[%s208 + $0x98] sm:$0x1]
      %s2287 = scalar_lea.vmem %s212, 16
      %v2288 = vld [vmem:[%s2287] sm:$0xf]
      %v2326 = vunpack.c.l.b16 %v2250
      %v2327 = vunpack.c.l.b16 %v2251
      %v2328 = vunpack.c.l.b16 %v2252
      %v2329 = vunpack.c.l.b16 %v2253
      %v2330 = vunpack.c.l.b16 %v2254
      %v2331 = vunpack.c.l.b16 %v2255
      %v2332 = vunpack.c.l.b16 %v2256
      %v2333 = vunpack.c.l.b16 %v2257
      %v2334 = vunpack.c.l.b16 %v2258
      %v2335 = vunpack.c.l.b16 %v2259
      %v2336 = vunpack.c.l.b16 %v2260
      %v2337 = vunpack.c.l.b16 %v2261
      %v2338 = vunpack.c.l.b16 %v2262
      %v2339 = vunpack.c.l.b16 %v2263
      %v2340 = vunpack.c.l.b16 %v2264
      %v2341 = vunpack.c.l.b16 %v2265
      %v2342 = vunpack.c.l.b16 %v2266
      %v2343 = vunpack.c.l.b16 %v2267
      %v2344 = vunpack.c.l.b16 %v2268
      %v2345 = vunpack.c.l.b16 %v2269
      %v2346 = vunpack.c.l.b16 %v2270
      %v2347 = vunpack.c.l.b16 %v2271
      %v2348 = vunpack.c.l.b16 %v2272
      %v2349 = vunpack.c.l.b16 %v2273
      %v2350 = vunpack.c.l.b16 %v2274
      %v2351 = vunpack.c.l.b16 %v2275
      %v2352 = vunpack.c.l.b16 %v2276
      %v2353 = vunpack.c.l.b16 %v2277
      %v2354 = vunpack.c.l.b16 %v2278
      %v2355 = vunpack.c.l.b16 %v2279
      %v2356 = vunpack.c.l.b16 %v2280
      %v2357 = vunpack.c.l.b16 %v2281
      %v2358 = vunpack.c.l.b16 %v2282
      %v2359 = vunpack.c.l.b16 %v2283
      %v2360 = vunpack.c.l.b16 %v2284
      %v2361 = vunpack.c.l.b16 %v2285
      %v2362 = vunpack.c.l.b16 %v2286
      %v2363 = vpack.c.b16 %v2327, %v2326
      %v2364 = vpack.c.b16 %v2329, %v2328
      %v2365 = vpack.c.b16 %v2331, %v2330
      %v2366 = vpack.c.b16 %v2333, %v2332
      %v2367 = vpack.c.b16 %v2335, %v2334
      %v2368 = vpack.c.b16 %v2337, %v2336
      %v2369 = vpack.c.b16 %v2339, %v2338
      %v2370 = vpack.c.b16 %v2341, %v2340
      %v2371 = vpack.c.b16 %v2343, %v2342
      %v2372 = vpack.c.b16 %v2345, %v2344
      %v2373 = vpack.c.b16 %v2347, %v2346
      %v2374 = vpack.c.b16 %v2349, %v2348
      %v2375 = vpack.c.b16 %v2351, %v2350
      %v2376 = vpack.c.b16 %v2353, %v2352
      %v2377 = vpack.c.b16 %v2355, %v2354
      %v2378 = vpack.c.b16 %v2357, %v2356
      %v2379 = vpack.c.b16 %v2359, %v2358
      %v2380 = vpack.c.b16 %v2361, %v2360
      %v2381 = vpack.c.b16 %v2362, %v2362
      %vm2382 = vsmask.f32 6400
      %v2384 = vshrl.u32 %v2363, 16
      %v2386 = vrot.slane %v2384, 1
      %v2387 = vshll.u32 %v2363, 16
      %v2389 = vrot.slane %v2387, 2
      %v2390 = vor.u32 %v2386, %v2389
      %v2392 = vshrl.u32 %v2364, 16
      %v2394 = vrot.slane %v2392, 1
      %v2395 = vshll.u32 %v2364, 16
      %v2397 = vrot.slane %v2395, 2
      %v2398 = vor.u32 %v2394, %v2397
      %v2399 = vsel %vm2382, %v2390, %v2398
      %v2401 = vshrl.u32 %v2365, 16
      %v2403 = vrot.slane %v2401, 1
      %v2404 = vshll.u32 %v2365, 16
      %v2406 = vrot.slane %v2404, 2
      %v2407 = vor.u32 %v2403, %v2406
      %v2408 = vsel %vm2382, %v2398, %v2407
      %v2410 = vshrl.u32 %v2366, 16
      %v2412 = vrot.slane %v2410, 1
      %v2413 = vshll.u32 %v2366, 16
      %v2415 = vrot.slane %v2413, 2
      %v2416 = vor.u32 %v2412, %v2415
      %v2417 = vsel %vm2382, %v2407, %v2416
      %v2419 = vshrl.u32 %v2367, 16
      %v2421 = vrot.slane %v2419, 1
      %v2422 = vshll.u32 %v2367, 16
      %v2424 = vrot.slane %v2422, 2
      %v2425 = vor.u32 %v2421, %v2424
      %v2426 = vsel %vm2382, %v2416, %v2425
      %v2428 = vshrl.u32 %v2368, 16
      %v2430 = vrot.slane %v2428, 1
      %v2431 = vshll.u32 %v2368, 16
      %v2433 = vrot.slane %v2431, 2
      %v2434 = vor.u32 %v2430, %v2433
      %v2435 = vsel %vm2382, %v2425, %v2434
      %v2437 = vshrl.u32 %v2369, 16
      %v2439 = vrot.slane %v2437, 1
      %v2440 = vshll.u32 %v2369, 16
      %v2442 = vrot.slane %v2440, 2
      %v2443 = vor.u32 %v2439, %v2442
      %v2444 = vsel %vm2382, %v2434, %v2443
      %v2446 = vshrl.u32 %v2370, 16
      %v2448 = vrot.slane %v2446, 1
      %v2449 = vshll.u32 %v2370, 16
      %v2451 = vrot.slane %v2449, 2
      %v2452 = vor.u32 %v2448, %v2451
      %v2453 = vsel %vm2382, %v2443, %v2452
      %v2455 = vshrl.u32 %v2371, 16
      %v2457 = vrot.slane %v2455, 1
      %v2458 = vshll.u32 %v2371, 16
      %v2460 = vrot.slane %v2458, 2
      %v2461 = vor.u32 %v2457, %v2460
      %v2462 = vsel %vm2382, %v2452, %v2461
      %v2464 = vshrl.u32 %v2372, 16
      %v2466 = vrot.slane %v2464, 1
      %v2467 = vshll.u32 %v2372, 16
      %v2469 = vrot.slane %v2467, 2
      %v2470 = vor.u32 %v2466, %v2469
      %v2471 = vsel %vm2382, %v2461, %v2470
      %v2473 = vshrl.u32 %v2373, 16
      %v2475 = vrot.slane %v2473, 1
      %v2476 = vshll.u32 %v2373, 16
      %v2478 = vrot.slane %v2476, 2
      %v2479 = vor.u32 %v2475, %v2478
      %v2480 = vsel %vm2382, %v2470, %v2479
      %v2482 = vshrl.u32 %v2374, 16
      %v2484 = vrot.slane %v2482, 1
      %v2485 = vshll.u32 %v2374, 16
      %v2487 = vrot.slane %v2485, 2
      %v2488 = vor.u32 %v2484, %v2487
      %v2489 = vsel %vm2382, %v2479, %v2488
      %v2491 = vshrl.u32 %v2375, 16
      %v2493 = vrot.slane %v2491, 1
      %v2494 = vshll.u32 %v2375, 16
      %v2496 = vrot.slane %v2494, 2
      %v2497 = vor.u32 %v2493, %v2496
      %v2498 = vsel %vm2382, %v2488, %v2497
      %v2500 = vshrl.u32 %v2376, 16
      %v2502 = vrot.slane %v2500, 1
      %v2503 = vshll.u32 %v2376, 16
      %v2505 = vrot.slane %v2503, 2
      %v2506 = vor.u32 %v2502, %v2505
      %v2507 = vsel %vm2382, %v2497, %v2506
      %v2509 = vshrl.u32 %v2377, 16
      %v2511 = vrot.slane %v2509, 1
      %v2512 = vshll.u32 %v2377, 16
      %v2514 = vrot.slane %v2512, 2
      %v2515 = vor.u32 %v2511, %v2514
      %v2516 = vsel %vm2382, %v2506, %v2515
      %v2518 = vshrl.u32 %v2378, 16
      %v2520 = vrot.slane %v2518, 1
      %v2521 = vshll.u32 %v2378, 16
      %v2523 = vrot.slane %v2521, 2
      %v2524 = vor.u32 %v2520, %v2523
      %v2525 = vsel %vm2382, %v2515, %v2524
      %v2527 = vshrl.u32 %v2379, 16
      %v2529 = vrot.slane %v2527, 1
      %v2530 = vshll.u32 %v2379, 16
      %v2532 = vrot.slane %v2530, 2
      %v2533 = vor.u32 %v2529, %v2532
      %v2534 = vsel %vm2382, %v2524, %v2533
      %v2536 = vshrl.u32 %v2380, 16
      %v2538 = vrot.slane %v2536, 1
      %v2539 = vshll.u32 %v2380, 16
      %v2541 = vrot.slane %v2539, 2
      %v2542 = vor.u32 %v2538, %v2541
      %v2543 = vsel %vm2382, %v2533, %v2542
      %v2545 = vshll.u32 %v2381, 16
      %v2547 = vrot.slane %v2545, 2
      %v2548 = vsel %vm2382, %v2542, %v2547
      %v2550 = vsel %vm353, %v2399, 0
      %v2553 = vsel %vm353, %v2408, 0
      %v2556 = vsel %vm353, %v2417, 0
      %v2559 = vsel %vm353, %v2426, 0
      %v2562 = vsel %vm353, %v2435, 0
      %v2565 = vsel %vm353, %v2444, 0
      %v2568 = vsel %vm353, %v2453, 0
      %v2571 = vsel %vm353, %v2462, 0
      %v2574 = vsel %vm353, %v2471, 0
      %v2577 = vsel %vm353, %v2480, 0
      %v2580 = vsel %vm353, %v2489, 0
      %v2583 = vsel %vm353, %v2498, 0
      %v2586 = vsel %vm353, %v2507, 0
      %v2589 = vsel %vm353, %v2516, 0
      %v2592 = vsel %vm353, %v2525, 0
      %v2595 = vsel %vm353, %v2534, 0
      %v2598 = vsel %vm353, %v2543, 0
      %v2601 = vsel %vm353, %v2548, 0
      %v2604 = vsel %vm408, %v2288, 0
      %2606 = vmatprep.subr.bf16.mxu0 0
      %2607 = vmatpush1.bf16.msra.mxu0 %v2604
      %2608 = vmatprep.subr.bf16.mxu0 0
      %2609 = vmatpush1.bf16.msra.mxu0 0
      %2610 = vmatprep.subr.bf16.mxu0 0
      %2611 = vmatpush1.bf16.msra.mxu0 0
      %2612 = vmatprep.subr.bf16.mxu0 0
      %2613 = vmatpush1.bf16.msra.mxu0 0
      %2614 = vmatprep.subr.bf16.mxu0 0
      %2615 = vmatpush1.bf16.msra.mxu0 0
      %2616 = vmatprep.subr.bf16.mxu0 0
      %2617 = vmatpush1.bf16.msra.mxu0 0
      %2618 = vmatprep.subr.bf16.mxu0 0
      %2619 = vmatpush1.bf16.msra.mxu0 0
      %2620 = vmatprep.subr.bf16.mxu0 0
      %2621 = vmatpush1.bf16.msra.mxu0 0
      %2622 = vmatprep.subr.bf16.mxu0 0
      %2623 = vmatpush1.bf16.msra.mxu0 0
      %2624 = vmatprep.subr.bf16.mxu0 0
      %2625 = vmatpush1.bf16.msra.mxu0 0
      %2626 = vmatprep.subr.bf16.mxu0 0
      %2627 = vmatpush1.bf16.msra.mxu0 0
      %2628 = vmatprep.subr.bf16.mxu0 0
      %2629 = vmatpush1.bf16.msra.mxu0 0
      %2630 = vmatprep.subr.bf16.mxu0 0
      %2631 = vmatpush1.bf16.msra.mxu0 0
      %2632 = vmatprep.subr.bf16.mxu0 0
      %2633 = vmatpush1.bf16.msra.mxu0 0
      %2634 = vmatprep.subr.bf16.mxu0 0
      %2635 = vmatpush1.bf16.msra.mxu0 0
      %2636 = vmatprep.subr.bf16.mxu0 0
      %2637 = vmatpush1.bf16.msra.mxu0 0
      %2638 = vmatprep.mubr.bf16.mxu0 0
      %2639 = vmatmul.mubr.bf16.gmra.mrb[0].mxu0 %v2550
      %v2640 = vpop.f32.mrb[0].mxu0
      %v2641 = vadd.f32 0.0, %v2640
      %v2642 = vpop.f32.mrb[0].mxu0
      %v2643 = vpop.f32.mrb[0].mxu0
      %v2644 = vadd.f32 0.0, %v2643
      %v2645 = vpop.f32.mrb[0].mxu0
      %2646 = vmatprep.mubr.bf16.mxu0 0
      %2647 = vmatmul.mubr.bf16.gmra.mrb[0].mxu0 %v2553
      %v2648 = vpop.f32.mrb[0].mxu0
      %v2649 = vadd.f32 0.0, %v2648
      %v2650 = vpop.f32.mrb[0].mxu0
      %v2651 = vpop.f32.mrb[0].mxu0
      %v2652 = vadd.f32 0.0, %v2651
      %v2653 = vpop.f32.mrb[0].mxu0
      %2654 = vmatprep.mubr.bf16.mxu0 0
      %2655 = vmatmul.mubr.bf16.gmra.mrb[0].mxu0 %v2556
      %v2656 = vpop.f32.mrb[0].mxu0
      %v2657 = vadd.f32 0.0, %v2656
      %v2658 = vpop.f32.mrb[0].mxu0
      %v2659 = vpop.f32.mrb[0].mxu0
      %v2660 = vadd.f32 0.0, %v2659
      %v2661 = vpop.f32.mrb[0].mxu0
      %2662 = vmatprep.mubr.bf16.mxu0 0
      %2663 = vmatmul.mubr.bf16.gmra.mrb[0].mxu0 %v2559
      %v2664 = vpop.f32.mrb[0].mxu0
      %v2665 = vadd.f32 0.0, %v2664
      %v2666 = vpop.f32.mrb[0].mxu0
      %v2667 = vpop.f32.mrb[0].mxu0
      %v2668 = vadd.f32 0.0, %v2667
      %v2669 = vpop.f32.mrb[0].mxu0
      %2670 = vmatprep.mubr.bf16.mxu0 0
      %2671 = vmatmul.mubr.bf16.gmra.mrb[0].mxu0 %v2562
      %v2672 = vpop.f32.mrb[0].mxu0
      %v2673 = vadd.f32 0.0, %v2672
      %v2674 = vpop.f32.mrb[0].mxu0
      %v2675 = vpop.f32.mrb[0].mxu0
      %v2676 = vadd.f32 0.0, %v2675
      %v2677 = vpop.f32.mrb[0].mxu0
      %2678 = vmatprep.mubr.bf16.mxu0 0
      %2679 = vmatmul.mubr.bf16.gmra.mrb[0].mxu0 %v2565
      %v2680 = vpop.f32.mrb[0].mxu0
      %v2681 = vadd.f32 0.0, %v2680
      %v2682 = vpop.f32.mrb[0].mxu0
      %v2683 = vpop.f32.mrb[0].mxu0
      %v2684 = vadd.f32 0.0, %v2683
      %v2685 = vpop.f32.mrb[0].mxu0
      %2686 = vmatprep.mubr.bf16.mxu0 0
      %2687 = vmatmul.mubr.bf16.gmra.mrb[0].mxu0 %v2568
      %v2688 = vpop.f32.mrb[0].mxu0
      %v2689 = vadd.f32 0.0, %v2688
      %v2690 = vpop.f32.mrb[0].mxu0
      %v2691 = vpop.f32.mrb[0].mxu0
      %v2692 = vadd.f32 0.0, %v2691
      %v2693 = vpop.f32.mrb[0].mxu0
      %2694 = vmatprep.mubr.bf16.mxu0 0
      %2695 = vmatmul.mubr.bf16.gmra.mrb[0].mxu0 %v2571
      %v2696 = vpop.f32.mrb[0].mxu0
      %v2697 = vadd.f32 0.0, %v2696
      %v2698 = vpop.f32.mrb[0].mxu0
      %v2699 = vpop.f32.mrb[0].mxu0
      %v2700 = vadd.f32 0.0, %v2699
      %v2701 = vpop.f32.mrb[0].mxu0
      %2702 = vmatprep.mubr.bf16.mxu0 0
      %2703 = vmatmul.mubr.bf16.gmra.mrb[0].mxu0 %v2574
      %v2704 = vpop.f32.mrb[0].mxu0
      %v2705 = vadd.f32 0.0, %v2704
      %v2706 = vpop.f32.mrb[0].mxu0
      %v2707 = vpop.f32.mrb[0].mxu0
      %v2708 = vadd.f32 0.0, %v2707
      %v2709 = vpop.f32.mrb[0].mxu0
      %2710 = vmatprep.mubr.bf16.mxu0 0
      %2711 = vmatmul.mubr.bf16.gmra.mrb[0].mxu0 %v2577
      %v2712 = vpop.f32.mrb[0].mxu0
      %v2713 = vadd.f32 0.0, %v2712
      %v2714 = vpop.f32.mrb[0].mxu0
      %v2715 = vpop.f32.mrb[0].mxu0
      %v2716 = vadd.f32 0.0, %v2715
      %v2717 = vpop.f32.mrb[0].mxu0
      %2718 = vmatprep.mubr.bf16.mxu0 0
      %2719 = vmatmul.mubr.bf16.gmra.mrb[0].mxu0 %v2580
      %v2720 = vpop.f32.mrb[0].mxu0
      %v2721 = vadd.f32 0.0, %v2720
      %v2722 = vpop.f32.mrb[0].mxu0
      %v2723 = vpop.f32.mrb[0].mxu0
      %v2724 = vadd.f32 0.0, %v2723
      %v2725 = vpop.f32.mrb[0].mxu0
      %2726 = vmatprep.mubr.bf16.mxu0 0
      %2727 = vmatmul.mubr.bf16.gmra.mrb[0].mxu0 %v2583
      %v2728 = vpop.f32.mrb[0].mxu0
      %v2729 = vadd.f32 0.0, %v2728
      %v2730 = vpop.f32.mrb[0].mxu0
      %v2731 = vpop.f32.mrb[0].mxu0
      %v2732 = vadd.f32 0.0, %v2731
      %v2733 = vpop.f32.mrb[0].mxu0
      %2734 = vmatprep.mubr.bf16.mxu0 0
      %2735 = vmatmul.mubr.bf16.gmra.mrb[0].mxu0 %v2586
      %v2736 = vpop.f32.mrb[0].mxu0
      %v2737 = vadd.f32 0.0, %v2736
      %v2738 = vpop.f32.mrb[0].mxu0
      %v2739 = vpop.f32.mrb[0].mxu0
      %v2740 = vadd.f32 0.0, %v2739
      %v2741 = vpop.f32.mrb[0].mxu0
      %2742 = vmatprep.mubr.bf16.mxu0 0
      %2743 = vmatmul.mubr.bf16.gmra.mrb[0].mxu0 %v2589
      %v2744 = vpop.f32.mrb[0].mxu0
      %v2745 = vadd.f32 0.0, %v2744
      %v2746 = vpop.f32.mrb[0].mxu0
      %v2747 = vpop.f32.mrb[0].mxu0
      %v2748 = vadd.f32 0.0, %v2747
      %v2749 = vpop.f32.mrb[0].mxu0
      %2750 = vmatprep.mubr.bf16.mxu0 0
      %2751 = vmatmul.mubr.bf16.gmra.mrb[0].mxu0 %v2592
      %v2752 = vpop.f32.mrb[0].mxu0
      %v2753 = vadd.f32 0.0, %v2752
      %v2754 = vpop.f32.mrb[0].mxu0
      %v2755 = vpop.f32.mrb[0].mxu0
      %v2756 = vadd.f32 0.0, %v2755
      %v2757 = vpop.f32.mrb[0].mxu0
      %2758 = vmatprep.mubr.bf16.mxu0 0
      %2759 = vmatmul.mubr.bf16.gmra.mrb[0].mxu0 %v2595
      %v2760 = vpop.f32.mrb[0].mxu0
      %v2761 = vadd.f32 0.0, %v2760
      %v2762 = vpop.f32.mrb[0].mxu0
      %v2763 = vpop.f32.mrb[0].mxu0
      %v2764 = vadd.f32 0.0, %v2763
      %v2765 = vpop.f32.mrb[0].mxu0
      %2766 = vmatprep.mubr.bf16.mxu0 0
      %2767 = vmatmul.mubr.bf16.gmra.mrb[0].mxu0 %v2598
      %v2768 = vpop.f32.mrb[0].mxu0
      %v2769 = vadd.f32 0.0, %v2768
      %v2770 = vpop.f32.mrb[0].mxu0
      %v2771 = vpop.f32.mrb[0].mxu0
      %v2772 = vadd.f32 0.0, %v2771
      %v2773 = vpop.f32.mrb[0].mxu0
      %2774 = vmatprep.mubr.bf16.mxu0 0
      %2775 = vmatmul.mubr.bf16.gmra.mrb[0].mxu0 %v2601
      %v2776 = vpop.f32.mrb[0].mxu0
      %v2777 = vadd.f32 0.0, %v2776
      %v2778 = vpop.f32.mrb[0].mxu0
      %v2779 = vpop.f32.mrb[0].mxu0
      %v2780 = vadd.f32 0.0, %v2779
      %v2781 = vpop.f32.mrb[0].mxu0
      %2782 = vdwg.mxu0
      %v2783 = vld [vmem:[#allocation2] sm:$0xff]
      %v2784 = vld [vmem:[#allocation2 + $0x8] sm:$0xff]
      %v2785 = vld [vmem:[#allocation2 + $0x10] sm:$0xff]
      %v2786 = vld [vmem:[#allocation2 + $0x18] sm:$0xff]
      %v2787 = vld [vmem:[#allocation2 + $0x20] sm:$0xff]
      %v2788 = vld [vmem:[#allocation2 + $0x28] sm:$0xff]
      %v2789 = vld [vmem:[#allocation2 + $0x30] sm:$0xff]
      %v2790 = vld [vmem:[#allocation2 + $0x38] sm:$0xff]
      %v2791 = vld [vmem:[#allocation2 + $0x40] sm:$0xff]
      %v2792 = vld [vmem:[#allocation2 + $0x48] sm:$0xff]
      %v2793 = vld [vmem:[#allocation2 + $0x50] sm:$0xff]
      %v2794 = vld [vmem:[#allocation2 + $0x58] sm:$0xff]
      %v2795 = vld [vmem:[#allocation2 + $0x60] sm:$0xff]
      %v2796 = vld [vmem:[#allocation2 + $0x68] sm:$0xff]
      %v2797 = vld [vmem:[#allocation2 + $0x70] sm:$0xff]
      %v2798 = vld [vmem:[#allocation2 + $0x78] sm:$0xff]
      %v2799 = vld [vmem:[#allocation2 + $0x80] sm:$0xff]
      %v2800 = vld [vmem:[#allocation2 + $0x88] sm:$0xff]
      %v2801 = vld [vmem:[#allocation2 + $0x90] sm:$0xff]
      %v2802 = vld [vmem:[#allocation2 + $0x98] sm:$0xff]
      %v2803 = vld [vmem:[#allocation2 + $0xa0] sm:$0xff]
      %v2804 = vld [vmem:[#allocation2 + $0xa8] sm:$0xff]
      %v2805 = vld [vmem:[#allocation2 + $0xb0] sm:$0xff]
      %v2806 = vld [vmem:[#allocation2 + $0xb8] sm:$0xff]
      %v2807 = vld [vmem:[#allocation2 + $0xc0] sm:$0xff]
      %v2808 = vld [vmem:[#allocation2 + $0xc8] sm:$0xff]
      %v2809 = vld [vmem:[#allocation2 + $0xd0] sm:$0xff]
      %v2810 = vld [vmem:[#allocation2 + $0xd8] sm:$0xff]
      %v2811 = vld [vmem:[#allocation2 + $0xe0] sm:$0xff]
      %v2812 = vld [vmem:[#allocation2 + $0xe8] sm:$0xff]
      %v2813 = vld [vmem:[#allocation2 + $0xf0] sm:$0xff]
      %v2814 = vld [vmem:[#allocation2 + $0xf8] sm:$0xff]
      %v2815 = vld [vmem:[#allocation2 + $0x100] sm:$0xff]
      %v2816 = vld [vmem:[#allocation2 + $0x108] sm:$0xff]
      %v2817 = vld [vmem:[#allocation2 + $0x110] sm:$0xff]
      %v2818 = vld [vmem:[#allocation2 + $0x118] sm:$0x3f]
      %v2819 = vadd.f32 %v2783, %v2641
      %v2820 = vadd.f32 %v2784, %v2644
      %v2821 = vadd.f32 %v2785, %v2649
      %v2822 = vadd.f32 %v2786, %v2652
      %v2823 = vadd.f32 %v2787, %v2657
      %v2824 = vadd.f32 %v2788, %v2660
      %v2825 = vadd.f32 %v2789, %v2665
      %v2826 = vadd.f32 %v2790, %v2668
      %v2827 = vadd.f32 %v2791, %v2673
      %v2828 = vadd.f32 %v2792, %v2676
      %v2829 = vadd.f32 %v2793, %v2681
      %v2830 = vadd.f32 %v2794, %v2684
      %v2831 = vadd.f32 %v2795, %v2689
      %v2832 = vadd.f32 %v2796, %v2692
      %v2833 = vadd.f32 %v2797, %v2697
      %v2834 = vadd.f32 %v2798, %v2700
      %v2835 = vadd.f32 %v2799, %v2705
      %v2836 = vadd.f32 %v2800, %v2708
      %v2837 = vadd.f32 %v2801, %v2713
      %v2838 = vadd.f32 %v2802, %v2716
      %v2839 = vadd.f32 %v2803, %v2721
      %v2840 = vadd.f32 %v2804, %v2724
      %v2841 = vadd.f32 %v2805, %v2729
      %v2842 = vadd.f32 %v2806, %v2732
      %v2843 = vadd.f32 %v2807, %v2737
      %v2844 = vadd.f32 %v2808, %v2740
      %v2845 = vadd.f32 %v2809, %v2745
      %v2846 = vadd.f32 %v2810, %v2748
      %v2847 = vadd.f32 %v2811, %v2753
      %v2848 = vadd.f32 %v2812, %v2756
      %v2849 = vadd.f32 %v2813, %v2761
      %v2850 = vadd.f32 %v2814, %v2764
      %v2851 = vadd.f32 %v2815, %v2769
      %v2852 = vadd.f32 %v2816, %v2772
      %v2853 = vadd.f32 %v2817, %v2777
      %v2854 = vadd.f32 %v2818, %v2780
      %2855 = vst [vmem:[#allocation2] sm:$0xff] %v2819
      %2856 = vst [vmem:[#allocation2 + $0x8] sm:$0xff] %v2820
      %2857 = vst [vmem:[#allocation2 + $0x10] sm:$0xff] %v2821
      %2858 = vst [vmem:[#allocation2 + $0x18] sm:$0xff] %v2822
      %2859 = vst [vmem:[#allocation2 + $0x20] sm:$0xff] %v2823
      %2860 = vst [vmem:[#allocation2 + $0x28] sm:$0xff] %v2824
      %2861 = vst [vmem:[#allocation2 + $0x30] sm:$0xff] %v2825
      %2862 = vst [vmem:[#allocation2 + $0x38] sm:$0xff] %v2826
      %2863 = vst [vmem:[#allocation2 + $0x40] sm:$0xff] %v2827
      %2864 = vst [vmem:[#allocation2 + $0x48] sm:$0xff] %v2828
      %2865 = vst [vmem:[#allocation2 + $0x50] sm:$0xff] %v2829
      %2866 = vst [vmem:[#allocation2 + $0x58] sm:$0xff] %v2830
      %2867 = vst [vmem:[#allocation2 + $0x60] sm:$0xff] %v2831
      %2868 = vst [vmem:[#allocation2 + $0x68] sm:$0xff] %v2832
      %2869 = vst [vmem:[#allocation2 + $0x70] sm:$0xff] %v2833
      %2870 = vst [vmem:[#allocation2 + $0x78] sm:$0xff] %v2834
      %2871 = vst [vmem:[#allocation2 + $0x80] sm:$0xff] %v2835
      %2872 = vst [vmem:[#allocation2 + $0x88] sm:$0xff] %v2836
      %2873 = vst [vmem:[#allocation2 + $0x90] sm:$0xff] %v2837
      %2874 = vst [vmem:[#allocation2 + $0x98] sm:$0xff] %v2838
      %2875 = vst [vmem:[#allocation2 + $0xa0] sm:$0xff] %v2839
      %2876 = vst [vmem:[#allocation2 + $0xa8] sm:$0xff] %v2840
      %2877 = vst [vmem:[#allocation2 + $0xb0] sm:$0xff] %v2841
      %2878 = vst [vmem:[#allocation2 + $0xb8] sm:$0xff] %v2842
      %2879 = vst [vmem:[#allocation2 + $0xc0] sm:$0xff] %v2843
      %2880 = vst [vmem:[#allocation2 + $0xc8] sm:$0xff] %v2844
      %2881 = vst [vmem:[#allocation2 + $0xd0] sm:$0xff] %v2845
      %2882 = vst [vmem:[#allocation2 + $0xd8] sm:$0xff] %v2846
      %2883 = vst [vmem:[#allocation2 + $0xe0] sm:$0xff] %v2847
      %2884 = vst [vmem:[#allocation2 + $0xe8] sm:$0xff] %v2848
      %2885 = vst [vmem:[#allocation2 + $0xf0] sm:$0xff] %v2849
      %2886 = vst [vmem:[#allocation2 + $0xf8] sm:$0xff] %v2850
      %2887 = vst [vmem:[#allocation2 + $0x100] sm:$0xff] %v2851
      %2888 = vst [vmem:[#allocation2 + $0x108] sm:$0xff] %v2852
      %2889 = vst [vmem:[#allocation2 + $0x110] sm:$0xff] %v2853
      %2890 = vst [vmem:[#allocation2 + $0x118] sm:$0x3f] %v2854
      %v2891 = vld [vmem:[%s208 + $0x8] sm:$0xc]
      %v2892 = vld [vmem:[%s208 + $0xc] sm:$0xf]
      %v2893 = vld [vmem:[%s208 + $0x10] sm:$0xf]
      %v2894 = vld [vmem:[%s208 + $0x14] sm:$0xf]
      %v2895 = vld [vmem:[%s208 + $0x18] sm:$0xf]
      %v2896 = vld [vmem:[%s208 + $0x1c] sm:$0xf]
      %v2897 = vld [vmem:[%s208 + $0x20] sm:$0xf]
      %v2898 = vld [vmem:[%s208 + $0x24] sm:$0xf]
      %v2899 = vld [vmem:[%s208 + $0x28] sm:$0xf]
      %v2900 = vld [vmem:[%s208 + $0x2c] sm:$0xf]
      %v2901 = vld [vmem:[%s208 + $0x30] sm:$0xf]
      %v2902 = vld [vmem:[%s208 + $0x34] sm:$0xf]
      %v2903 = vld [vmem:[%s208 + $0x38] sm:$0xf]
      %v2904 = vld [vmem:[%s208 + $0x3c] sm:$0xf]
      %v2905 = vld [vmem:[%s208 + $0x40] sm:$0xf]
      %v2906 = vld [vmem:[%s208 + $0x44] sm:$0xf]
      %v2907 = vld [vmem:[%s208 + $0x48] sm:$0xf]
      %v2908 = vld [vmem:[%s208 + $0x4c] sm:$0xf]
      %v2909 = vld [vmem:[%s208 + $0x50] sm:$0xf]
      %v2910 = vld [vmem:[%s208 + $0x54] sm:$0xf]
      %v2911 = vld [vmem:[%s208 + $0x58] sm:$0xf]
      %v2912 = vld [vmem:[%s208 + $0x5c] sm:$0xf]
      %v2913 = vld [vmem:[%s208 + $0x60] sm:$0xf]
      %v2914 = vld [vmem:[%s208 + $0x64] sm:$0xf]
      %v2915 = vld [vmem:[%s208 + $0x68] sm:$0xf]
      %v2916 = vld [vmem:[%s208 + $0x6c] sm:$0xf]
      %v2917 = vld [vmem:[%s208 + $0x70] sm:$0xf]
      %v2918 = vld [vmem:[%s208 + $0x74] sm:$0xf]
      %v2919 = vld [vmem:[%s208 + $0x78] sm:$0xf]
      %v2920 = vld [vmem:[%s208 + $0x7c] sm:$0xf]
      %v2921 = vld [vmem:[%s208 + $0x80] sm:$0xf]
      %v2922 = vld [vmem:[%s208 + $0x84] sm:$0xf]
      %v2923 = vld [vmem:[%s208 + $0x88] sm:$0xf]
      %v2924 = vld [vmem:[%s208 + $0x8c] sm:$0xf]
      %v2925 = vld [vmem:[%s208 + $0x90] sm:$0xf]
      %v2926 = vld [vmem:[%s208 + $0x94] sm:$0xf]
      %v2927 = vld [vmem:[%s208 + $0x98] sm:$0x1]
      %s2928 = scalar_lea.vmem %s212, 20
      %v2929 = vld [vmem:[%s2928] sm:$0xf]
      %v2967 = vunpack.c.l.b16 %v2891
      %v2968 = vunpack.c.l.b16 %v2892
      %v2969 = vunpack.c.l.b16 %v2893
      %v2970 = vunpack.c.l.b16 %v2894
      %v2971 = vunpack.c.l.b16 %v2895
      %v2972 = vunpack.c.l.b16 %v2896
      %v2973 = vunpack.c.l.b16 %v2897
      %v2974 = vunpack.c.l.b16 %v2898
      %v2975 = vunpack.c.l.b16 %v2899
      %v2976 = vunpack.c.l.b16 %v2900
      %v2977 = vunpack.c.l.b16 %v2901
      %v2978 = vunpack.c.l.b16 %v2902
      %v2979 = vunpack.c.l.b16 %v2903
      %v2980 = vunpack.c.l.b16 %v2904
      %v2981 = vunpack.c.l.b16 %v2905
      %v2982 = vunpack.c.l.b16 %v2906
      %v2983 = vunpack.c.l.b16 %v2907
      %v2984 = vunpack.c.l.b16 %v2908
      %v2985 = vunpack.c.l.b16 %v2909
      %v2986 = vunpack.c.l.b16 %v2910
      %v2987 = vunpack.c.l.b16 %v2911
      %v2988 = vunpack.c.l.b16 %v2912
      %v2989 = vunpack.c.l.b16 %v2913
      %v2990 = vunpack.c.l.b16 %v2914
      %v2991 = vunpack.c.l.b16 %v2915
      %v2992 = vunpack.c.l.b16 %v2916
      %v2993 = vunpack.c.l.b16 %v2917
      %v2994 = vunpack.c.l.b16 %v2918
      %v2995 = vunpack.c.l.b16 %v2919
      %v2996 = vunpack.c.l.b16 %v2920
      %v2997 = vunpack.c.l.b16 %v2921
      %v2998 = vunpack.c.l.b16 %v2922
      %v2999 = vunpack.c.l.b16 %v2923
      %v3000 = vunpack.c.l.b16 %v2924
      %v3001 = vunpack.c.l.b16 %v2925
      %v3002 = vunpack.c.l.b16 %v2926
      %v3003 = vunpack.c.l.b16 %v2927
      %v3004 = vpack.c.b16 %v2968, %v2967
      %v3005 = vpack.c.b16 %v2970, %v2969
      %v3006 = vpack.c.b16 %v2972, %v2971
      %v3007 = vpack.c.b16 %v2974, %v2973
      %v3008 = vpack.c.b16 %v2976, %v2975
      %v3009 = vpack.c.b16 %v2978, %v2977
      %v3010 = vpack.c.b16 %v2980, %v2979
      %v3011 = vpack.c.b16 %v2982, %v2981
      %v3012 = vpack.c.b16 %v2984, %v2983
      %v3013 = vpack.c.b16 %v2986, %v2985
      %v3014 = vpack.c.b16 %v2988, %v2987
      %v3015 = vpack.c.b16 %v2990, %v2989
      %v3016 = vpack.c.b16 %v2992, %v2991
      %v3017 = vpack.c.b16 %v2994, %v2993
      %v3018 = vpack.c.b16 %v2996, %v2995
      %v3019 = vpack.c.b16 %v2998, %v2997
      %v3020 = vpack.c.b16 %v3000, %v2999
      %v3021 = vpack.c.b16 %v3002, %v3001
      %v3022 = vpack.c.b16 %v3003, %v3003
      %vm3023 = vcmask 1045504
      %v3024 = vrot.slane %v3004, 2
      %v3025 = vrot.slane %v3005, 2
      %v3026 = vsel %vm3023, %v3024, %v3025
      %v3027 = vrot.slane %v3006, 2
      %v3028 = vsel %vm3023, %v3025, %v3027
      %v3029 = vrot.slane %v3007, 2
      %v3030 = vsel %vm3023, %v3027, %v3029
      %v3031 = vrot.slane %v3008, 2
      %v3032 = vsel %vm3023, %v3029, %v3031
      %v3033 = vrot.slane %v3009, 2
      %v3034 = vsel %vm3023, %v3031, %v3033
      %v3035 = vrot.slane %v3010, 2
      %v3036 = vsel %vm3023, %v3033, %v3035
      %v3037 = vrot.slane %v3011, 2
      %v3038 = vsel %vm3023, %v3035, %v3037
      %v3039 = vrot.slane %v3012, 2
      %v3040 = vsel %vm3023, %v3037, %v3039
      %v3041 = vrot.slane %v3013, 2
      %v3042 = vsel %vm3023, %v3039, %v3041
      %v3043 = vrot.slane %v3014, 2
      %v3044 = vsel %vm3023, %v3041, %v3043
      %v3045 = vrot.slane %v3015, 2
      %v3046 = vsel %vm3023, %v3043, %v3045
      %v3047 = vrot.slane %v3016, 2
      %v3048 = vsel %vm3023, %v3045, %v3047
      %v3049 = vrot.slane %v3017, 2
      %v3050 = vsel %vm3023, %v3047, %v3049
      %v3051 = vrot.slane %v3018, 2
      %v3052 = vsel %vm3023, %v3049, %v3051
      %v3053 = vrot.slane %v3019, 2
      %v3054 = vsel %vm3023, %v3051, %v3053
      %v3055 = vrot.slane %v3020, 2
      %v3056 = vsel %vm3023, %v3053, %v3055
      %v3057 = vrot.slane %v3021, 2
      %v3058 = vsel %vm3023, %v3055, %v3057
      %v3059 = vrot.slane %v3022, 2
      %v3060 = vsel %vm3023, %v3057, %v3059
      %v3062 = vsel %vm353, %v3026, 0
      %v3065 = vsel %vm353, %v3028, 0
      %v3068 = vsel %vm353, %v3030, 0
      %v3071 = vsel %vm353, %v3032, 0
      %v3074 = vsel %vm353, %v3034, 0
      %v3077 = vsel %vm353, %v3036, 0
      %v3080 = vsel %vm353, %v3038, 0
      %v3083 = vsel %vm353, %v3040, 0
      %v3086 = vsel %vm353, %v3042, 0
      %v3089 = vsel %vm353, %v3044, 0
      %v3092 = vsel %vm353, %v3046, 0
      %v3095 = vsel %vm353, %v3048, 0
      %v3098 = vsel %vm353, %v3050, 0
      %v3101 = vsel %vm353, %v3052, 0
      %v3104 = vsel %vm353, %v3054, 0
      %v3107 = vsel %vm353, %v3056, 0
      %v3110 = vsel %vm353, %v3058, 0
      %v3113 = vsel %vm353, %v3060, 0
      %v3116 = vsel %vm408, %v2929, 0
      %3118 = vmatprep.subr.bf16.mxu0 0
      %3119 = vmatpush1.bf16.msra.mxu0 %v3116
      %3120 = vmatprep.subr.bf16.mxu0 0
      %3121 = vmatpush1.bf16.msra.mxu0 0
      %3122 = vmatprep.subr.bf16.mxu0 0
      %3123 = vmatpush1.bf16.msra.mxu0 0
      %3124 = vmatprep.subr.bf16.mxu0 0
      %3125 = vmatpush1.bf16.msra.mxu0 0
      %3126 = vmatprep.subr.bf16.mxu0 0
      %3127 = vmatpush1.bf16.msra.mxu0 0
      %3128 = vmatprep.subr.bf16.mxu0 0
      %3129 = vmatpush1.bf16.msra.mxu0 0
      %3130 = vmatprep.subr.bf16.mxu0 0
      %3131 = vmatpush1.bf16.msra.mxu0 0
      %3132 = vmatprep.subr.bf16.mxu0 0
      %3133 = vmatpush1.bf16.msra.mxu0 0
      %3134 = vmatprep.subr.bf16.mxu0 0
      %3135 = vmatpush1.bf16.msra.mxu0 0
      %3136 = vmatprep.subr.bf16.mxu0 0
      %3137 = vmatpush1.bf16.msra.mxu0 0
      %3138 = vmatprep.subr.bf16.mxu0 0
      %3139 = vmatpush1.bf16.msra.mxu0 0
      %3140 = vmatprep.subr.bf16.mxu0 0
      %3141 = vmatpush1.bf16.msra.mxu0 0
      %3142 = vmatprep.subr.bf16.mxu0 0
      %3143 = vmatpush1.bf16.msra.mxu0 0
      %3144 = vmatprep.subr.bf16.mxu0 0
      %3145 = vmatpush1.bf16.msra.mxu0 0
      %3146 = vmatprep.subr.bf16.mxu0 0
      %3147 = vmatpush1.bf16.msra.mxu0 0
      %3148 = vmatprep.subr.bf16.mxu0 0
      %3149 = vmatpush1.bf16.msra.mxu0 0
      %3150 = vmatprep.mubr.bf16.mxu0 0
      %3151 = vmatmul.mubr.bf16.gmra.mrb[0].mxu0 %v3062
      %v3152 = vpop.f32.mrb[0].mxu0
      %v3153 = vadd.f32 0.0, %v3152
      %v3154 = vpop.f32.mrb[0].mxu0
      %v3155 = vpop.f32.mrb[0].mxu0
      %v3156 = vadd.f32 0.0, %v3155
      %v3157 = vpop.f32.mrb[0].mxu0
      %3158 = vmatprep.mubr.bf16.mxu0 0
      %3159 = vmatmul.mubr.bf16.gmra.mrb[0].mxu0 %v3065
      %v3160 = vpop.f32.mrb[0].mxu0
      %v3161 = vadd.f32 0.0, %v3160
      %v3162 = vpop.f32.mrb[0].mxu0
      %v3163 = vpop.f32.mrb[0].mxu0
      %v3164 = vadd.f32 0.0, %v3163
      %v3165 = vpop.f32.mrb[0].mxu0
      %3166 = vmatprep.mubr.bf16.mxu0 0
      %3167 = vmatmul.mubr.bf16.gmra.mrb[0].mxu0 %v3068
      %v3168 = vpop.f32.mrb[0].mxu0
      %v3169 = vadd.f32 0.0, %v3168
      %v3170 = vpop.f32.mrb[0].mxu0
      %v3171 = vpop.f32.mrb[0].mxu0
      %v3172 = vadd.f32 0.0, %v3171
      %v3173 = vpop.f32.mrb[0].mxu0
      %3174 = vmatprep.mubr.bf16.mxu0 0
      %3175 = vmatmul.mubr.bf16.gmra.mrb[0].mxu0 %v3071
      %v3176 = vpop.f32.mrb[0].mxu0
      %v3177 = vadd.f32 0.0, %v3176
      %v3178 = vpop.f32.mrb[0].mxu0
      %v3179 = vpop.f32.mrb[0].mxu0
      %v3180 = vadd.f32 0.0, %v3179
      %v3181 = vpop.f32.mrb[0].mxu0
      %3182 = vmatprep.mubr.bf16.mxu0 0
      %3183 = vmatmul.mubr.bf16.gmra.mrb[0].mxu0 %v3074
      %v3184 = vpop.f32.mrb[0].mxu0
      %v3185 = vadd.f32 0.0, %v3184
      %v3186 = vpop.f32.mrb[0].mxu0
      %v3187 = vpop.f32.mrb[0].mxu0
      %v3188 = vadd.f32 0.0, %v3187
      %v3189 = vpop.f32.mrb[0].mxu0
      %3190 = vmatprep.mubr.bf16.mxu0 0
      %3191 = vmatmul.mubr.bf16.gmra.mrb[0].mxu0 %v3077
      %v3192 = vpop.f32.mrb[0].mxu0
      %v3193 = vadd.f32 0.0, %v3192
      %v3194 = vpop.f32.mrb[0].mxu0
      %v3195 = vpop.f32.mrb[0].mxu0
      %v3196 = vadd.f32 0.0, %v3195
      %v3197 = vpop.f32.mrb[0].mxu0
      %3198 = vmatprep.mubr.bf16.mxu0 0
      %3199 = vmatmul.mubr.bf16.gmra.mrb[0].mxu0 %v3080
      %v3200 = vpop.f32.mrb[0].mxu0
      %v3201 = vadd.f32 0.0, %v3200
      %v3202 = vpop.f32.mrb[0].mxu0
      %v3203 = vpop.f32.mrb[0].mxu0
      %v3204 = vadd.f32 0.0, %v3203
      %v3205 = vpop.f32.mrb[0].mxu0
      %3206 = vmatprep.mubr.bf16.mxu0 0
      %3207 = vmatmul.mubr.bf16.gmra.mrb[0].mxu0 %v3083
      %v3208 = vpop.f32.mrb[0].mxu0
      %v3209 = vadd.f32 0.0, %v3208
      %v3210 = vpop.f32.mrb[0].mxu0
      %v3211 = vpop.f32.mrb[0].mxu0
      %v3212 = vadd.f32 0.0, %v3211
      %v3213 = vpop.f32.mrb[0].mxu0
      %3214 = vmatprep.mubr.bf16.mxu0 0
      %3215 = vmatmul.mubr.bf16.gmra.mrb[0].mxu0 %v3086
      %v3216 = vpop.f32.mrb[0].mxu0
      %v3217 = vadd.f32 0.0, %v3216
      %v3218 = vpop.f32.mrb[0].mxu0
      %v3219 = vpop.f32.mrb[0].mxu0
      %v3220 = vadd.f32 0.0, %v3219
      %v3221 = vpop.f32.mrb[0].mxu0
      %3222 = vmatprep.mubr.bf16.mxu0 0
      %3223 = vmatmul.mubr.bf16.gmra.mrb[0].mxu0 %v3089
      %v3224 = vpop.f32.mrb[0].mxu0
      %v3225 = vadd.f32 0.0, %v3224
      %v3226 = vpop.f32.mrb[0].mxu0
      %v3227 = vpop.f32.mrb[0].mxu0
      %v3228 = vadd.f32 0.0, %v3227
      %v3229 = vpop.f32.mrb[0].mxu0
      %3230 = vmatprep.mubr.bf16.mxu0 0
      %3231 = vmatmul.mubr.bf16.gmra.mrb[0].mxu0 %v3092
      %v3232 = vpop.f32.mrb[0].mxu0
      %v3233 = vadd.f32 0.0, %v3232
      %v3234 = vpop.f32.mrb[0].mxu0
      %v3235 = vpop.f32.mrb[0].mxu0
      %v3236 = vadd.f32 0.0, %v3235
      %v3237 = vpop.f32.mrb[0].mxu0
      %3238 = vmatprep.mubr.bf16.mxu0 0
      %3239 = vmatmul.mubr.bf16.gmra.mrb[0].mxu0 %v3095
      %v3240 = vpop.f32.mrb[0].mxu0
      %v3241 = vadd.f32 0.0, %v3240
      %v3242 = vpop.f32.mrb[0].mxu0
      %v3243 = vpop.f32.mrb[0].mxu0
      %v3244 = vadd.f32 0.0, %v3243
      %v3245 = vpop.f32.mrb[0].mxu0
      %3246 = vmatprep.mubr.bf16.mxu0 0
      %3247 = vmatmul.mubr.bf16.gmra.mrb[0].mxu0 %v3098
      %v3248 = vpop.f32.mrb[0].mxu0
      %v3249 = vadd.f32 0.0, %v3248
      %v3250 = vpop.f32.mrb[0].mxu0
      %v3251 = vpop.f32.mrb[0].mxu0
      %v3252 = vadd.f32 0.0, %v3251
      %v3253 = vpop.f32.mrb[0].mxu0
      %3254 = vmatprep.mubr.bf16.mxu0 0
      %3255 = vmatmul.mubr.bf16.gmra.mrb[0].mxu0 %v3101
      %v3256 = vpop.f32.mrb[0].mxu0
      %v3257 = vadd.f32 0.0, %v3256
      %v3258 = vpop.f32.mrb[0].mxu0
      %v3259 = vpop.f32.mrb[0].mxu0
      %v3260 = vadd.f32 0.0, %v3259
      %v3261 = vpop.f32.mrb[0].mxu0
      %3262 = vmatprep.mubr.bf16.mxu0 0
      %3263 = vmatmul.mubr.bf16.gmra.mrb[0].mxu0 %v3104
      %v3264 = vpop.f32.mrb[0].mxu0
      %v3265 = vadd.f32 0.0, %v3264
      %v3266 = vpop.f32.mrb[0].mxu0
      %v3267 = vpop.f32.mrb[0].mxu0
      %v3268 = vadd.f32 0.0, %v3267
      %v3269 = vpop.f32.mrb[0].mxu0
      %3270 = vmatprep.mubr.bf16.mxu0 0
      %3271 = vmatmul.mubr.bf16.gmra.mrb[0].mxu0 %v3107
      %v3272 = vpop.f32.mrb[0].mxu0
      %v3273 = vadd.f32 0.0, %v3272
      %v3274 = vpop.f32.mrb[0].mxu0
      %v3275 = vpop.f32.mrb[0].mxu0
      %v3276 = vadd.f32 0.0, %v3275
      %v3277 = vpop.f32.mrb[0].mxu0
      %3278 = vmatprep.mubr.bf16.mxu0 0
      %3279 = vmatmul.mubr.bf16.gmra.mrb[0].mxu0 %v3110
      %v3280 = vpop.f32.mrb[0].mxu0
      %v3281 = vadd.f32 0.0, %v3280
      %v3282 = vpop.f32.mrb[0].mxu0
      %v3283 = vpop.f32.mrb[0].mxu0
      %v3284 = vadd.f32 0.0, %v3283
      %v3285 = vpop.f32.mrb[0].mxu0
      %3286 = vmatprep.mubr.bf16.mxu0 0
      %3287 = vmatmul.mubr.bf16.gmra.mrb[0].mxu0 %v3113
      %v3288 = vpop.f32.mrb[0].mxu0
      %v3289 = vadd.f32 0.0, %v3288
      %v3290 = vpop.f32.mrb[0].mxu0
      %v3291 = vpop.f32.mrb[0].mxu0
      %v3292 = vadd.f32 0.0, %v3291
      %v3293 = vpop.f32.mrb[0].mxu0
      %3294 = vdwg.mxu0
      %v3295 = vld [vmem:[#allocation2] sm:$0xff]
      %v3296 = vld [vmem:[#allocation2 + $0x8] sm:$0xff]
      %v3297 = vld [vmem:[#allocation2 + $0x10] sm:$0xff]
      %v3298 = vld [vmem:[#allocation2 + $0x18] sm:$0xff]
      %v3299 = vld [vmem:[#allocation2 + $0x20] sm:$0xff]
      %v3300 = vld [vmem:[#allocation2 + $0x28] sm:$0xff]
      %v3301 = vld [vmem:[#allocation2 + $0x30] sm:$0xff]
      %v3302 = vld [vmem:[#allocation2 + $0x38] sm:$0xff]
      %v3303 = vld [vmem:[#allocation2 + $0x40] sm:$0xff]
      %v3304 = vld [vmem:[#allocation2 + $0x48] sm:$0xff]
      %v3305 = vld [vmem:[#allocation2 + $0x50] sm:$0xff]
      %v3306 = vld [vmem:[#allocation2 + $0x58] sm:$0xff]
      %v3307 = vld [vmem:[#allocation2 + $0x60] sm:$0xff]
      %v3308 = vld [vmem:[#allocation2 + $0x68] sm:$0xff]
      %v3309 = vld [vmem:[#allocation2 + $0x70] sm:$0xff]
      %v3310 = vld [vmem:[#allocation2 + $0x78] sm:$0xff]
      %v3311 = vld [vmem:[#allocation2 + $0x80] sm:$0xff]
      %v3312 = vld [vmem:[#allocation2 + $0x88] sm:$0xff]
      %v3313 = vld [vmem:[#allocation2 + $0x90] sm:$0xff]
      %v3314 = vld [vmem:[#allocation2 + $0x98] sm:$0xff]
      %v3315 = vld [vmem:[#allocation2 + $0xa0] sm:$0xff]
      %v3316 = vld [vmem:[#allocation2 + $0xa8] sm:$0xff]
      %v3317 = vld [vmem:[#allocation2 + $0xb0] sm:$0xff]
      %v3318 = vld [vmem:[#allocation2 + $0xb8] sm:$0xff]
      %v3319 = vld [vmem:[#allocation2 + $0xc0] sm:$0xff]
      %v3320 = vld [vmem:[#allocation2 + $0xc8] sm:$0xff]
      %v3321 = vld [vmem:[#allocation2 + $0xd0] sm:$0xff]
      %v3322 = vld [vmem:[#allocation2 + $0xd8] sm:$0xff]
      %v3323 = vld [vmem:[#allocation2 + $0xe0] sm:$0xff]
      %v3324 = vld [vmem:[#allocation2 + $0xe8] sm:$0xff]
      %v3325 = vld [vmem:[#allocation2 + $0xf0] sm:$0xff]
      %v3326 = vld [vmem:[#allocation2 + $0xf8] sm:$0xff]
      %v3327 = vld [vmem:[#allocation2 + $0x100] sm:$0xff]
      %v3328 = vld [vmem:[#allocation2 + $0x108] sm:$0xff]
      %v3329 = vld [vmem:[#allocation2 + $0x110] sm:$0xff]
      %v3330 = vld [vmem:[#allocation2 + $0x118] sm:$0x3f]
      %v3331 = vadd.f32 %v3295, %v3153
      %v3332 = vadd.f32 %v3296, %v3156
      %v3333 = vadd.f32 %v3297, %v3161
      %v3334 = vadd.f32 %v3298, %v3164
      %v3335 = vadd.f32 %v3299, %v3169
      %v3336 = vadd.f32 %v3300, %v3172
      %v3337 = vadd.f32 %v3301, %v3177
      %v3338 = vadd.f32 %v3302, %v3180
      %v3339 = vadd.f32 %v3303, %v3185
      %v3340 = vadd.f32 %v3304, %v3188
      %v3341 = vadd.f32 %v3305, %v3193
      %v3342 = vadd.f32 %v3306, %v3196
      %v3343 = vadd.f32 %v3307, %v3201
      %v3344 = vadd.f32 %v3308, %v3204
      %v3345 = vadd.f32 %v3309, %v3209
      %v3346 = vadd.f32 %v3310, %v3212
      %v3347 = vadd.f32 %v3311, %v3217
      %v3348 = vadd.f32 %v3312, %v3220
      %v3349 = vadd.f32 %v3313, %v3225
      %v3350 = vadd.f32 %v3314, %v3228
      %v3351 = vadd.f32 %v3315, %v3233
      %v3352 = vadd.f32 %v3316, %v3236
      %v3353 = vadd.f32 %v3317, %v3241
      %v3354 = vadd.f32 %v3318, %v3244
      %v3355 = vadd.f32 %v3319, %v3249
      %v3356 = vadd.f32 %v3320, %v3252
      %v3357 = vadd.f32 %v3321, %v3257
      %v3358 = vadd.f32 %v3322, %v3260
      %v3359 = vadd.f32 %v3323, %v3265
      %v3360 = vadd.f32 %v3324, %v3268
      %v3361 = vadd.f32 %v3325, %v3273
      %v3362 = vadd.f32 %v3326, %v3276
      %v3363 = vadd.f32 %v3327, %v3281
      %v3364 = vadd.f32 %v3328, %v3284
      %v3365 = vadd.f32 %v3329, %v3289
      %v3366 = vadd.f32 %v3330, %v3292
      %3367 = vst [vmem:[#allocation2] sm:$0xff] %v3331
      %3368 = vst [vmem:[#allocation2 + $0x8] sm:$0xff] %v3332
      %3369 = vst [vmem:[#allocation2 + $0x10] sm:$0xff] %v3333
      %3370 = vst [vmem:[#allocation2 + $0x18] sm:$0xff] %v3334
      %3371 = vst [vmem:[#allocation2 + $0x20] sm:$0xff] %v3335
      %3372 = vst [vmem:[#allocation2 + $0x28] sm:$0xff] %v3336
      %3373 = vst [vmem:[#allocation2 + $0x30] sm:$0xff] %v3337
      %3374 = vst [vmem:[#allocation2 + $0x38] sm:$0xff] %v3338
      %3375 = vst [vmem:[#allocation2 + $0x40] sm:$0xff] %v3339
      %3376 = vst [vmem:[#allocation2 + $0x48] sm:$0xff] %v3340
      %3377 = vst [vmem:[#allocation2 + $0x50] sm:$0xff] %v3341
      %3378 = vst [vmem:[#allocation2 + $0x58] sm:$0xff] %v3342
      %3379 = vst [vmem:[#allocation2 + $0x60] sm:$0xff] %v3343
      %3380 = vst [vmem:[#allocation2 + $0x68] sm:$0xff] %v3344
      %3381 = vst [vmem:[#allocation2 + $0x70] sm:$0xff] %v3345
      %3382 = vst [vmem:[#allocation2 + $0x78] sm:$0xff] %v3346
      %3383 = vst [vmem:[#allocation2 + $0x80] sm:$0xff] %v3347
      %3384 = vst [vmem:[#allocation2 + $0x88] sm:$0xff] %v3348
      %3385 = vst [vmem:[#allocation2 + $0x90] sm:$0xff] %v3349
      %3386 = vst [vmem:[#allocation2 + $0x98] sm:$0xff] %v3350
      %3387 = vst [vmem:[#allocation2 + $0xa0] sm:$0xff] %v3351
      %3388 = vst [vmem:[#allocation2 + $0xa8] sm:$0xff] %v3352
      %3389 = vst [vmem:[#allocation2 + $0xb0] sm:$0xff] %v3353
      %3390 = vst [vmem:[#allocation2 + $0xb8] sm:$0xff] %v3354
      %3391 = vst [vmem:[#allocation2 + $0xc0] sm:$0xff] %v3355
      %3392 = vst [vmem:[#allocation2 + $0xc8] sm:$0xff] %v3356
      %3393 = vst [vmem:[#allocation2 + $0xd0] sm:$0xff] %v3357
      %3394 = vst [vmem:[#allocation2 + $0xd8] sm:$0xff] %v3358
      %3395 = vst [vmem:[#allocation2 + $0xe0] sm:$0xff] %v3359
      %3396 = vst [vmem:[#allocation2 + $0xe8] sm:$0xff] %v3360
      %3397 = vst [vmem:[#allocation2 + $0xf0] sm:$0xff] %v3361
      %3398 = vst [vmem:[#allocation2 + $0xf8] sm:$0xff] %v3362
      %3399 = vst [vmem:[#allocation2 + $0x100] sm:$0xff] %v3363
      %3400 = vst [vmem:[#allocation2 + $0x108] sm:$0xff] %v3364
      %3401 = vst [vmem:[#allocation2 + $0x110] sm:$0xff] %v3365
      %3402 = vst [vmem:[#allocation2 + $0x118] sm:$0x3f] %v3366
      %v3403 = vld [vmem:[%s208 + $0x10] sm:$0xc]
      %v3404 = vld [vmem:[%s208 + $0x14] sm:$0xf]
      %v3405 = vld [vmem:[%s208 + $0x18] sm:$0xf]
      %v3406 = vld [vmem:[%s208 + $0x1c] sm:$0xf]
      %v3407 = vld [vmem:[%s208 + $0x20] sm:$0xf]
      %v3408 = vld [vmem:[%s208 + $0x24] sm:$0xf]
      %v3409 = vld [vmem:[%s208 + $0x28] sm:$0xf]
      %v3410 = vld [vmem:[%s208 + $0x2c] sm:$0xf]
      %v3411 = vld [vmem:[%s208 + $0x30] sm:$0xf]
      %v3412 = vld [vmem:[%s208 + $0x34] sm:$0xf]
      %v3413 = vld [vmem:[%s208 + $0x38] sm:$0xf]
      %v3414 = vld [vmem:[%s208 + $0x3c] sm:$0xf]
      %v3415 = vld [vmem:[%s208 + $0x40] sm:$0xf]
      %v3416 = vld [vmem:[%s208 + $0x44] sm:$0xf]
      %v3417 = vld [vmem:[%s208 + $0x48] sm:$0xf]
      %v3418 = vld [vmem:[%s208 + $0x4c] sm:$0xf]
      %v3419 = vld [vmem:[%s208 + $0x50] sm:$0xf]
      %v3420 = vld [vmem:[%s208 + $0x54] sm:$0xf]
      %v3421 = vld [vmem:[%s208 + $0x58] sm:$0xf]
      %v3422 = vld [vmem:[%s208 + $0x5c] sm:$0xf]
      %v3423 = vld [vmem:[%s208 + $0x60] sm:$0xf]
      %v3424 = vld [vmem:[%s208 + $0x64] sm:$0xf]
      %v3425 = vld [vmem:[%s208 + $0x68] sm:$0xf]
      %v3426 = vld [vmem:[%s208 + $0x6c] sm:$0xf]
      %v3427 = vld [vmem:[%s208 + $0x70] sm:$0xf]
      %v3428 = vld [vmem:[%s208 + $0x74] sm:$0xf]
      %v3429 = vld [vmem:[%s208 + $0x78] sm:$0xf]
      %v3430 = vld [vmem:[%s208 + $0x7c] sm:$0xf]
      %v3431 = vld [vmem:[%s208 + $0x80] sm:$0xf]
      %v3432 = vld [vmem:[%s208 + $0x84] sm:$0xf]
      %v3433 = vld [vmem:[%s208 + $0x88] sm:$0xf]
      %v3434 = vld [vmem:[%s208 + $0x8c] sm:$0xf]
      %v3435 = vld [vmem:[%s208 + $0x90] sm:$0xf]
      %v3436 = vld [vmem:[%s208 + $0x94] sm:$0xf]
      %v3437 = vld [vmem:[%s208 + $0x98] sm:$0xf]
      %v3438 = vld [vmem:[%s208 + $0x9c] sm:$0xf]
      %v3439 = vld [vmem:[%s208 + $0xa0] sm:$0x1]
      %s3440 = scalar_lea.vmem %s212, 24
      %v3441 = vld [vmem:[%s3440] sm:$0xf]
      %v3479 = vunpack.c.l.b16 %v3403
      %v3480 = vunpack.c.l.b16 %v3404
      %v3481 = vunpack.c.l.b16 %v3405
      %v3482 = vunpack.c.l.b16 %v3406
      %v3483 = vunpack.c.l.b16 %v3407
      %v3484 = vunpack.c.l.b16 %v3408
      %v3485 = vunpack.c.l.b16 %v3409
      %v3486 = vunpack.c.l.b16 %v3410
      %v3487 = vunpack.c.l.b16 %v3411
      %v3488 = vunpack.c.l.b16 %v3412
      %v3489 = vunpack.c.l.b16 %v3413
      %v3490 = vunpack.c.l.b16 %v3414
      %v3491 = vunpack.c.l.b16 %v3415
      %v3492 = vunpack.c.l.b16 %v3416
      %v3493 = vunpack.c.l.b16 %v3417
      %v3494 = vunpack.c.l.b16 %v3418
      %v3495 = vunpack.c.l.b16 %v3419
      %v3496 = vunpack.c.l.b16 %v3420
      %v3497 = vunpack.c.l.b16 %v3421
      %v3498 = vunpack.c.l.b16 %v3422
      %v3499 = vunpack.c.l.b16 %v3423
      %v3500 = vunpack.c.l.b16 %v3424
      %v3501 = vunpack.c.l.b16 %v3425
      %v3502 = vunpack.c.l.b16 %v3426
      %v3503 = vunpack.c.l.b16 %v3427
      %v3504 = vunpack.c.l.b16 %v3428
      %v3505 = vunpack.c.l.b16 %v3429
      %v3506 = vunpack.c.l.b16 %v3430
      %v3507 = vunpack.c.l.b16 %v3431
      %v3508 = vunpack.c.l.b16 %v3432
      %v3509 = vunpack.c.l.b16 %v3433
      %v3510 = vunpack.c.l.b16 %v3434
      %v3511 = vunpack.c.l.b16 %v3435
      %v3512 = vunpack.c.l.b16 %v3436
      %v3513 = vunpack.c.l.b16 %v3437
      %v3514 = vunpack.c.l.b16 %v3438
      %v3515 = vunpack.c.l.b16 %v3439
      %v3516 = vpack.c.b16 %v3480, %v3479
      %v3517 = vpack.c.b16 %v3482, %v3481
      %v3518 = vpack.c.b16 %v3484, %v3483
      %v3519 = vpack.c.b16 %v3486, %v3485
      %v3520 = vpack.c.b16 %v3488, %v3487
      %v3521 = vpack.c.b16 %v3490, %v3489
      %v3522 = vpack.c.b16 %v3492, %v3491
      %v3523 = vpack.c.b16 %v3494, %v3493
      %v3524 = vpack.c.b16 %v3496, %v3495
      %v3525 = vpack.c.b16 %v3498, %v3497
      %v3526 = vpack.c.b16 %v3500, %v3499
      %v3527 = vpack.c.b16 %v3502, %v3501
      %v3528 = vpack.c.b16 %v3504, %v3503
      %v3529 = vpack.c.b16 %v3506, %v3505
      %v3530 = vpack.c.b16 %v3508, %v3507
      %v3531 = vpack.c.b16 %v3510, %v3509
      %v3532 = vpack.c.b16 %v3512, %v3511
      %v3533 = vpack.c.b16 %v3514, %v3513
      %v3534 = vpack.c.b16 %v3515, %v3515
      %v3535 = vrot.slane %v3516, 2
      %v3536 = vrot.slane %v3517, 2
      %v3537 = vsel %vm3023, %v3535, %v3536
      %v3538 = vrot.slane %v3518, 2
      %v3539 = vsel %vm3023, %v3536, %v3538
      %v3540 = vrot.slane %v3519, 2
      %v3541 = vsel %vm3023, %v3538, %v3540
      %v3542 = vrot.slane %v3520, 2
      %v3543 = vsel %vm3023, %v3540, %v3542
      %v3544 = vrot.slane %v3521, 2
      %v3545 = vsel %vm3023, %v3542, %v3544
      %v3546 = vrot.slane %v3522, 2
      %v3547 = vsel %vm3023, %v3544, %v3546
      %v3548 = vrot.slane %v3523, 2
      %v3549 = vsel %vm3023, %v3546, %v3548
      %v3550 = vrot.slane %v3524, 2
      %v3551 = vsel %vm3023, %v3548, %v3550
      %v3552 = vrot.slane %v3525, 2
      %v3553 = vsel %vm3023, %v3550, %v3552
      %v3554 = vrot.slane %v3526, 2
      %v3555 = vsel %vm3023, %v3552, %v3554
      %v3556 = vrot.slane %v3527, 2
      %v3557 = vsel %vm3023, %v3554, %v3556
      %v3558 = vrot.slane %v3528, 2
      %v3559 = vsel %vm3023, %v3556, %v3558
      %v3560 = vrot.slane %v3529, 2
      %v3561 = vsel %vm3023, %v3558, %v3560
      %v3562 = vrot.slane %v3530, 2
      %v3563 = vsel %vm3023, %v3560, %v3562
      %v3564 = vrot.slane %v3531, 2
      %v3565 = vsel %vm3023, %v3562, %v3564
      %v3566 = vrot.slane %v3532, 2
      %v3567 = vsel %vm3023, %v3564, %v3566
      %v3568 = vrot.slane %v3533, 2
      %v3569 = vsel %vm3023, %v3566, %v3568
      %v3570 = vrot.slane %v3534, 2
      %v3571 = vsel %vm3023, %v3568, %v3570
      %v3573 = vsel %vm353, %v3537, 0
      %v3576 = vsel %vm353, %v3539, 0
      %v3579 = vsel %vm353, %v3541, 0
      %v3582 = vsel %vm353, %v3543, 0
      %v3585 = vsel %vm353, %v3545, 0
      %v3588 = vsel %vm353, %v3547, 0
      %v3591 = vsel %vm353, %v3549, 0
      %v3594 = vsel %vm353, %v3551, 0
      %v3597 = vsel %vm353, %v3553, 0
      %v3600 = vsel %vm353, %v3555, 0
      %v3603 = vsel %vm353, %v3557, 0
      %v3606 = vsel %vm353, %v3559, 0
      %v3609 = vsel %vm353, %v3561, 0
      %v3612 = vsel %vm353, %v3563, 0
      %v3615 = vsel %vm353, %v3565, 0
      %v3618 = vsel %vm353, %v3567, 0
      %v3621 = vsel %vm353, %v3569, 0
      %v3624 = vsel %vm353, %v3571, 0
      %v3627 = vsel %vm408, %v3441, 0
      %3629 = vmatprep.subr.bf16.mxu0 0
      %3630 = vmatpush1.bf16.msra.mxu0 %v3627
      %3631 = vmatprep.subr.bf16.mxu0 0
      %3632 = vmatpush1.bf16.msra.mxu0 0
      %3633 = vmatprep.subr.bf16.mxu0 0
      %3634 = vmatpush1.bf16.msra.mxu0 0
      %3635 = vmatprep.subr.bf16.mxu0 0
      %3636 = vmatpush1.bf16.msra.mxu0 0
      %3637 = vmatprep.subr.bf16.mxu0 0
      %3638 = vmatpush1.bf16.msra.mxu0 0
      %3639 = vmatprep.subr.bf16.mxu0 0
      %3640 = vmatpush1.bf16.msra.mxu0 0
      %3641 = vmatprep.subr.bf16.mxu0 0
      %3642 = vmatpush1.bf16.msra.mxu0 0
      %3643 = vmatprep.subr.bf16.mxu0 0
      %3644 = vmatpush1.bf16.msra.mxu0 0
      %3645 = vmatprep.subr.bf16.mxu0 0
      %3646 = vmatpush1.bf16.msra.mxu0 0
      %3647 = vmatprep.subr.bf16.mxu0 0
      %3648 = vmatpush1.bf16.msra.mxu0 0
      %3649 = vmatprep.subr.bf16.mxu0 0
      %3650 = vmatpush1.bf16.msra.mxu0 0
      %3651 = vmatprep.subr.bf16.mxu0 0
      %3652 = vmatpush1.bf16.msra.mxu0 0
      %3653 = vmatprep.subr.bf16.mxu0 0
      %3654 = vmatpush1.bf16.msra.mxu0 0
      %3655 = vmatprep.subr.bf16.mxu0 0
      %3656 = vmatpush1.bf16.msra.mxu0 0
      %3657 = vmatprep.subr.bf16.mxu0 0
      %3658 = vmatpush1.bf16.msra.mxu0 0
      %3659 = vmatprep.subr.bf16.mxu0 0
      %3660 = vmatpush1.bf16.msra.mxu0 0
      %3661 = vmatprep.mubr.bf16.mxu0 0
      %3662 = vmatmul.mubr.bf16.gmra.mrb[0].mxu0 %v3573
      %v3663 = vpop.f32.mrb[0].mxu0
      %v3664 = vadd.f32 0.0, %v3663
      %v3665 = vpop.f32.mrb[0].mxu0
      %v3666 = vpop.f32.mrb[0].mxu0
      %v3667 = vadd.f32 0.0, %v3666
      %v3668 = vpop.f32.mrb[0].mxu0
      %3669 = vmatprep.mubr.bf16.mxu0 0
      %3670 = vmatmul.mubr.bf16.gmra.mrb[0].mxu0 %v3576
      %v3671 = vpop.f32.mrb[0].mxu0
      %v3672 = vadd.f32 0.0, %v3671
      %v3673 = vpop.f32.mrb[0].mxu0
      %v3674 = vpop.f32.mrb[0].mxu0
      %v3675 = vadd.f32 0.0, %v3674
      %v3676 = vpop.f32.mrb[0].mxu0
      %3677 = vmatprep.mubr.bf16.mxu0 0
      %3678 = vmatmul.mubr.bf16.gmra.mrb[0].mxu0 %v3579
      %v3679 = vpop.f32.mrb[0].mxu0
      %v3680 = vadd.f32 0.0, %v3679
      %v3681 = vpop.f32.mrb[0].mxu0
      %v3682 = vpop.f32.mrb[0].mxu0
      %v3683 = vadd.f32 0.0, %v3682
      %v3684 = vpop.f32.mrb[0].mxu0
      %3685 = vmatprep.mubr.bf16.mxu0 0
      %3686 = vmatmul.mubr.bf16.gmra.mrb[0].mxu0 %v3582
      %v3687 = vpop.f32.mrb[0].mxu0
      %v3688 = vadd.f32 0.0, %v3687
      %v3689 = vpop.f32.mrb[0].mxu0
      %v3690 = vpop.f32.mrb[0].mxu0
      %v3691 = vadd.f32 0.0, %v3690
      %v3692 = vpop.f32.mrb[0].mxu0
      %3693 = vmatprep.mubr.bf16.mxu0 0
      %3694 = vmatmul.mubr.bf16.gmra.mrb[0].mxu0 %v3585
      %v3695 = vpop.f32.mrb[0].mxu0
      %v3696 = vadd.f32 0.0, %v3695
      %v3697 = vpop.f32.mrb[0].mxu0
      %v3698 = vpop.f32.mrb[0].mxu0
      %v3699 = vadd.f32 0.0, %v3698
      %v3700 = vpop.f32.mrb[0].mxu0
      %3701 = vmatprep.mubr.bf16.mxu0 0
      %3702 = vmatmul.mubr.bf16.gmra.mrb[0].mxu0 %v3588
      %v3703 = vpop.f32.mrb[0].mxu0
      %v3704 = vadd.f32 0.0, %v3703
      %v3705 = vpop.f32.mrb[0].mxu0
      %v3706 = vpop.f32.mrb[0].mxu0
      %v3707 = vadd.f32 0.0, %v3706
      %v3708 = vpop.f32.mrb[0].mxu0
      %3709 = vmatprep.mubr.bf16.mxu0 0
      %3710 = vmatmul.mubr.bf16.gmra.mrb[0].mxu0 %v3591
      %v3711 = vpop.f32.mrb[0].mxu0
      %v3712 = vadd.f32 0.0, %v3711
      %v3713 = vpop.f32.mrb[0].mxu0
      %v3714 = vpop.f32.mrb[0].mxu0
      %v3715 = vadd.f32 0.0, %v3714
      %v3716 = vpop.f32.mrb[0].mxu0
      %3717 = vmatprep.mubr.bf16.mxu0 0
      %3718 = vmatmul.mubr.bf16.gmra.mrb[0].mxu0 %v3594
      %v3719 = vpop.f32.mrb[0].mxu0
      %v3720 = vadd.f32 0.0, %v3719
      %v3721 = vpop.f32.mrb[0].mxu0
      %v3722 = vpop.f32.mrb[0].mxu0
      %v3723 = vadd.f32 0.0, %v3722
      %v3724 = vpop.f32.mrb[0].mxu0
      %3725 = vmatprep.mubr.bf16.mxu0 0
      %3726 = vmatmul.mubr.bf16.gmra.mrb[0].mxu0 %v3597
      %v3727 = vpop.f32.mrb[0].mxu0
      %v3728 = vadd.f32 0.0, %v3727
      %v3729 = vpop.f32.mrb[0].mxu0
      %v3730 = vpop.f32.mrb[0].mxu0
      %v3731 = vadd.f32 0.0, %v3730
      %v3732 = vpop.f32.mrb[0].mxu0
      %3733 = vmatprep.mubr.bf16.mxu0 0
      %3734 = vmatmul.mubr.bf16.gmra.mrb[0].mxu0 %v3600
      %v3735 = vpop.f32.mrb[0].mxu0
      %v3736 = vadd.f32 0.0, %v3735
      %v3737 = vpop.f32.mrb[0].mxu0
      %v3738 = vpop.f32.mrb[0].mxu0
      %v3739 = vadd.f32 0.0, %v3738
      %v3740 = vpop.f32.mrb[0].mxu0
      %3741 = vmatprep.mubr.bf16.mxu0 0
      %3742 = vmatmul.mubr.bf16.gmra.mrb[0].mxu0 %v3603
      %v3743 = vpop.f32.mrb[0].mxu0
      %v3744 = vadd.f32 0.0, %v3743
      %v3745 = vpop.f32.mrb[0].mxu0
      %v3746 = vpop.f32.mrb[0].mxu0
      %v3747 = vadd.f32 0.0, %v3746
      %v3748 = vpop.f32.mrb[0].mxu0
      %3749 = vmatprep.mubr.bf16.mxu0 0
      %3750 = vmatmul.mubr.bf16.gmra.mrb[0].mxu0 %v3606
      %v3751 = vpop.f32.mrb[0].mxu0
      %v3752 = vadd.f32 0.0, %v3751
      %v3753 = vpop.f32.mrb[0].mxu0
      %v3754 = vpop.f32.mrb[0].mxu0
      %v3755 = vadd.f32 0.0, %v3754
      %v3756 = vpop.f32.mrb[0].mxu0
      %3757 = vmatprep.mubr.bf16.mxu0 0
      %3758 = vmatmul.mubr.bf16.gmra.mrb[0].mxu0 %v3609
      %v3759 = vpop.f32.mrb[0].mxu0
      %v3760 = vadd.f32 0.0, %v3759
      %v3761 = vpop.f32.mrb[0].mxu0
      %v3762 = vpop.f32.mrb[0].mxu0
      %v3763 = vadd.f32 0.0, %v3762
      %v3764 = vpop.f32.mrb[0].mxu0
      %3765 = vmatprep.mubr.bf16.mxu0 0
      %3766 = vmatmul.mubr.bf16.gmra.mrb[0].mxu0 %v3612
      %v3767 = vpop.f32.mrb[0].mxu0
      %v3768 = vadd.f32 0.0, %v3767
      %v3769 = vpop.f32.mrb[0].mxu0
      %v3770 = vpop.f32.mrb[0].mxu0
      %v3771 = vadd.f32 0.0, %v3770
      %v3772 = vpop.f32.mrb[0].mxu0
      %3773 = vmatprep.mubr.bf16.mxu0 0
      %3774 = vmatmul.mubr.bf16.gmra.mrb[0].mxu0 %v3615
      %v3775 = vpop.f32.mrb[0].mxu0
      %v3776 = vadd.f32 0.0, %v3775
      %v3777 = vpop.f32.mrb[0].mxu0
      %v3778 = vpop.f32.mrb[0].mxu0
      %v3779 = vadd.f32 0.0, %v3778
      %v3780 = vpop.f32.mrb[0].mxu0
      %3781 = vmatprep.mubr.bf16.mxu0 0
      %3782 = vmatmul.mubr.bf16.gmra.mrb[0].mxu0 %v3618
      %v3783 = vpop.f32.mrb[0].mxu0
      %v3784 = vadd.f32 0.0, %v3783
      %v3785 = vpop.f32.mrb[0].mxu0
      %v3786 = vpop.f32.mrb[0].mxu0
      %v3787 = vadd.f32 0.0, %v3786
      %v3788 = vpop.f32.mrb[0].mxu0
      %3789 = vmatprep.mubr.bf16.mxu0 0
      %3790 = vmatmul.mubr.bf16.gmra.mrb[0].mxu0 %v3621
      %v3791 = vpop.f32.mrb[0].mxu0
      %v3792 = vadd.f32 0.0, %v3791
      %v3793 = vpop.f32.mrb[0].mxu0
      %v3794 = vpop.f32.mrb[0].mxu0
      %v3795 = vadd.f32 0.0, %v3794
      %v3796 = vpop.f32.mrb[0].mxu0
      %3797 = vmatprep.mubr.bf16.mxu0 0
      %3798 = vmatmul.mubr.bf16.gmra.mrb[0].mxu0 %v3624
      %v3799 = vpop.f32.mrb[0].mxu0
      %v3800 = vadd.f32 0.0, %v3799
      %v3801 = vpop.f32.mrb[0].mxu0
      %v3802 = vpop.f32.mrb[0].mxu0
      %v3803 = vadd.f32 0.0, %v3802
      %v3804 = vpop.f32.mrb[0].mxu0
      %3805 = vdwg.mxu0
      %v3806 = vld [vmem:[#allocation2] sm:$0xff]
      %v3807 = vld [vmem:[#allocation2 + $0x8] sm:$0xff]
      %v3808 = vld [vmem:[#allocation2 + $0x10] sm:$0xff]
      %v3809 = vld [vmem:[#allocation2 + $0x18] sm:$0xff]
      %v3810 = vld [vmem:[#allocation2 + $0x20] sm:$0xff]
      %v3811 = vld [vmem:[#allocation2 + $0x28] sm:$0xff]
      %v3812 = vld [vmem:[#allocation2 + $0x30] sm:$0xff]
      %v3813 = vld [vmem:[#allocation2 + $0x38] sm:$0xff]
      %v3814 = vld [vmem:[#allocation2 + $0x40] sm:$0xff]
      %v3815 = vld [vmem:[#allocation2 + $0x48] sm:$0xff]
      %v3816 = vld [vmem:[#allocation2 + $0x50] sm:$0xff]
      %v3817 = vld [vmem:[#allocation2 + $0x58] sm:$0xff]
      %v3818 = vld [vmem:[#allocation2 + $0x60] sm:$0xff]
      %v3819 = vld [vmem:[#allocation2 + $0x68] sm:$0xff]
      %v3820 = vld [vmem:[#allocation2 + $0x70] sm:$0xff]
      %v3821 = vld [vmem:[#allocation2 + $0x78] sm:$0xff]
      %v3822 = vld [vmem:[#allocation2 + $0x80] sm:$0xff]
      %v3823 = vld [vmem:[#allocation2 + $0x88] sm:$0xff]
      %v3824 = vld [vmem:[#allocation2 + $0x90] sm:$0xff]
      %v3825 = vld [vmem:[#allocation2 + $0x98] sm:$0xff]
      %v3826 = vld [vmem:[#allocation2 + $0xa0] sm:$0xff]
      %v3827 = vld [vmem:[#allocation2 + $0xa8] sm:$0xff]
      %v3828 = vld [vmem:[#allocation2 + $0xb0] sm:$0xff]
      %v3829 = vld [vmem:[#allocation2 + $0xb8] sm:$0xff]
      %v3830 = vld [vmem:[#allocation2 + $0xc0] sm:$0xff]
      %v3831 = vld [vmem:[#allocation2 + $0xc8] sm:$0xff]
      %v3832 = vld [vmem:[#allocation2 + $0xd0] sm:$0xff]
      %v3833 = vld [vmem:[#allocation2 + $0xd8] sm:$0xff]
      %v3834 = vld [vmem:[#allocation2 + $0xe0] sm:$0xff]
      %v3835 = vld [vmem:[#allocation2 + $0xe8] sm:$0xff]
      %v3836 = vld [vmem:[#allocation2 + $0xf0] sm:$0xff]
      %v3837 = vld [vmem:[#allocation2 + $0xf8] sm:$0xff]
      %v3838 = vld [vmem:[#allocation2 + $0x100] sm:$0xff]
      %v3839 = vld [vmem:[#allocation2 + $0x108] sm:$0xff]
      %v3840 = vld [vmem:[#allocation2 + $0x110] sm:$0xff]
      %v3841 = vld [vmem:[#allocation2 + $0x118] sm:$0x3f]
      %v3842 = vadd.f32 %v3806, %v3664
      %v3843 = vadd.f32 %v3807, %v3667
      %v3844 = vadd.f32 %v3808, %v3672
      %v3845 = vadd.f32 %v3809, %v3675
      %v3846 = vadd.f32 %v3810, %v3680
      %v3847 = vadd.f32 %v3811, %v3683
      %v3848 = vadd.f32 %v3812, %v3688
      %v3849 = vadd.f32 %v3813, %v3691
      %v3850 = vadd.f32 %v3814, %v3696
      %v3851 = vadd.f32 %v3815, %v3699
      %v3852 = vadd.f32 %v3816, %v3704
      %v3853 = vadd.f32 %v3817, %v3707
      %v3854 = vadd.f32 %v3818, %v3712
      %v3855 = vadd.f32 %v3819, %v3715
      %v3856 = vadd.f32 %v3820, %v3720
      %v3857 = vadd.f32 %v3821, %v3723
      %v3858 = vadd.f32 %v3822, %v3728
      %v3859 = vadd.f32 %v3823, %v3731
      %v3860 = vadd.f32 %v3824, %v3736
      %v3861 = vadd.f32 %v3825, %v3739
      %v3862 = vadd.f32 %v3826, %v3744
      %v3863 = vadd.f32 %v3827, %v3747
      %v3864 = vadd.f32 %v3828, %v3752
      %v3865 = vadd.f32 %v3829, %v3755
      %v3866 = vadd.f32 %v3830, %v3760
      %v3867 = vadd.f32 %v3831, %v3763
      %v3868 = vadd.f32 %v3832, %v3768
      %v3869 = vadd.f32 %v3833, %v3771
      %v3870 = vadd.f32 %v3834, %v3776
      %v3871 = vadd.f32 %v3835, %v3779
      %v3872 = vadd.f32 %v3836, %v3784
      %v3873 = vadd.f32 %v3837, %v3787
      %v3874 = vadd.f32 %v3838, %v3792
      %v3875 = vadd.f32 %v3839, %v3795
      %v3876 = vadd.f32 %v3840, %v3800
      %v3877 = vadd.f32 %v3841, %v3803
      %3878 = vst [vmem:[#allocation2] sm:$0xff] %v3842
      %3879 = vst [vmem:[#allocation2 + $0x8] sm:$0xff] %v3843
      %3880 = vst [vmem:[#allocation2 + $0x10] sm:$0xff] %v3844
      %3881 = vst [vmem:[#allocation2 + $0x18] sm:$0xff] %v3845
      %3882 = vst [vmem:[#allocation2 + $0x20] sm:$0xff] %v3846
      %3883 = vst [vmem:[#allocation2 + $0x28] sm:$0xff] %v3847
      %3884 = vst [vmem:[#allocation2 + $0x30] sm:$0xff] %v3848
      %3885 = vst [vmem:[#allocation2 + $0x38] sm:$0xff] %v3849
      %3886 = vst [vmem:[#allocation2 + $0x40] sm:$0xff] %v3850
      %3887 = vst [vmem:[#allocation2 + $0x48] sm:$0xff] %v3851
      %3888 = vst [vmem:[#allocation2 + $0x50] sm:$0xff] %v3852
      %3889 = vst [vmem:[#allocation2 + $0x58] sm:$0xff] %v3853
      %3890 = vst [vmem:[#allocation2 + $0x60] sm:$0xff] %v3854
      %3891 = vst [vmem:[#allocation2 + $0x68] sm:$0xff] %v3855
      %3892 = vst [vmem:[#allocation2 + $0x70] sm:$0xff] %v3856
      %3893 = vst [vmem:[#allocation2 + $0x78] sm:$0xff] %v3857
      %3894 = vst [vmem:[#allocation2 + $0x80] sm:$0xff] %v3858
      %3895 = vst [vmem:[#allocation2 + $0x88] sm:$0xff] %v3859
      %3896 = vst [vmem:[#allocation2 + $0x90] sm:$0xff] %v3860
      %3897 = vst [vmem:[#allocation2 + $0x98] sm:$0xff] %v3861
      %3898 = vst [vmem:[#allocation2 + $0xa0] sm:$0xff] %v3862
      %3899 = vst [vmem:[#allocation2 + $0xa8] sm:$0xff] %v3863
      %3900 = vst [vmem:[#allocation2 + $0xb0] sm:$0xff] %v3864
      %3901 = vst [vmem:[#allocation2 + $0xb8] sm:$0xff] %v3865
      %3902 = vst [vmem:[#allocation2 + $0xc0] sm:$0xff] %v3866
      %3903 = vst [vmem:[#allocation2 + $0xc8] sm:$0xff] %v3867
      %3904 = vst [vmem:[#allocation2 + $0xd0] sm:$0xff] %v3868
      %3905 = vst [vmem:[#allocation2 + $0xd8] sm:$0xff] %v3869
      %3906 = vst [vmem:[#allocation2 + $0xe0] sm:$0xff] %v3870
      %3907 = vst [vmem:[#allocation2 + $0xe8] sm:$0xff] %v3871
      %3908 = vst [vmem:[#allocation2 + $0xf0] sm:$0xff] %v3872
      %3909 = vst [vmem:[#allocation2 + $0xf8] sm:$0xff] %v3873
      %3910 = vst [vmem:[#allocation2 + $0x100] sm:$0xff] %v3874
      %3911 = vst [vmem:[#allocation2 + $0x108] sm:$0xff] %v3875
      %3912 = vst [vmem:[#allocation2 + $0x110] sm:$0xff] %v3876
      %3913 = vst [vmem:[#allocation2 + $0x118] sm:$0x3f] %v3877
      %v3914 = vld [vmem:[%s208 + $0x10] sm:$0xc]
      %v3915 = vld [vmem:[%s208 + $0x14] sm:$0xf]
      %v3916 = vld [vmem:[%s208 + $0x18] sm:$0xf]
      %v3917 = vld [vmem:[%s208 + $0x1c] sm:$0xf]
      %v3918 = vld [vmem:[%s208 + $0x20] sm:$0xf]
      %v3919 = vld [vmem:[%s208 + $0x24] sm:$0xf]
      %v3920 = vld [vmem:[%s208 + $0x28] sm:$0xf]
      %v3921 = vld [vmem:[%s208 + $0x2c] sm:$0xf]
      %v3922 = vld [vmem:[%s208 + $0x30] sm:$0xf]
      %v3923 = vld [vmem:[%s208 + $0x34] sm:$0xf]
      %v3924 = vld [vmem:[%s208 + $0x38] sm:$0xf]
      %v3925 = vld [vmem:[%s208 + $0x3c] sm:$0xf]
      %v3926 = vld [vmem:[%s208 + $0x40] sm:$0xf]
      %v3927 = vld [vmem:[%s208 + $0x44] sm:$0xf]
      %v3928 = vld [vmem:[%s208 + $0x48] sm:$0xf]
      %v3929 = vld [vmem:[%s208 + $0x4c] sm:$0xf]
      %v3930 = vld [vmem:[%s208 + $0x50] sm:$0xf]
      %v3931 = vld [vmem:[%s208 + $0x54] sm:$0xf]
      %v3932 = vld [vmem:[%s208 + $0x58] sm:$0xf]
      %v3933 = vld [vmem:[%s208 + $0x5c] sm:$0xf]
      %v3934 = vld [vmem:[%s208 + $0x60] sm:$0xf]
      %v3935 = vld [vmem:[%s208 + $0x64] sm:$0xf]
      %v3936 = vld [vmem:[%s208 + $0x68] sm:$0xf]
      %v3937 = vld [vmem:[%s208 + $0x6c] sm:$0xf]
      %v3938 = vld [vmem:[%s208 + $0x70] sm:$0xf]
      %v3939 = vld [vmem:[%s208 + $0x74] sm:$0xf]
      %v3940 = vld [vmem:[%s208 + $0x78] sm:$0xf]
      %v3941 = vld [vmem:[%s208 + $0x7c] sm:$0xf]
      %v3942 = vld [vmem:[%s208 + $0x80] sm:$0xf]
      %v3943 = vld [vmem:[%s208 + $0x84] sm:$0xf]
      %v3944 = vld [vmem:[%s208 + $0x88] sm:$0xf]
      %v3945 = vld [vmem:[%s208 + $0x8c] sm:$0xf]
      %v3946 = vld [vmem:[%s208 + $0x90] sm:$0xf]
      %v3947 = vld [vmem:[%s208 + $0x94] sm:$0xf]
      %v3948 = vld [vmem:[%s208 + $0x98] sm:$0xf]
      %v3949 = vld [vmem:[%s208 + $0x9c] sm:$0xf]
      %v3950 = vld [vmem:[%s208 + $0xa0] sm:$0x3]
      %s3951 = scalar_lea.vmem %s212, 28
      %v3952 = vld [vmem:[%s3951] sm:$0xf]
      %v3990 = vunpack.c.l.b16 %v3914
      %v3991 = vunpack.c.l.b16 %v3915
      %v3992 = vunpack.c.l.b16 %v3916
      %v3993 = vunpack.c.l.b16 %v3917
      %v3994 = vunpack.c.l.b16 %v3918
      %v3995 = vunpack.c.l.b16 %v3919
      %v3996 = vunpack.c.l.b16 %v3920
      %v3997 = vunpack.c.l.b16 %v3921
      %v3998 = vunpack.c.l.b16 %v3922
      %v3999 = vunpack.c.l.b16 %v3923
      %v4000 = vunpack.c.l.b16 %v3924
      %v4001 = vunpack.c.l.b16 %v3925
      %v4002 = vunpack.c.l.b16 %v3926
      %v4003 = vunpack.c.l.b16 %v3927
      %v4004 = vunpack.c.l.b16 %v3928
      %v4005 = vunpack.c.l.b16 %v3929
      %v4006 = vunpack.c.l.b16 %v3930
      %v4007 = vunpack.c.l.b16 %v3931
      %v4008 = vunpack.c.l.b16 %v3932
      %v4009 = vunpack.c.l.b16 %v3933
      %v4010 = vunpack.c.l.b16 %v3934
      %v4011 = vunpack.c.l.b16 %v3935
      %v4012 = vunpack.c.l.b16 %v3936
      %v4013 = vunpack.c.l.b16 %v3937
      %v4014 = vunpack.c.l.b16 %v3938
      %v4015 = vunpack.c.l.b16 %v3939
      %v4016 = vunpack.c.l.b16 %v3940
      %v4017 = vunpack.c.l.b16 %v3941
      %v4018 = vunpack.c.l.b16 %v3942
      %v4019 = vunpack.c.l.b16 %v3943
      %v4020 = vunpack.c.l.b16 %v3944
      %v4021 = vunpack.c.l.b16 %v3945
      %v4022 = vunpack.c.l.b16 %v3946
      %v4023 = vunpack.c.l.b16 %v3947
      %v4024 = vunpack.c.l.b16 %v3948
      %v4025 = vunpack.c.l.b16 %v3949
      %v4026 = vunpack.c.l.b16 %v3950
      %v4027 = vpack.c.b16 %v3991, %v3990
      %v4028 = vpack.c.b16 %v3993, %v3992
      %v4029 = vpack.c.b16 %v3995, %v3994
      %v4030 = vpack.c.b16 %v3997, %v3996
      %v4031 = vpack.c.b16 %v3999, %v3998
      %v4032 = vpack.c.b16 %v4001, %v4000
      %v4033 = vpack.c.b16 %v4003, %v4002
      %v4034 = vpack.c.b16 %v4005, %v4004
      %v4035 = vpack.c.b16 %v4007, %v4006
      %v4036 = vpack.c.b16 %v4009, %v4008
      %v4037 = vpack.c.b16 %v4011, %v4010
      %v4038 = vpack.c.b16 %v4013, %v4012
      %v4039 = vpack.c.b16 %v4015, %v4014
      %v4040 = vpack.c.b16 %v4017, %v4016
      %v4041 = vpack.c.b16 %v4019, %v4018
      %v4042 = vpack.c.b16 %v4021, %v4020
      %v4043 = vpack.c.b16 %v4023, %v4022
      %v4044 = vpack.c.b16 %v4025, %v4024
      %v4045 = vpack.c.b16 %v4026, %v4026
      %vm4046 = vsmask.f32 5376
      %v4048 = vshrl.u32 %v4027, 16
      %v4050 = vrot.slane %v4048, 2
      %v4051 = vshll.u32 %v4027, 16
      %v4053 = vrot.slane %v4051, 3
      %v4054 = vor.u32 %v4050, %v4053
      %v4056 = vshrl.u32 %v4028, 16
      %v4058 = vrot.slane %v4056, 2
      %v4059 = vshll.u32 %v4028, 16
      %v4061 = vrot.slane %v4059, 3
      %v4062 = vor.u32 %v4058, %v4061
      %v4063 = vsel %vm4046, %v4054, %v4062
      %v4065 = vshrl.u32 %v4029, 16
      %v4067 = vrot.slane %v4065, 2
      %v4068 = vshll.u32 %v4029, 16
      %v4070 = vrot.slane %v4068, 3
      %v4071 = vor.u32 %v4067, %v4070
      %v4072 = vsel %vm4046, %v4062, %v4071
      %v4074 = vshrl.u32 %v4030, 16
      %v4076 = vrot.slane %v4074, 2
      %v4077 = vshll.u32 %v4030, 16
      %v4079 = vrot.slane %v4077, 3
      %v4080 = vor.u32 %v4076, %v4079
      %v4081 = vsel %vm4046, %v4071, %v4080
      %v4083 = vshrl.u32 %v4031, 16
      %v4085 = vrot.slane %v4083, 2
      %v4086 = vshll.u32 %v4031, 16
      %v4088 = vrot.slane %v4086, 3
      %v4089 = vor.u32 %v4085, %v4088
      %v4090 = vsel %vm4046, %v4080, %v4089
      %v4092 = vshrl.u32 %v4032, 16
      %v4094 = vrot.slane %v4092, 2
      %v4095 = vshll.u32 %v4032, 16
      %v4097 = vrot.slane %v4095, 3
      %v4098 = vor.u32 %v4094, %v4097
      %v4099 = vsel %vm4046, %v4089, %v4098
      %v4101 = vshrl.u32 %v4033, 16
      %v4103 = vrot.slane %v4101, 2
      %v4104 = vshll.u32 %v4033, 16
      %v4106 = vrot.slane %v4104, 3
      %v4107 = vor.u32 %v4103, %v4106
      %v4108 = vsel %vm4046, %v4098, %v4107
      %v4110 = vshrl.u32 %v4034, 16
      %v4112 = vrot.slane %v4110, 2
      %v4113 = vshll.u32 %v4034, 16
      %v4115 = vrot.slane %v4113, 3
      %v4116 = vor.u32 %v4112, %v4115
      %v4117 = vsel %vm4046, %v4107, %v4116
      %v4119 = vshrl.u32 %v4035, 16
      %v4121 = vrot.slane %v4119, 2
      %v4122 = vshll.u32 %v4035, 16
      %v4124 = vrot.slane %v4122, 3
      %v4125 = vor.u32 %v4121, %v4124
      %v4126 = vsel %vm4046, %v4116, %v4125
      %v4128 = vshrl.u32 %v4036, 16
      %v4130 = vrot.slane %v4128, 2
      %v4131 = vshll.u32 %v4036, 16
      %v4133 = vrot.slane %v4131, 3
      %v4134 = vor.u32 %v4130, %v4133
      %v4135 = vsel %vm4046, %v4125, %v4134
      %v4137 = vshrl.u32 %v4037, 16
      %v4139 = vrot.slane %v4137, 2
      %v4140 = vshll.u32 %v4037, 16
      %v4142 = vrot.slane %v4140, 3
      %v4143 = vor.u32 %v4139, %v4142
      %v4144 = vsel %vm4046, %v4134, %v4143
      %v4146 = vshrl.u32 %v4038, 16
      %v4148 = vrot.slane %v4146, 2
      %v4149 = vshll.u32 %v4038, 16
      %v4151 = vrot.slane %v4149, 3
      %v4152 = vor.u32 %v4148, %v4151
      %v4153 = vsel %vm4046, %v4143, %v4152
      %v4155 = vshrl.u32 %v4039, 16
      %v4157 = vrot.slane %v4155, 2
      %v4158 = vshll.u32 %v4039, 16
      %v4160 = vrot.slane %v4158, 3
      %v4161 = vor.u32 %v4157, %v4160
      %v4162 = vsel %vm4046, %v4152, %v4161
      %v4164 = vshrl.u32 %v4040, 16
      %v4166 = vrot.slane %v4164, 2
      %v4167 = vshll.u32 %v4040, 16
      %v4169 = vrot.slane %v4167, 3
      %v4170 = vor.u32 %v4166, %v4169
      %v4171 = vsel %vm4046, %v4161, %v4170
      %v4173 = vshrl.u32 %v4041, 16
      %v4175 = vrot.slane %v4173, 2
      %v4176 = vshll.u32 %v4041, 16
      %v4178 = vrot.slane %v4176, 3
      %v4179 = vor.u32 %v4175, %v4178
      %v4180 = vsel %vm4046, %v4170, %v4179
      %v4182 = vshrl.u32 %v4042, 16
      %v4184 = vrot.slane %v4182, 2
      %v4185 = vshll.u32 %v4042, 16
      %v4187 = vrot.slane %v4185, 3
      %v4188 = vor.u32 %v4184, %v4187
      %v4189 = vsel %vm4046, %v4179, %v4188
      %v4191 = vshrl.u32 %v4043, 16
      %v4193 = vrot.slane %v4191, 2
      %v4194 = vshll.u32 %v4043, 16
      %v4196 = vrot.slane %v4194, 3
      %v4197 = vor.u32 %v4193, %v4196
      %v4198 = vsel %vm4046, %v4188, %v4197
      %v4200 = vshrl.u32 %v4044, 16
      %v4202 = vrot.slane %v4200, 2
      %v4203 = vshll.u32 %v4044, 16
      %v4205 = vrot.slane %v4203, 3
      %v4206 = vor.u32 %v4202, %v4205
      %v4207 = vsel %vm4046, %v4197, %v4206
      %v4209 = vshrl.u32 %v4045, 16
      %v4211 = vrot.slane %v4209, 2
      %v4212 = vshll.u32 %v4045, 16
      %v4214 = vrot.slane %v4212, 3
      %v4215 = vor.u32 %v4211, %v4214
      %v4216 = vsel %vm4046, %v4206, %v4215
      %v4218 = vsel %vm353, %v4063, 0
      %v4221 = vsel %vm353, %v4072, 0
      %v4224 = vsel %vm353, %v4081, 0
      %v4227 = vsel %vm353, %v4090, 0
      %v4230 = vsel %vm353, %v4099, 0
      %v4233 = vsel %vm353, %v4108, 0
      %v4236 = vsel %vm353, %v4117, 0
      %v4239 = vsel %vm353, %v4126, 0
      %v4242 = vsel %vm353, %v4135, 0
      %v4245 = vsel %vm353, %v4144, 0
      %v4248 = vsel %vm353, %v4153, 0
      %v4251 = vsel %vm353, %v4162, 0
      %v4254 = vsel %vm353, %v4171, 0
      %v4257 = vsel %vm353, %v4180, 0
      %v4260 = vsel %vm353, %v4189, 0
      %v4263 = vsel %vm353, %v4198, 0
      %v4266 = vsel %vm353, %v4207, 0
      %v4269 = vsel %vm353, %v4216, 0
      %v4272 = vsel %vm408, %v3952, 0
      %4274 = vmatprep.subr.bf16.mxu0 0
      %4275 = vmatpush1.bf16.msra.mxu0 %v4272
      %4276 = vmatprep.subr.bf16.mxu0 0
      %4277 = vmatpush1.bf16.msra.mxu0 0
      %4278 = vmatprep.subr.bf16.mxu0 0
      %4279 = vmatpush1.bf16.msra.mxu0 0
      %4280 = vmatprep.subr.bf16.mxu0 0
      %4281 = vmatpush1.bf16.msra.mxu0 0
      %4282 = vmatprep.subr.bf16.mxu0 0
      %4283 = vmatpush1.bf16.msra.mxu0 0
      %4284 = vmatprep.subr.bf16.mxu0 0
      %4285 = vmatpush1.bf16.msra.mxu0 0
      %4286 = vmatprep.subr.bf16.mxu0 0
      %4287 = vmatpush1.bf16.msra.mxu0 0
      %4288 = vmatprep.subr.bf16.mxu0 0
      %4289 = vmatpush1.bf16.msra.mxu0 0
      %4290 = vmatprep.subr.bf16.mxu0 0
      %4291 = vmatpush1.bf16.msra.mxu0 0
      %4292 = vmatprep.subr.bf16.mxu0 0
      %4293 = vmatpush1.bf16.msra.mxu0 0
      %4294 = vmatprep.subr.bf16.mxu0 0
      %4295 = vmatpush1.bf16.msra.mxu0 0
      %4296 = vmatprep.subr.bf16.mxu0 0
      %4297 = vmatpush1.bf16.msra.mxu0 0
      %4298 = vmatprep.subr.bf16.mxu0 0
      %4299 = vmatpush1.bf16.msra.mxu0 0
      %4300 = vmatprep.subr.bf16.mxu0 0
      %4301 = vmatpush1.bf16.msra.mxu0 0
      %4302 = vmatprep.subr.bf16.mxu0 0
      %4303 = vmatpush1.bf16.msra.mxu0 0
      %4304 = vmatprep.subr.bf16.mxu0 0
      %4305 = vmatpush1.bf16.msra.mxu0 0
      %4306 = vmatprep.mubr.bf16.mxu0 0
      %4307 = vmatmul.mubr.bf16.gmra.mrb[0].mxu0 %v4218
      %v4308 = vpop.f32.mrb[0].mxu0
      %v4309 = vadd.f32 0.0, %v4308
      %v4310 = vpop.f32.mrb[0].mxu0
      %v4311 = vpop.f32.mrb[0].mxu0
      %v4312 = vadd.f32 0.0, %v4311
      %v4313 = vpop.f32.mrb[0].mxu0
      %4314 = vmatprep.mubr.bf16.mxu0 0
      %4315 = vmatmul.mubr.bf16.gmra.mrb[0].mxu0 %v4221
      %v4316 = vpop.f32.mrb[0].mxu0
      %v4317 = vadd.f32 0.0, %v4316
      %v4318 = vpop.f32.mrb[0].mxu0
      %v4319 = vpop.f32.mrb[0].mxu0
      %v4320 = vadd.f32 0.0, %v4319
      %v4321 = vpop.f32.mrb[0].mxu0
      %4322 = vmatprep.mubr.bf16.mxu0 0
      %4323 = vmatmul.mubr.bf16.gmra.mrb[0].mxu0 %v4224
      %v4324 = vpop.f32.mrb[0].mxu0
      %v4325 = vadd.f32 0.0, %v4324
      %v4326 = vpop.f32.mrb[0].mxu0
      %v4327 = vpop.f32.mrb[0].mxu0
      %v4328 = vadd.f32 0.0, %v4327
      %v4329 = vpop.f32.mrb[0].mxu0
      %4330 = vmatprep.mubr.bf16.mxu0 0
      %4331 = vmatmul.mubr.bf16.gmra.mrb[0].mxu0 %v4227
      %v4332 = vpop.f32.mrb[0].mxu0
      %v4333 = vadd.f32 0.0, %v4332
      %v4334 = vpop.f32.mrb[0].mxu0
      %v4335 = vpop.f32.mrb[0].mxu0
      %v4336 = vadd.f32 0.0, %v4335
      %v4337 = vpop.f32.mrb[0].mxu0
      %4338 = vmatprep.mubr.bf16.mxu0 0
      %4339 = vmatmul.mubr.bf16.gmra.mrb[0].mxu0 %v4230
      %v4340 = vpop.f32.mrb[0].mxu0
      %v4341 = vadd.f32 0.0, %v4340
      %v4342 = vpop.f32.mrb[0].mxu0
      %v4343 = vpop.f32.mrb[0].mxu0
      %v4344 = vadd.f32 0.0, %v4343
      %v4345 = vpop.f32.mrb[0].mxu0
      %4346 = vmatprep.mubr.bf16.mxu0 0
      %4347 = vmatmul.mubr.bf16.gmra.mrb[0].mxu0 %v4233
      %v4348 = vpop.f32.mrb[0].mxu0
      %v4349 = vadd.f32 0.0, %v4348
      %v4350 = vpop.f32.mrb[0].mxu0
      %v4351 = vpop.f32.mrb[0].mxu0
      %v4352 = vadd.f32 0.0, %v4351
      %v4353 = vpop.f32.mrb[0].mxu0
      %4354 = vmatprep.mubr.bf16.mxu0 0
      %4355 = vmatmul.mubr.bf16.gmra.mrb[0].mxu0 %v4236
      %v4356 = vpop.f32.mrb[0].mxu0
      %v4357 = vadd.f32 0.0, %v4356
      %v4358 = vpop.f32.mrb[0].mxu0
      %v4359 = vpop.f32.mrb[0].mxu0
      %v4360 = vadd.f32 0.0, %v4359
      %v4361 = vpop.f32.mrb[0].mxu0
      %4362 = vmatprep.mubr.bf16.mxu0 0
      %4363 = vmatmul.mubr.bf16.gmra.mrb[0].mxu0 %v4239
      %v4364 = vpop.f32.mrb[0].mxu0
      %v4365 = vadd.f32 0.0, %v4364
      %v4366 = vpop.f32.mrb[0].mxu0
      %v4367 = vpop.f32.mrb[0].mxu0
      %v4368 = vadd.f32 0.0, %v4367
      %v4369 = vpop.f32.mrb[0].mxu0
      %4370 = vmatprep.mubr.bf16.mxu0 0
      %4371 = vmatmul.mubr.bf16.gmra.mrb[0].mxu0 %v4242
      %v4372 = vpop.f32.mrb[0].mxu0
      %v4373 = vadd.f32 0.0, %v4372
      %v4374 = vpop.f32.mrb[0].mxu0
      %v4375 = vpop.f32.mrb[0].mxu0
      %v4376 = vadd.f32 0.0, %v4375
      %v4377 = vpop.f32.mrb[0].mxu0
      %4378 = vmatprep.mubr.bf16.mxu0 0
      %4379 = vmatmul.mubr.bf16.gmra.mrb[0].mxu0 %v4245
      %v4380 = vpop.f32.mrb[0].mxu0
      %v4381 = vadd.f32 0.0, %v4380
      %v4382 = vpop.f32.mrb[0].mxu0
      %v4383 = vpop.f32.mrb[0].mxu0
      %v4384 = vadd.f32 0.0, %v4383
      %v4385 = vpop.f32.mrb[0].mxu0
      %4386 = vmatprep.mubr.bf16.mxu0 0
      %4387 = vmatmul.mubr.bf16.gmra.mrb[0].mxu0 %v4248
      %v4388 = vpop.f32.mrb[0].mxu0
      %v4389 = vadd.f32 0.0, %v4388
      %v4390 = vpop.f32.mrb[0].mxu0
      %v4391 = vpop.f32.mrb[0].mxu0
      %v4392 = vadd.f32 0.0, %v4391
      %v4393 = vpop.f32.mrb[0].mxu0
      %4394 = vmatprep.mubr.bf16.mxu0 0
      %4395 = vmatmul.mubr.bf16.gmra.mrb[0].mxu0 %v4251
      %v4396 = vpop.f32.mrb[0].mxu0
      %v4397 = vadd.f32 0.0, %v4396
      %v4398 = vpop.f32.mrb[0].mxu0
      %v4399 = vpop.f32.mrb[0].mxu0
      %v4400 = vadd.f32 0.0, %v4399
      %v4401 = vpop.f32.mrb[0].mxu0
      %4402 = vmatprep.mubr.bf16.mxu0 0
      %4403 = vmatmul.mubr.bf16.gmra.mrb[0].mxu0 %v4254
      %v4404 = vpop.f32.mrb[0].mxu0
      %v4405 = vadd.f32 0.0, %v4404
      %v4406 = vpop.f32.mrb[0].mxu0
      %v4407 = vpop.f32.mrb[0].mxu0
      %v4408 = vadd.f32 0.0, %v4407
      %v4409 = vpop.f32.mrb[0].mxu0
      %4410 = vmatprep.mubr.bf16.mxu0 0
      %4411 = vmatmul.mubr.bf16.gmra.mrb[0].mxu0 %v4257
      %v4412 = vpop.f32.mrb[0].mxu0
      %v4413 = vadd.f32 0.0, %v4412
      %v4414 = vpop.f32.mrb[0].mxu0
      %v4415 = vpop.f32.mrb[0].mxu0
      %v4416 = vadd.f32 0.0, %v4415
      %v4417 = vpop.f32.mrb[0].mxu0
      %4418 = vmatprep.mubr.bf16.mxu0 0
      %4419 = vmatmul.mubr.bf16.gmra.mrb[0].mxu0 %v4260
      %v4420 = vpop.f32.mrb[0].mxu0
      %v4421 = vadd.f32 0.0, %v4420
      %v4422 = vpop.f32.mrb[0].mxu0
      %v4423 = vpop.f32.mrb[0].mxu0
      %v4424 = vadd.f32 0.0, %v4423
      %v4425 = vpop.f32.mrb[0].mxu0
      %4426 = vmatprep.mubr.bf16.mxu0 0
      %4427 = vmatmul.mubr.bf16.gmra.mrb[0].mxu0 %v4263
      %v4428 = vpop.f32.mrb[0].mxu0
      %v4429 = vadd.f32 0.0, %v4428
      %v4430 = vpop.f32.mrb[0].mxu0
      %v4431 = vpop.f32.mrb[0].mxu0
      %v4432 = vadd.f32 0.0, %v4431
      %v4433 = vpop.f32.mrb[0].mxu0
      %4434 = vmatprep.mubr.bf16.mxu0 0
      %4435 = vmatmul.mubr.bf16.gmra.mrb[0].mxu0 %v4266
      %v4436 = vpop.f32.mrb[0].mxu0
      %v4437 = vadd.f32 0.0, %v4436
      %v4438 = vpop.f32.mrb[0].mxu0
      %v4439 = vpop.f32.mrb[0].mxu0
      %v4440 = vadd.f32 0.0, %v4439
      %v4441 = vpop.f32.mrb[0].mxu0
      %4442 = vmatprep.mubr.bf16.mxu0 0
      %4443 = vmatmul.mubr.bf16.gmra.mrb[0].mxu0 %v4269
      %v4444 = vpop.f32.mrb[0].mxu0
      %v4445 = vadd.f32 0.0, %v4444
      %v4446 = vpop.f32.mrb[0].mxu0
      %v4447 = vpop.f32.mrb[0].mxu0
      %v4448 = vadd.f32 0.0, %v4447
      %v4449 = vpop.f32.mrb[0].mxu0
      %4450 = vdwg.mxu0
      %v4451 = vld [vmem:[#allocation2] sm:$0xff]
      %v4452 = vld [vmem:[#allocation2 + $0x8] sm:$0xff]
      %v4453 = vld [vmem:[#allocation2 + $0x10] sm:$0xff]
      %v4454 = vld [vmem:[#allocation2 + $0x18] sm:$0xff]
      %v4455 = vld [vmem:[#allocation2 + $0x20] sm:$0xff]
      %v4456 = vld [vmem:[#allocation2 + $0x28] sm:$0xff]
      %v4457 = vld [vmem:[#allocation2 + $0x30] sm:$0xff]
      %v4458 = vld [vmem:[#allocation2 + $0x38] sm:$0xff]
      %v4459 = vld [vmem:[#allocation2 + $0x40] sm:$0xff]
      %v4460 = vld [vmem:[#allocation2 + $0x48] sm:$0xff]
      %v4461 = vld [vmem:[#allocation2 + $0x50] sm:$0xff]
      %v4462 = vld [vmem:[#allocation2 + $0x58] sm:$0xff]
      %v4463 = vld [vmem:[#allocation2 + $0x60] sm:$0xff]
      %v4464 = vld [vmem:[#allocation2 + $0x68] sm:$0xff]
      %v4465 = vld [vmem:[#allocation2 + $0x70] sm:$0xff]
      %v4466 = vld [vmem:[#allocation2 + $0x78] sm:$0xff]
      %v4467 = vld [vmem:[#allocation2 + $0x80] sm:$0xff]
      %v4468 = vld [vmem:[#allocation2 + $0x88] sm:$0xff]
      %v4469 = vld [vmem:[#allocation2 + $0x90] sm:$0xff]
      %v4470 = vld [vmem:[#allocation2 + $0x98] sm:$0xff]
      %v4471 = vld [vmem:[#allocation2 + $0xa0] sm:$0xff]
      %v4472 = vld [vmem:[#allocation2 + $0xa8] sm:$0xff]
      %v4473 = vld [vmem:[#allocation2 + $0xb0] sm:$0xff]
      %v4474 = vld [vmem:[#allocation2 + $0xb8] sm:$0xff]
      %v4475 = vld [vmem:[#allocation2 + $0xc0] sm:$0xff]
      %v4476 = vld [vmem:[#allocation2 + $0xc8] sm:$0xff]
      %v4477 = vld [vmem:[#allocation2 + $0xd0] sm:$0xff]
      %v4478 = vld [vmem:[#allocation2 + $0xd8] sm:$0xff]
      %v4479 = vld [vmem:[#allocation2 + $0xe0] sm:$0xff]
      %v4480 = vld [vmem:[#allocation2 + $0xe8] sm:$0xff]
      %v4481 = vld [vmem:[#allocation2 + $0xf0] sm:$0xff]
      %v4482 = vld [vmem:[#allocation2 + $0xf8] sm:$0xff]
      %v4483 = vld [vmem:[#allocation2 + $0x100] sm:$0xff]
      %v4484 = vld [vmem:[#allocation2 + $0x108] sm:$0xff]
      %v4485 = vld [vmem:[#allocation2 + $0x110] sm:$0xff]
      %v4486 = vld [vmem:[#allocation2 + $0x118] sm:$0x3f]
      %v4487 = vadd.f32 %v4451, %v4309
      %v4488 = vadd.f32 %v4452, %v4312
      %v4489 = vadd.f32 %v4453, %v4317
      %v4490 = vadd.f32 %v4454, %v4320
      %v4491 = vadd.f32 %v4455, %v4325
      %v4492 = vadd.f32 %v4456, %v4328
      %v4493 = vadd.f32 %v4457, %v4333
      %v4494 = vadd.f32 %v4458, %v4336
      %v4495 = vadd.f32 %v4459, %v4341
      %v4496 = vadd.f32 %v4460, %v4344
      %v4497 = vadd.f32 %v4461, %v4349
      %v4498 = vadd.f32 %v4462, %v4352
      %v4499 = vadd.f32 %v4463, %v4357
      %v4500 = vadd.f32 %v4464, %v4360
      %v4501 = vadd.f32 %v4465, %v4365
      %v4502 = vadd.f32 %v4466, %v4368
      %v4503 = vadd.f32 %v4467, %v4373
      %v4504 = vadd.f32 %v4468, %v4376
      %v4505 = vadd.f32 %v4469, %v4381
      %v4506 = vadd.f32 %v4470, %v4384
      %v4507 = vadd.f32 %v4471, %v4389
      %v4508 = vadd.f32 %v4472, %v4392
      %v4509 = vadd.f32 %v4473, %v4397
      %v4510 = vadd.f32 %v4474, %v4400
      %v4511 = vadd.f32 %v4475, %v4405
      %v4512 = vadd.f32 %v4476, %v4408
      %v4513 = vadd.f32 %v4477, %v4413
      %v4514 = vadd.f32 %v4478, %v4416
      %v4515 = vadd.f32 %v4479, %v4421
      %v4516 = vadd.f32 %v4480, %v4424
      %v4517 = vadd.f32 %v4481, %v4429
      %v4518 = vadd.f32 %v4482, %v4432
      %v4519 = vadd.f32 %v4483, %v4437
      %v4520 = vadd.f32 %v4484, %v4440
      %v4521 = vadd.f32 %v4485, %v4445
      %v4522 = vadd.f32 %v4486, %v4448
      %4523 = vst [vmem:[#allocation2] sm:$0xff] %v4487
      %4524 = vst [vmem:[#allocation2 + $0x8] sm:$0xff] %v4488
      %4525 = vst [vmem:[#allocation2 + $0x10] sm:$0xff] %v4489
      %4526 = vst [vmem:[#allocation2 + $0x18] sm:$0xff] %v4490
      %4527 = vst [vmem:[#allocation2 + $0x20] sm:$0xff] %v4491
      %4528 = vst [vmem:[#allocation2 + $0x28] sm:$0xff] %v4492
      %4529 = vst [vmem:[#allocation2 + $0x30] sm:$0xff] %v4493
      %4530 = vst [vmem:[#allocation2 + $0x38] sm:$0xff] %v4494
      %4531 = vst [vmem:[#allocation2 + $0x40] sm:$0xff] %v4495
      %4532 = vst [vmem:[#allocation2 + $0x48] sm:$0xff] %v4496
      %4533 = vst [vmem:[#allocation2 + $0x50] sm:$0xff] %v4497
      %4534 = vst [vmem:[#allocation2 + $0x58] sm:$0xff] %v4498
      %4535 = vst [vmem:[#allocation2 + $0x60] sm:$0xff] %v4499
      %4536 = vst [vmem:[#allocation2 + $0x68] sm:$0xff] %v4500
      %4537 = vst [vmem:[#allocation2 + $0x70] sm:$0xff] %v4501
      %4538 = vst [vmem:[#allocation2 + $0x78] sm:$0xff] %v4502
      %4539 = vst [vmem:[#allocation2 + $0x80] sm:$0xff] %v4503
      %4540 = vst [vmem:[#allocation2 + $0x88] sm:$0xff] %v4504
      %4541 = vst [vmem:[#allocation2 + $0x90] sm:$0xff] %v4505
      %4542 = vst [vmem:[#allocation2 + $0x98] sm:$0xff] %v4506
      %4543 = vst [vmem:[#allocation2 + $0xa0] sm:$0xff] %v4507
      %4544 = vst [vmem:[#allocation2 + $0xa8] sm:$0xff] %v4508
      %4545 = vst [vmem:[#allocation2 + $0xb0] sm:$0xff] %v4509
      %4546 = vst [vmem:[#allocation2 + $0xb8] sm:$0xff] %v4510
      %4547 = vst [vmem:[#allocation2 + $0xc0] sm:$0xff] %v4511
      %4548 = vst [vmem:[#allocation2 + $0xc8] sm:$0xff] %v4512
      %4549 = vst [vmem:[#allocation2 + $0xd0] sm:$0xff] %v4513
      %4550 = vst [vmem:[#allocation2 + $0xd8] sm:$0xff] %v4514
      %4551 = vst [vmem:[#allocation2 + $0xe0] sm:$0xff] %v4515
      %4552 = vst [vmem:[#allocation2 + $0xe8] sm:$0xff] %v4516
      %4553 = vst [vmem:[#allocation2 + $0xf0] sm:$0xff] %v4517
      %4554 = vst [vmem:[#allocation2 + $0xf8] sm:$0xff] %v4518
      %4555 = vst [vmem:[#allocation2 + $0x100] sm:$0xff] %v4519
      %4556 = vst [vmem:[#allocation2 + $0x108] sm:$0xff] %v4520
      %4557 = vst [vmem:[#allocation2 + $0x110] sm:$0xff] %v4521
      %4558 = vst [vmem:[#allocation2 + $0x118] sm:$0x3f] %v4522
      %v4559 = vld [vmem:[%s208 + $0x10] sm:$0x8]
      %v4560 = vld [vmem:[%s208 + $0x14] sm:$0xf]
      %v4561 = vld [vmem:[%s208 + $0x18] sm:$0xf]
      %v4562 = vld [vmem:[%s208 + $0x1c] sm:$0xf]
      %v4563 = vld [vmem:[%s208 + $0x20] sm:$0xf]
      %v4564 = vld [vmem:[%s208 + $0x24] sm:$0xf]
      %v4565 = vld [vmem:[%s208 + $0x28] sm:$0xf]
      %v4566 = vld [vmem:[%s208 + $0x2c] sm:$0xf]
      %v4567 = vld [vmem:[%s208 + $0x30] sm:$0xf]
      %v4568 = vld [vmem:[%s208 + $0x34] sm:$0xf]
      %v4569 = vld [vmem:[%s208 + $0x38] sm:$0xf]
      %v4570 = vld [vmem:[%s208 + $0x3c] sm:$0xf]
      %v4571 = vld [vmem:[%s208 + $0x40] sm:$0xf]
      %v4572 = vld [vmem:[%s208 + $0x44] sm:$0xf]
      %v4573 = vld [vmem:[%s208 + $0x48] sm:$0xf]
      %v4574 = vld [vmem:[%s208 + $0x4c] sm:$0xf]
      %v4575 = vld [vmem:[%s208 + $0x50] sm:$0xf]
      %v4576 = vld [vmem:[%s208 + $0x54] sm:$0xf]
      %v4577 = vld [vmem:[%s208 + $0x58] sm:$0xf]
      %v4578 = vld [vmem:[%s208 + $0x5c] sm:$0xf]
      %v4579 = vld [vmem:[%s208 + $0x60] sm:$0xf]
      %v4580 = vld [vmem:[%s208 + $0x64] sm:$0xf]
      %v4581 = vld [vmem:[%s208 + $0x68] sm:$0xf]
      %v4582 = vld [vmem:[%s208 + $0x6c] sm:$0xf]
      %v4583 = vld [vmem:[%s208 + $0x70] sm:$0xf]
      %v4584 = vld [vmem:[%s208 + $0x74] sm:$0xf]
      %v4585 = vld [vmem:[%s208 + $0x78] sm:$0xf]
      %v4586 = vld [vmem:[%s208 + $0x7c] sm:$0xf]
      %v4587 = vld [vmem:[%s208 + $0x80] sm:$0xf]
      %v4588 = vld [vmem:[%s208 + $0x84] sm:$0xf]
      %v4589 = vld [vmem:[%s208 + $0x88] sm:$0xf]
      %v4590 = vld [vmem:[%s208 + $0x8c] sm:$0xf]
      %v4591 = vld [vmem:[%s208 + $0x90] sm:$0xf]
      %v4592 = vld [vmem:[%s208 + $0x94] sm:$0xf]
      %v4593 = vld [vmem:[%s208 + $0x98] sm:$0xf]
      %v4594 = vld [vmem:[%s208 + $0x9c] sm:$0xf]
      %v4595 = vld [vmem:[%s208 + $0xa0] sm:$0x3]
      %s4596 = scalar_lea.vmem %s212, 32
      %v4597 = vld [vmem:[%s4596] sm:$0xf]
      %v4635 = vunpack.c.l.b16 %v4559
      %v4636 = vunpack.c.l.b16 %v4560
      %v4637 = vunpack.c.l.b16 %v4561
      %v4638 = vunpack.c.l.b16 %v4562
      %v4639 = vunpack.c.l.b16 %v4563
      %v4640 = vunpack.c.l.b16 %v4564
      %v4641 = vunpack.c.l.b16 %v4565
      %v4642 = vunpack.c.l.b16 %v4566
      %v4643 = vunpack.c.l.b16 %v4567
      %v4644 = vunpack.c.l.b16 %v4568
      %v4645 = vunpack.c.l.b16 %v4569
      %v4646 = vunpack.c.l.b16 %v4570
      %v4647 = vunpack.c.l.b16 %v4571
      %v4648 = vunpack.c.l.b16 %v4572
      %v4649 = vunpack.c.l.b16 %v4573
      %v4650 = vunpack.c.l.b16 %v4574
      %v4651 = vunpack.c.l.b16 %v4575
      %v4652 = vunpack.c.l.b16 %v4576
      %v4653 = vunpack.c.l.b16 %v4577
      %v4654 = vunpack.c.l.b16 %v4578
      %v4655 = vunpack.c.l.b16 %v4579
      %v4656 = vunpack.c.l.b16 %v4580
      %v4657 = vunpack.c.l.b16 %v4581
      %v4658 = vunpack.c.l.b16 %v4582
      %v4659 = vunpack.c.l.b16 %v4583
      %v4660 = vunpack.c.l.b16 %v4584
      %v4661 = vunpack.c.l.b16 %v4585
      %v4662 = vunpack.c.l.b16 %v4586
      %v4663 = vunpack.c.l.b16 %v4587
      %v4664 = vunpack.c.l.b16 %v4588
      %v4665 = vunpack.c.l.b16 %v4589
      %v4666 = vunpack.c.l.b16 %v4590
      %v4667 = vunpack.c.l.b16 %v4591
      %v4668 = vunpack.c.l.b16 %v4592
      %v4669 = vunpack.c.l.b16 %v4593
      %v4670 = vunpack.c.l.b16 %v4594
      %v4671 = vunpack.c.l.b16 %v4595
      %v4672 = vpack.c.b16 %v4636, %v4635
      %v4673 = vpack.c.b16 %v4638, %v4637
      %v4674 = vpack.c.b16 %v4640, %v4639
      %v4675 = vpack.c.b16 %v4642, %v4641
      %v4676 = vpack.c.b16 %v4644, %v4643
      %v4677 = vpack.c.b16 %v4646, %v4645
      %v4678 = vpack.c.b16 %v4648, %v4647
      %v4679 = vpack.c.b16 %v4650, %v4649
      %v4680 = vpack.c.b16 %v4652, %v4651
      %v4681 = vpack.c.b16 %v4654, %v4653
      %v4682 = vpack.c.b16 %v4656, %v4655
      %v4683 = vpack.c.b16 %v4658, %v4657
      %v4684 = vpack.c.b16 %v4660, %v4659
      %v4685 = vpack.c.b16 %v4662, %v4661
      %v4686 = vpack.c.b16 %v4664, %v4663
      %v4687 = vpack.c.b16 %v4666, %v4665
      %v4688 = vpack.c.b16 %v4668, %v4667
      %v4689 = vpack.c.b16 %v4670, %v4669
      %v4690 = vpack.c.b16 %v4671, %v4671
      %vm4691 = vcmask 1044480
      %v4692 = vrot.slane %v4672, 3
      %v4693 = vrot.slane %v4673, 3
      %v4694 = vsel %vm4691, %v4692, %v4693
      %v4695 = vrot.slane %v4674, 3
      %v4696 = vsel %vm4691, %v4693, %v4695
      %v4697 = vrot.slane %v4675, 3
      %v4698 = vsel %vm4691, %v4695, %v4697
      %v4699 = vrot.slane %v4676, 3
      %v4700 = vsel %vm4691, %v4697, %v4699
      %v4701 = vrot.slane %v4677, 3
      %v4702 = vsel %vm4691, %v4699, %v4701
      %v4703 = vrot.slane %v4678, 3
      %v4704 = vsel %vm4691, %v4701, %v4703
      %v4705 = vrot.slane %v4679, 3
      %v4706 = vsel %vm4691, %v4703, %v4705
      %v4707 = vrot.slane %v4680, 3
      %v4708 = vsel %vm4691, %v4705, %v4707
      %v4709 = vrot.slane %v4681, 3
      %v4710 = vsel %vm4691, %v4707, %v4709
      %v4711 = vrot.slane %v4682, 3
      %v4712 = vsel %vm4691, %v4709, %v4711
      %v4713 = vrot.slane %v4683, 3
      %v4714 = vsel %vm4691, %v4711, %v4713
      %v4715 = vrot.slane %v4684, 3
      %v4716 = vsel %vm4691, %v4713, %v4715
      %v4717 = vrot.slane %v4685, 3
      %v4718 = vsel %vm4691, %v4715, %v4717
      %v4719 = vrot.slane %v4686, 3
      %v4720 = vsel %vm4691, %v4717, %v4719
      %v4721 = vrot.slane %v4687, 3
      %v4722 = vsel %vm4691, %v4719, %v4721
      %v4723 = vrot.slane %v4688, 3
      %v4724 = vsel %vm4691, %v4721, %v4723
      %v4725 = vrot.slane %v4689, 3
      %v4726 = vsel %vm4691, %v4723, %v4725
      %v4727 = vrot.slane %v4690, 3
      %v4728 = vsel %vm4691, %v4725, %v4727
      %v4730 = vsel %vm353, %v4694, 0
      %v4733 = vsel %vm353, %v4696, 0
      %v4736 = vsel %vm353, %v4698, 0
      %v4739 = vsel %vm353, %v4700, 0
      %v4742 = vsel %vm353, %v4702, 0
      %v4745 = vsel %vm353, %v4704, 0
      %v4748 = vsel %vm353, %v4706, 0
      %v4751 = vsel %vm353, %v4708, 0
      %v4754 = vsel %vm353, %v4710, 0
      %v4757 = vsel %vm353, %v4712, 0
      %v4760 = vsel %vm353, %v4714, 0
      %v4763 = vsel %vm353, %v4716, 0
      %v4766 = vsel %vm353, %v4718, 0
      %v4769 = vsel %vm353, %v4720, 0
      %v4772 = vsel %vm353, %v4722, 0
      %v4775 = vsel %vm353, %v4724, 0
      %v4778 = vsel %vm353, %v4726, 0
      %v4781 = vsel %vm353, %v4728, 0
      %v4784 = vsel %vm408, %v4597, 0
      %4786 = vmatprep.subr.bf16.mxu0 0
      %4787 = vmatpush1.bf16.msra.mxu0 %v4784
      %4788 = vmatprep.subr.bf16.mxu0 0
      %4789 = vmatpush1.bf16.msra.mxu0 0
      %4790 = vmatprep.subr.bf16.mxu0 0
      %4791 = vmatpush1.bf16.msra.mxu0 0
      %4792 = vmatprep.subr.bf16.mxu0 0
      %4793 = vmatpush1.bf16.msra.mxu0 0
      %4794 = vmatprep.subr.bf16.mxu0 0
      %4795 = vmatpush1.bf16.msra.mxu0 0
      %4796 = vmatprep.subr.bf16.mxu0 0
      %4797 = vmatpush1.bf16.msra.mxu0 0
      %4798 = vmatprep.subr.bf16.mxu0 0
      %4799 = vmatpush1.bf16.msra.mxu0 0
      %4800 = vmatprep.subr.bf16.mxu0 0
      %4801 = vmatpush1.bf16.msra.mxu0 0
      %4802 = vmatprep.subr.bf16.mxu0 0
      %4803 = vmatpush1.bf16.msra.mxu0 0
      %4804 = vmatprep.subr.bf16.mxu0 0
      %4805 = vmatpush1.bf16.msra.mxu0 0
      %4806 = vmatprep.subr.bf16.mxu0 0
      %4807 = vmatpush1.bf16.msra.mxu0 0
      %4808 = vmatprep.subr.bf16.mxu0 0
      %4809 = vmatpush1.bf16.msra.mxu0 0
      %4810 = vmatprep.subr.bf16.mxu0 0
      %4811 = vmatpush1.bf16.msra.mxu0 0
      %4812 = vmatprep.subr.bf16.mxu0 0
      %4813 = vmatpush1.bf16.msra.mxu0 0
      %4814 = vmatprep.subr.bf16.mxu0 0
      %4815 = vmatpush1.bf16.msra.mxu0 0
      %4816 = vmatprep.subr.bf16.mxu0 0
      %4817 = vmatpush1.bf16.msra.mxu0 0
      %4818 = vmatprep.mubr.bf16.mxu0 0
      %4819 = vmatmul.mubr.bf16.gmra.mrb[0].mxu0 %v4730
      %v4820 = vpop.f32.mrb[0].mxu0
      %v4821 = vadd.f32 0.0, %v4820
      %v4822 = vpop.f32.mrb[0].mxu0
      %v4823 = vpop.f32.mrb[0].mxu0
      %v4824 = vadd.f32 0.0, %v4823
      %v4825 = vpop.f32.mrb[0].mxu0
      %4826 = vmatprep.mubr.bf16.mxu0 0
      %4827 = vmatmul.mubr.bf16.gmra.mrb[0].mxu0 %v4733
      %v4828 = vpop.f32.mrb[0].mxu0
      %v4829 = vadd.f32 0.0, %v4828
      %v4830 = vpop.f32.mrb[0].mxu0
      %v4831 = vpop.f32.mrb[0].mxu0
      %v4832 = vadd.f32 0.0, %v4831
      %v4833 = vpop.f32.mrb[0].mxu0
      %4834 = vmatprep.mubr.bf16.mxu0 0
      %4835 = vmatmul.mubr.bf16.gmra.mrb[0].mxu0 %v4736
      %v4836 = vpop.f32.mrb[0].mxu0
      %v4837 = vadd.f32 0.0, %v4836
      %v4838 = vpop.f32.mrb[0].mxu0
      %v4839 = vpop.f32.mrb[0].mxu0
      %v4840 = vadd.f32 0.0, %v4839
      %v4841 = vpop.f32.mrb[0].mxu0
      %4842 = vmatprep.mubr.bf16.mxu0 0
      %4843 = vmatmul.mubr.bf16.gmra.mrb[0].mxu0 %v4739
      %v4844 = vpop.f32.mrb[0].mxu0
      %v4845 = vadd.f32 0.0, %v4844
      %v4846 = vpop.f32.mrb[0].mxu0
      %v4847 = vpop.f32.mrb[0].mxu0
      %v4848 = vadd.f32 0.0, %v4847
      %v4849 = vpop.f32.mrb[0].mxu0
      %4850 = vmatprep.mubr.bf16.mxu0 0
      %4851 = vmatmul.mubr.bf16.gmra.mrb[0].mxu0 %v4742
      %v4852 = vpop.f32.mrb[0].mxu0
      %v4853 = vadd.f32 0.0, %v4852
      %v4854 = vpop.f32.mrb[0].mxu0
      %v4855 = vpop.f32.mrb[0].mxu0
      %v4856 = vadd.f32 0.0, %v4855
      %v4857 = vpop.f32.mrb[0].mxu0
      %4858 = vmatprep.mubr.bf16.mxu0 0
      %4859 = vmatmul.mubr.bf16.gmra.mrb[0].mxu0 %v4745
      %v4860 = vpop.f32.mrb[0].mxu0
      %v4861 = vadd.f32 0.0, %v4860
      %v4862 = vpop.f32.mrb[0].mxu0
      %v4863 = vpop.f32.mrb[0].mxu0
      %v4864 = vadd.f32 0.0, %v4863
      %v4865 = vpop.f32.mrb[0].mxu0
      %4866 = vmatprep.mubr.bf16.mxu0 0
      %4867 = vmatmul.mubr.bf16.gmra.mrb[0].mxu0 %v4748
      %v4868 = vpop.f32.mrb[0].mxu0
      %v4869 = vadd.f32 0.0, %v4868
      %v4870 = vpop.f32.mrb[0].mxu0
      %v4871 = vpop.f32.mrb[0].mxu0
      %v4872 = vadd.f32 0.0, %v4871
      %v4873 = vpop.f32.mrb[0].mxu0
      %4874 = vmatprep.mubr.bf16.mxu0 0
      %4875 = vmatmul.mubr.bf16.gmra.mrb[0].mxu0 %v4751
      %v4876 = vpop.f32.mrb[0].mxu0
      %v4877 = vadd.f32 0.0, %v4876
      %v4878 = vpop.f32.mrb[0].mxu0
      %v4879 = vpop.f32.mrb[0].mxu0
      %v4880 = vadd.f32 0.0, %v4879
      %v4881 = vpop.f32.mrb[0].mxu0
      %4882 = vmatprep.mubr.bf16.mxu0 0
      %4883 = vmatmul.mubr.bf16.gmra.mrb[0].mxu0 %v4754
      %v4884 = vpop.f32.mrb[0].mxu0
      %v4885 = vadd.f32 0.0, %v4884
      %v4886 = vpop.f32.mrb[0].mxu0
      %v4887 = vpop.f32.mrb[0].mxu0
      %v4888 = vadd.f32 0.0, %v4887
      %v4889 = vpop.f32.mrb[0].mxu0
      %4890 = vmatprep.mubr.bf16.mxu0 0
      %4891 = vmatmul.mubr.bf16.gmra.mrb[0].mxu0 %v4757
      %v4892 = vpop.f32.mrb[0].mxu0
      %v4893 = vadd.f32 0.0, %v4892
      %v4894 = vpop.f32.mrb[0].mxu0
      %v4895 = vpop.f32.mrb[0].mxu0
      %v4896 = vadd.f32 0.0, %v4895
      %v4897 = vpop.f32.mrb[0].mxu0
      %4898 = vmatprep.mubr.bf16.mxu0 0
      %4899 = vmatmul.mubr.bf16.gmra.mrb[0].mxu0 %v4760
      %v4900 = vpop.f32.mrb[0].mxu0
      %v4901 = vadd.f32 0.0, %v4900
      %v4902 = vpop.f32.mrb[0].mxu0
      %v4903 = vpop.f32.mrb[0].mxu0
      %v4904 = vadd.f32 0.0, %v4903
      %v4905 = vpop.f32.mrb[0].mxu0
      %4906 = vmatprep.mubr.bf16.mxu0 0
      %4907 = vmatmul.mubr.bf16.gmra.mrb[0].mxu0 %v4763
      %v4908 = vpop.f32.mrb[0].mxu0
      %v4909 = vadd.f32 0.0, %v4908
      %v4910 = vpop.f32.mrb[0].mxu0
      %v4911 = vpop.f32.mrb[0].mxu0
      %v4912 = vadd.f32 0.0, %v4911
      %v4913 = vpop.f32.mrb[0].mxu0
      %4914 = vmatprep.mubr.bf16.mxu0 0
      %4915 = vmatmul.mubr.bf16.gmra.mrb[0].mxu0 %v4766
      %v4916 = vpop.f32.mrb[0].mxu0
      %v4917 = vadd.f32 0.0, %v4916
      %v4918 = vpop.f32.mrb[0].mxu0
      %v4919 = vpop.f32.mrb[0].mxu0
      %v4920 = vadd.f32 0.0, %v4919
      %v4921 = vpop.f32.mrb[0].mxu0
      %4922 = vmatprep.mubr.bf16.mxu0 0
      %4923 = vmatmul.mubr.bf16.gmra.mrb[0].mxu0 %v4769
      %v4924 = vpop.f32.mrb[0].mxu0
      %v4925 = vadd.f32 0.0, %v4924
      %v4926 = vpop.f32.mrb[0].mxu0
      %v4927 = vpop.f32.mrb[0].mxu0
      %v4928 = vadd.f32 0.0, %v4927
      %v4929 = vpop.f32.mrb[0].mxu0
      %4930 = vmatprep.mubr.bf16.mxu0 0
      %4931 = vmatmul.mubr.bf16.gmra.mrb[0].mxu0 %v4772
      %v4932 = vpop.f32.mrb[0].mxu0
      %v4933 = vadd.f32 0.0, %v4932
      %v4934 = vpop.f32.mrb[0].mxu0
      %v4935 = vpop.f32.mrb[0].mxu0
      %v4936 = vadd.f32 0.0, %v4935
      %v4937 = vpop.f32.mrb[0].mxu0
      %4938 = vmatprep.mubr.bf16.mxu0 0
      %4939 = vmatmul.mubr.bf16.gmra.mrb[0].mxu0 %v4775
      %v4940 = vpop.f32.mrb[0].mxu0
      %v4941 = vadd.f32 0.0, %v4940
      %v4942 = vpop.f32.mrb[0].mxu0
      %v4943 = vpop.f32.mrb[0].mxu0
      %v4944 = vadd.f32 0.0, %v4943
      %v4945 = vpop.f32.mrb[0].mxu0
      %4946 = vmatprep.mubr.bf16.mxu0 0
      %4947 = vmatmul.mubr.bf16.gmra.mrb[0].mxu0 %v4778
      %v4948 = vpop.f32.mrb[0].mxu0
      %v4949 = vadd.f32 0.0, %v4948
      %v4950 = vpop.f32.mrb[0].mxu0
      %v4951 = vpop.f32.mrb[0].mxu0
      %v4952 = vadd.f32 0.0, %v4951
      %v4953 = vpop.f32.mrb[0].mxu0
      %4954 = vmatprep.mubr.bf16.mxu0 0
      %4955 = vmatmul.mubr.bf16.gmra.mrb[0].mxu0 %v4781
      %v4956 = vpop.f32.mrb[0].mxu0
      %v4957 = vadd.f32 0.0, %v4956
      %v4958 = vpop.f32.mrb[0].mxu0
      %v4959 = vpop.f32.mrb[0].mxu0
      %v4960 = vadd.f32 0.0, %v4959
      %v4961 = vpop.f32.mrb[0].mxu0
      %4962 = vdwg.mxu0
      %v4963 = vld [vmem:[#allocation2] sm:$0xff]
      %v4964 = vld [vmem:[#allocation2 + $0x8] sm:$0xff]
      %v4965 = vld [vmem:[#allocation2 + $0x10] sm:$0xff]
      %v4966 = vld [vmem:[#allocation2 + $0x18] sm:$0xff]
      %v4967 = vld [vmem:[#allocation2 + $0x20] sm:$0xff]
      %v4968 = vld [vmem:[#allocation2 + $0x28] sm:$0xff]
      %v4969 = vld [vmem:[#allocation2 + $0x30] sm:$0xff]
      %v4970 = vld [vmem:[#allocation2 + $0x38] sm:$0xff]
      %v4971 = vld [vmem:[#allocation2 + $0x40] sm:$0xff]
      %v4972 = vld [vmem:[#allocation2 + $0x48] sm:$0xff]
      %v4973 = vld [vmem:[#allocation2 + $0x50] sm:$0xff]
      %v4974 = vld [vmem:[#allocation2 + $0x58] sm:$0xff]
      %v4975 = vld [vmem:[#allocation2 + $0x60] sm:$0xff]
      %v4976 = vld [vmem:[#allocation2 + $0x68] sm:$0xff]
      %v4977 = vld [vmem:[#allocation2 + $0x70] sm:$0xff]
      %v4978 = vld [vmem:[#allocation2 + $0x78] sm:$0xff]
      %v4979 = vld [vmem:[#allocation2 + $0x80] sm:$0xff]
      %v4980 = vld [vmem:[#allocation2 + $0x88] sm:$0xff]
      %v4981 = vld [vmem:[#allocation2 + $0x90] sm:$0xff]
      %v4982 = vld [vmem:[#allocation2 + $0x98] sm:$0xff]
      %v4983 = vld [vmem:[#allocation2 + $0xa0] sm:$0xff]
      %v4984 = vld [vmem:[#allocation2 + $0xa8] sm:$0xff]
      %v4985 = vld [vmem:[#allocation2 + $0xb0] sm:$0xff]
      %v4986 = vld [vmem:[#allocation2 + $0xb8] sm:$0xff]
      %v4987 = vld [vmem:[#allocation2 + $0xc0] sm:$0xff]
      %v4988 = vld [vmem:[#allocation2 + $0xc8] sm:$0xff]
      %v4989 = vld [vmem:[#allocation2 + $0xd0] sm:$0xff]
      %v4990 = vld [vmem:[#allocation2 + $0xd8] sm:$0xff]
      %v4991 = vld [vmem:[#allocation2 + $0xe0] sm:$0xff]
      %v4992 = vld [vmem:[#allocation2 + $0xe8] sm:$0xff]
      %v4993 = vld [vmem:[#allocation2 + $0xf0] sm:$0xff]
      %v4994 = vld [vmem:[#allocation2 + $0xf8] sm:$0xff]
      %v4995 = vld [vmem:[#allocation2 + $0x100] sm:$0xff]
      %v4996 = vld [vmem:[#allocation2 + $0x108] sm:$0xff]
      %v4997 = vld [vmem:[#allocation2 + $0x110] sm:$0xff]
      %v4998 = vld [vmem:[#allocation2 + $0x118] sm:$0x3f]
      %v4999 = vadd.f32 %v4963, %v4821
      %v5000 = vadd.f32 %v4964, %v4824
      %v5001 = vadd.f32 %v4965, %v4829
      %v5002 = vadd.f32 %v4966, %v4832
      %v5003 = vadd.f32 %v4967, %v4837
      %v5004 = vadd.f32 %v4968, %v4840
      %v5005 = vadd.f32 %v4969, %v4845
      %v5006 = vadd.f32 %v4970, %v4848
      %v5007 = vadd.f32 %v4971, %v4853
      %v5008 = vadd.f32 %v4972, %v4856
      %v5009 = vadd.f32 %v4973, %v4861
      %v5010 = vadd.f32 %v4974, %v4864
      %v5011 = vadd.f32 %v4975, %v4869
      %v5012 = vadd.f32 %v4976, %v4872
      %v5013 = vadd.f32 %v4977, %v4877
      %v5014 = vadd.f32 %v4978, %v4880
      %v5015 = vadd.f32 %v4979, %v4885
      %v5016 = vadd.f32 %v4980, %v4888
      %v5017 = vadd.f32 %v4981, %v4893
      %v5018 = vadd.f32 %v4982, %v4896
      %v5019 = vadd.f32 %v4983, %v4901
      %v5020 = vadd.f32 %v4984, %v4904
      %v5021 = vadd.f32 %v4985, %v4909
      %v5022 = vadd.f32 %v4986, %v4912
      %v5023 = vadd.f32 %v4987, %v4917
      %v5024 = vadd.f32 %v4988, %v4920
      %v5025 = vadd.f32 %v4989, %v4925
      %v5026 = vadd.f32 %v4990, %v4928
      %v5027 = vadd.f32 %v4991, %v4933
      %v5028 = vadd.f32 %v4992, %v4936
      %v5029 = vadd.f32 %v4993, %v4941
      %v5030 = vadd.f32 %v4994, %v4944
      %v5031 = vadd.f32 %v4995, %v4949
      %v5032 = vadd.f32 %v4996, %v4952
      %v5033 = vadd.f32 %v4997, %v4957
      %v5034 = vadd.f32 %v4998, %v4960
      %5035 = vst [vmem:[#allocation2] sm:$0xff] %v4999
      %5036 = vst [vmem:[#allocation2 + $0x8] sm:$0xff] %v5000
      %5037 = vst [vmem:[#allocation2 + $0x10] sm:$0xff] %v5001
      %5038 = vst [vmem:[#allocation2 + $0x18] sm:$0xff] %v5002
      %5039 = vst [vmem:[#allocation2 + $0x20] sm:$0xff] %v5003
      %5040 = vst [vmem:[#allocation2 + $0x28] sm:$0xff] %v5004
      %5041 = vst [vmem:[#allocation2 + $0x30] sm:$0xff] %v5005
      %5042 = vst [vmem:[#allocation2 + $0x38] sm:$0xff] %v5006
      %5043 = vst [vmem:[#allocation2 + $0x40] sm:$0xff] %v5007
      %5044 = vst [vmem:[#allocation2 + $0x48] sm:$0xff] %v5008
      %5045 = vst [vmem:[#allocation2 + $0x50] sm:$0xff] %v5009
      %5046 = vst [vmem:[#allocation2 + $0x58] sm:$0xff] %v5010
      %5047 = vst [vmem:[#allocation2 + $0x60] sm:$0xff] %v5011
      %5048 = vst [vmem:[#allocation2 + $0x68] sm:$0xff] %v5012
      %5049 = vst [vmem:[#allocation2 + $0x70] sm:$0xff] %v5013
      %5050 = vst [vmem:[#allocation2 + $0x78] sm:$0xff] %v5014
      %5051 = vst [vmem:[#allocation2 + $0x80] sm:$0xff] %v5015
      %5052 = vst [vmem:[#allocation2 + $0x88] sm:$0xff] %v5016
      %5053 = vst [vmem:[#allocation2 + $0x90] sm:$0xff] %v5017
      %5054 = vst [vmem:[#allocation2 + $0x98] sm:$0xff] %v5018
      %5055 = vst [vmem:[#allocation2 + $0xa0] sm:$0xff] %v5019
      %5056 = vst [vmem:[#allocation2 + $0xa8] sm:$0xff] %v5020
      %5057 = vst [vmem:[#allocation2 + $0xb0] sm:$0xff] %v5021
      %5058 = vst [vmem:[#allocation2 + $0xb8] sm:$0xff] %v5022
      %5059 = vst [vmem:[#allocation2 + $0xc0] sm:$0xff] %v5023
      %5060 = vst [vmem:[#allocation2 + $0xc8] sm:$0xff] %v5024
      %5061 = vst [vmem:[#allocation2 + $0xd0] sm:$0xff] %v5025
      %5062 = vst [vmem:[#allocation2 + $0xd8] sm:$0xff] %v5026
      %5063 = vst [vmem:[#allocation2 + $0xe0] sm:$0xff] %v5027
      %5064 = vst [vmem:[#allocation2 + $0xe8] sm:$0xff] %v5028
      %5065 = vst [vmem:[#allocation2 + $0xf0] sm:$0xff] %v5029
      %5066 = vst [vmem:[#allocation2 + $0xf8] sm:$0xff] %v5030
      %5067 = vst [vmem:[#allocation2 + $0x100] sm:$0xff] %v5031
      %5068 = vst [vmem:[#allocation2 + $0x108] sm:$0xff] %v5032
      %5069 = vst [vmem:[#allocation2 + $0x110] sm:$0xff] %v5033
      %5070 = vst [vmem:[#allocation2 + $0x118] sm:$0x3f] %v5034
      %v5071 = vld [vmem:[#allocation2] sm:$0xff]
      %v5072 = vld [vmem:[#allocation2 + $0x8] sm:$0xff]
      %v5073 = vld [vmem:[#allocation2 + $0x10] sm:$0xff]
      %v5074 = vld [vmem:[#allocation2 + $0x18] sm:$0xff]
      %v5075 = vld [vmem:[#allocation2 + $0x20] sm:$0xff]
      %v5076 = vld [vmem:[#allocation2 + $0x28] sm:$0xff]
      %v5077 = vld [vmem:[#allocation2 + $0x30] sm:$0xff]
      %v5078 = vld [vmem:[#allocation2 + $0x38] sm:$0xff]
      %v5079 = vld [vmem:[#allocation2 + $0x40] sm:$0xff]
      %v5080 = vld [vmem:[#allocation2 + $0x48] sm:$0xff]
      %v5081 = vld [vmem:[#allocation2 + $0x50] sm:$0xff]
      %v5082 = vld [vmem:[#allocation2 + $0x58] sm:$0xff]
      %v5083 = vld [vmem:[#allocation2 + $0x60] sm:$0xff]
      %v5084 = vld [vmem:[#allocation2 + $0x68] sm:$0xff]
      %v5085 = vld [vmem:[#allocation2 + $0x70] sm:$0xff]
      %v5086 = vld [vmem:[#allocation2 + $0x78] sm:$0xff]
      %v5087 = vld [vmem:[#allocation2 + $0x80] sm:$0xff]
      %v5088 = vld [vmem:[#allocation2 + $0x88] sm:$0xff]
      %v5089 = vld [vmem:[#allocation2 + $0x90] sm:$0xff]
      %v5090 = vld [vmem:[#allocation2 + $0x98] sm:$0xff]
      %v5091 = vld [vmem:[#allocation2 + $0xa0] sm:$0xff]
      %v5092 = vld [vmem:[#allocation2 + $0xa8] sm:$0xff]
      %v5093 = vld [vmem:[#allocation2 + $0xb0] sm:$0xff]
      %v5094 = vld [vmem:[#allocation2 + $0xb8] sm:$0xff]
      %v5095 = vld [vmem:[#allocation2 + $0xc0] sm:$0xff]
      %v5096 = vld [vmem:[#allocation2 + $0xc8] sm:$0xff]
      %v5097 = vld [vmem:[#allocation2 + $0xd0] sm:$0xff]
      %v5098 = vld [vmem:[#allocation2 + $0xd8] sm:$0xff]
      %v5099 = vld [vmem:[#allocation2 + $0xe0] sm:$0xff]
      %v5100 = vld [vmem:[#allocation2 + $0xe8] sm:$0xff]
      %v5101 = vld [vmem:[#allocation2 + $0xf0] sm:$0xff]
      %v5102 = vld [vmem:[#allocation2 + $0xf8] sm:$0xff]
      %v5103 = vld [vmem:[#allocation2 + $0x100] sm:$0xff]
      %v5104 = vld [vmem:[#allocation2 + $0x108] sm:$0xff]
      %v5105 = vld [vmem:[#allocation2 + $0x110] sm:$0xff]
      %v5106 = vld [vmem:[#allocation2 + $0x118] sm:$0x3f]
      %v5107 = vld [vmem:[%s216] sm:$0x1]
      %v5108 = vlaneseq
      %v5109 = vshrl.u32 %v5108, 7
      %v5110 = vsub.s32 0, %v5109
      %v5111 = vrot.slane %v5107, %v5110
      %v5112 = vmul.f32 %v5071, %v5111
      %v5113 = vmul.f32 %v5072, %v5111
      %v5114 = vmul.f32 %v5073, %v5111
      %v5115 = vmul.f32 %v5074, %v5111
      %v5116 = vmul.f32 %v5075, %v5111
      %v5117 = vmul.f32 %v5076, %v5111
      %v5118 = vmul.f32 %v5077, %v5111
      %v5119 = vmul.f32 %v5078, %v5111
      %v5120 = vmul.f32 %v5079, %v5111
      %v5121 = vmul.f32 %v5080, %v5111
      %v5122 = vmul.f32 %v5081, %v5111
      %v5123 = vmul.f32 %v5082, %v5111
      %v5124 = vmul.f32 %v5083, %v5111
      %v5125 = vmul.f32 %v5084, %v5111
      %v5126 = vmul.f32 %v5085, %v5111
      %v5127 = vmul.f32 %v5086, %v5111
      %v5128 = vmul.f32 %v5087, %v5111
      %v5129 = vmul.f32 %v5088, %v5111
      %v5130 = vmul.f32 %v5089, %v5111
      %v5131 = vmul.f32 %v5090, %v5111
      %v5132 = vmul.f32 %v5091, %v5111
      %v5133 = vmul.f32 %v5092, %v5111
      %v5134 = vmul.f32 %v5093, %v5111
      %v5135 = vmul.f32 %v5094, %v5111
      %v5136 = vmul.f32 %v5095, %v5111
      %v5137 = vmul.f32 %v5096, %v5111
      %v5138 = vmul.f32 %v5097, %v5111
      %v5139 = vmul.f32 %v5098, %v5111
      %v5140 = vmul.f32 %v5099, %v5111
      %v5141 = vmul.f32 %v5100, %v5111
      %v5142 = vmul.f32 %v5101, %v5111
      %v5143 = vmul.f32 %v5102, %v5111
      %v5144 = vmul.f32 %v5103, %v5111
      %v5145 = vmul.f32 %v5104, %v5111
      %v5146 = vmul.f32 %v5105, %v5111
      %v5147 = vmul.f32 %v5106, %v5111
      %v5148 = vld [vmem:[%s216 + $0x1] sm:$0x1]
      %v5149 = vlaneseq
      %v5150 = vshrl.u32 %v5149, 7
      %v5151 = vsub.s32 0, %v5150
      %v5152 = vrot.slane %v5148, %v5151
      %v5153 = vadd.f32 %v5112, %v5152
      %v5154 = vadd.f32 %v5113, %v5152
      %v5155 = vadd.f32 %v5114, %v5152
      %v5156 = vadd.f32 %v5115, %v5152
      %v5157 = vadd.f32 %v5116, %v5152
      %v5158 = vadd.f32 %v5117, %v5152
      %v5159 = vadd.f32 %v5118, %v5152
      %v5160 = vadd.f32 %v5119, %v5152
      %v5161 = vadd.f32 %v5120, %v5152
      %v5162 = vadd.f32 %v5121, %v5152
      %v5163 = vadd.f32 %v5122, %v5152
      %v5164 = vadd.f32 %v5123, %v5152
      %v5165 = vadd.f32 %v5124, %v5152
      %v5166 = vadd.f32 %v5125, %v5152
      %v5167 = vadd.f32 %v5126, %v5152
      %v5168 = vadd.f32 %v5127, %v5152
      %v5169 = vadd.f32 %v5128, %v5152
      %v5170 = vadd.f32 %v5129, %v5152
      %v5171 = vadd.f32 %v5130, %v5152
      %v5172 = vadd.f32 %v5131, %v5152
      %v5173 = vadd.f32 %v5132, %v5152
      %v5174 = vadd.f32 %v5133, %v5152
      %v5175 = vadd.f32 %v5134, %v5152
      %v5176 = vadd.f32 %v5135, %v5152
      %v5177 = vadd.f32 %v5136, %v5152
      %v5178 = vadd.f32 %v5137, %v5152
      %v5179 = vadd.f32 %v5138, %v5152
      %v5180 = vadd.f32 %v5139, %v5152
      %v5181 = vadd.f32 %v5140, %v5152
      %v5182 = vadd.f32 %v5141, %v5152
      %v5183 = vadd.f32 %v5142, %v5152
      %v5184 = vadd.f32 %v5143, %v5152
      %v5185 = vadd.f32 %v5144, %v5152
      %v5186 = vadd.f32 %v5145, %v5152
      %v5187 = vadd.f32 %v5146, %v5152
      %v5188 = vadd.f32 %v5147, %v5152
      %v5189 = vmul.f32 %v5153, 0.5
      %v5190 = vmul.f32 %v5154, 0.5
      %v5191 = vmul.f32 %v5155, 0.5
      %v5192 = vmul.f32 %v5156, 0.5
      %v5193 = vmul.f32 %v5157, 0.5
      %v5194 = vmul.f32 %v5158, 0.5
      %v5195 = vmul.f32 %v5159, 0.5
      %v5196 = vmul.f32 %v5160, 0.5
      %v5197 = vmul.f32 %v5161, 0.5
      %v5198 = vmul.f32 %v5162, 0.5
      %v5199 = vmul.f32 %v5163, 0.5
      %v5200 = vmul.f32 %v5164, 0.5
      %v5201 = vmul.f32 %v5165, 0.5
      %v5202 = vmul.f32 %v5166, 0.5
      %v5203 = vmul.f32 %v5167, 0.5
      %v5204 = vmul.f32 %v5168, 0.5
      %v5205 = vmul.f32 %v5169, 0.5
      %v5206 = vmul.f32 %v5170, 0.5
      %v5207 = vmul.f32 %v5171, 0.5
      %v5208 = vmul.f32 %v5172, 0.5
      %v5209 = vmul.f32 %v5173, 0.5
      %v5210 = vmul.f32 %v5174, 0.5
      %v5211 = vmul.f32 %v5175, 0.5
      %v5212 = vmul.f32 %v5176, 0.5
      %v5213 = vmul.f32 %v5177, 0.5
      %v5214 = vmul.f32 %v5178, 0.5
      %v5215 = vmul.f32 %v5179, 0.5
      %v5216 = vmul.f32 %v5180, 0.5
      %v5217 = vmul.f32 %v5181, 0.5
      %v5218 = vmul.f32 %v5182, 0.5
      %v5219 = vmul.f32 %v5183, 0.5
      %v5220 = vmul.f32 %v5184, 0.5
      %v5221 = vmul.f32 %v5185, 0.5
      %v5222 = vmul.f32 %v5186, 0.5
      %v5223 = vmul.f32 %v5187, 0.5
      %v5224 = vmul.f32 %v5188, 0.5
      %v5225 = vtanh.pop %v5189
      %v5226 = vtanh.pop %v5190
      %v5227 = vtanh.pop %v5191
      %v5228 = vtanh.pop %v5192
      %v5229 = vtanh.pop %v5193
      %v5230 = vtanh.pop %v5194
      %v5231 = vtanh.pop %v5195
      %v5232 = vtanh.pop %v5196
      %v5233 = vtanh.pop %v5197
      %v5234 = vtanh.pop %v5198
      %v5235 = vtanh.pop %v5199
      %v5236 = vtanh.pop %v5200
      %v5237 = vtanh.pop %v5201
      %v5238 = vtanh.pop %v5202
      %v5239 = vtanh.pop %v5203
      %v5240 = vtanh.pop %v5204
      %v5241 = vtanh.pop %v5205
      %v5242 = vtanh.pop %v5206
      %v5243 = vtanh.pop %v5207
      %v5244 = vtanh.pop %v5208
      %v5245 = vtanh.pop %v5209
      %v5246 = vtanh.pop %v5210
      %v5247 = vtanh.pop %v5211
      %v5248 = vtanh.pop %v5212
      %v5249 = vtanh.pop %v5213
      %v5250 = vtanh.pop %v5214
      %v5251 = vtanh.pop %v5215
      %v5252 = vtanh.pop %v5216
      %v5253 = vtanh.pop %v5217
      %v5254 = vtanh.pop %v5218
      %v5255 = vtanh.pop %v5219
      %v5256 = vtanh.pop %v5220
      %v5257 = vtanh.pop %v5221
      %v5258 = vtanh.pop %v5222
      %v5259 = vtanh.pop %v5223
      %v5260 = vtanh.pop %v5224
      %v5261 = vmul.f32 %v5225, 0.5
      %v5262 = vmul.f32 %v5226, 0.5
      %v5263 = vmul.f32 %v5227, 0.5
      %v5264 = vmul.f32 %v5228, 0.5
      %v5265 = vmul.f32 %v5229, 0.5
      %v5266 = vmul.f32 %v5230, 0.5
      %v5267 = vmul.f32 %v5231, 0.5
      %v5268 = vmul.f32 %v5232, 0.5
      %v5269 = vmul.f32 %v5233, 0.5
      %v5270 = vmul.f32 %v5234, 0.5
      %v5271 = vmul.f32 %v5235, 0.5
      %v5272 = vmul.f32 %v5236, 0.5
      %v5273 = vmul.f32 %v5237, 0.5
      %v5274 = vmul.f32 %v5238, 0.5
      %v5275 = vmul.f32 %v5239, 0.5
      %v5276 = vmul.f32 %v5240, 0.5
      %v5277 = vmul.f32 %v5241, 0.5
      %v5278 = vmul.f32 %v5242, 0.5
      %v5279 = vmul.f32 %v5243, 0.5
      %v5280 = vmul.f32 %v5244, 0.5
      %v5281 = vmul.f32 %v5245, 0.5
      %v5282 = vmul.f32 %v5246, 0.5
      %v5283 = vmul.f32 %v5247, 0.5
      %v5284 = vmul.f32 %v5248, 0.5
      %v5285 = vmul.f32 %v5249, 0.5
      %v5286 = vmul.f32 %v5250, 0.5
      %v5287 = vmul.f32 %v5251, 0.5
      %v5288 = vmul.f32 %v5252, 0.5
      %v5289 = vmul.f32 %v5253, 0.5
      %v5290 = vmul.f32 %v5254, 0.5
      %v5291 = vmul.f32 %v5255, 0.5
      %v5292 = vmul.f32 %v5256, 0.5
      %v5293 = vmul.f32 %v5257, 0.5
      %v5294 = vmul.f32 %v5258, 0.5
      %v5295 = vmul.f32 %v5259, 0.5
      %v5296 = vmul.f32 %v5260, 0.5
      %v5297 = vadd.f32 %v5261, 0.5
      %v5298 = vadd.f32 %v5262, 0.5
      %v5299 = vadd.f32 %v5263, 0.5
      %v5300 = vadd.f32 %v5264, 0.5
      %v5301 = vadd.f32 %v5265, 0.5
      %v5302 = vadd.f32 %v5266, 0.5
      %v5303 = vadd.f32 %v5267, 0.5
      %v5304 = vadd.f32 %v5268, 0.5
      %v5305 = vadd.f32 %v5269, 0.5
      %v5306 = vadd.f32 %v5270, 0.5
      %v5307 = vadd.f32 %v5271, 0.5
      %v5308 = vadd.f32 %v5272, 0.5
      %v5309 = vadd.f32 %v5273, 0.5
      %v5310 = vadd.f32 %v5274, 0.5
      %v5311 = vadd.f32 %v5275, 0.5
      %v5312 = vadd.f32 %v5276, 0.5
      %v5313 = vadd.f32 %v5277, 0.5
      %v5314 = vadd.f32 %v5278, 0.5
      %v5315 = vadd.f32 %v5279, 0.5
      %v5316 = vadd.f32 %v5280, 0.5
      %v5317 = vadd.f32 %v5281, 0.5
      %v5318 = vadd.f32 %v5282, 0.5
      %v5319 = vadd.f32 %v5283, 0.5
      %v5320 = vadd.f32 %v5284, 0.5
      %v5321 = vadd.f32 %v5285, 0.5
      %v5322 = vadd.f32 %v5286, 0.5
      %v5323 = vadd.f32 %v5287, 0.5
      %v5324 = vadd.f32 %v5288, 0.5
      %v5325 = vadd.f32 %v5289, 0.5
      %v5326 = vadd.f32 %v5290, 0.5
      %v5327 = vadd.f32 %v5291, 0.5
      %v5328 = vadd.f32 %v5292, 0.5
      %v5329 = vadd.f32 %v5293, 0.5
      %v5330 = vadd.f32 %v5294, 0.5
      %v5331 = vadd.f32 %v5295, 0.5
      %v5332 = vadd.f32 %v5296, 0.5
      %v5333 = vmul.f32 %v5153, %v5297
      %v5334 = vmul.f32 %v5154, %v5298
      %v5335 = vmul.f32 %v5155, %v5299
      %v5336 = vmul.f32 %v5156, %v5300
      %v5337 = vmul.f32 %v5157, %v5301
      %v5338 = vmul.f32 %v5158, %v5302
      %v5339 = vmul.f32 %v5159, %v5303
      %v5340 = vmul.f32 %v5160, %v5304
      %v5341 = vmul.f32 %v5161, %v5305
      %v5342 = vmul.f32 %v5162, %v5306
      %v5343 = vmul.f32 %v5163, %v5307
      %v5344 = vmul.f32 %v5164, %v5308
      %v5345 = vmul.f32 %v5165, %v5309
      %v5346 = vmul.f32 %v5166, %v5310
      %v5347 = vmul.f32 %v5167, %v5311
      %v5348 = vmul.f32 %v5168, %v5312
      %v5349 = vmul.f32 %v5169, %v5313
      %v5350 = vmul.f32 %v5170, %v5314
      %v5351 = vmul.f32 %v5171, %v5315
      %v5352 = vmul.f32 %v5172, %v5316
      %v5353 = vmul.f32 %v5173, %v5317
      %v5354 = vmul.f32 %v5174, %v5318
      %v5355 = vmul.f32 %v5175, %v5319
      %v5356 = vmul.f32 %v5176, %v5320
      %v5357 = vmul.f32 %v5177, %v5321
      %v5358 = vmul.f32 %v5178, %v5322
      %v5359 = vmul.f32 %v5179, %v5323
      %v5360 = vmul.f32 %v5180, %v5324
      %v5361 = vmul.f32 %v5181, %v5325
      %v5362 = vmul.f32 %v5182, %v5326
      %v5363 = vmul.f32 %v5183, %v5327
      %v5364 = vmul.f32 %v5184, %v5328
      %v5365 = vmul.f32 %v5185, %v5329
      %v5366 = vmul.f32 %v5186, %v5330
      %v5367 = vmul.f32 %v5187, %v5331
      %v5368 = vmul.f32 %v5188, %v5332
      %v5369 = vpack.c.bf16 %v5334, %v5333
      %v5370 = vpack.c.bf16 %v5336, %v5335
      %v5371 = vpack.c.bf16 %v5338, %v5337
      %v5372 = vpack.c.bf16 %v5340, %v5339
      %v5373 = vpack.c.bf16 %v5342, %v5341
      %v5374 = vpack.c.bf16 %v5344, %v5343
      %v5375 = vpack.c.bf16 %v5346, %v5345
      %v5376 = vpack.c.bf16 %v5348, %v5347
      %v5377 = vpack.c.bf16 %v5350, %v5349
      %v5378 = vpack.c.bf16 %v5352, %v5351
      %v5379 = vpack.c.bf16 %v5354, %v5353
      %v5380 = vpack.c.bf16 %v5356, %v5355
      %v5381 = vpack.c.bf16 %v5358, %v5357
      %v5382 = vpack.c.bf16 %v5360, %v5359
      %v5383 = vpack.c.bf16 %v5362, %v5361
      %v5384 = vpack.c.bf16 %v5364, %v5363
      %v5385 = vpack.c.bf16 %v5366, %v5365
      %v5386 = vpack.c.bf16 %v5368, %v5367
      %v5405 = vunpack.c.l.b16 %v5369
      %v5406 = vunpack.c.h.b16 %v5369
      %v5407 = vunpack.c.l.b16 %v5370
      %v5408 = vunpack.c.h.b16 %v5370
      %v5409 = vunpack.c.l.b16 %v5371
      %v5410 = vunpack.c.h.b16 %v5371
      %v5411 = vunpack.c.l.b16 %v5372
      %v5412 = vunpack.c.h.b16 %v5372
      %v5413 = vunpack.c.l.b16 %v5373
      %v5414 = vunpack.c.h.b16 %v5373
      %v5415 = vunpack.c.l.b16 %v5374
      %v5416 = vunpack.c.h.b16 %v5374
      %v5417 = vunpack.c.l.b16 %v5375
      %v5418 = vunpack.c.h.b16 %v5375
      %v5419 = vunpack.c.l.b16 %v5376
      %v5420 = vunpack.c.h.b16 %v5376
      %v5421 = vunpack.c.l.b16 %v5377
      %v5422 = vunpack.c.h.b16 %v5377
      %v5423 = vunpack.c.l.b16 %v5378
      %v5424 = vunpack.c.h.b16 %v5378
      %v5425 = vunpack.c.l.b16 %v5379
      %v5426 = vunpack.c.h.b16 %v5379
      %v5427 = vunpack.c.l.b16 %v5380
      %v5428 = vunpack.c.h.b16 %v5380
      %v5429 = vunpack.c.l.b16 %v5381
      %v5430 = vunpack.c.h.b16 %v5381
      %v5431 = vunpack.c.l.b16 %v5382
      %v5432 = vunpack.c.h.b16 %v5382
      %v5433 = vunpack.c.l.b16 %v5383
      %v5434 = vunpack.c.h.b16 %v5383
      %v5435 = vunpack.c.l.b16 %v5384
      %v5436 = vunpack.c.h.b16 %v5384
      %v5437 = vunpack.c.l.b16 %v5385
      %v5438 = vunpack.c.h.b16 %v5385
      %v5439 = vunpack.c.l.b16 %v5386
      %v5440 = vunpack.c.h.b16 %v5386
      %v5441 = vpack.c.b16 %v5405, %v5405
      %v5442 = vpack.c.b16 %v5406, %v5406
      %v5443 = vpack.c.b16 %v5407, %v5407
      %v5444 = vpack.c.b16 %v5408, %v5408
      %v5445 = vpack.c.b16 %v5409, %v5409
      %v5446 = vpack.c.b16 %v5410, %v5410
      %v5447 = vpack.c.b16 %v5411, %v5411
      %v5448 = vpack.c.b16 %v5412, %v5412
      %v5449 = vpack.c.b16 %v5413, %v5413
      %v5450 = vpack.c.b16 %v5414, %v5414
      %v5451 = vpack.c.b16 %v5415, %v5415
      %v5452 = vpack.c.b16 %v5416, %v5416
      %v5453 = vpack.c.b16 %v5417, %v5417
      %v5454 = vpack.c.b16 %v5418, %v5418
      %v5455 = vpack.c.b16 %v5419, %v5419
      %v5456 = vpack.c.b16 %v5420, %v5420
      %v5457 = vpack.c.b16 %v5421, %v5421
      %v5458 = vpack.c.b16 %v5422, %v5422
      %v5459 = vpack.c.b16 %v5423, %v5423
      %v5460 = vpack.c.b16 %v5424, %v5424
      %v5461 = vpack.c.b16 %v5425, %v5425
      %v5462 = vpack.c.b16 %v5426, %v5426
      %v5463 = vpack.c.b16 %v5427, %v5427
      %v5464 = vpack.c.b16 %v5428, %v5428
      %v5465 = vpack.c.b16 %v5429, %v5429
      %v5466 = vpack.c.b16 %v5430, %v5430
      %v5467 = vpack.c.b16 %v5431, %v5431
      %v5468 = vpack.c.b16 %v5432, %v5432
      %v5469 = vpack.c.b16 %v5433, %v5433
      %v5470 = vpack.c.b16 %v5434, %v5434
      %v5471 = vpack.c.b16 %v5435, %v5435
      %v5472 = vpack.c.b16 %v5436, %v5436
      %v5473 = vpack.c.b16 %v5437, %v5437
      %v5474 = vpack.c.b16 %v5438, %v5438
      %v5475 = vpack.c.b16 %v5439, %v5439
      %v5476 = vpack.c.b16 %v5440, %v5440
      %5513 = vst [vmem:[%s224] sm:$0xf] %v5441
      %5514 = vst [vmem:[%s224 + $0x4] sm:$0xf] %v5442
      %5515 = vst [vmem:[%s224 + $0x8] sm:$0xf] %v5443
      %5516 = vst [vmem:[%s224 + $0xc] sm:$0xf] %v5444
      %5517 = vst [vmem:[%s224 + $0x10] sm:$0xf] %v5445
      %5518 = vst [vmem:[%s224 + $0x14] sm:$0xf] %v5446
      %5519 = vst [vmem:[%s224 + $0x18] sm:$0xf] %v5447
      %5520 = vst [vmem:[%s224 + $0x1c] sm:$0xf] %v5448
      %5521 = vst [vmem:[%s224 + $0x20] sm:$0xf] %v5449
      %5522 = vst [vmem:[%s224 + $0x24] sm:$0xf] %v5450
      %5523 = vst [vmem:[%s224 + $0x28] sm:$0xf] %v5451
      %5524 = vst [vmem:[%s224 + $0x2c] sm:$0xf] %v5452
      %5525 = vst [vmem:[%s224 + $0x30] sm:$0xf] %v5453
      %5526 = vst [vmem:[%s224 + $0x34] sm:$0xf] %v5454
      %5527 = vst [vmem:[%s224 + $0x38] sm:$0xf] %v5455
      %5528 = vst [vmem:[%s224 + $0x3c] sm:$0xf] %v5456
      %5529 = vst [vmem:[%s224 + $0x40] sm:$0xf] %v5457
      %5530 = vst [vmem:[%s224 + $0x44] sm:$0xf] %v5458
      %5531 = vst [vmem:[%s224 + $0x48] sm:$0xf] %v5459
      %5532 = vst [vmem:[%s224 + $0x4c] sm:$0xf] %v5460
      %5533 = vst [vmem:[%s224 + $0x50] sm:$0xf] %v5461
      %5534 = vst [vmem:[%s224 + $0x54] sm:$0xf] %v5462
      %5535 = vst [vmem:[%s224 + $0x58] sm:$0xf] %v5463
      %5536 = vst [vmem:[%s224 + $0x5c] sm:$0xf] %v5464
      %5537 = vst [vmem:[%s224 + $0x60] sm:$0xf] %v5465
      %5538 = vst [vmem:[%s224 + $0x64] sm:$0xf] %v5466
      %5539 = vst [vmem:[%s224 + $0x68] sm:$0xf] %v5467
      %5540 = vst [vmem:[%s224 + $0x6c] sm:$0xf] %v5468
      %5541 = vst [vmem:[%s224 + $0x70] sm:$0xf] %v5469
      %5542 = vst [vmem:[%s224 + $0x74] sm:$0xf] %v5470
      %5543 = vst [vmem:[%s224 + $0x78] sm:$0xf] %v5471
      %5544 = vst [vmem:[%s224 + $0x7c] sm:$0xf] %v5472
      %5545 = vst [vmem:[%s224 + $0x80] sm:$0xf] %v5473
      %5546 = vst [vmem:[%s224 + $0x84] sm:$0xf] %v5474
      %5547 = vst [vmem:[%s224 + $0x88] sm:$0xf] %v5475
      %5548 = vst [vmem:[%s224 + $0x8c] sm:$0x7] %v5476
      %p5549 = scmp.lt.s32.totalorder %s18, 1
      %s5550 = scalar_select %p5549, %s18, 1
      %p5551 = scmp.lt.s32.totalorder %s19, 0
      %s5552 = scalar_select %p5551, %s19, 0
      %s5553 = smul.addr %s5550, 36
      %s5554 = sadd.s32 %s5552, %s5553
      %s5555 = smul.addr %s5554, 4
      %s5556 = scalar_lea.vmem %s3, %s5555
      // Predicated region
      $region33: #{tpu_custom_call.1} parent=31 // pred_check
        %p5557 = pneg %p124
      $region34: #{tpu_custom_call.1} parent=31 // pred_check_branch
        %5559 = sbr.rel (%p5557) target = $region36
      $region35: #{tpu_custom_call.1} parent=31 // pred_region
        _
      $region36: #{tpu_custom_call.1} parent=31 // pred_fallthru
        _
    $region32: #{tpu_custom_call.1} parent=5 // pred_fallthru
      _
    %p5560 = scmp.le.s32.totalorder 2, %s9
    // Predicated region
    $region37: #{tpu_custom_call.1} parent=5 // pred_check
      %p5561 = pneg %p5560
    $region38: #{tpu_custom_call.1} parent=5 // pred_check_branch
      %5563 = sbr.rel (%p5561) target = $region40
    $region39: #{tpu_custom_call.1} parent=5 // pred_region
      %s5564 = ssub.s32 %s9, 2
      // Predicated region
      $region41: #{tpu_custom_call.1} parent=39 // pred_check
        %p5565 = pneg %p130
      $region42: #{tpu_custom_call.1} parent=39 // pred_check_branch
        %5567 = sbr.rel (%p5565) target = $region44
      $region43: #{tpu_custom_call.1} parent=39 // pred_region
        %p5568 = scmp.lt.s32.totalorder %s20, 1
        %s5569 = scalar_select %p5568, %s20, 1
        %p5570 = scmp.lt.s32.totalorder %s21, 0
        %s5571 = scalar_select %p5570, %s21, 0
        %s5572 = smul.addr %s5569, 36
        %s5573 = sadd.s32 %s5571, %s5572
        %s5574 = smul.addr %s5573, 4
        %s5575 = scalar_lea.vmem %s3, %s5574
      $region44: #{tpu_custom_call.1} parent=39 // pred_fallthru
        _
    $region40: #{tpu_custom_call.1} parent=5 // pred_fallthru
      _
  $region6: #{tpu_custom_call.1} parent=0 // loop_footer
    %s13 = sadd.s32 1, %s9
  $region7: #{tpu_custom_call.1} parent=0 // loop_footer_branch
    %8 = sbr.rel target = $region3
  $region8: #{tpu_custom_call.1} parent=0 // loop_exit
    _

</llo_original>
